<compile_context>
chip_gen: v7x
topology: tpu7x:2x2x1
jax: 0.10.0
libtpu: 0.0.40
codegen_flags: <defaults>
</compile_context>

<pallas_src>
import numpy as np
import jax
import jax.numpy as jnp
from jax.experimental import pallas as pl
from jax.experimental.pallas import tpu as pltpu

# ---- static configuration (shapes implied by CNN_2.__init__) ----
BATCH = 2          # cfg.batch_size
C_IN = 4           # cfg.n_inputs
WIN = 64           # cfg.window_size
D, K1 = 10, 10     # spectral filters: 10 out channels, kernel 10, stride 2
F2, K2 = 32, 5
F3, K3 = 64, 4
F4, K4 = 128, 4
N_HID = 32

L1 = (WIN - K1) // 2 + 1     # 28
L2 = L1 - K2 + 1             # 24
L3 = L2 - K3 + 1             # 21
L4 = L3 - K4 + 1             # 18
LE = WIN // 2                # 32 (even / odd decimated length)
ROWS = BATCH * L4            # 36 rows after x.view(-1, 128)

LANE = 128                   # per-batch lane offset inside all conv buffers
NCOL = BATCH * LANE          # 256 lanes: batch 0 at [0,128), batch 1 at [128,256)

# packed-weight layout inside `wpack` (368 rows x 256 cols, bf16)
_W4_R = 0                    # rows   0..127, cols 0..255 : conv4 weight (128,256)
_W3_R = 128                  # rows 128..191, cols 0..128 : conv3 weight+bias col
_SEO_R, _SEO_C = 128, 192    # rows 128..191, cols 192..255 : even/odd select (64,64)
_W2_R = 192                  # rows 192..223, cols 0..50  : conv2 weight+bias col
_W1_R = 224                  # rows 224..233, cols 0..39  : merged wsin+wcos (10,40)
_L1B_R = 234                 # row 234, cols 0..31 : lin1 bias
_L2W_R = 235                 # row 235, cols 0..31 : lin2 weight
_L2B_R = 236                 # row 236, col 0      : lin2 bias
_WL1_R = 240                 # rows 240..367, cols 0..31 : lin1 weight (128,32)
_B4_C = 32                   # rows 240..367, col 32     : conv4 bias column
_WPACK_ROWS, _WPACK_COLS = 368, 256


def create_filters(d, n=1):
    x = np.arange(0, d, 1)
    wsin = np.empty((d, n, d), dtype=np.float32)
    wcos = np.empty((d, n, d), dtype=np.float32)
    for i in range(d):
        for j in range(n):
            wsin[i, j, :] = np.sin(2 * np.pi * ((i + 1) / d) * x)
            wcos[i, j, :] = np.cos(2 * np.pi * ((i + 1) / d) * x)
    return wsin, wcos


# ---------------- Pallas kernel (fully fused forward) ----------------

def cnn2_kernel(xb_ref, wpack_ref, out_ref, im2_ref, h4s_ref, zs_ref):
    f32 = jnp.float32
    bf16 = jnp.bfloat16

    # Constant 1.0 rows used to fold the conv2 / conv3 biases into the MXU
    # contraction.  Conv im2col builds never touch these rows before they are
    # consumed (conv1/conv2 builds write rows <50 / <128 only).
    ones_row = jnp.ones((1, NCOL), bf16)
    im2_ref[D * K2:D * K2 + 1, :] = ones_row          # row 50  (conv2 bias row)
    im2_ref[F2 * K3:F2 * K3 + 1, :] = ones_row        # row 128 (conv3 bias row)

    # ---- even/odd de-interleave of the raw input on the MXU ----
    # deo[b*C_IN + c, 32p + u] = x[b, c, 2u + p]  (exact: S is a 0/1 matrix)
    s_eo = wpack_ref[_SEO_R:_SEO_R + WIN, _SEO_C:_SEO_C + WIN]      # (64, 64)
    deo = jnp.dot(xb_ref[...].astype(bf16), s_eo, preferred_element_type=f32)

    # ---- layer 1: conv1d(x, wsin, 2) + conv1d(x, wcos, 2) == conv1d(x, wsin+wcos, 2)
    # im2col over the parity-decimated streams; batch b at lane offset b*128.
    for p in range(2):
        for m in range(K1 // 2):
            r0 = (p * (K1 // 2) + m) * C_IN
            for b in range(BATCH):
                im2_ref[r0:r0 + C_IN, b * LANE:b * LANE + L1] = (
                    deo[b * C_IN:(b + 1) * C_IN,
                        32 * p + m:32 * p + m + L1].astype(bf16))
    w1 = wpack_ref[_W1_R:_W1_R + D, 0:C_IN * K1]                    # (10, 40)
    h1 = jnp.maximum(
        jnp.dot(w1, im2_ref[0:C_IN * K1, :], preferred_element_type=f32), 0.0)

    # shared im2col builder: taps stacked along the contraction axis, batch b
    # at the lane-tile-aligned offset b*128.
    def build_im2col(h, c_in, k_taps, l_out):
        for k in range(k_taps):
            for b in range(BATCH):
                im2_ref[k * c_in:(k + 1) * c_in, b * LANE:b * LANE + l_out] = (
                    h[:, b * LANE + k:b * LANE + k + l_out].astype(bf16))

    # ---- conv2 (k=5) + relu; bias folded into the matmul (ones row 50) ----
    build_im2col(h1, D, K2, L2)
    w2 = wpack_ref[_W2_R:_W2_R + F2, 0:D * K2 + 1]                  # (32, 51)
    h2 = jnp.maximum(
        jnp.dot(w2, im2_ref[0:D * K2 + 1, :], preferred_element_type=f32), 0.0)

    # ---- conv3 (k=4) + relu; bias folded into the matmul (ones row 128) ----
    build_im2col(h2, F2, K3, L3)
    w3 = wpack_ref[_W3_R:_W3_R + F3, 0:F2 * K3 + 1]                 # (64, 129)
    h3 = jnp.maximum(
        jnp.dot(w3, im2_ref[0:F2 * K3 + 1, :], preferred_element_type=f32), 0.0)

    # ---- conv4 (k=4) + relu; bias added from a packed column (K already 256) ----
    build_im2col(h3, F3, K4, L4)
    w4 = wpack_ref[_W4_R:_W4_R + F4, 0:F3 * K4]                     # (128, 256)
    b4 = wpack_ref[_WL1_R:_WL1_R + F4, _B4_C:_B4_C + 1].astype(f32)  # (128, 1)
    h4 = jnp.maximum(
        jnp.dot(w4, im2_ref[0:F3 * K4, :], preferred_element_type=f32) + b4,
        0.0)                                                        # (128, 256)

    # stage conv4 output in VMEM so the flatten gathers with cheap vector loads
    h4s_ref[...] = h4

    # ---- torch x.view(-1, 128): flat index of (b, c, l) is b*2304 + 18*c + l.
    # Gather each of the 36 output rows from its 8 contributing channel
    # segments (lane roll + one-sided select), one unmasked 128-lane store per
    # row into the bf16 flattened-activation scratch.
    lane = jax.lax.broadcasted_iota(jnp.int32, (1, LANE), 1)
    for b in range(BATCH):
        for r in range(L4):
            c_lo = (LANE * r) // L4
            acc = None
            for s in range(8):
                c = c_lo + s
                off = L4 * c - LANE * r        # dest-lane offset of channel c
                v = h4s_ref[c:c + 1, b * LANE:(b + 1) * LANE]       # (1, 128)
                shift = off % LANE
                rolled = pltpu.roll(v, shift, 1) if shift else v
                if acc is None:
                    acc = rolled               # first segment starts at lane 0
                else:
                    # segments processed in increasing lane order: each later
                    # segment overwrites [off, 128), so every lane ends up
                    # with exactly its own channel's data.
                    acc = jnp.where(lane >= off, rolled, acc)
            zs_ref[b * L4 + r:b * L4 + r + 1, :] = acc.astype(bf16)

    # ---- MLP: relu(z @ W1 + b1); lin2 (N=1) on the VPU; final relu ----
    # (lin1_drop is identity at inference.)
    z = zs_ref[...]                                                 # (36, 128) bf16
    wl1 = wpack_ref[_WL1_R:_WL1_R + F4, 0:N_HID]                    # (128, 32)
    l1b = wpack_ref[_L1B_R:_L1B_R + 1, 0:N_HID].astype(f32)         # (1, 32)
    hid = jnp.maximum(
        jnp.dot(z, wl1, preferred_element_type=f32) + l1b, 0.0)     # (36, 32)
    l2w = wpack_ref[_L2W_R:_L2W_R + 1, 0:N_HID].astype(f32)         # (1, 32)
    l2b = wpack_ref[_L2B_R:_L2B_R + 1, 0:1].astype(f32)             # (1, 1)
    y = jnp.sum(hid * l2w, axis=1, keepdims=True) + l2b             # (36, 1)
    out_ref[...] = jnp.maximum(y, 0.0)


# ---------------- wrappers ----------------

@jax.jit
def cnn2_forward(x, wpack):
    # contiguous reshape only (no repack / transpose is materialized)
    xb = x.reshape(BATCH * C_IN, WIN)
    return pl.pallas_call(
        cnn2_kernel,
        out_shape=jax.ShapeDtypeStruct((ROWS, 1), jnp.float32),
        scratch_shapes=[
            pltpu.VMEM((F3 * K4, NCOL), jnp.bfloat16),   # im2col scratch (256, 256)
            pltpu.VMEM((F4, NCOL), jnp.float32),         # conv4 staging (128, 256)
            pltpu.VMEM((ROWS, LANE), jnp.bfloat16),      # flattened activations (36, 128)
        ],
    )(xb, wpack)


def prepare_params(params):
    """One-time parameter layout packing (hoisted out of the per-call path)."""
    wpack = np.zeros((_WPACK_ROWS, _WPACK_COLS), np.float32)

    # layer-1 filter: wsin+wcos merged, taps reordered to (parity, m, c_in)
    # columns to match the kernel's im2col row ordering.
    w1 = (np.asarray(params["wsin"]) + np.asarray(params["wcos"]))
    w1 = w1.reshape(D, C_IN, K1 // 2, 2).transpose(0, 3, 2, 1).reshape(D, C_IN * K1)
    # convN weights as (C_out, K * C_in) im2col matrices (tap-major rows).
    w2 = np.asarray(params["w2"]).transpose(0, 2, 1).reshape(F2, K2 * D)
    w3 = np.asarray(params["w3"]).transpose(0, 2, 1).reshape(F3, K3 * F2)
    w4 = np.asarray(params["w4"]).transpose(0, 2, 1).reshape(F4, K4 * F3)

    wpack[_W4_R:_W4_R + F4, 0:K4 * F3] = w4
    wpack[_W3_R:_W3_R + F3, 0:K3 * F2] = w3
    wpack[_W3_R:_W3_R + F3, K3 * F2] = np.asarray(params["b3"])   # bias col 128
    wpack[_W2_R:_W2_R + F2, 0:K2 * D] = w2
    wpack[_W2_R:_W2_R + F2, K2 * D] = np.asarray(params["b2"])    # bias col 50
    wpack[_W1_R:_W1_R + D, 0:C_IN * K1] = w1

    # even/odd de-interleave selection matrix: S[2u, u] = 1, S[2u+1, 32+u] = 1
    s_eo = np.zeros((WIN, WIN), np.float32)
    for u in range(LE):
        s_eo[2 * u, u] = 1.0
        s_eo[2 * u + 1, LE + u] = 1.0
    wpack[_SEO_R:_SEO_R + WIN, _SEO_C:_SEO_C + WIN] = s_eo

    # MLP tail + conv4 bias column
    wpack[_WL1_R:_WL1_R + F4, 0:N_HID] = np.asarray(params["lin1_w"])
    wpack[_WL1_R:_WL1_R + F4, _B4_C] = np.asarray(params["b4"])
    wpack[_L1B_R, 0:N_HID] = np.asarray(params["lin1_b"])
    wpack[_L2W_R, 0:N_HID] = np.asarray(params["lin2_w"])[:, 0]
    wpack[_L2B_R, 0] = np.asarray(params["lin2_b"])[0]

    return jnp.asarray(wpack, dtype=jnp.bfloat16)


def init_params(key):
    """Deterministic synthetic params with PyTorch default-init bounds."""
    wsin, wcos = create_filters(D, C_IN)
    ks = jax.random.split(key, 10)

    def uni(k, shape, fan_in):
        bound = 1.0 / np.sqrt(fan_in)
        return jax.random.uniform(k, shape, jnp.float32, -bound, bound)

    return dict(
        wsin=jnp.asarray(wsin), wcos=jnp.asarray(wcos),
        w2=uni(ks[0], (F2, D, K2), D * K2), b2=uni(ks[1], (F2,), D * K2),
        w3=uni(ks[2], (F3, F2, K3), F2 * K3), b3=uni(ks[3], (F3,), F2 * K3),
        w4=uni(ks[4], (F4, F3, K4), F3 * K4), b4=uni(ks[5], (F4,), F3 * K4),
        lin1_w=uni(ks[6], (F4, N_HID), F4),   # stored (in, out) = torch W.T
        lin1_b=uni(ks[7], (N_HID,), F4),
        lin2_w=uni(ks[8], (N_HID, 1), N_HID),
        lin2_b=uni(ks[9], (1,), N_HID),
    )


def ref_forward(x, params):
    """Pure-JAX reference reproducing the PyTorch forward (eval mode)."""
    dn = ("NCH", "OIH", "NCH")

    def conv(h, w, stride):
        return jax.lax.conv_general_dilated(h, w, (stride,), "VALID",
                                            dimension_numbers=dn)

    h = jax.nn.relu(conv(x, params["wsin"], 2) + conv(x, params["wcos"], 2))
    h = jax.nn.relu(conv(h, params["w2"], 1) + params["b2"][None, :, None])
    h = jax.nn.relu(conv(h, params["w3"], 1) + params["b3"][None, :, None])
    h = jax.nn.relu(conv(h, params["w4"], 1) + params["b4"][None, :, None])
    z = h.reshape(-1, F4)
    z = jax.nn.relu(z @ params["lin1_w"] + params["lin1_b"])
    z = z @ params["lin2_w"] + params["lin2_b"]
    return jax.nn.relu(z)


if __name__ == "__main__":
    key = jax.random.PRNGKey(0)
    kx, kp = jax.random.split(key)
    x = jax.random.normal(kx, (BATCH, C_IN, WIN), jnp.float32)
    params = init_params(kp)
    wpack = prepare_params(params)

    out = cnn2_forward(x, wpack)
    out = jax.block_until_ready(out)
    assert out.shape == (ROWS, 1), out.shape

    ref = ref_forward(x, params)
    np.testing.assert_allclose(np.asarray(out), np.asarray(ref),
                               rtol=5e-2, atol=5e-2)
    print("KERNEL_OK")
</pallas_src>

<mosaic_0001>
module attributes {stable_mosaic.version = 11 : i64} {
  func.func @cnn2_kernel(%arg0: memref<8x64xf32, #tpu.memory_space<vmem>>, %arg1: memref<368x256xbf16, #tpu.memory_space<vmem>>, %arg2: memref<36x1xf32, #tpu.memory_space<vmem>>, %arg3: memref<256x256xbf16, #tpu.memory_space<vmem>>, %arg4: memref<128x256xf32, #tpu.memory_space<vmem>>, %arg5: memref<36x128xbf16, #tpu.memory_space<vmem>>) attributes {dimension_semantics = [], scalar_prefetch = 0 : i64, scratch_operands = 3 : i64, tpu.core_type = #tpu.core_type<tc>} {
    %cst = arith.constant 1.000000e+00 : bf16
    %0 = vector.broadcast %cst : bf16 to vector<1x256xbf16>
    %c50 = arith.constant 50 : index
    %c0 = arith.constant 0 : index
    %1 = vector.load %arg3[%c50, %c0] : memref<256x256xbf16, #tpu.memory_space<vmem>>, vector<1x256xbf16>
    tpu.vector_store %arg3[%c50, %c0], %0 {strides = array<i32>} : memref<256x256xbf16, #tpu.memory_space<vmem>>, vector<1x256xbf16>,
    %c128 = arith.constant 128 : index
    %c0_0 = arith.constant 0 : index
    %2 = vector.load %arg3[%c128, %c0_0] : memref<256x256xbf16, #tpu.memory_space<vmem>>, vector<1x256xbf16>
    tpu.vector_store %arg3[%c128, %c0_0], %0 {strides = array<i32>} : memref<256x256xbf16, #tpu.memory_space<vmem>>, vector<1x256xbf16>,
    %c128_1 = arith.constant 128 : index
    %c192 = arith.constant 192 : index
    %3 = vector.load %arg1[%c128_1, %c192] : memref<368x256xbf16, #tpu.memory_space<vmem>>, vector<64x64xbf16>
    %c0_2 = arith.constant 0 : index
    %c0_3 = arith.constant 0 : index
    %4 = vector.load %arg0[%c0_2, %c0_3] : memref<8x64xf32, #tpu.memory_space<vmem>>, vector<8x64xf32>
    %5 = arith.truncf %4 : vector<8x64xf32> to vector<8x64xbf16>
    %cst_4 = arith.constant dense<0.000000e+00> : vector<8x64xf32>
    %6 = tpu.matmul %5, %3, %cst_4 {dimension_numbers = #tpu.dot_dimension_numbers<[1], [0], [0], [1], [0, 0, 1, 1], [], []>} : vector<8x64xbf16>, vector<64x64xbf16>, vector<8x64xf32> -> vector<8x64xf32>
    %7 = vector.extract_strided_slice %6 {offsets = [0, 0], sizes = [4, 28], strides = [1, 1]} : vector<8x64xf32> to vector<4x28xf32>
    %8 = arith.truncf %7 : vector<4x28xf32> to vector<4x28xbf16>
    %c0_5 = arith.constant 0 : index
    %c0_6 = arith.constant 0 : index
    %9 = vector.load %arg3[%c0_5, %c0_6] : memref<256x256xbf16, #tpu.memory_space<vmem>>, vector<4x28xbf16>
    tpu.vector_store %arg3[%c0_5, %c0_6], %8 {strides = array<i32>} : memref<256x256xbf16, #tpu.memory_space<vmem>>, vector<4x28xbf16>,
    %10 = vector.extract_strided_slice %6 {offsets = [4, 0], sizes = [4, 28], strides = [1, 1]} : vector<8x64xf32> to vector<4x28xf32>
    %11 = arith.truncf %10 : vector<4x28xf32> to vector<4x28xbf16>
    %c0_7 = arith.constant 0 : index
    %c128_8 = arith.constant 128 : index
    %12 = vector.load %arg3[%c0_7, %c128_8] : memref<256x256xbf16, #tpu.memory_space<vmem>>, vector<4x28xbf16>
    tpu.vector_store %arg3[%c0_7, %c128_8], %11 {strides = array<i32>} : memref<256x256xbf16, #tpu.memory_space<vmem>>, vector<4x28xbf16>,
    %13 = vector.extract_strided_slice %6 {offsets = [0, 1], sizes = [4, 28], strides = [1, 1]} : vector<8x64xf32> to vector<4x28xf32>
    %14 = arith.truncf %13 : vector<4x28xf32> to vector<4x28xbf16>
    %c4 = arith.constant 4 : index
    %c0_9 = arith.constant 0 : index
    %15 = vector.load %arg3[%c4, %c0_9] : memref<256x256xbf16, #tpu.memory_space<vmem>>, vector<4x28xbf16>
    tpu.vector_store %arg3[%c4, %c0_9], %14 {strides = array<i32>} : memref<256x256xbf16, #tpu.memory_space<vmem>>, vector<4x28xbf16>,
    %16 = vector.extract_strided_slice %6 {offsets = [4, 1], sizes = [4, 28], strides = [1, 1]} : vector<8x64xf32> to vector<4x28xf32>
    %17 = arith.truncf %16 : vector<4x28xf32> to vector<4x28xbf16>
    %c4_10 = arith.constant 4 : index
    %c128_11 = arith.constant 128 : index
    %18 = vector.load %arg3[%c4_10, %c128_11] : memref<256x256xbf16, #tpu.memory_space<vmem>>, vector<4x28xbf16>
    tpu.vector_store %arg3[%c4_10, %c128_11], %17 {strides = array<i32>} : memref<256x256xbf16, #tpu.memory_space<vmem>>, vector<4x28xbf16>,
    %19 = vector.extract_strided_slice %6 {offsets = [0, 2], sizes = [4, 28], strides = [1, 1]} : vector<8x64xf32> to vector<4x28xf32>
    %20 = arith.truncf %19 : vector<4x28xf32> to vector<4x28xbf16>
    %c8 = arith.constant 8 : index
    %c0_12 = arith.constant 0 : index
    %21 = vector.load %arg3[%c8, %c0_12] : memref<256x256xbf16, #tpu.memory_space<vmem>>, vector<4x28xbf16>
    tpu.vector_store %arg3[%c8, %c0_12], %20 {strides = array<i32>} : memref<256x256xbf16, #tpu.memory_space<vmem>>, vector<4x28xbf16>,
    %22 = vector.extract_strided_slice %6 {offsets = [4, 2], sizes = [4, 28], strides = [1, 1]} : vector<8x64xf32> to vector<4x28xf32>
    %23 = arith.truncf %22 : vector<4x28xf32> to vector<4x28xbf16>
    %c8_13 = arith.constant 8 : index
    %c128_14 = arith.constant 128 : index
    %24 = vector.load %arg3[%c8_13, %c128_14] : memref<256x256xbf16, #tpu.memory_space<vmem>>, vector<4x28xbf16>
    tpu.vector_store %arg3[%c8_13, %c128_14], %23 {strides = array<i32>} : memref<256x256xbf16, #tpu.memory_space<vmem>>, vector<4x28xbf16>,
    %25 = vector.extract_strided_slice %6 {offsets = [0, 3], sizes = [4, 28], strides = [1, 1]} : vector<8x64xf32> to vector<4x28xf32>
    %26 = arith.truncf %25 : vector<4x28xf32> to vector<4x28xbf16>
    %c12 = arith.constant 12 : index
    %c0_15 = arith.constant 0 : index
    %27 = vector.load %arg3[%c12, %c0_15] : memref<256x256xbf16, #tpu.memory_space<vmem>>, vector<4x28xbf16>
    tpu.vector_store %arg3[%c12, %c0_15], %26 {strides = array<i32>} : memref<256x256xbf16, #tpu.memory_space<vmem>>, vector<4x28xbf16>,
    %28 = vector.extract_strided_slice %6 {offsets = [4, 3], sizes = [4, 28], strides = [1, 1]} : vector<8x64xf32> to vector<4x28xf32>
    %29 = arith.truncf %28 : vector<4x28xf32> to vector<4x28xbf16>
    %c12_16 = arith.constant 12 : index
    %c128_17 = arith.constant 128 : index
    %30 = vector.load %arg3[%c12_16, %c128_17] : memref<256x256xbf16, #tpu.memory_space<vmem>>, vector<4x28xbf16>
    tpu.vector_store %arg3[%c12_16, %c128_17], %29 {strides = array<i32>} : memref<256x256xbf16, #tpu.memory_space<vmem>>, vector<4x28xbf16>,
    %31 = vector.extract_strided_slice %6 {offsets = [0, 4], sizes = [4, 28], strides = [1, 1]} : vector<8x64xf32> to vector<4x28xf32>
    %32 = arith.truncf %31 : vector<4x28xf32> to vector<4x28xbf16>
    %c16 = arith.constant 16 : index
    %c0_18 = arith.constant 0 : index
    %33 = vector.load %arg3[%c16, %c0_18] : memref<256x256xbf16, #tpu.memory_space<vmem>>, vector<4x28xbf16>
    tpu.vector_store %arg3[%c16, %c0_18], %32 {strides = array<i32>} : memref<256x256xbf16, #tpu.memory_space<vmem>>, vector<4x28xbf16>,
    %34 = vector.extract_strided_slice %6 {offsets = [4, 4], sizes = [4, 28], strides = [1, 1]} : vector<8x64xf32> to vector<4x28xf32>
    %35 = arith.truncf %34 : vector<4x28xf32> to vector<4x28xbf16>
    %c16_19 = arith.constant 16 : index
    %c128_20 = arith.constant 128 : index
    %36 = vector.load %arg3[%c16_19, %c128_20] : memref<256x256xbf16, #tpu.memory_space<vmem>>, vector<4x28xbf16>
    tpu.vector_store %arg3[%c16_19, %c128_20], %35 {strides = array<i32>} : memref<256x256xbf16, #tpu.memory_space<vmem>>, vector<4x28xbf16>,
    %37 = vector.extract_strided_slice %6 {offsets = [0, 32], sizes = [4, 28], strides = [1, 1]} : vector<8x64xf32> to vector<4x28xf32>
    %38 = arith.truncf %37 : vector<4x28xf32> to vector<4x28xbf16>
    %c20 = arith.constant 20 : index
    %c0_21 = arith.constant 0 : index
    %39 = vector.load %arg3[%c20, %c0_21] : memref<256x256xbf16, #tpu.memory_space<vmem>>, vector<4x28xbf16>
    tpu.vector_store %arg3[%c20, %c0_21], %38 {strides = array<i32>} : memref<256x256xbf16, #tpu.memory_space<vmem>>, vector<4x28xbf16>,
    %40 = vector.extract_strided_slice %6 {offsets = [4, 32], sizes = [4, 28], strides = [1, 1]} : vector<8x64xf32> to vector<4x28xf32>
    %41 = arith.truncf %40 : vector<4x28xf32> to vector<4x28xbf16>
    %c20_22 = arith.constant 20 : index
    %c128_23 = arith.constant 128 : index
    %42 = vector.load %arg3[%c20_22, %c128_23] : memref<256x256xbf16, #tpu.memory_space<vmem>>, vector<4x28xbf16>
    tpu.vector_store %arg3[%c20_22, %c128_23], %41 {strides = array<i32>} : memref<256x256xbf16, #tpu.memory_space<vmem>>, vector<4x28xbf16>,
    %43 = vector.extract_strided_slice %6 {offsets = [0, 33], sizes = [4, 28], strides = [1, 1]} : vector<8x64xf32> to vector<4x28xf32>
    %44 = arith.truncf %43 : vector<4x28xf32> to vector<4x28xbf16>
    %c24 = arith.constant 24 : index
    %c0_24 = arith.constant 0 : index
    %45 = vector.load %arg3[%c24, %c0_24] : memref<256x256xbf16, #tpu.memory_space<vmem>>, vector<4x28xbf16>
    tpu.vector_store %arg3[%c24, %c0_24], %44 {strides = array<i32>} : memref<256x256xbf16, #tpu.memory_space<vmem>>, vector<4x28xbf16>,
    %46 = vector.extract_strided_slice %6 {offsets = [4, 33], sizes = [4, 28], strides = [1, 1]} : vector<8x64xf32> to vector<4x28xf32>
    %47 = arith.truncf %46 : vector<4x28xf32> to vector<4x28xbf16>
    %c24_25 = arith.constant 24 : index
    %c128_26 = arith.constant 128 : index
    %48 = vector.load %arg3[%c24_25, %c128_26] : memref<256x256xbf16, #tpu.memory_space<vmem>>, vector<4x28xbf16>
    tpu.vector_store %arg3[%c24_25, %c128_26], %47 {strides = array<i32>} : memref<256x256xbf16, #tpu.memory_space<vmem>>, vector<4x28xbf16>,
    %49 = vector.extract_strided_slice %6 {offsets = [0, 34], sizes = [4, 28], strides = [1, 1]} : vector<8x64xf32> to vector<4x28xf32>
    %50 = arith.truncf %49 : vector<4x28xf32> to vector<4x28xbf16>
    %c28 = arith.constant 28 : index
    %c0_27 = arith.constant 0 : index
    %51 = vector.load %arg3[%c28, %c0_27] : memref<256x256xbf16, #tpu.memory_space<vmem>>, vector<4x28xbf16>
    tpu.vector_store %arg3[%c28, %c0_27], %50 {strides = array<i32>} : memref<256x256xbf16, #tpu.memory_space<vmem>>, vector<4x28xbf16>,
    %52 = vector.extract_strided_slice %6 {offsets = [4, 34], sizes = [4, 28], strides = [1, 1]} : vector<8x64xf32> to vector<4x28xf32>
    %53 = arith.truncf %52 : vector<4x28xf32> to vector<4x28xbf16>
    %c28_28 = arith.constant 28 : index
    %c128_29 = arith.constant 128 : index
    %54 = vector.load %arg3[%c28_28, %c128_29] : memref<256x256xbf16, #tpu.memory_space<vmem>>, vector<4x28xbf16>
    tpu.vector_store %arg3[%c28_28, %c128_29], %53 {strides = array<i32>} : memref<256x256xbf16, #tpu.memory_space<vmem>>, vector<4x28xbf16>,
    %55 = vector.extract_strided_slice %6 {offsets = [0, 35], sizes = [4, 28], strides = [1, 1]} : vector<8x64xf32> to vector<4x28xf32>
    %56 = arith.truncf %55 : vector<4x28xf32> to vector<4x28xbf16>
    %c32 = arith.constant 32 : index
    %c0_30 = arith.constant 0 : index
    %57 = vector.load %arg3[%c32, %c0_30] : memref<256x256xbf16, #tpu.memory_space<vmem>>, vector<4x28xbf16>
    tpu.vector_store %arg3[%c32, %c0_30], %56 {strides = array<i32>} : memref<256x256xbf16, #tpu.memory_space<vmem>>, vector<4x28xbf16>,
    %58 = vector.extract_strided_slice %6 {offsets = [4, 35], sizes = [4, 28], strides = [1, 1]} : vector<8x64xf32> to vector<4x28xf32>
    %59 = arith.truncf %58 : vector<4x28xf32> to vector<4x28xbf16>
    %c32_31 = arith.constant 32 : index
    %c128_32 = arith.constant 128 : index
    %60 = vector.load %arg3[%c32_31, %c128_32] : memref<256x256xbf16, #tpu.memory_space<vmem>>, vector<4x28xbf16>
    tpu.vector_store %arg3[%c32_31, %c128_32], %59 {strides = array<i32>} : memref<256x256xbf16, #tpu.memory_space<vmem>>, vector<4x28xbf16>,
    %61 = vector.extract_strided_slice %6 {offsets = [0, 36], sizes = [4, 28], strides = [1, 1]} : vector<8x64xf32> to vector<4x28xf32>
    %62 = arith.truncf %61 : vector<4x28xf32> to vector<4x28xbf16>
    %c36 = arith.constant 36 : index
    %c0_33 = arith.constant 0 : index
    %63 = vector.load %arg3[%c36, %c0_33] : memref<256x256xbf16, #tpu.memory_space<vmem>>, vector<4x28xbf16>
    tpu.vector_store %arg3[%c36, %c0_33], %62 {strides = array<i32>} : memref<256x256xbf16, #tpu.memory_space<vmem>>, vector<4x28xbf16>,
    %64 = vector.extract_strided_slice %6 {offsets = [4, 36], sizes = [4, 28], strides = [1, 1]} : vector<8x64xf32> to vector<4x28xf32>
    %65 = arith.truncf %64 : vector<4x28xf32> to vector<4x28xbf16>
    %c36_34 = arith.constant 36 : index
    %c128_35 = arith.constant 128 : index
    %66 = vector.load %arg3[%c36_34, %c128_35] : memref<256x256xbf16, #tpu.memory_space<vmem>>, vector<4x28xbf16>
    tpu.vector_store %arg3[%c36_34, %c128_35], %65 {strides = array<i32>} : memref<256x256xbf16, #tpu.memory_space<vmem>>, vector<4x28xbf16>,
    %c224 = arith.constant 224 : index
    %c0_36 = arith.constant 0 : index
    %67 = vector.load %arg1[%c224, %c0_36] : memref<368x256xbf16, #tpu.memory_space<vmem>>, vector<10x40xbf16>
    %c0_37 = arith.constant 0 : index
    %c0_38 = arith.constant 0 : index
    %68 = vector.load %arg3[%c0_37, %c0_38] : memref<256x256xbf16, #tpu.memory_space<vmem>>, vector<40x256xbf16>
    %cst_39 = arith.constant dense<0.000000e+00> : vector<10x256xf32>
    %69 = tpu.matmul %67, %68, %cst_39 {dimension_numbers = #tpu.dot_dimension_numbers<[1], [0], [0], [1], [0, 0, 1, 1], [], []>} : vector<10x40xbf16>, vector<40x256xbf16>, vector<10x256xf32> -> vector<10x256xf32>
    %cst_40 = arith.constant 0.000000e+00 : f32
    %70 = vector.broadcast %cst_40 : f32 to vector<10x256xf32>
    %71 = arith.maximumf %69, %70 : vector<10x256xf32>
    %72 = vector.extract_strided_slice %71 {offsets = [0, 0], sizes = [10, 24], strides = [1, 1]} : vector<10x256xf32> to vector<10x24xf32>
    %73 = arith.truncf %72 : vector<10x24xf32> to vector<10x24xbf16>
    %c0_41 = arith.constant 0 : index
    %c0_42 = arith.constant 0 : index
    %74 = vector.load %arg3[%c0_41, %c0_42] : memref<256x256xbf16, #tpu.memory_space<vmem>>, vector<10x24xbf16>
    tpu.vector_store %arg3[%c0_41, %c0_42], %73 {strides = array<i32>} : memref<256x256xbf16, #tpu.memory_space<vmem>>, vector<10x24xbf16>,
    %75 = vector.extract_strided_slice %71 {offsets = [0, 128], sizes = [10, 24], strides = [1, 1]} : vector<10x256xf32> to vector<10x24xf32>
    %76 = arith.truncf %75 : vector<10x24xf32> to vector<10x24xbf16>
    %c0_43 = arith.constant 0 : index
    %c128_44 = arith.constant 128 : index
    %77 = vector.load %arg3[%c0_43, %c128_44] : memref<256x256xbf16, #tpu.memory_space<vmem>>, vector<10x24xbf16>
    tpu.vector_store %arg3[%c0_43, %c128_44], %76 {strides = array<i32>} : memref<256x256xbf16, #tpu.memory_space<vmem>>, vector<10x24xbf16>,
    %78 = vector.extract_strided_slice %71 {offsets = [0, 1], sizes = [10, 24], strides = [1, 1]} : vector<10x256xf32> to vector<10x24xf32>
    %79 = arith.truncf %78 : vector<10x24xf32> to vector<10x24xbf16>
    %c10 = arith.constant 10 : index
    %c0_45 = arith.constant 0 : index
    %80 = vector.load %arg3[%c10, %c0_45] : memref<256x256xbf16, #tpu.memory_space<vmem>>, vector<10x24xbf16>
    tpu.vector_store %arg3[%c10, %c0_45], %79 {strides = array<i32>} : memref<256x256xbf16, #tpu.memory_space<vmem>>, vector<10x24xbf16>,
    %81 = vector.extract_strided_slice %71 {offsets = [0, 129], sizes = [10, 24], strides = [1, 1]} : vector<10x256xf32> to vector<10x24xf32>
    %82 = arith.truncf %81 : vector<10x24xf32> to vector<10x24xbf16>
    %c10_46 = arith.constant 10 : index
    %c128_47 = arith.constant 128 : index
    %83 = vector.load %arg3[%c10_46, %c128_47] : memref<256x256xbf16, #tpu.memory_space<vmem>>, vector<10x24xbf16>
    tpu.vector_store %arg3[%c10_46, %c128_47], %82 {strides = array<i32>} : memref<256x256xbf16, #tpu.memory_space<vmem>>, vector<10x24xbf16>,
    %84 = vector.extract_strided_slice %71 {offsets = [0, 2], sizes = [10, 24], strides = [1, 1]} : vector<10x256xf32> to vector<10x24xf32>
    %85 = arith.truncf %84 : vector<10x24xf32> to vector<10x24xbf16>
    %c20_48 = arith.constant 20 : index
    %c0_49 = arith.constant 0 : index
    %86 = vector.load %arg3[%c20_48, %c0_49] : memref<256x256xbf16, #tpu.memory_space<vmem>>, vector<10x24xbf16>
    tpu.vector_store %arg3[%c20_48, %c0_49], %85 {strides = array<i32>} : memref<256x256xbf16, #tpu.memory_space<vmem>>, vector<10x24xbf16>,
    %87 = vector.extract_strided_slice %71 {offsets = [0, 130], sizes = [10, 24], strides = [1, 1]} : vector<10x256xf32> to vector<10x24xf32>
    %88 = arith.truncf %87 : vector<10x24xf32> to vector<10x24xbf16>
    %c20_50 = arith.constant 20 : index
    %c128_51 = arith.constant 128 : index
    %89 = vector.load %arg3[%c20_50, %c128_51] : memref<256x256xbf16, #tpu.memory_space<vmem>>, vector<10x24xbf16>
    tpu.vector_store %arg3[%c20_50, %c128_51], %88 {strides = array<i32>} : memref<256x256xbf16, #tpu.memory_space<vmem>>, vector<10x24xbf16>,
    %90 = vector.extract_strided_slice %71 {offsets = [0, 3], sizes = [10, 24], strides = [1, 1]} : vector<10x256xf32> to vector<10x24xf32>
    %91 = arith.truncf %90 : vector<10x24xf32> to vector<10x24xbf16>
    %c30 = arith.constant 30 : index
    %c0_52 = arith.constant 0 : index
    %92 = vector.load %arg3[%c30, %c0_52] : memref<256x256xbf16, #tpu.memory_space<vmem>>, vector<10x24xbf16>
    tpu.vector_store %arg3[%c30, %c0_52], %91 {strides = array<i32>} : memref<256x256xbf16, #tpu.memory_space<vmem>>, vector<10x24xbf16>,
    %93 = vector.extract_strided_slice %71 {offsets = [0, 131], sizes = [10, 24], strides = [1, 1]} : vector<10x256xf32> to vector<10x24xf32>
    %94 = arith.truncf %93 : vector<10x24xf32> to vector<10x24xbf16>
    %c30_53 = arith.constant 30 : index
    %c128_54 = arith.constant 128 : index
    %95 = vector.load %arg3[%c30_53, %c128_54] : memref<256x256xbf16, #tpu.memory_space<vmem>>, vector<10x24xbf16>
    tpu.vector_store %arg3[%c30_53, %c128_54], %94 {strides = array<i32>} : memref<256x256xbf16, #tpu.memory_space<vmem>>, vector<10x24xbf16>,
    %96 = vector.extract_strided_slice %71 {offsets = [0, 4], sizes = [10, 24], strides = [1, 1]} : vector<10x256xf32> to vector<10x24xf32>
    %97 = arith.truncf %96 : vector<10x24xf32> to vector<10x24xbf16>
    %c40 = arith.constant 40 : index
    %c0_55 = arith.constant 0 : index
    %98 = vector.load %arg3[%c40, %c0_55] : memref<256x256xbf16, #tpu.memory_space<vmem>>, vector<10x24xbf16>
    tpu.vector_store %arg3[%c40, %c0_55], %97 {strides = array<i32>} : memref<256x256xbf16, #tpu.memory_space<vmem>>, vector<10x24xbf16>,
    %99 = vector.extract_strided_slice %71 {offsets = [0, 132], sizes = [10, 24], strides = [1, 1]} : vector<10x256xf32> to vector<10x24xf32>
    %100 = arith.truncf %99 : vector<10x24xf32> to vector<10x24xbf16>
    %c40_56 = arith.constant 40 : index
    %c128_57 = arith.constant 128 : index
    %101 = vector.load %arg3[%c40_56, %c128_57] : memref<256x256xbf16, #tpu.memory_space<vmem>>, vector<10x24xbf16>
    tpu.vector_store %arg3[%c40_56, %c128_57], %100 {strides = array<i32>} : memref<256x256xbf16, #tpu.memory_space<vmem>>, vector<10x24xbf16>,
    %c192_58 = arith.constant 192 : index
    %c0_59 = arith.constant 0 : index
    %102 = vector.load %arg1[%c192_58, %c0_59] : memref<368x256xbf16, #tpu.memory_space<vmem>>, vector<32x51xbf16>
    %c0_60 = arith.constant 0 : index
    %c0_61 = arith.constant 0 : index
    %103 = vector.load %arg3[%c0_60, %c0_61] : memref<256x256xbf16, #tpu.memory_space<vmem>>, vector<51x256xbf16>
    %cst_62 = arith.constant dense<0.000000e+00> : vector<32x256xf32>
    %104 = tpu.matmul %102, %103, %cst_62 {dimension_numbers = #tpu.dot_dimension_numbers<[1], [0], [0], [1], [0, 0, 1, 1], [], []>} : vector<32x51xbf16>, vector<51x256xbf16>, vector<32x256xf32> -> vector<32x256xf32>
    %cst_63 = arith.constant 0.000000e+00 : f32
    %105 = vector.broadcast %cst_63 : f32 to vector<32x256xf32>
    %106 = arith.maximumf %104, %105 : vector<32x256xf32>
    %107 = vector.extract_strided_slice %106 {offsets = [0, 0], sizes = [32, 21], strides = [1, 1]} : vector<32x256xf32> to vector<32x21xf32>
    %108 = arith.truncf %107 : vector<32x21xf32> to vector<32x21xbf16>
    %c0_64 = arith.constant 0 : index
    %c0_65 = arith.constant 0 : index
    %109 = vector.load %arg3[%c0_64, %c0_65] : memref<256x256xbf16, #tpu.memory_space<vmem>>, vector<32x21xbf16>
    tpu.vector_store %arg3[%c0_64, %c0_65], %108 {strides = array<i32>} : memref<256x256xbf16, #tpu.memory_space<vmem>>, vector<32x21xbf16>,
    %110 = vector.extract_strided_slice %106 {offsets = [0, 128], sizes = [32, 21], strides = [1, 1]} : vector<32x256xf32> to vector<32x21xf32>
    %111 = arith.truncf %110 : vector<32x21xf32> to vector<32x21xbf16>
    %c0_66 = arith.constant 0 : index
    %c128_67 = arith.constant 128 : index
    %112 = vector.load %arg3[%c0_66, %c128_67] : memref<256x256xbf16, #tpu.memory_space<vmem>>, vector<32x21xbf16>
    tpu.vector_store %arg3[%c0_66, %c128_67], %111 {strides = array<i32>} : memref<256x256xbf16, #tpu.memory_space<vmem>>, vector<32x21xbf16>,
    %113 = vector.extract_strided_slice %106 {offsets = [0, 1], sizes = [32, 21], strides = [1, 1]} : vector<32x256xf32> to vector<32x21xf32>
    %114 = arith.truncf %113 : vector<32x21xf32> to vector<32x21xbf16>
    %c32_68 = arith.constant 32 : index
    %c0_69 = arith.constant 0 : index
    %115 = vector.load %arg3[%c32_68, %c0_69] : memref<256x256xbf16, #tpu.memory_space<vmem>>, vector<32x21xbf16>
    tpu.vector_store %arg3[%c32_68, %c0_69], %114 {strides = array<i32>} : memref<256x256xbf16, #tpu.memory_space<vmem>>, vector<32x21xbf16>,
    %116 = vector.extract_strided_slice %106 {offsets = [0, 129], sizes = [32, 21], strides = [1, 1]} : vector<32x256xf32> to vector<32x21xf32>
    %117 = arith.truncf %116 : vector<32x21xf32> to vector<32x21xbf16>
    %c32_70 = arith.constant 32 : index
    %c128_71 = arith.constant 128 : index
    %118 = vector.load %arg3[%c32_70, %c128_71] : memref<256x256xbf16, #tpu.memory_space<vmem>>, vector<32x21xbf16>
    tpu.vector_store %arg3[%c32_70, %c128_71], %117 {strides = array<i32>} : memref<256x256xbf16, #tpu.memory_space<vmem>>, vector<32x21xbf16>,
    %119 = vector.extract_strided_slice %106 {offsets = [0, 2], sizes = [32, 21], strides = [1, 1]} : vector<32x256xf32> to vector<32x21xf32>
    %120 = arith.truncf %119 : vector<32x21xf32> to vector<32x21xbf16>
    %c64 = arith.constant 64 : index
    %c0_72 = arith.constant 0 : index
    %121 = vector.load %arg3[%c64, %c0_72] : memref<256x256xbf16, #tpu.memory_space<vmem>>, vector<32x21xbf16>
    tpu.vector_store %arg3[%c64, %c0_72], %120 {strides = array<i32>} : memref<256x256xbf16, #tpu.memory_space<vmem>>, vector<32x21xbf16>,
    %122 = vector.extract_strided_slice %106 {offsets = [0, 130], sizes = [32, 21], strides = [1, 1]} : vector<32x256xf32> to vector<32x21xf32>
    %123 = arith.truncf %122 : vector<32x21xf32> to vector<32x21xbf16>
    %c64_73 = arith.constant 64 : index
    %c128_74 = arith.constant 128 : index
    %124 = vector.load %arg3[%c64_73, %c128_74] : memref<256x256xbf16, #tpu.memory_space<vmem>>, vector<32x21xbf16>
    tpu.vector_store %arg3[%c64_73, %c128_74], %123 {strides = array<i32>} : memref<256x256xbf16, #tpu.memory_space<vmem>>, vector<32x21xbf16>,
    %125 = vector.extract_strided_slice %106 {offsets = [0, 3], sizes = [32, 21], strides = [1, 1]} : vector<32x256xf32> to vector<32x21xf32>
    %126 = arith.truncf %125 : vector<32x21xf32> to vector<32x21xbf16>
    %c96 = arith.constant 96 : index
    %c0_75 = arith.constant 0 : index
    %127 = vector.load %arg3[%c96, %c0_75] : memref<256x256xbf16, #tpu.memory_space<vmem>>, vector<32x21xbf16>
    tpu.vector_store %arg3[%c96, %c0_75], %126 {strides = array<i32>} : memref<256x256xbf16, #tpu.memory_space<vmem>>, vector<32x21xbf16>,
    %128 = vector.extract_strided_slice %106 {offsets = [0, 131], sizes = [32, 21], strides = [1, 1]} : vector<32x256xf32> to vector<32x21xf32>
    %129 = arith.truncf %128 : vector<32x21xf32> to vector<32x21xbf16>
    %c96_76 = arith.constant 96 : index
    %c128_77 = arith.constant 128 : index
    %130 = vector.load %arg3[%c96_76, %c128_77] : memref<256x256xbf16, #tpu.memory_space<vmem>>, vector<32x21xbf16>
    tpu.vector_store %arg3[%c96_76, %c128_77], %129 {strides = array<i32>} : memref<256x256xbf16, #tpu.memory_space<vmem>>, vector<32x21xbf16>,
    %c128_78 = arith.constant 128 : index
    %c0_79 = arith.constant 0 : index
    %131 = vector.load %arg1[%c128_78, %c0_79] : memref<368x256xbf16, #tpu.memory_space<vmem>>, vector<64x129xbf16>
    %c0_80 = arith.constant 0 : index
    %c0_81 = arith.constant 0 : index
    %132 = vector.load %arg3[%c0_80, %c0_81] : memref<256x256xbf16, #tpu.memory_space<vmem>>, vector<129x256xbf16>
    %cst_82 = arith.constant dense<0.000000e+00> : vector<64x256xf32>
    %133 = tpu.matmul %131, %132, %cst_82 {dimension_numbers = #tpu.dot_dimension_numbers<[1], [0], [0], [1], [0, 0, 1, 1], [], []>} : vector<64x129xbf16>, vector<129x256xbf16>, vector<64x256xf32> -> vector<64x256xf32>
    %cst_83 = arith.constant 0.000000e+00 : f32
    %134 = vector.broadcast %cst_83 : f32 to vector<64x256xf32>
    %135 = arith.maximumf %133, %134 : vector<64x256xf32>
    %136 = vector.extract_strided_slice %135 {offsets = [0, 0], sizes = [64, 18], strides = [1, 1]} : vector<64x256xf32> to vector<64x18xf32>
    %137 = arith.truncf %136 : vector<64x18xf32> to vector<64x18xbf16>
    %c0_84 = arith.constant 0 : index
    %c0_85 = arith.constant 0 : index
    %138 = vector.load %arg3[%c0_84, %c0_85] : memref<256x256xbf16, #tpu.memory_space<vmem>>, vector<64x18xbf16>
    tpu.vector_store %arg3[%c0_84, %c0_85], %137 {strides = array<i32>} : memref<256x256xbf16, #tpu.memory_space<vmem>>, vector<64x18xbf16>,
    %139 = vector.extract_strided_slice %135 {offsets = [0, 128], sizes = [64, 18], strides = [1, 1]} : vector<64x256xf32> to vector<64x18xf32>
    %140 = arith.truncf %139 : vector<64x18xf32> to vector<64x18xbf16>
    %c0_86 = arith.constant 0 : index
    %c128_87 = arith.constant 128 : index
    %141 = vector.load %arg3[%c0_86, %c128_87] : memref<256x256xbf16, #tpu.memory_space<vmem>>, vector<64x18xbf16>
    tpu.vector_store %arg3[%c0_86, %c128_87], %140 {strides = array<i32>} : memref<256x256xbf16, #tpu.memory_space<vmem>>, vector<64x18xbf16>,
    %142 = vector.extract_strided_slice %135 {offsets = [0, 1], sizes = [64, 18], strides = [1, 1]} : vector<64x256xf32> to vector<64x18xf32>
    %143 = arith.truncf %142 : vector<64x18xf32> to vector<64x18xbf16>
    %c64_88 = arith.constant 64 : index
    %c0_89 = arith.constant 0 : index
    %144 = vector.load %arg3[%c64_88, %c0_89] : memref<256x256xbf16, #tpu.memory_space<vmem>>, vector<64x18xbf16>
    tpu.vector_store %arg3[%c64_88, %c0_89], %143 {strides = array<i32>} : memref<256x256xbf16, #tpu.memory_space<vmem>>, vector<64x18xbf16>,
    %145 = vector.extract_strided_slice %135 {offsets = [0, 129], sizes = [64, 18], strides = [1, 1]} : vector<64x256xf32> to vector<64x18xf32>
    %146 = arith.truncf %145 : vector<64x18xf32> to vector<64x18xbf16>
    %c64_90 = arith.constant 64 : index
    %c128_91 = arith.constant 128 : index
    %147 = vector.load %arg3[%c64_90, %c128_91] : memref<256x256xbf16, #tpu.memory_space<vmem>>, vector<64x18xbf16>
    tpu.vector_store %arg3[%c64_90, %c128_91], %146 {strides = array<i32>} : memref<256x256xbf16, #tpu.memory_space<vmem>>, vector<64x18xbf16>,
    %148 = vector.extract_strided_slice %135 {offsets = [0, 2], sizes = [64, 18], strides = [1, 1]} : vector<64x256xf32> to vector<64x18xf32>
    %149 = arith.truncf %148 : vector<64x18xf32> to vector<64x18xbf16>
    %c128_92 = arith.constant 128 : index
    %c0_93 = arith.constant 0 : index
    %150 = vector.load %arg3[%c128_92, %c0_93] : memref<256x256xbf16, #tpu.memory_space<vmem>>, vector<64x18xbf16>
    tpu.vector_store %arg3[%c128_92, %c0_93], %149 {strides = array<i32>} : memref<256x256xbf16, #tpu.memory_space<vmem>>, vector<64x18xbf16>,
    %151 = vector.extract_strided_slice %135 {offsets = [0, 130], sizes = [64, 18], strides = [1, 1]} : vector<64x256xf32> to vector<64x18xf32>
    %152 = arith.truncf %151 : vector<64x18xf32> to vector<64x18xbf16>
    %c128_94 = arith.constant 128 : index
    %c128_95 = arith.constant 128 : index
    %153 = vector.load %arg3[%c128_94, %c128_95] : memref<256x256xbf16, #tpu.memory_space<vmem>>, vector<64x18xbf16>
    tpu.vector_store %arg3[%c128_94, %c128_95], %152 {strides = array<i32>} : memref<256x256xbf16, #tpu.memory_space<vmem>>, vector<64x18xbf16>,
    %154 = vector.extract_strided_slice %135 {offsets = [0, 3], sizes = [64, 18], strides = [1, 1]} : vector<64x256xf32> to vector<64x18xf32>
    %155 = arith.truncf %154 : vector<64x18xf32> to vector<64x18xbf16>
    %c192_96 = arith.constant 192 : index
    %c0_97 = arith.constant 0 : index
    %156 = vector.load %arg3[%c192_96, %c0_97] : memref<256x256xbf16, #tpu.memory_space<vmem>>, vector<64x18xbf16>
    tpu.vector_store %arg3[%c192_96, %c0_97], %155 {strides = array<i32>} : memref<256x256xbf16, #tpu.memory_space<vmem>>, vector<64x18xbf16>,
    %157 = vector.extract_strided_slice %135 {offsets = [0, 131], sizes = [64, 18], strides = [1, 1]} : vector<64x256xf32> to vector<64x18xf32>
    %158 = arith.truncf %157 : vector<64x18xf32> to vector<64x18xbf16>
    %c192_98 = arith.constant 192 : index
    %c128_99 = arith.constant 128 : index
    %159 = vector.load %arg3[%c192_98, %c128_99] : memref<256x256xbf16, #tpu.memory_space<vmem>>, vector<64x18xbf16>
    tpu.vector_store %arg3[%c192_98, %c128_99], %158 {strides = array<i32>} : memref<256x256xbf16, #tpu.memory_space<vmem>>, vector<64x18xbf16>,
    %c0_100 = arith.constant 0 : index
    %c0_101 = arith.constant 0 : index
    %160 = vector.load %arg1[%c0_100, %c0_101] : memref<368x256xbf16, #tpu.memory_space<vmem>>, vector<128x256xbf16>
    %c240 = arith.constant 240 : index
    %c32_102 = arith.constant 32 : index
    %161 = vector.load %arg1[%c240, %c32_102] : memref<368x256xbf16, #tpu.memory_space<vmem>>, vector<128x1xbf16>
    %162 = arith.extf %161 : vector<128x1xbf16> to vector<128x1xf32>
    %c0_103 = arith.constant 0 : index
    %c0_104 = arith.constant 0 : index
    %163 = vector.load %arg3[%c0_103, %c0_104] : memref<256x256xbf16, #tpu.memory_space<vmem>>, vector<256x256xbf16>
    %cst_105 = arith.constant dense<0.000000e+00> : vector<128x256xf32>
    %164 = tpu.matmul %160, %163, %cst_105 {dimension_numbers = #tpu.dot_dimension_numbers<[1], [0], [0], [1], [0, 0, 1, 1], [], []>} : vector<128x256xbf16>, vector<256x256xbf16>, vector<128x256xf32> -> vector<128x256xf32>
    %165 = vector.broadcast %162 : vector<128x1xf32> to vector<128x256xf32>
    %166 = arith.addf %164, %165 : vector<128x256xf32>
    %cst_106 = arith.constant 0.000000e+00 : f32
    %167 = vector.broadcast %cst_106 : f32 to vector<128x256xf32>
    %168 = arith.maximumf %166, %167 : vector<128x256xf32>
    %c0_107 = arith.constant 0 : index
    %c0_108 = arith.constant 0 : index
    %169 = vector.load %arg4[%c0_107, %c0_108] : memref<128x256xf32, #tpu.memory_space<vmem>>, vector<128x256xf32>
    tpu.vector_store %arg4[%c0_107, %c0_108], %168 {strides = array<i32>} : memref<128x256xf32, #tpu.memory_space<vmem>>, vector<128x256xf32>,
    %170 = tpu.iota {dimensions = array<i32: 1>} : vector<1x128xi32>
    %c0_109 = arith.constant 0 : index
    %c0_110 = arith.constant 0 : index
    %171 = vector.load %arg4[%c0_109, %c0_110] : memref<128x256xf32, #tpu.memory_space<vmem>>, vector<1x128xf32>
    %c1 = arith.constant 1 : index
    %c0_111 = arith.constant 0 : index
    %172 = vector.load %arg4[%c1, %c0_111] : memref<128x256xf32, #tpu.memory_space<vmem>>, vector<1x128xf32>
    %c18_i32 = arith.constant 18 : i32
    %173 = tpu.dynamic_rotate %172 by %c18_i32 dim 1 : vector<1x128xf32>, i32 -> vector<1x128xf32>
    %c18_i32_112 = arith.constant 18 : i32
    %174 = vector.broadcast %c18_i32_112 : i32 to vector<1x128xi32>
    %175 = arith.cmpi sge, %170, %174 : vector<1x128xi32>
    %176 = arith.select %175, %173, %171 : vector<1x128xi1>, vector<1x128xf32>
    %c2 = arith.constant 2 : index
    %c0_113 = arith.constant 0 : index
    %177 = vector.load %arg4[%c2, %c0_113] : memref<128x256xf32, #tpu.memory_space<vmem>>, vector<1x128xf32>
    %c36_i32 = arith.constant 36 : i32
    %178 = tpu.dynamic_rotate %177 by %c36_i32 dim 1 : vector<1x128xf32>, i32 -> vector<1x128xf32>
    %c36_i32_114 = arith.constant 36 : i32
    %179 = vector.broadcast %c36_i32_114 : i32 to vector<1x128xi32>
    %180 = arith.cmpi sge, %170, %179 : vector<1x128xi32>
    %181 = arith.select %180, %178, %176 : vector<1x128xi1>, vector<1x128xf32>
    %c3 = arith.constant 3 : index
    %c0_115 = arith.constant 0 : index
    %182 = vector.load %arg4[%c3, %c0_115] : memref<128x256xf32, #tpu.memory_space<vmem>>, vector<1x128xf32>
    %c54_i32 = arith.constant 54 : i32
    %183 = tpu.dynamic_rotate %182 by %c54_i32 dim 1 : vector<1x128xf32>, i32 -> vector<1x128xf32>
    %c54_i32_116 = arith.constant 54 : i32
    %184 = vector.broadcast %c54_i32_116 : i32 to vector<1x128xi32>
    %185 = arith.cmpi sge, %170, %184 : vector<1x128xi32>
    %186 = arith.select %185, %183, %181 : vector<1x128xi1>, vector<1x128xf32>
    %c4_117 = arith.constant 4 : index
    %c0_118 = arith.constant 0 : index
    %187 = vector.load %arg4[%c4_117, %c0_118] : memref<128x256xf32, #tpu.memory_space<vmem>>, vector<1x128xf32>
    %c72_i32 = arith.constant 72 : i32
    %188 = tpu.dynamic_rotate %187 by %c72_i32 dim 1 : vector<1x128xf32>, i32 -> vector<1x128xf32>
    %c72_i32_119 = arith.constant 72 : i32
    %189 = vector.broadcast %c72_i32_119 : i32 to vector<1x128xi32>
    %190 = arith.cmpi sge, %170, %189 : vector<1x128xi32>
    %191 = arith.select %190, %188, %186 : vector<1x128xi1>, vector<1x128xf32>
    %c5 = arith.constant 5 : index
    %c0_120 = arith.constant 0 : index
    %192 = vector.load %arg4[%c5, %c0_120] : memref<128x256xf32, #tpu.memory_space<vmem>>, vector<1x128xf32>
    %c90_i32 = arith.constant 90 : i32
    %193 = tpu.dynamic_rotate %192 by %c90_i32 dim 1 : vector<1x128xf32>, i32 -> vector<1x128xf32>
    %c90_i32_121 = arith.constant 90 : i32
    %194 = vector.broadcast %c90_i32_121 : i32 to vector<1x128xi32>
    %195 = arith.cmpi sge, %170, %194 : vector<1x128xi32>
    %196 = arith.select %195, %193, %191 : vector<1x128xi1>, vector<1x128xf32>
    %c6 = arith.constant 6 : index
    %c0_122 = arith.constant 0 : index
    %197 = vector.load %arg4[%c6, %c0_122] : memref<128x256xf32, #tpu.memory_space<vmem>>, vector<1x128xf32>
    %c108_i32 = arith.constant 108 : i32
    %198 = tpu.dynamic_rotate %197 by %c108_i32 dim 1 : vector<1x128xf32>, i32 -> vector<1x128xf32>
    %c108_i32_123 = arith.constant 108 : i32
    %199 = vector.broadcast %c108_i32_123 : i32 to vector<1x128xi32>
    %200 = arith.cmpi sge, %170, %199 : vector<1x128xi32>
    %201 = arith.select %200, %198, %196 : vector<1x128xi1>, vector<1x128xf32>
    %c7 = arith.constant 7 : index
    %c0_124 = arith.constant 0 : index
    %202 = vector.load %arg4[%c7, %c0_124] : memref<128x256xf32, #tpu.memory_space<vmem>>, vector<1x128xf32>
    %c126_i32 = arith.constant 126 : i32
    %203 = tpu.dynamic_rotate %202 by %c126_i32 dim 1 : vector<1x128xf32>, i32 -> vector<1x128xf32>
    %c126_i32_125 = arith.constant 126 : i32
    %204 = vector.broadcast %c126_i32_125 : i32 to vector<1x128xi32>
    %205 = arith.cmpi sge, %170, %204 : vector<1x128xi32>
    %206 = arith.select %205, %203, %201 : vector<1x128xi1>, vector<1x128xf32>
    %207 = arith.truncf %206 : vector<1x128xf32> to vector<1x128xbf16>
    %c0_126 = arith.constant 0 : index
    %c0_127 = arith.constant 0 : index
    %208 = vector.load %arg5[%c0_126, %c0_127] : memref<36x128xbf16, #tpu.memory_space<vmem>>, vector<1x128xbf16>
    tpu.vector_store %arg5[%c0_126, %c0_127], %207 {strides = array<i32>} : memref<36x128xbf16, #tpu.memory_space<vmem>>, vector<1x128xbf16>,
    %c7_128 = arith.constant 7 : index
    %c0_129 = arith.constant 0 : index
    %209 = vector.load %arg4[%c7_128, %c0_129] : memref<128x256xf32, #tpu.memory_space<vmem>>, vector<1x128xf32>
    %c126_i32_130 = arith.constant 126 : i32
    %210 = tpu.dynamic_rotate %209 by %c126_i32_130 dim 1 : vector<1x128xf32>, i32 -> vector<1x128xf32>
    %c8_131 = arith.constant 8 : index
    %c0_132 = arith.constant 0 : index
    %211 = vector.load %arg4[%c8_131, %c0_132] : memref<128x256xf32, #tpu.memory_space<vmem>>, vector<1x128xf32>
    %c16_i32 = arith.constant 16 : i32
    %212 = tpu.dynamic_rotate %211 by %c16_i32 dim 1 : vector<1x128xf32>, i32 -> vector<1x128xf32>
    %c16_i32_133 = arith.constant 16 : i32
    %213 = vector.broadcast %c16_i32_133 : i32 to vector<1x128xi32>
    %214 = arith.cmpi sge, %170, %213 : vector<1x128xi32>
    %215 = arith.select %214, %212, %210 : vector<1x128xi1>, vector<1x128xf32>
    %c9 = arith.constant 9 : index
    %c0_134 = arith.constant 0 : index
    %216 = vector.load %arg4[%c9, %c0_134] : memref<128x256xf32, #tpu.memory_space<vmem>>, vector<1x128xf32>
    %c34_i32 = arith.constant 34 : i32
    %217 = tpu.dynamic_rotate %216 by %c34_i32 dim 1 : vector<1x128xf32>, i32 -> vector<1x128xf32>
    %c34_i32_135 = arith.constant 34 : i32
    %218 = vector.broadcast %c34_i32_135 : i32 to vector<1x128xi32>
    %219 = arith.cmpi sge, %170, %218 : vector<1x128xi32>
    %220 = arith.select %219, %217, %215 : vector<1x128xi1>, vector<1x128xf32>
    %c10_136 = arith.constant 10 : index
    %c0_137 = arith.constant 0 : index
    %221 = vector.load %arg4[%c10_136, %c0_137] : memref<128x256xf32, #tpu.memory_space<vmem>>, vector<1x128xf32>
    %c52_i32 = arith.constant 52 : i32
    %222 = tpu.dynamic_rotate %221 by %c52_i32 dim 1 : vector<1x128xf32>, i32 -> vector<1x128xf32>
    %c52_i32_138 = arith.constant 52 : i32
    %223 = vector.broadcast %c52_i32_138 : i32 to vector<1x128xi32>
    %224 = arith.cmpi sge, %170, %223 : vector<1x128xi32>
    %225 = arith.select %224, %222, %220 : vector<1x128xi1>, vector<1x128xf32>
    %c11 = arith.constant 11 : index
    %c0_139 = arith.constant 0 : index
    %226 = vector.load %arg4[%c11, %c0_139] : memref<128x256xf32, #tpu.memory_space<vmem>>, vector<1x128xf32>
    %c70_i32 = arith.constant 70 : i32
    %227 = tpu.dynamic_rotate %226 by %c70_i32 dim 1 : vector<1x128xf32>, i32 -> vector<1x128xf32>
    %c70_i32_140 = arith.constant 70 : i32
    %228 = vector.broadcast %c70_i32_140 : i32 to vector<1x128xi32>
    %229 = arith.cmpi sge, %170, %228 : vector<1x128xi32>
    %230 = arith.select %229, %227, %225 : vector<1x128xi1>, vector<1x128xf32>
    %c12_141 = arith.constant 12 : index
    %c0_142 = arith.constant 0 : index
    %231 = vector.load %arg4[%c12_141, %c0_142] : memref<128x256xf32, #tpu.memory_space<vmem>>, vector<1x128xf32>
    %c88_i32 = arith.constant 88 : i32
    %232 = tpu.dynamic_rotate %231 by %c88_i32 dim 1 : vector<1x128xf32>, i32 -> vector<1x128xf32>
    %c88_i32_143 = arith.constant 88 : i32
    %233 = vector.broadcast %c88_i32_143 : i32 to vector<1x128xi32>
    %234 = arith.cmpi sge, %170, %233 : vector<1x128xi32>
    %235 = arith.select %234, %232, %230 : vector<1x128xi1>, vector<1x128xf32>
    %c13 = arith.constant 13 : index
    %c0_144 = arith.constant 0 : index
    %236 = vector.load %arg4[%c13, %c0_144] : memref<128x256xf32, #tpu.memory_space<vmem>>, vector<1x128xf32>
    %c106_i32 = arith.constant 106 : i32
    %237 = tpu.dynamic_rotate %236 by %c106_i32 dim 1 : vector<1x128xf32>, i32 -> vector<1x128xf32>
    %c106_i32_145 = arith.constant 106 : i32
    %238 = vector.broadcast %c106_i32_145 : i32 to vector<1x128xi32>
    %239 = arith.cmpi sge, %170, %238 : vector<1x128xi32>
    %240 = arith.select %239, %237, %235 : vector<1x128xi1>, vector<1x128xf32>
    %c14 = arith.constant 14 : index
    %c0_146 = arith.constant 0 : index
    %241 = vector.load %arg4[%c14, %c0_146] : memref<128x256xf32, #tpu.memory_space<vmem>>, vector<1x128xf32>
    %c124_i32 = arith.constant 124 : i32
    %242 = tpu.dynamic_rotate %241 by %c124_i32 dim 1 : vector<1x128xf32>, i32 -> vector<1x128xf32>
    %c124_i32_147 = arith.constant 124 : i32
    %243 = vector.broadcast %c124_i32_147 : i32 to vector<1x128xi32>
    %244 = arith.cmpi sge, %170, %243 : vector<1x128xi32>
    %245 = arith.select %244, %242, %240 : vector<1x128xi1>, vector<1x128xf32>
    %246 = arith.truncf %245 : vector<1x128xf32> to vector<1x128xbf16>
    %c1_148 = arith.constant 1 : index
    %c0_149 = arith.constant 0 : index
    %247 = vector.load %arg5[%c1_148, %c0_149] : memref<36x128xbf16, #tpu.memory_space<vmem>>, vector<1x128xbf16>
    tpu.vector_store %arg5[%c1_148, %c0_149], %246 {strides = array<i32>} : memref<36x128xbf16, #tpu.memory_space<vmem>>, vector<1x128xbf16>,
    %c14_150 = arith.constant 14 : index
    %c0_151 = arith.constant 0 : index
    %248 = vector.load %arg4[%c14_150, %c0_151] : memref<128x256xf32, #tpu.memory_space<vmem>>, vector<1x128xf32>
    %c124_i32_152 = arith.constant 124 : i32
    %249 = tpu.dynamic_rotate %248 by %c124_i32_152 dim 1 : vector<1x128xf32>, i32 -> vector<1x128xf32>
    %c15 = arith.constant 15 : index
    %c0_153 = arith.constant 0 : index
    %250 = vector.load %arg4[%c15, %c0_153] : memref<128x256xf32, #tpu.memory_space<vmem>>, vector<1x128xf32>
    %c14_i32 = arith.constant 14 : i32
    %251 = tpu.dynamic_rotate %250 by %c14_i32 dim 1 : vector<1x128xf32>, i32 -> vector<1x128xf32>
    %c14_i32_154 = arith.constant 14 : i32
    %252 = vector.broadcast %c14_i32_154 : i32 to vector<1x128xi32>
    %253 = arith.cmpi sge, %170, %252 : vector<1x128xi32>
    %254 = arith.select %253, %251, %249 : vector<1x128xi1>, vector<1x128xf32>
    %c16_155 = arith.constant 16 : index
    %c0_156 = arith.constant 0 : index
    %255 = vector.load %arg4[%c16_155, %c0_156] : memref<128x256xf32, #tpu.memory_space<vmem>>, vector<1x128xf32>
    %c32_i32 = arith.constant 32 : i32
    %256 = tpu.dynamic_rotate %255 by %c32_i32 dim 1 : vector<1x128xf32>, i32 -> vector<1x128xf32>
    %c32_i32_157 = arith.constant 32 : i32
    %257 = vector.broadcast %c32_i32_157 : i32 to vector<1x128xi32>
    %258 = arith.cmpi sge, %170, %257 : vector<1x128xi32>
    %259 = arith.select %258, %256, %254 : vector<1x128xi1>, vector<1x128xf32>
    %c17 = arith.constant 17 : index
    %c0_158 = arith.constant 0 : index
    %260 = vector.load %arg4[%c17, %c0_158] : memref<128x256xf32, #tpu.memory_space<vmem>>, vector<1x128xf32>
    %c50_i32 = arith.constant 50 : i32
    %261 = tpu.dynamic_rotate %260 by %c50_i32 dim 1 : vector<1x128xf32>, i32 -> vector<1x128xf32>
    %c50_i32_159 = arith.constant 50 : i32
    %262 = vector.broadcast %c50_i32_159 : i32 to vector<1x128xi32>
    %263 = arith.cmpi sge, %170, %262 : vector<1x128xi32>
    %264 = arith.select %263, %261, %259 : vector<1x128xi1>, vector<1x128xf32>
    %c18 = arith.constant 18 : index
    %c0_160 = arith.constant 0 : index
    %265 = vector.load %arg4[%c18, %c0_160] : memref<128x256xf32, #tpu.memory_space<vmem>>, vector<1x128xf32>
    %c68_i32 = arith.constant 68 : i32
    %266 = tpu.dynamic_rotate %265 by %c68_i32 dim 1 : vector<1x128xf32>, i32 -> vector<1x128xf32>
    %c68_i32_161 = arith.constant 68 : i32
    %267 = vector.broadcast %c68_i32_161 : i32 to vector<1x128xi32>
    %268 = arith.cmpi sge, %170, %267 : vector<1x128xi32>
    %269 = arith.select %268, %266, %264 : vector<1x128xi1>, vector<1x128xf32>
    %c19 = arith.constant 19 : index
    %c0_162 = arith.constant 0 : index
    %270 = vector.load %arg4[%c19, %c0_162] : memref<128x256xf32, #tpu.memory_space<vmem>>, vector<1x128xf32>
    %c86_i32 = arith.constant 86 : i32
    %271 = tpu.dynamic_rotate %270 by %c86_i32 dim 1 : vector<1x128xf32>, i32 -> vector<1x128xf32>
    %c86_i32_163 = arith.constant 86 : i32
    %272 = vector.broadcast %c86_i32_163 : i32 to vector<1x128xi32>
    %273 = arith.cmpi sge, %170, %272 : vector<1x128xi32>
    %274 = arith.select %273, %271, %269 : vector<1x128xi1>, vector<1x128xf32>
    %c20_164 = arith.constant 20 : index
    %c0_165 = arith.constant 0 : index
    %275 = vector.load %arg4[%c20_164, %c0_165] : memref<128x256xf32, #tpu.memory_space<vmem>>, vector<1x128xf32>
    %c104_i32 = arith.constant 104 : i32
    %276 = tpu.dynamic_rotate %275 by %c104_i32 dim 1 : vector<1x128xf32>, i32 -> vector<1x128xf32>
    %c104_i32_166 = arith.constant 104 : i32
    %277 = vector.broadcast %c104_i32_166 : i32 to vector<1x128xi32>
    %278 = arith.cmpi sge, %170, %277 : vector<1x128xi32>
    %279 = arith.select %278, %276, %274 : vector<1x128xi1>, vector<1x128xf32>
    %c21 = arith.constant 21 : index
    %c0_167 = arith.constant 0 : index
    %280 = vector.load %arg4[%c21, %c0_167] : memref<128x256xf32, #tpu.memory_space<vmem>>, vector<1x128xf32>
    %c122_i32 = arith.constant 122 : i32
    %281 = tpu.dynamic_rotate %280 by %c122_i32 dim 1 : vector<1x128xf32>, i32 -> vector<1x128xf32>
    %c122_i32_168 = arith.constant 122 : i32
    %282 = vector.broadcast %c122_i32_168 : i32 to vector<1x128xi32>
    %283 = arith.cmpi sge, %170, %282 : vector<1x128xi32>
    %284 = arith.select %283, %281, %279 : vector<1x128xi1>, vector<1x128xf32>
    %285 = arith.truncf %284 : vector<1x128xf32> to vector<1x128xbf16>
    %c2_169 = arith.constant 2 : index
    %c0_170 = arith.constant 0 : index
    %286 = vector.load %arg5[%c2_169, %c0_170] : memref<36x128xbf16, #tpu.memory_space<vmem>>, vector<1x128xbf16>
    tpu.vector_store %arg5[%c2_169, %c0_170], %285 {strides = array<i32>} : memref<36x128xbf16, #tpu.memory_space<vmem>>, vector<1x128xbf16>,
    %c21_171 = arith.constant 21 : index
    %c0_172 = arith.constant 0 : index
    %287 = vector.load %arg4[%c21_171, %c0_172] : memref<128x256xf32, #tpu.memory_space<vmem>>, vector<1x128xf32>
    %c122_i32_173 = arith.constant 122 : i32
    %288 = tpu.dynamic_rotate %287 by %c122_i32_173 dim 1 : vector<1x128xf32>, i32 -> vector<1x128xf32>
    %c22 = arith.constant 22 : index
    %c0_174 = arith.constant 0 : index
    %289 = vector.load %arg4[%c22, %c0_174] : memref<128x256xf32, #tpu.memory_space<vmem>>, vector<1x128xf32>
    %c12_i32 = arith.constant 12 : i32
    %290 = tpu.dynamic_rotate %289 by %c12_i32 dim 1 : vector<1x128xf32>, i32 -> vector<1x128xf32>
    %c12_i32_175 = arith.constant 12 : i32
    %291 = vector.broadcast %c12_i32_175 : i32 to vector<1x128xi32>
    %292 = arith.cmpi sge, %170, %291 : vector<1x128xi32>
    %293 = arith.select %292, %290, %288 : vector<1x128xi1>, vector<1x128xf32>
    %c23 = arith.constant 23 : index
    %c0_176 = arith.constant 0 : index
    %294 = vector.load %arg4[%c23, %c0_176] : memref<128x256xf32, #tpu.memory_space<vmem>>, vector<1x128xf32>
    %c30_i32 = arith.constant 30 : i32
    %295 = tpu.dynamic_rotate %294 by %c30_i32 dim 1 : vector<1x128xf32>, i32 -> vector<1x128xf32>
    %c30_i32_177 = arith.constant 30 : i32
    %296 = vector.broadcast %c30_i32_177 : i32 to vector<1x128xi32>
    %297 = arith.cmpi sge, %170, %296 : vector<1x128xi32>
    %298 = arith.select %297, %295, %293 : vector<1x128xi1>, vector<1x128xf32>
    %c24_178 = arith.constant 24 : index
    %c0_179 = arith.constant 0 : index
    %299 = vector.load %arg4[%c24_178, %c0_179] : memref<128x256xf32, #tpu.memory_space<vmem>>, vector<1x128xf32>
    %c48_i32 = arith.constant 48 : i32
    %300 = tpu.dynamic_rotate %299 by %c48_i32 dim 1 : vector<1x128xf32>, i32 -> vector<1x128xf32>
    %c48_i32_180 = arith.constant 48 : i32
    %301 = vector.broadcast %c48_i32_180 : i32 to vector<1x128xi32>
    %302 = arith.cmpi sge, %170, %301 : vector<1x128xi32>
    %303 = arith.select %302, %300, %298 : vector<1x128xi1>, vector<1x128xf32>
    %c25 = arith.constant 25 : index
    %c0_181 = arith.constant 0 : index
    %304 = vector.load %arg4[%c25, %c0_181] : memref<128x256xf32, #tpu.memory_space<vmem>>, vector<1x128xf32>
    %c66_i32 = arith.constant 66 : i32
    %305 = tpu.dynamic_rotate %304 by %c66_i32 dim 1 : vector<1x128xf32>, i32 -> vector<1x128xf32>
    %c66_i32_182 = arith.constant 66 : i32
    %306 = vector.broadcast %c66_i32_182 : i32 to vector<1x128xi32>
    %307 = arith.cmpi sge, %170, %306 : vector<1x128xi32>
    %308 = arith.select %307, %305, %303 : vector<1x128xi1>, vector<1x128xf32>
    %c26 = arith.constant 26 : index
    %c0_183 = arith.constant 0 : index
    %309 = vector.load %arg4[%c26, %c0_183] : memref<128x256xf32, #tpu.memory_space<vmem>>, vector<1x128xf32>
    %c84_i32 = arith.constant 84 : i32
    %310 = tpu.dynamic_rotate %309 by %c84_i32 dim 1 : vector<1x128xf32>, i32 -> vector<1x128xf32>
    %c84_i32_184 = arith.constant 84 : i32
    %311 = vector.broadcast %c84_i32_184 : i32 to vector<1x128xi32>
    %312 = arith.cmpi sge, %170, %311 : vector<1x128xi32>
    %313 = arith.select %312, %310, %308 : vector<1x128xi1>, vector<1x128xf32>
    %c27 = arith.constant 27 : index
    %c0_185 = arith.constant 0 : index
    %314 = vector.load %arg4[%c27, %c0_185] : memref<128x256xf32, #tpu.memory_space<vmem>>, vector<1x128xf32>
    %c102_i32 = arith.constant 102 : i32
    %315 = tpu.dynamic_rotate %314 by %c102_i32 dim 1 : vector<1x128xf32>, i32 -> vector<1x128xf32>
    %c102_i32_186 = arith.constant 102 : i32
    %316 = vector.broadcast %c102_i32_186 : i32 to vector<1x128xi32>
    %317 = arith.cmpi sge, %170, %316 : vector<1x128xi32>
    %318 = arith.select %317, %315, %313 : vector<1x128xi1>, vector<1x128xf32>
    %c28_187 = arith.constant 28 : index
    %c0_188 = arith.constant 0 : index
    %319 = vector.load %arg4[%c28_187, %c0_188] : memref<128x256xf32, #tpu.memory_space<vmem>>, vector<1x128xf32>
    %c120_i32 = arith.constant 120 : i32
    %320 = tpu.dynamic_rotate %319 by %c120_i32 dim 1 : vector<1x128xf32>, i32 -> vector<1x128xf32>
    %c120_i32_189 = arith.constant 120 : i32
    %321 = vector.broadcast %c120_i32_189 : i32 to vector<1x128xi32>
    %322 = arith.cmpi sge, %170, %321 : vector<1x128xi32>
    %323 = arith.select %322, %320, %318 : vector<1x128xi1>, vector<1x128xf32>
    %324 = arith.truncf %323 : vector<1x128xf32> to vector<1x128xbf16>
    %c3_190 = arith.constant 3 : index
    %c0_191 = arith.constant 0 : index
    %325 = vector.load %arg5[%c3_190, %c0_191] : memref<36x128xbf16, #tpu.memory_space<vmem>>, vector<1x128xbf16>
    tpu.vector_store %arg5[%c3_190, %c0_191], %324 {strides = array<i32>} : memref<36x128xbf16, #tpu.memory_space<vmem>>, vector<1x128xbf16>,
    %c28_192 = arith.constant 28 : index
    %c0_193 = arith.constant 0 : index
    %326 = vector.load %arg4[%c28_192, %c0_193] : memref<128x256xf32, #tpu.memory_space<vmem>>, vector<1x128xf32>
    %c120_i32_194 = arith.constant 120 : i32
    %327 = tpu.dynamic_rotate %326 by %c120_i32_194 dim 1 : vector<1x128xf32>, i32 -> vector<1x128xf32>
    %c29 = arith.constant 29 : index
    %c0_195 = arith.constant 0 : index
    %328 = vector.load %arg4[%c29, %c0_195] : memref<128x256xf32, #tpu.memory_space<vmem>>, vector<1x128xf32>
    %c10_i32 = arith.constant 10 : i32
    %329 = tpu.dynamic_rotate %328 by %c10_i32 dim 1 : vector<1x128xf32>, i32 -> vector<1x128xf32>
    %c10_i32_196 = arith.constant 10 : i32
    %330 = vector.broadcast %c10_i32_196 : i32 to vector<1x128xi32>
    %331 = arith.cmpi sge, %170, %330 : vector<1x128xi32>
    %332 = arith.select %331, %329, %327 : vector<1x128xi1>, vector<1x128xf32>
    %c30_197 = arith.constant 30 : index
    %c0_198 = arith.constant 0 : index
    %333 = vector.load %arg4[%c30_197, %c0_198] : memref<128x256xf32, #tpu.memory_space<vmem>>, vector<1x128xf32>
    %c28_i32 = arith.constant 28 : i32
    %334 = tpu.dynamic_rotate %333 by %c28_i32 dim 1 : vector<1x128xf32>, i32 -> vector<1x128xf32>
    %c28_i32_199 = arith.constant 28 : i32
    %335 = vector.broadcast %c28_i32_199 : i32 to vector<1x128xi32>
    %336 = arith.cmpi sge, %170, %335 : vector<1x128xi32>
    %337 = arith.select %336, %334, %332 : vector<1x128xi1>, vector<1x128xf32>
    %c31 = arith.constant 31 : index
    %c0_200 = arith.constant 0 : index
    %338 = vector.load %arg4[%c31, %c0_200] : memref<128x256xf32, #tpu.memory_space<vmem>>, vector<1x128xf32>
    %c46_i32 = arith.constant 46 : i32
    %339 = tpu.dynamic_rotate %338 by %c46_i32 dim 1 : vector<1x128xf32>, i32 -> vector<1x128xf32>
    %c46_i32_201 = arith.constant 46 : i32
    %340 = vector.broadcast %c46_i32_201 : i32 to vector<1x128xi32>
    %341 = arith.cmpi sge, %170, %340 : vector<1x128xi32>
    %342 = arith.select %341, %339, %337 : vector<1x128xi1>, vector<1x128xf32>
    %c32_202 = arith.constant 32 : index
    %c0_203 = arith.constant 0 : index
    %343 = vector.load %arg4[%c32_202, %c0_203] : memref<128x256xf32, #tpu.memory_space<vmem>>, vector<1x128xf32>
    %c64_i32 = arith.constant 64 : i32
    %344 = tpu.dynamic_rotate %343 by %c64_i32 dim 1 : vector<1x128xf32>, i32 -> vector<1x128xf32>
    %c64_i32_204 = arith.constant 64 : i32
    %345 = vector.broadcast %c64_i32_204 : i32 to vector<1x128xi32>
    %346 = arith.cmpi sge, %170, %345 : vector<1x128xi32>
    %347 = arith.select %346, %344, %342 : vector<1x128xi1>, vector<1x128xf32>
    %c33 = arith.constant 33 : index
    %c0_205 = arith.constant 0 : index
    %348 = vector.load %arg4[%c33, %c0_205] : memref<128x256xf32, #tpu.memory_space<vmem>>, vector<1x128xf32>
    %c82_i32 = arith.constant 82 : i32
    %349 = tpu.dynamic_rotate %348 by %c82_i32 dim 1 : vector<1x128xf32>, i32 -> vector<1x128xf32>
    %c82_i32_206 = arith.constant 82 : i32
    %350 = vector.broadcast %c82_i32_206 : i32 to vector<1x128xi32>
    %351 = arith.cmpi sge, %170, %350 : vector<1x128xi32>
    %352 = arith.select %351, %349, %347 : vector<1x128xi1>, vector<1x128xf32>
    %c34 = arith.constant 34 : index
    %c0_207 = arith.constant 0 : index
    %353 = vector.load %arg4[%c34, %c0_207] : memref<128x256xf32, #tpu.memory_space<vmem>>, vector<1x128xf32>
    %c100_i32 = arith.constant 100 : i32
    %354 = tpu.dynamic_rotate %353 by %c100_i32 dim 1 : vector<1x128xf32>, i32 -> vector<1x128xf32>
    %c100_i32_208 = arith.constant 100 : i32
    %355 = vector.broadcast %c100_i32_208 : i32 to vector<1x128xi32>
    %356 = arith.cmpi sge, %170, %355 : vector<1x128xi32>
    %357 = arith.select %356, %354, %352 : vector<1x128xi1>, vector<1x128xf32>
    %c35 = arith.constant 35 : index
    %c0_209 = arith.constant 0 : index
    %358 = vector.load %arg4[%c35, %c0_209] : memref<128x256xf32, #tpu.memory_space<vmem>>, vector<1x128xf32>
    %c118_i32 = arith.constant 118 : i32
    %359 = tpu.dynamic_rotate %358 by %c118_i32 dim 1 : vector<1x128xf32>, i32 -> vector<1x128xf32>
    %c118_i32_210 = arith.constant 118 : i32
    %360 = vector.broadcast %c118_i32_210 : i32 to vector<1x128xi32>
    %361 = arith.cmpi sge, %170, %360 : vector<1x128xi32>
    %362 = arith.select %361, %359, %357 : vector<1x128xi1>, vector<1x128xf32>
    %363 = arith.truncf %362 : vector<1x128xf32> to vector<1x128xbf16>
    %c4_211 = arith.constant 4 : index
    %c0_212 = arith.constant 0 : index
    %364 = vector.load %arg5[%c4_211, %c0_212] : memref<36x128xbf16, #tpu.memory_space<vmem>>, vector<1x128xbf16>
    tpu.vector_store %arg5[%c4_211, %c0_212], %363 {strides = array<i32>} : memref<36x128xbf16, #tpu.memory_space<vmem>>, vector<1x128xbf16>,
    %c35_213 = arith.constant 35 : index
    %c0_214 = arith.constant 0 : index
    %365 = vector.load %arg4[%c35_213, %c0_214] : memref<128x256xf32, #tpu.memory_space<vmem>>, vector<1x128xf32>
    %c118_i32_215 = arith.constant 118 : i32
    %366 = tpu.dynamic_rotate %365 by %c118_i32_215 dim 1 : vector<1x128xf32>, i32 -> vector<1x128xf32>
    %c36_216 = arith.constant 36 : index
    %c0_217 = arith.constant 0 : index
    %367 = vector.load %arg4[%c36_216, %c0_217] : memref<128x256xf32, #tpu.memory_space<vmem>>, vector<1x128xf32>
    %c8_i32 = arith.constant 8 : i32
    %368 = tpu.dynamic_rotate %367 by %c8_i32 dim 1 : vector<1x128xf32>, i32 -> vector<1x128xf32>
    %c8_i32_218 = arith.constant 8 : i32
    %369 = vector.broadcast %c8_i32_218 : i32 to vector<1x128xi32>
    %370 = arith.cmpi sge, %170, %369 : vector<1x128xi32>
    %371 = arith.select %370, %368, %366 : vector<1x128xi1>, vector<1x128xf32>
    %c37 = arith.constant 37 : index
    %c0_219 = arith.constant 0 : index
    %372 = vector.load %arg4[%c37, %c0_219] : memref<128x256xf32, #tpu.memory_space<vmem>>, vector<1x128xf32>
    %c26_i32 = arith.constant 26 : i32
    %373 = tpu.dynamic_rotate %372 by %c26_i32 dim 1 : vector<1x128xf32>, i32 -> vector<1x128xf32>
    %c26_i32_220 = arith.constant 26 : i32
    %374 = vector.broadcast %c26_i32_220 : i32 to vector<1x128xi32>
    %375 = arith.cmpi sge, %170, %374 : vector<1x128xi32>
    %376 = arith.select %375, %373, %371 : vector<1x128xi1>, vector<1x128xf32>
    %c38 = arith.constant 38 : index
    %c0_221 = arith.constant 0 : index
    %377 = vector.load %arg4[%c38, %c0_221] : memref<128x256xf32, #tpu.memory_space<vmem>>, vector<1x128xf32>
    %c44_i32 = arith.constant 44 : i32
    %378 = tpu.dynamic_rotate %377 by %c44_i32 dim 1 : vector<1x128xf32>, i32 -> vector<1x128xf32>
    %c44_i32_222 = arith.constant 44 : i32
    %379 = vector.broadcast %c44_i32_222 : i32 to vector<1x128xi32>
    %380 = arith.cmpi sge, %170, %379 : vector<1x128xi32>
    %381 = arith.select %380, %378, %376 : vector<1x128xi1>, vector<1x128xf32>
    %c39 = arith.constant 39 : index
    %c0_223 = arith.constant 0 : index
    %382 = vector.load %arg4[%c39, %c0_223] : memref<128x256xf32, #tpu.memory_space<vmem>>, vector<1x128xf32>
    %c62_i32 = arith.constant 62 : i32
    %383 = tpu.dynamic_rotate %382 by %c62_i32 dim 1 : vector<1x128xf32>, i32 -> vector<1x128xf32>
    %c62_i32_224 = arith.constant 62 : i32
    %384 = vector.broadcast %c62_i32_224 : i32 to vector<1x128xi32>
    %385 = arith.cmpi sge, %170, %384 : vector<1x128xi32>
    %386 = arith.select %385, %383, %381 : vector<1x128xi1>, vector<1x128xf32>
    %c40_225 = arith.constant 40 : index
    %c0_226 = arith.constant 0 : index
    %387 = vector.load %arg4[%c40_225, %c0_226] : memref<128x256xf32, #tpu.memory_space<vmem>>, vector<1x128xf32>
    %c80_i32 = arith.constant 80 : i32
    %388 = tpu.dynamic_rotate %387 by %c80_i32 dim 1 : vector<1x128xf32>, i32 -> vector<1x128xf32>
    %c80_i32_227 = arith.constant 80 : i32
    %389 = vector.broadcast %c80_i32_227 : i32 to vector<1x128xi32>
    %390 = arith.cmpi sge, %170, %389 : vector<1x128xi32>
    %391 = arith.select %390, %388, %386 : vector<1x128xi1>, vector<1x128xf32>
    %c41 = arith.constant 41 : index
    %c0_228 = arith.constant 0 : index
    %392 = vector.load %arg4[%c41, %c0_228] : memref<128x256xf32, #tpu.memory_space<vmem>>, vector<1x128xf32>
    %c98_i32 = arith.constant 98 : i32
    %393 = tpu.dynamic_rotate %392 by %c98_i32 dim 1 : vector<1x128xf32>, i32 -> vector<1x128xf32>
    %c98_i32_229 = arith.constant 98 : i32
    %394 = vector.broadcast %c98_i32_229 : i32 to vector<1x128xi32>
    %395 = arith.cmpi sge, %170, %394 : vector<1x128xi32>
    %396 = arith.select %395, %393, %391 : vector<1x128xi1>, vector<1x128xf32>
    %c42 = arith.constant 42 : index
    %c0_230 = arith.constant 0 : index
    %397 = vector.load %arg4[%c42, %c0_230] : memref<128x256xf32, #tpu.memory_space<vmem>>, vector<1x128xf32>
    %c116_i32 = arith.constant 116 : i32
    %398 = tpu.dynamic_rotate %397 by %c116_i32 dim 1 : vector<1x128xf32>, i32 -> vector<1x128xf32>
    %c116_i32_231 = arith.constant 116 : i32
    %399 = vector.broadcast %c116_i32_231 : i32 to vector<1x128xi32>
    %400 = arith.cmpi sge, %170, %399 : vector<1x128xi32>
    %401 = arith.select %400, %398, %396 : vector<1x128xi1>, vector<1x128xf32>
    %402 = arith.truncf %401 : vector<1x128xf32> to vector<1x128xbf16>
    %c5_232 = arith.constant 5 : index
    %c0_233 = arith.constant 0 : index
    %403 = vector.load %arg5[%c5_232, %c0_233] : memref<36x128xbf16, #tpu.memory_space<vmem>>, vector<1x128xbf16>
    tpu.vector_store %arg5[%c5_232, %c0_233], %402 {strides = array<i32>} : memref<36x128xbf16, #tpu.memory_space<vmem>>, vector<1x128xbf16>,
    %c42_234 = arith.constant 42 : index
    %c0_235 = arith.constant 0 : index
    %404 = vector.load %arg4[%c42_234, %c0_235] : memref<128x256xf32, #tpu.memory_space<vmem>>, vector<1x128xf32>
    %c116_i32_236 = arith.constant 116 : i32
    %405 = tpu.dynamic_rotate %404 by %c116_i32_236 dim 1 : vector<1x128xf32>, i32 -> vector<1x128xf32>
    %c43 = arith.constant 43 : index
    %c0_237 = arith.constant 0 : index
    %406 = vector.load %arg4[%c43, %c0_237] : memref<128x256xf32, #tpu.memory_space<vmem>>, vector<1x128xf32>
    %c6_i32 = arith.constant 6 : i32
    %407 = tpu.dynamic_rotate %406 by %c6_i32 dim 1 : vector<1x128xf32>, i32 -> vector<1x128xf32>
    %c6_i32_238 = arith.constant 6 : i32
    %408 = vector.broadcast %c6_i32_238 : i32 to vector<1x128xi32>
    %409 = arith.cmpi sge, %170, %408 : vector<1x128xi32>
    %410 = arith.select %409, %407, %405 : vector<1x128xi1>, vector<1x128xf32>
    %c44 = arith.constant 44 : index
    %c0_239 = arith.constant 0 : index
    %411 = vector.load %arg4[%c44, %c0_239] : memref<128x256xf32, #tpu.memory_space<vmem>>, vector<1x128xf32>
    %c24_i32 = arith.constant 24 : i32
    %412 = tpu.dynamic_rotate %411 by %c24_i32 dim 1 : vector<1x128xf32>, i32 -> vector<1x128xf32>
    %c24_i32_240 = arith.constant 24 : i32
    %413 = vector.broadcast %c24_i32_240 : i32 to vector<1x128xi32>
    %414 = arith.cmpi sge, %170, %413 : vector<1x128xi32>
    %415 = arith.select %414, %412, %410 : vector<1x128xi1>, vector<1x128xf32>
    %c45 = arith.constant 45 : index
    %c0_241 = arith.constant 0 : index
    %416 = vector.load %arg4[%c45, %c0_241] : memref<128x256xf32, #tpu.memory_space<vmem>>, vector<1x128xf32>
    %c42_i32 = arith.constant 42 : i32
    %417 = tpu.dynamic_rotate %416 by %c42_i32 dim 1 : vector<1x128xf32>, i32 -> vector<1x128xf32>
    %c42_i32_242 = arith.constant 42 : i32
    %418 = vector.broadcast %c42_i32_242 : i32 to vector<1x128xi32>
    %419 = arith.cmpi sge, %170, %418 : vector<1x128xi32>
    %420 = arith.select %419, %417, %415 : vector<1x128xi1>, vector<1x128xf32>
    %c46 = arith.constant 46 : index
    %c0_243 = arith.constant 0 : index
    %421 = vector.load %arg4[%c46, %c0_243] : memref<128x256xf32, #tpu.memory_space<vmem>>, vector<1x128xf32>
    %c60_i32 = arith.constant 60 : i32
    %422 = tpu.dynamic_rotate %421 by %c60_i32 dim 1 : vector<1x128xf32>, i32 -> vector<1x128xf32>
    %c60_i32_244 = arith.constant 60 : i32
    %423 = vector.broadcast %c60_i32_244 : i32 to vector<1x128xi32>
    %424 = arith.cmpi sge, %170, %423 : vector<1x128xi32>
    %425 = arith.select %424, %422, %420 : vector<1x128xi1>, vector<1x128xf32>
    %c47 = arith.constant 47 : index
    %c0_245 = arith.constant 0 : index
    %426 = vector.load %arg4[%c47, %c0_245] : memref<128x256xf32, #tpu.memory_space<vmem>>, vector<1x128xf32>
    %c78_i32 = arith.constant 78 : i32
    %427 = tpu.dynamic_rotate %426 by %c78_i32 dim 1 : vector<1x128xf32>, i32 -> vector<1x128xf32>
    %c78_i32_246 = arith.constant 78 : i32
    %428 = vector.broadcast %c78_i32_246 : i32 to vector<1x128xi32>
    %429 = arith.cmpi sge, %170, %428 : vector<1x128xi32>
    %430 = arith.select %429, %427, %425 : vector<1x128xi1>, vector<1x128xf32>
    %c48 = arith.constant 48 : index
    %c0_247 = arith.constant 0 : index
    %431 = vector.load %arg4[%c48, %c0_247] : memref<128x256xf32, #tpu.memory_space<vmem>>, vector<1x128xf32>
    %c96_i32 = arith.constant 96 : i32
    %432 = tpu.dynamic_rotate %431 by %c96_i32 dim 1 : vector<1x128xf32>, i32 -> vector<1x128xf32>
    %c96_i32_248 = arith.constant 96 : i32
    %433 = vector.broadcast %c96_i32_248 : i32 to vector<1x128xi32>
    %434 = arith.cmpi sge, %170, %433 : vector<1x128xi32>
    %435 = arith.select %434, %432, %430 : vector<1x128xi1>, vector<1x128xf32>
    %c49 = arith.constant 49 : index
    %c0_249 = arith.constant 0 : index
    %436 = vector.load %arg4[%c49, %c0_249] : memref<128x256xf32, #tpu.memory_space<vmem>>, vector<1x128xf32>
    %c114_i32 = arith.constant 114 : i32
    %437 = tpu.dynamic_rotate %436 by %c114_i32 dim 1 : vector<1x128xf32>, i32 -> vector<1x128xf32>
    %c114_i32_250 = arith.constant 114 : i32
    %438 = vector.broadcast %c114_i32_250 : i32 to vector<1x128xi32>
    %439 = arith.cmpi sge, %170, %438 : vector<1x128xi32>
    %440 = arith.select %439, %437, %435 : vector<1x128xi1>, vector<1x128xf32>
    %441 = arith.truncf %440 : vector<1x128xf32> to vector<1x128xbf16>
    %c6_251 = arith.constant 6 : index
    %c0_252 = arith.constant 0 : index
    %442 = vector.load %arg5[%c6_251, %c0_252] : memref<36x128xbf16, #tpu.memory_space<vmem>>, vector<1x128xbf16>
    tpu.vector_store %arg5[%c6_251, %c0_252], %441 {strides = array<i32>} : memref<36x128xbf16, #tpu.memory_space<vmem>>, vector<1x128xbf16>,
    %c49_253 = arith.constant 49 : index
    %c0_254 = arith.constant 0 : index
    %443 = vector.load %arg4[%c49_253, %c0_254] : memref<128x256xf32, #tpu.memory_space<vmem>>, vector<1x128xf32>
    %c114_i32_255 = arith.constant 114 : i32
    %444 = tpu.dynamic_rotate %443 by %c114_i32_255 dim 1 : vector<1x128xf32>, i32 -> vector<1x128xf32>
    %c50_256 = arith.constant 50 : index
    %c0_257 = arith.constant 0 : index
    %445 = vector.load %arg4[%c50_256, %c0_257] : memref<128x256xf32, #tpu.memory_space<vmem>>, vector<1x128xf32>
    %c4_i32 = arith.constant 4 : i32
    %446 = tpu.dynamic_rotate %445 by %c4_i32 dim 1 : vector<1x128xf32>, i32 -> vector<1x128xf32>
    %c4_i32_258 = arith.constant 4 : i32
    %447 = vector.broadcast %c4_i32_258 : i32 to vector<1x128xi32>
    %448 = arith.cmpi sge, %170, %447 : vector<1x128xi32>
    %449 = arith.select %448, %446, %444 : vector<1x128xi1>, vector<1x128xf32>
    %c51 = arith.constant 51 : index
    %c0_259 = arith.constant 0 : index
    %450 = vector.load %arg4[%c51, %c0_259] : memref<128x256xf32, #tpu.memory_space<vmem>>, vector<1x128xf32>
    %c22_i32 = arith.constant 22 : i32
    %451 = tpu.dynamic_rotate %450 by %c22_i32 dim 1 : vector<1x128xf32>, i32 -> vector<1x128xf32>
    %c22_i32_260 = arith.constant 22 : i32
    %452 = vector.broadcast %c22_i32_260 : i32 to vector<1x128xi32>
    %453 = arith.cmpi sge, %170, %452 : vector<1x128xi32>
    %454 = arith.select %453, %451, %449 : vector<1x128xi1>, vector<1x128xf32>
    %c52 = arith.constant 52 : index
    %c0_261 = arith.constant 0 : index
    %455 = vector.load %arg4[%c52, %c0_261] : memref<128x256xf32, #tpu.memory_space<vmem>>, vector<1x128xf32>
    %c40_i32 = arith.constant 40 : i32
    %456 = tpu.dynamic_rotate %455 by %c40_i32 dim 1 : vector<1x128xf32>, i32 -> vector<1x128xf32>
    %c40_i32_262 = arith.constant 40 : i32
    %457 = vector.broadcast %c40_i32_262 : i32 to vector<1x128xi32>
    %458 = arith.cmpi sge, %170, %457 : vector<1x128xi32>
    %459 = arith.select %458, %456, %454 : vector<1x128xi1>, vector<1x128xf32>
    %c53 = arith.constant 53 : index
    %c0_263 = arith.constant 0 : index
    %460 = vector.load %arg4[%c53, %c0_263] : memref<128x256xf32, #tpu.memory_space<vmem>>, vector<1x128xf32>
    %c58_i32 = arith.constant 58 : i32
    %461 = tpu.dynamic_rotate %460 by %c58_i32 dim 1 : vector<1x128xf32>, i32 -> vector<1x128xf32>
    %c58_i32_264 = arith.constant 58 : i32
    %462 = vector.broadcast %c58_i32_264 : i32 to vector<1x128xi32>
    %463 = arith.cmpi sge, %170, %462 : vector<1x128xi32>
    %464 = arith.select %463, %461, %459 : vector<1x128xi1>, vector<1x128xf32>
    %c54 = arith.constant 54 : index
    %c0_265 = arith.constant 0 : index
    %465 = vector.load %arg4[%c54, %c0_265] : memref<128x256xf32, #tpu.memory_space<vmem>>, vector<1x128xf32>
    %c76_i32 = arith.constant 76 : i32
    %466 = tpu.dynamic_rotate %465 by %c76_i32 dim 1 : vector<1x128xf32>, i32 -> vector<1x128xf32>
    %c76_i32_266 = arith.constant 76 : i32
    %467 = vector.broadcast %c76_i32_266 : i32 to vector<1x128xi32>
    %468 = arith.cmpi sge, %170, %467 : vector<1x128xi32>
    %469 = arith.select %468, %466, %464 : vector<1x128xi1>, vector<1x128xf32>
    %c55 = arith.constant 55 : index
    %c0_267 = arith.constant 0 : index
    %470 = vector.load %arg4[%c55, %c0_267] : memref<128x256xf32, #tpu.memory_space<vmem>>, vector<1x128xf32>
    %c94_i32 = arith.constant 94 : i32
    %471 = tpu.dynamic_rotate %470 by %c94_i32 dim 1 : vector<1x128xf32>, i32 -> vector<1x128xf32>
    %c94_i32_268 = arith.constant 94 : i32
    %472 = vector.broadcast %c94_i32_268 : i32 to vector<1x128xi32>
    %473 = arith.cmpi sge, %170, %472 : vector<1x128xi32>
    %474 = arith.select %473, %471, %469 : vector<1x128xi1>, vector<1x128xf32>
    %c56 = arith.constant 56 : index
    %c0_269 = arith.constant 0 : index
    %475 = vector.load %arg4[%c56, %c0_269] : memref<128x256xf32, #tpu.memory_space<vmem>>, vector<1x128xf32>
    %c112_i32 = arith.constant 112 : i32
    %476 = tpu.dynamic_rotate %475 by %c112_i32 dim 1 : vector<1x128xf32>, i32 -> vector<1x128xf32>
    %c112_i32_270 = arith.constant 112 : i32
    %477 = vector.broadcast %c112_i32_270 : i32 to vector<1x128xi32>
    %478 = arith.cmpi sge, %170, %477 : vector<1x128xi32>
    %479 = arith.select %478, %476, %474 : vector<1x128xi1>, vector<1x128xf32>
    %480 = arith.truncf %479 : vector<1x128xf32> to vector<1x128xbf16>
    %c7_271 = arith.constant 7 : index
    %c0_272 = arith.constant 0 : index
    %481 = vector.load %arg5[%c7_271, %c0_272] : memref<36x128xbf16, #tpu.memory_space<vmem>>, vector<1x128xbf16>
    tpu.vector_store %arg5[%c7_271, %c0_272], %480 {strides = array<i32>} : memref<36x128xbf16, #tpu.memory_space<vmem>>, vector<1x128xbf16>,
    %c56_273 = arith.constant 56 : index
    %c0_274 = arith.constant 0 : index
    %482 = vector.load %arg4[%c56_273, %c0_274] : memref<128x256xf32, #tpu.memory_space<vmem>>, vector<1x128xf32>
    %c112_i32_275 = arith.constant 112 : i32
    %483 = tpu.dynamic_rotate %482 by %c112_i32_275 dim 1 : vector<1x128xf32>, i32 -> vector<1x128xf32>
    %c57 = arith.constant 57 : index
    %c0_276 = arith.constant 0 : index
    %484 = vector.load %arg4[%c57, %c0_276] : memref<128x256xf32, #tpu.memory_space<vmem>>, vector<1x128xf32>
    %c2_i32 = arith.constant 2 : i32
    %485 = tpu.dynamic_rotate %484 by %c2_i32 dim 1 : vector<1x128xf32>, i32 -> vector<1x128xf32>
    %c2_i32_277 = arith.constant 2 : i32
    %486 = vector.broadcast %c2_i32_277 : i32 to vector<1x128xi32>
    %487 = arith.cmpi sge, %170, %486 : vector<1x128xi32>
    %488 = arith.select %487, %485, %483 : vector<1x128xi1>, vector<1x128xf32>
    %c58 = arith.constant 58 : index
    %c0_278 = arith.constant 0 : index
    %489 = vector.load %arg4[%c58, %c0_278] : memref<128x256xf32, #tpu.memory_space<vmem>>, vector<1x128xf32>
    %c20_i32 = arith.constant 20 : i32
    %490 = tpu.dynamic_rotate %489 by %c20_i32 dim 1 : vector<1x128xf32>, i32 -> vector<1x128xf32>
    %c20_i32_279 = arith.constant 20 : i32
    %491 = vector.broadcast %c20_i32_279 : i32 to vector<1x128xi32>
    %492 = arith.cmpi sge, %170, %491 : vector<1x128xi32>
    %493 = arith.select %492, %490, %488 : vector<1x128xi1>, vector<1x128xf32>
    %c59 = arith.constant 59 : index
    %c0_280 = arith.constant 0 : index
    %494 = vector.load %arg4[%c59, %c0_280] : memref<128x256xf32, #tpu.memory_space<vmem>>, vector<1x128xf32>
    %c38_i32 = arith.constant 38 : i32
    %495 = tpu.dynamic_rotate %494 by %c38_i32 dim 1 : vector<1x128xf32>, i32 -> vector<1x128xf32>
    %c38_i32_281 = arith.constant 38 : i32
    %496 = vector.broadcast %c38_i32_281 : i32 to vector<1x128xi32>
    %497 = arith.cmpi sge, %170, %496 : vector<1x128xi32>
    %498 = arith.select %497, %495, %493 : vector<1x128xi1>, vector<1x128xf32>
    %c60 = arith.constant 60 : index
    %c0_282 = arith.constant 0 : index
    %499 = vector.load %arg4[%c60, %c0_282] : memref<128x256xf32, #tpu.memory_space<vmem>>, vector<1x128xf32>
    %c56_i32 = arith.constant 56 : i32
    %500 = tpu.dynamic_rotate %499 by %c56_i32 dim 1 : vector<1x128xf32>, i32 -> vector<1x128xf32>
    %c56_i32_283 = arith.constant 56 : i32
    %501 = vector.broadcast %c56_i32_283 : i32 to vector<1x128xi32>
    %502 = arith.cmpi sge, %170, %501 : vector<1x128xi32>
    %503 = arith.select %502, %500, %498 : vector<1x128xi1>, vector<1x128xf32>
    %c61 = arith.constant 61 : index
    %c0_284 = arith.constant 0 : index
    %504 = vector.load %arg4[%c61, %c0_284] : memref<128x256xf32, #tpu.memory_space<vmem>>, vector<1x128xf32>
    %c74_i32 = arith.constant 74 : i32
    %505 = tpu.dynamic_rotate %504 by %c74_i32 dim 1 : vector<1x128xf32>, i32 -> vector<1x128xf32>
    %c74_i32_285 = arith.constant 74 : i32
    %506 = vector.broadcast %c74_i32_285 : i32 to vector<1x128xi32>
    %507 = arith.cmpi sge, %170, %506 : vector<1x128xi32>
    %508 = arith.select %507, %505, %503 : vector<1x128xi1>, vector<1x128xf32>
    %c62 = arith.constant 62 : index
    %c0_286 = arith.constant 0 : index
    %509 = vector.load %arg4[%c62, %c0_286] : memref<128x256xf32, #tpu.memory_space<vmem>>, vector<1x128xf32>
    %c92_i32 = arith.constant 92 : i32
    %510 = tpu.dynamic_rotate %509 by %c92_i32 dim 1 : vector<1x128xf32>, i32 -> vector<1x128xf32>
    %c92_i32_287 = arith.constant 92 : i32
    %511 = vector.broadcast %c92_i32_287 : i32 to vector<1x128xi32>
    %512 = arith.cmpi sge, %170, %511 : vector<1x128xi32>
    %513 = arith.select %512, %510, %508 : vector<1x128xi1>, vector<1x128xf32>
    %c63 = arith.constant 63 : index
    %c0_288 = arith.constant 0 : index
    %514 = vector.load %arg4[%c63, %c0_288] : memref<128x256xf32, #tpu.memory_space<vmem>>, vector<1x128xf32>
    %c110_i32 = arith.constant 110 : i32
    %515 = tpu.dynamic_rotate %514 by %c110_i32 dim 1 : vector<1x128xf32>, i32 -> vector<1x128xf32>
    %c110_i32_289 = arith.constant 110 : i32
    %516 = vector.broadcast %c110_i32_289 : i32 to vector<1x128xi32>
    %517 = arith.cmpi sge, %170, %516 : vector<1x128xi32>
    %518 = arith.select %517, %515, %513 : vector<1x128xi1>, vector<1x128xf32>
    %519 = arith.truncf %518 : vector<1x128xf32> to vector<1x128xbf16>
    %c8_290 = arith.constant 8 : index
    %c0_291 = arith.constant 0 : index
    %520 = vector.load %arg5[%c8_290, %c0_291] : memref<36x128xbf16, #tpu.memory_space<vmem>>, vector<1x128xbf16>
    tpu.vector_store %arg5[%c8_290, %c0_291], %519 {strides = array<i32>} : memref<36x128xbf16, #tpu.memory_space<vmem>>, vector<1x128xbf16>,
    %c64_292 = arith.constant 64 : index
    %c0_293 = arith.constant 0 : index
    %521 = vector.load %arg4[%c64_292, %c0_293] : memref<128x256xf32, #tpu.memory_space<vmem>>, vector<1x128xf32>
    %c65 = arith.constant 65 : index
    %c0_294 = arith.constant 0 : index
    %522 = vector.load %arg4[%c65, %c0_294] : memref<128x256xf32, #tpu.memory_space<vmem>>, vector<1x128xf32>
    %c18_i32_295 = arith.constant 18 : i32
    %523 = tpu.dynamic_rotate %522 by %c18_i32_295 dim 1 : vector<1x128xf32>, i32 -> vector<1x128xf32>
    %c18_i32_296 = arith.constant 18 : i32
    %524 = vector.broadcast %c18_i32_296 : i32 to vector<1x128xi32>
    %525 = arith.cmpi sge, %170, %524 : vector<1x128xi32>
    %526 = arith.select %525, %523, %521 : vector<1x128xi1>, vector<1x128xf32>
    %c66 = arith.constant 66 : index
    %c0_297 = arith.constant 0 : index
    %527 = vector.load %arg4[%c66, %c0_297] : memref<128x256xf32, #tpu.memory_space<vmem>>, vector<1x128xf32>
    %c36_i32_298 = arith.constant 36 : i32
    %528 = tpu.dynamic_rotate %527 by %c36_i32_298 dim 1 : vector<1x128xf32>, i32 -> vector<1x128xf32>
    %c36_i32_299 = arith.constant 36 : i32
    %529 = vector.broadcast %c36_i32_299 : i32 to vector<1x128xi32>
    %530 = arith.cmpi sge, %170, %529 : vector<1x128xi32>
    %531 = arith.select %530, %528, %526 : vector<1x128xi1>, vector<1x128xf32>
    %c67 = arith.constant 67 : index
    %c0_300 = arith.constant 0 : index
    %532 = vector.load %arg4[%c67, %c0_300] : memref<128x256xf32, #tpu.memory_space<vmem>>, vector<1x128xf32>
    %c54_i32_301 = arith.constant 54 : i32
    %533 = tpu.dynamic_rotate %532 by %c54_i32_301 dim 1 : vector<1x128xf32>, i32 -> vector<1x128xf32>
    %c54_i32_302 = arith.constant 54 : i32
    %534 = vector.broadcast %c54_i32_302 : i32 to vector<1x128xi32>
    %535 = arith.cmpi sge, %170, %534 : vector<1x128xi32>
    %536 = arith.select %535, %533, %531 : vector<1x128xi1>, vector<1x128xf32>
    %c68 = arith.constant 68 : index
    %c0_303 = arith.constant 0 : index
    %537 = vector.load %arg4[%c68, %c0_303] : memref<128x256xf32, #tpu.memory_space<vmem>>, vector<1x128xf32>
    %c72_i32_304 = arith.constant 72 : i32
    %538 = tpu.dynamic_rotate %537 by %c72_i32_304 dim 1 : vector<1x128xf32>, i32 -> vector<1x128xf32>
    %c72_i32_305 = arith.constant 72 : i32
    %539 = vector.broadcast %c72_i32_305 : i32 to vector<1x128xi32>
    %540 = arith.cmpi sge, %170, %539 : vector<1x128xi32>
    %541 = arith.select %540, %538, %536 : vector<1x128xi1>, vector<1x128xf32>
    %c69 = arith.constant 69 : index
    %c0_306 = arith.constant 0 : index
    %542 = vector.load %arg4[%c69, %c0_306] : memref<128x256xf32, #tpu.memory_space<vmem>>, vector<1x128xf32>
    %c90_i32_307 = arith.constant 90 : i32
    %543 = tpu.dynamic_rotate %542 by %c90_i32_307 dim 1 : vector<1x128xf32>, i32 -> vector<1x128xf32>
    %c90_i32_308 = arith.constant 90 : i32
    %544 = vector.broadcast %c90_i32_308 : i32 to vector<1x128xi32>
    %545 = arith.cmpi sge, %170, %544 : vector<1x128xi32>
    %546 = arith.select %545, %543, %541 : vector<1x128xi1>, vector<1x128xf32>
    %c70 = arith.constant 70 : index
    %c0_309 = arith.constant 0 : index
    %547 = vector.load %arg4[%c70, %c0_309] : memref<128x256xf32, #tpu.memory_space<vmem>>, vector<1x128xf32>
    %c108_i32_310 = arith.constant 108 : i32
    %548 = tpu.dynamic_rotate %547 by %c108_i32_310 dim 1 : vector<1x128xf32>, i32 -> vector<1x128xf32>
    %c108_i32_311 = arith.constant 108 : i32
    %549 = vector.broadcast %c108_i32_311 : i32 to vector<1x128xi32>
    %550 = arith.cmpi sge, %170, %549 : vector<1x128xi32>
    %551 = arith.select %550, %548, %546 : vector<1x128xi1>, vector<1x128xf32>
    %c71 = arith.constant 71 : index
    %c0_312 = arith.constant 0 : index
    %552 = vector.load %arg4[%c71, %c0_312] : memref<128x256xf32, #tpu.memory_space<vmem>>, vector<1x128xf32>
    %c126_i32_313 = arith.constant 126 : i32
    %553 = tpu.dynamic_rotate %552 by %c126_i32_313 dim 1 : vector<1x128xf32>, i32 -> vector<1x128xf32>
    %c126_i32_314 = arith.constant 126 : i32
    %554 = vector.broadcast %c126_i32_314 : i32 to vector<1x128xi32>
    %555 = arith.cmpi sge, %170, %554 : vector<1x128xi32>
    %556 = arith.select %555, %553, %551 : vector<1x128xi1>, vector<1x128xf32>
    %557 = arith.truncf %556 : vector<1x128xf32> to vector<1x128xbf16>
    %c9_315 = arith.constant 9 : index
    %c0_316 = arith.constant 0 : index
    %558 = vector.load %arg5[%c9_315, %c0_316] : memref<36x128xbf16, #tpu.memory_space<vmem>>, vector<1x128xbf16>
    tpu.vector_store %arg5[%c9_315, %c0_316], %557 {strides = array<i32>} : memref<36x128xbf16, #tpu.memory_space<vmem>>, vector<1x128xbf16>,
    %c71_317 = arith.constant 71 : index
    %c0_318 = arith.constant 0 : index
    %559 = vector.load %arg4[%c71_317, %c0_318] : memref<128x256xf32, #tpu.memory_space<vmem>>, vector<1x128xf32>
    %c126_i32_319 = arith.constant 126 : i32
    %560 = tpu.dynamic_rotate %559 by %c126_i32_319 dim 1 : vector<1x128xf32>, i32 -> vector<1x128xf32>
    %c72 = arith.constant 72 : index
    %c0_320 = arith.constant 0 : index
    %561 = vector.load %arg4[%c72, %c0_320] : memref<128x256xf32, #tpu.memory_space<vmem>>, vector<1x128xf32>
    %c16_i32_321 = arith.constant 16 : i32
    %562 = tpu.dynamic_rotate %561 by %c16_i32_321 dim 1 : vector<1x128xf32>, i32 -> vector<1x128xf32>
    %c16_i32_322 = arith.constant 16 : i32
    %563 = vector.broadcast %c16_i32_322 : i32 to vector<1x128xi32>
    %564 = arith.cmpi sge, %170, %563 : vector<1x128xi32>
    %565 = arith.select %564, %562, %560 : vector<1x128xi1>, vector<1x128xf32>
    %c73 = arith.constant 73 : index
    %c0_323 = arith.constant 0 : index
    %566 = vector.load %arg4[%c73, %c0_323] : memref<128x256xf32, #tpu.memory_space<vmem>>, vector<1x128xf32>
    %c34_i32_324 = arith.constant 34 : i32
    %567 = tpu.dynamic_rotate %566 by %c34_i32_324 dim 1 : vector<1x128xf32>, i32 -> vector<1x128xf32>
    %c34_i32_325 = arith.constant 34 : i32
    %568 = vector.broadcast %c34_i32_325 : i32 to vector<1x128xi32>
    %569 = arith.cmpi sge, %170, %568 : vector<1x128xi32>
    %570 = arith.select %569, %567, %565 : vector<1x128xi1>, vector<1x128xf32>
    %c74 = arith.constant 74 : index
    %c0_326 = arith.constant 0 : index
    %571 = vector.load %arg4[%c74, %c0_326] : memref<128x256xf32, #tpu.memory_space<vmem>>, vector<1x128xf32>
    %c52_i32_327 = arith.constant 52 : i32
    %572 = tpu.dynamic_rotate %571 by %c52_i32_327 dim 1 : vector<1x128xf32>, i32 -> vector<1x128xf32>
    %c52_i32_328 = arith.constant 52 : i32
    %573 = vector.broadcast %c52_i32_328 : i32 to vector<1x128xi32>
    %574 = arith.cmpi sge, %170, %573 : vector<1x128xi32>
    %575 = arith.select %574, %572, %570 : vector<1x128xi1>, vector<1x128xf32>
    %c75 = arith.constant 75 : index
    %c0_329 = arith.constant 0 : index
    %576 = vector.load %arg4[%c75, %c0_329] : memref<128x256xf32, #tpu.memory_space<vmem>>, vector<1x128xf32>
    %c70_i32_330 = arith.constant 70 : i32
    %577 = tpu.dynamic_rotate %576 by %c70_i32_330 dim 1 : vector<1x128xf32>, i32 -> vector<1x128xf32>
    %c70_i32_331 = arith.constant 70 : i32
    %578 = vector.broadcast %c70_i32_331 : i32 to vector<1x128xi32>
    %579 = arith.cmpi sge, %170, %578 : vector<1x128xi32>
    %580 = arith.select %579, %577, %575 : vector<1x128xi1>, vector<1x128xf32>
    %c76 = arith.constant 76 : index
    %c0_332 = arith.constant 0 : index
    %581 = vector.load %arg4[%c76, %c0_332] : memref<128x256xf32, #tpu.memory_space<vmem>>, vector<1x128xf32>
    %c88_i32_333 = arith.constant 88 : i32
    %582 = tpu.dynamic_rotate %581 by %c88_i32_333 dim 1 : vector<1x128xf32>, i32 -> vector<1x128xf32>
    %c88_i32_334 = arith.constant 88 : i32
    %583 = vector.broadcast %c88_i32_334 : i32 to vector<1x128xi32>
    %584 = arith.cmpi sge, %170, %583 : vector<1x128xi32>
    %585 = arith.select %584, %582, %580 : vector<1x128xi1>, vector<1x128xf32>
    %c77 = arith.constant 77 : index
    %c0_335 = arith.constant 0 : index
    %586 = vector.load %arg4[%c77, %c0_335] : memref<128x256xf32, #tpu.memory_space<vmem>>, vector<1x128xf32>
    %c106_i32_336 = arith.constant 106 : i32
    %587 = tpu.dynamic_rotate %586 by %c106_i32_336 dim 1 : vector<1x128xf32>, i32 -> vector<1x128xf32>
    %c106_i32_337 = arith.constant 106 : i32
    %588 = vector.broadcast %c106_i32_337 : i32 to vector<1x128xi32>
    %589 = arith.cmpi sge, %170, %588 : vector<1x128xi32>
    %590 = arith.select %589, %587, %585 : vector<1x128xi1>, vector<1x128xf32>
    %c78 = arith.constant 78 : index
    %c0_338 = arith.constant 0 : index
    %591 = vector.load %arg4[%c78, %c0_338] : memref<128x256xf32, #tpu.memory_space<vmem>>, vector<1x128xf32>
    %c124_i32_339 = arith.constant 124 : i32
    %592 = tpu.dynamic_rotate %591 by %c124_i32_339 dim 1 : vector<1x128xf32>, i32 -> vector<1x128xf32>
    %c124_i32_340 = arith.constant 124 : i32
    %593 = vector.broadcast %c124_i32_340 : i32 to vector<1x128xi32>
    %594 = arith.cmpi sge, %170, %593 : vector<1x128xi32>
    %595 = arith.select %594, %592, %590 : vector<1x128xi1>, vector<1x128xf32>
    %596 = arith.truncf %595 : vector<1x128xf32> to vector<1x128xbf16>
    %c10_341 = arith.constant 10 : index
    %c0_342 = arith.constant 0 : index
    %597 = vector.load %arg5[%c10_341, %c0_342] : memref<36x128xbf16, #tpu.memory_space<vmem>>, vector<1x128xbf16>
    tpu.vector_store %arg5[%c10_341, %c0_342], %596 {strides = array<i32>} : memref<36x128xbf16, #tpu.memory_space<vmem>>, vector<1x128xbf16>,
    %c78_343 = arith.constant 78 : index
    %c0_344 = arith.constant 0 : index
    %598 = vector.load %arg4[%c78_343, %c0_344] : memref<128x256xf32, #tpu.memory_space<vmem>>, vector<1x128xf32>
    %c124_i32_345 = arith.constant 124 : i32
    %599 = tpu.dynamic_rotate %598 by %c124_i32_345 dim 1 : vector<1x128xf32>, i32 -> vector<1x128xf32>
    %c79 = arith.constant 79 : index
    %c0_346 = arith.constant 0 : index
    %600 = vector.load %arg4[%c79, %c0_346] : memref<128x256xf32, #tpu.memory_space<vmem>>, vector<1x128xf32>
    %c14_i32_347 = arith.constant 14 : i32
    %601 = tpu.dynamic_rotate %600 by %c14_i32_347 dim 1 : vector<1x128xf32>, i32 -> vector<1x128xf32>
    %c14_i32_348 = arith.constant 14 : i32
    %602 = vector.broadcast %c14_i32_348 : i32 to vector<1x128xi32>
    %603 = arith.cmpi sge, %170, %602 : vector<1x128xi32>
    %604 = arith.select %603, %601, %599 : vector<1x128xi1>, vector<1x128xf32>
    %c80 = arith.constant 80 : index
    %c0_349 = arith.constant 0 : index
    %605 = vector.load %arg4[%c80, %c0_349] : memref<128x256xf32, #tpu.memory_space<vmem>>, vector<1x128xf32>
    %c32_i32_350 = arith.constant 32 : i32
    %606 = tpu.dynamic_rotate %605 by %c32_i32_350 dim 1 : vector<1x128xf32>, i32 -> vector<1x128xf32>
    %c32_i32_351 = arith.constant 32 : i32
    %607 = vector.broadcast %c32_i32_351 : i32 to vector<1x128xi32>
    %608 = arith.cmpi sge, %170, %607 : vector<1x128xi32>
    %609 = arith.select %608, %606, %604 : vector<1x128xi1>, vector<1x128xf32>
    %c81 = arith.constant 81 : index
    %c0_352 = arith.constant 0 : index
    %610 = vector.load %arg4[%c81, %c0_352] : memref<128x256xf32, #tpu.memory_space<vmem>>, vector<1x128xf32>
    %c50_i32_353 = arith.constant 50 : i32
    %611 = tpu.dynamic_rotate %610 by %c50_i32_353 dim 1 : vector<1x128xf32>, i32 -> vector<1x128xf32>
    %c50_i32_354 = arith.constant 50 : i32
    %612 = vector.broadcast %c50_i32_354 : i32 to vector<1x128xi32>
    %613 = arith.cmpi sge, %170, %612 : vector<1x128xi32>
    %614 = arith.select %613, %611, %609 : vector<1x128xi1>, vector<1x128xf32>
    %c82 = arith.constant 82 : index
    %c0_355 = arith.constant 0 : index
    %615 = vector.load %arg4[%c82, %c0_355] : memref<128x256xf32, #tpu.memory_space<vmem>>, vector<1x128xf32>
    %c68_i32_356 = arith.constant 68 : i32
    %616 = tpu.dynamic_rotate %615 by %c68_i32_356 dim 1 : vector<1x128xf32>, i32 -> vector<1x128xf32>
    %c68_i32_357 = arith.constant 68 : i32
    %617 = vector.broadcast %c68_i32_357 : i32 to vector<1x128xi32>
    %618 = arith.cmpi sge, %170, %617 : vector<1x128xi32>
    %619 = arith.select %618, %616, %614 : vector<1x128xi1>, vector<1x128xf32>
    %c83 = arith.constant 83 : index
    %c0_358 = arith.constant 0 : index
    %620 = vector.load %arg4[%c83, %c0_358] : memref<128x256xf32, #tpu.memory_space<vmem>>, vector<1x128xf32>
    %c86_i32_359 = arith.constant 86 : i32
    %621 = tpu.dynamic_rotate %620 by %c86_i32_359 dim 1 : vector<1x128xf32>, i32 -> vector<1x128xf32>
    %c86_i32_360 = arith.constant 86 : i32
    %622 = vector.broadcast %c86_i32_360 : i32 to vector<1x128xi32>
    %623 = arith.cmpi sge, %170, %622 : vector<1x128xi32>
    %624 = arith.select %623, %621, %619 : vector<1x128xi1>, vector<1x128xf32>
    %c84 = arith.constant 84 : index
    %c0_361 = arith.constant 0 : index
    %625 = vector.load %arg4[%c84, %c0_361] : memref<128x256xf32, #tpu.memory_space<vmem>>, vector<1x128xf32>
    %c104_i32_362 = arith.constant 104 : i32
    %626 = tpu.dynamic_rotate %625 by %c104_i32_362 dim 1 : vector<1x128xf32>, i32 -> vector<1x128xf32>
    %c104_i32_363 = arith.constant 104 : i32
    %627 = vector.broadcast %c104_i32_363 : i32 to vector<1x128xi32>
    %628 = arith.cmpi sge, %170, %627 : vector<1x128xi32>
    %629 = arith.select %628, %626, %624 : vector<1x128xi1>, vector<1x128xf32>
    %c85 = arith.constant 85 : index
    %c0_364 = arith.constant 0 : index
    %630 = vector.load %arg4[%c85, %c0_364] : memref<128x256xf32, #tpu.memory_space<vmem>>, vector<1x128xf32>
    %c122_i32_365 = arith.constant 122 : i32
    %631 = tpu.dynamic_rotate %630 by %c122_i32_365 dim 1 : vector<1x128xf32>, i32 -> vector<1x128xf32>
    %c122_i32_366 = arith.constant 122 : i32
    %632 = vector.broadcast %c122_i32_366 : i32 to vector<1x128xi32>
    %633 = arith.cmpi sge, %170, %632 : vector<1x128xi32>
    %634 = arith.select %633, %631, %629 : vector<1x128xi1>, vector<1x128xf32>
    %635 = arith.truncf %634 : vector<1x128xf32> to vector<1x128xbf16>
    %c11_367 = arith.constant 11 : index
    %c0_368 = arith.constant 0 : index
    %636 = vector.load %arg5[%c11_367, %c0_368] : memref<36x128xbf16, #tpu.memory_space<vmem>>, vector<1x128xbf16>
    tpu.vector_store %arg5[%c11_367, %c0_368], %635 {strides = array<i32>} : memref<36x128xbf16, #tpu.memory_space<vmem>>, vector<1x128xbf16>,
    %c85_369 = arith.constant 85 : index
    %c0_370 = arith.constant 0 : index
    %637 = vector.load %arg4[%c85_369, %c0_370] : memref<128x256xf32, #tpu.memory_space<vmem>>, vector<1x128xf32>
    %c122_i32_371 = arith.constant 122 : i32
    %638 = tpu.dynamic_rotate %637 by %c122_i32_371 dim 1 : vector<1x128xf32>, i32 -> vector<1x128xf32>
    %c86 = arith.constant 86 : index
    %c0_372 = arith.constant 0 : index
    %639 = vector.load %arg4[%c86, %c0_372] : memref<128x256xf32, #tpu.memory_space<vmem>>, vector<1x128xf32>
    %c12_i32_373 = arith.constant 12 : i32
    %640 = tpu.dynamic_rotate %639 by %c12_i32_373 dim 1 : vector<1x128xf32>, i32 -> vector<1x128xf32>
    %c12_i32_374 = arith.constant 12 : i32
    %641 = vector.broadcast %c12_i32_374 : i32 to vector<1x128xi32>
    %642 = arith.cmpi sge, %170, %641 : vector<1x128xi32>
    %643 = arith.select %642, %640, %638 : vector<1x128xi1>, vector<1x128xf32>
    %c87 = arith.constant 87 : index
    %c0_375 = arith.constant 0 : index
    %644 = vector.load %arg4[%c87, %c0_375] : memref<128x256xf32, #tpu.memory_space<vmem>>, vector<1x128xf32>
    %c30_i32_376 = arith.constant 30 : i32
    %645 = tpu.dynamic_rotate %644 by %c30_i32_376 dim 1 : vector<1x128xf32>, i32 -> vector<1x128xf32>
    %c30_i32_377 = arith.constant 30 : i32
    %646 = vector.broadcast %c30_i32_377 : i32 to vector<1x128xi32>
    %647 = arith.cmpi sge, %170, %646 : vector<1x128xi32>
    %648 = arith.select %647, %645, %643 : vector<1x128xi1>, vector<1x128xf32>
    %c88 = arith.constant 88 : index
    %c0_378 = arith.constant 0 : index
    %649 = vector.load %arg4[%c88, %c0_378] : memref<128x256xf32, #tpu.memory_space<vmem>>, vector<1x128xf32>
    %c48_i32_379 = arith.constant 48 : i32
    %650 = tpu.dynamic_rotate %649 by %c48_i32_379 dim 1 : vector<1x128xf32>, i32 -> vector<1x128xf32>
    %c48_i32_380 = arith.constant 48 : i32
    %651 = vector.broadcast %c48_i32_380 : i32 to vector<1x128xi32>
    %652 = arith.cmpi sge, %170, %651 : vector<1x128xi32>
    %653 = arith.select %652, %650, %648 : vector<1x128xi1>, vector<1x128xf32>
    %c89 = arith.constant 89 : index
    %c0_381 = arith.constant 0 : index
    %654 = vector.load %arg4[%c89, %c0_381] : memref<128x256xf32, #tpu.memory_space<vmem>>, vector<1x128xf32>
    %c66_i32_382 = arith.constant 66 : i32
    %655 = tpu.dynamic_rotate %654 by %c66_i32_382 dim 1 : vector<1x128xf32>, i32 -> vector<1x128xf32>
    %c66_i32_383 = arith.constant 66 : i32
    %656 = vector.broadcast %c66_i32_383 : i32 to vector<1x128xi32>
    %657 = arith.cmpi sge, %170, %656 : vector<1x128xi32>
    %658 = arith.select %657, %655, %653 : vector<1x128xi1>, vector<1x128xf32>
    %c90 = arith.constant 90 : index
    %c0_384 = arith.constant 0 : index
    %659 = vector.load %arg4[%c90, %c0_384] : memref<128x256xf32, #tpu.memory_space<vmem>>, vector<1x128xf32>
    %c84_i32_385 = arith.constant 84 : i32
    %660 = tpu.dynamic_rotate %659 by %c84_i32_385 dim 1 : vector<1x128xf32>, i32 -> vector<1x128xf32>
    %c84_i32_386 = arith.constant 84 : i32
    %661 = vector.broadcast %c84_i32_386 : i32 to vector<1x128xi32>
    %662 = arith.cmpi sge, %170, %661 : vector<1x128xi32>
    %663 = arith.select %662, %660, %658 : vector<1x128xi1>, vector<1x128xf32>
    %c91 = arith.constant 91 : index
    %c0_387 = arith.constant 0 : index
    %664 = vector.load %arg4[%c91, %c0_387] : memref<128x256xf32, #tpu.memory_space<vmem>>, vector<1x128xf32>
    %c102_i32_388 = arith.constant 102 : i32
    %665 = tpu.dynamic_rotate %664 by %c102_i32_388 dim 1 : vector<1x128xf32>, i32 -> vector<1x128xf32>
    %c102_i32_389 = arith.constant 102 : i32
    %666 = vector.broadcast %c102_i32_389 : i32 to vector<1x128xi32>
    %667 = arith.cmpi sge, %170, %666 : vector<1x128xi32>
    %668 = arith.select %667, %665, %663 : vector<1x128xi1>, vector<1x128xf32>
    %c92 = arith.constant 92 : index
    %c0_390 = arith.constant 0 : index
    %669 = vector.load %arg4[%c92, %c0_390] : memref<128x256xf32, #tpu.memory_space<vmem>>, vector<1x128xf32>
    %c120_i32_391 = arith.constant 120 : i32
    %670 = tpu.dynamic_rotate %669 by %c120_i32_391 dim 1 : vector<1x128xf32>, i32 -> vector<1x128xf32>
    %c120_i32_392 = arith.constant 120 : i32
    %671 = vector.broadcast %c120_i32_392 : i32 to vector<1x128xi32>
    %672 = arith.cmpi sge, %170, %671 : vector<1x128xi32>
    %673 = arith.select %672, %670, %668 : vector<1x128xi1>, vector<1x128xf32>
    %674 = arith.truncf %673 : vector<1x128xf32> to vector<1x128xbf16>
    %c12_393 = arith.constant 12 : index
    %c0_394 = arith.constant 0 : index
    %675 = vector.load %arg5[%c12_393, %c0_394] : memref<36x128xbf16, #tpu.memory_space<vmem>>, vector<1x128xbf16>
    tpu.vector_store %arg5[%c12_393, %c0_394], %674 {strides = array<i32>} : memref<36x128xbf16, #tpu.memory_space<vmem>>, vector<1x128xbf16>,
    %c92_395 = arith.constant 92 : index
    %c0_396 = arith.constant 0 : index
    %676 = vector.load %arg4[%c92_395, %c0_396] : memref<128x256xf32, #tpu.memory_space<vmem>>, vector<1x128xf32>
    %c120_i32_397 = arith.constant 120 : i32
    %677 = tpu.dynamic_rotate %676 by %c120_i32_397 dim 1 : vector<1x128xf32>, i32 -> vector<1x128xf32>
    %c93 = arith.constant 93 : index
    %c0_398 = arith.constant 0 : index
    %678 = vector.load %arg4[%c93, %c0_398] : memref<128x256xf32, #tpu.memory_space<vmem>>, vector<1x128xf32>
    %c10_i32_399 = arith.constant 10 : i32
    %679 = tpu.dynamic_rotate %678 by %c10_i32_399 dim 1 : vector<1x128xf32>, i32 -> vector<1x128xf32>
    %c10_i32_400 = arith.constant 10 : i32
    %680 = vector.broadcast %c10_i32_400 : i32 to vector<1x128xi32>
    %681 = arith.cmpi sge, %170, %680 : vector<1x128xi32>
    %682 = arith.select %681, %679, %677 : vector<1x128xi1>, vector<1x128xf32>
    %c94 = arith.constant 94 : index
    %c0_401 = arith.constant 0 : index
    %683 = vector.load %arg4[%c94, %c0_401] : memref<128x256xf32, #tpu.memory_space<vmem>>, vector<1x128xf32>
    %c28_i32_402 = arith.constant 28 : i32
    %684 = tpu.dynamic_rotate %683 by %c28_i32_402 dim 1 : vector<1x128xf32>, i32 -> vector<1x128xf32>
    %c28_i32_403 = arith.constant 28 : i32
    %685 = vector.broadcast %c28_i32_403 : i32 to vector<1x128xi32>
    %686 = arith.cmpi sge, %170, %685 : vector<1x128xi32>
    %687 = arith.select %686, %684, %682 : vector<1x128xi1>, vector<1x128xf32>
    %c95 = arith.constant 95 : index
    %c0_404 = arith.constant 0 : index
    %688 = vector.load %arg4[%c95, %c0_404] : memref<128x256xf32, #tpu.memory_space<vmem>>, vector<1x128xf32>
    %c46_i32_405 = arith.constant 46 : i32
    %689 = tpu.dynamic_rotate %688 by %c46_i32_405 dim 1 : vector<1x128xf32>, i32 -> vector<1x128xf32>
    %c46_i32_406 = arith.constant 46 : i32
    %690 = vector.broadcast %c46_i32_406 : i32 to vector<1x128xi32>
    %691 = arith.cmpi sge, %170, %690 : vector<1x128xi32>
    %692 = arith.select %691, %689, %687 : vector<1x128xi1>, vector<1x128xf32>
    %c96_407 = arith.constant 96 : index
    %c0_408 = arith.constant 0 : index
    %693 = vector.load %arg4[%c96_407, %c0_408] : memref<128x256xf32, #tpu.memory_space<vmem>>, vector<1x128xf32>
    %c64_i32_409 = arith.constant 64 : i32
    %694 = tpu.dynamic_rotate %693 by %c64_i32_409 dim 1 : vector<1x128xf32>, i32 -> vector<1x128xf32>
    %c64_i32_410 = arith.constant 64 : i32
    %695 = vector.broadcast %c64_i32_410 : i32 to vector<1x128xi32>
    %696 = arith.cmpi sge, %170, %695 : vector<1x128xi32>
    %697 = arith.select %696, %694, %692 : vector<1x128xi1>, vector<1x128xf32>
    %c97 = arith.constant 97 : index
    %c0_411 = arith.constant 0 : index
    %698 = vector.load %arg4[%c97, %c0_411] : memref<128x256xf32, #tpu.memory_space<vmem>>, vector<1x128xf32>
    %c82_i32_412 = arith.constant 82 : i32
    %699 = tpu.dynamic_rotate %698 by %c82_i32_412 dim 1 : vector<1x128xf32>, i32 -> vector<1x128xf32>
    %c82_i32_413 = arith.constant 82 : i32
    %700 = vector.broadcast %c82_i32_413 : i32 to vector<1x128xi32>
    %701 = arith.cmpi sge, %170, %700 : vector<1x128xi32>
    %702 = arith.select %701, %699, %697 : vector<1x128xi1>, vector<1x128xf32>
    %c98 = arith.constant 98 : index
    %c0_414 = arith.constant 0 : index
    %703 = vector.load %arg4[%c98, %c0_414] : memref<128x256xf32, #tpu.memory_space<vmem>>, vector<1x128xf32>
    %c100_i32_415 = arith.constant 100 : i32
    %704 = tpu.dynamic_rotate %703 by %c100_i32_415 dim 1 : vector<1x128xf32>, i32 -> vector<1x128xf32>
    %c100_i32_416 = arith.constant 100 : i32
    %705 = vector.broadcast %c100_i32_416 : i32 to vector<1x128xi32>
    %706 = arith.cmpi sge, %170, %705 : vector<1x128xi32>
    %707 = arith.select %706, %704, %702 : vector<1x128xi1>, vector<1x128xf32>
    %c99 = arith.constant 99 : index
    %c0_417 = arith.constant 0 : index
    %708 = vector.load %arg4[%c99, %c0_417] : memref<128x256xf32, #tpu.memory_space<vmem>>, vector<1x128xf32>
    %c118_i32_418 = arith.constant 118 : i32
    %709 = tpu.dynamic_rotate %708 by %c118_i32_418 dim 1 : vector<1x128xf32>, i32 -> vector<1x128xf32>
    %c118_i32_419 = arith.constant 118 : i32
    %710 = vector.broadcast %c118_i32_419 : i32 to vector<1x128xi32>
    %711 = arith.cmpi sge, %170, %710 : vector<1x128xi32>
    %712 = arith.select %711, %709, %707 : vector<1x128xi1>, vector<1x128xf32>
    %713 = arith.truncf %712 : vector<1x128xf32> to vector<1x128xbf16>
    %c13_420 = arith.constant 13 : index
    %c0_421 = arith.constant 0 : index
    %714 = vector.load %arg5[%c13_420, %c0_421] : memref<36x128xbf16, #tpu.memory_space<vmem>>, vector<1x128xbf16>
    tpu.vector_store %arg5[%c13_420, %c0_421], %713 {strides = array<i32>} : memref<36x128xbf16, #tpu.memory_space<vmem>>, vector<1x128xbf16>,
    %c99_422 = arith.constant 99 : index
    %c0_423 = arith.constant 0 : index
    %715 = vector.load %arg4[%c99_422, %c0_423] : memref<128x256xf32, #tpu.memory_space<vmem>>, vector<1x128xf32>
    %c118_i32_424 = arith.constant 118 : i32
    %716 = tpu.dynamic_rotate %715 by %c118_i32_424 dim 1 : vector<1x128xf32>, i32 -> vector<1x128xf32>
    %c100 = arith.constant 100 : index
    %c0_425 = arith.constant 0 : index
    %717 = vector.load %arg4[%c100, %c0_425] : memref<128x256xf32, #tpu.memory_space<vmem>>, vector<1x128xf32>
    %c8_i32_426 = arith.constant 8 : i32
    %718 = tpu.dynamic_rotate %717 by %c8_i32_426 dim 1 : vector<1x128xf32>, i32 -> vector<1x128xf32>
    %c8_i32_427 = arith.constant 8 : i32
    %719 = vector.broadcast %c8_i32_427 : i32 to vector<1x128xi32>
    %720 = arith.cmpi sge, %170, %719 : vector<1x128xi32>
    %721 = arith.select %720, %718, %716 : vector<1x128xi1>, vector<1x128xf32>
    %c101 = arith.constant 101 : index
    %c0_428 = arith.constant 0 : index
    %722 = vector.load %arg4[%c101, %c0_428] : memref<128x256xf32, #tpu.memory_space<vmem>>, vector<1x128xf32>
    %c26_i32_429 = arith.constant 26 : i32
    %723 = tpu.dynamic_rotate %722 by %c26_i32_429 dim 1 : vector<1x128xf32>, i32 -> vector<1x128xf32>
    %c26_i32_430 = arith.constant 26 : i32
    %724 = vector.broadcast %c26_i32_430 : i32 to vector<1x128xi32>
    %725 = arith.cmpi sge, %170, %724 : vector<1x128xi32>
    %726 = arith.select %725, %723, %721 : vector<1x128xi1>, vector<1x128xf32>
    %c102 = arith.constant 102 : index
    %c0_431 = arith.constant 0 : index
    %727 = vector.load %arg4[%c102, %c0_431] : memref<128x256xf32, #tpu.memory_space<vmem>>, vector<1x128xf32>
    %c44_i32_432 = arith.constant 44 : i32
    %728 = tpu.dynamic_rotate %727 by %c44_i32_432 dim 1 : vector<1x128xf32>, i32 -> vector<1x128xf32>
    %c44_i32_433 = arith.constant 44 : i32
    %729 = vector.broadcast %c44_i32_433 : i32 to vector<1x128xi32>
    %730 = arith.cmpi sge, %170, %729 : vector<1x128xi32>
    %731 = arith.select %730, %728, %726 : vector<1x128xi1>, vector<1x128xf32>
    %c103 = arith.constant 103 : index
    %c0_434 = arith.constant 0 : index
    %732 = vector.load %arg4[%c103, %c0_434] : memref<128x256xf32, #tpu.memory_space<vmem>>, vector<1x128xf32>
    %c62_i32_435 = arith.constant 62 : i32
    %733 = tpu.dynamic_rotate %732 by %c62_i32_435 dim 1 : vector<1x128xf32>, i32 -> vector<1x128xf32>
    %c62_i32_436 = arith.constant 62 : i32
    %734 = vector.broadcast %c62_i32_436 : i32 to vector<1x128xi32>
    %735 = arith.cmpi sge, %170, %734 : vector<1x128xi32>
    %736 = arith.select %735, %733, %731 : vector<1x128xi1>, vector<1x128xf32>
    %c104 = arith.constant 104 : index
    %c0_437 = arith.constant 0 : index
    %737 = vector.load %arg4[%c104, %c0_437] : memref<128x256xf32, #tpu.memory_space<vmem>>, vector<1x128xf32>
    %c80_i32_438 = arith.constant 80 : i32
    %738 = tpu.dynamic_rotate %737 by %c80_i32_438 dim 1 : vector<1x128xf32>, i32 -> vector<1x128xf32>
    %c80_i32_439 = arith.constant 80 : i32
    %739 = vector.broadcast %c80_i32_439 : i32 to vector<1x128xi32>
    %740 = arith.cmpi sge, %170, %739 : vector<1x128xi32>
    %741 = arith.select %740, %738, %736 : vector<1x128xi1>, vector<1x128xf32>
    %c105 = arith.constant 105 : index
    %c0_440 = arith.constant 0 : index
    %742 = vector.load %arg4[%c105, %c0_440] : memref<128x256xf32, #tpu.memory_space<vmem>>, vector<1x128xf32>
    %c98_i32_441 = arith.constant 98 : i32
    %743 = tpu.dynamic_rotate %742 by %c98_i32_441 dim 1 : vector<1x128xf32>, i32 -> vector<1x128xf32>
    %c98_i32_442 = arith.constant 98 : i32
    %744 = vector.broadcast %c98_i32_442 : i32 to vector<1x128xi32>
    %745 = arith.cmpi sge, %170, %744 : vector<1x128xi32>
    %746 = arith.select %745, %743, %741 : vector<1x128xi1>, vector<1x128xf32>
    %c106 = arith.constant 106 : index
    %c0_443 = arith.constant 0 : index
    %747 = vector.load %arg4[%c106, %c0_443] : memref<128x256xf32, #tpu.memory_space<vmem>>, vector<1x128xf32>
    %c116_i32_444 = arith.constant 116 : i32
    %748 = tpu.dynamic_rotate %747 by %c116_i32_444 dim 1 : vector<1x128xf32>, i32 -> vector<1x128xf32>
    %c116_i32_445 = arith.constant 116 : i32
    %749 = vector.broadcast %c116_i32_445 : i32 to vector<1x128xi32>
    %750 = arith.cmpi sge, %170, %749 : vector<1x128xi32>
    %751 = arith.select %750, %748, %746 : vector<1x128xi1>, vector<1x128xf32>
    %752 = arith.truncf %751 : vector<1x128xf32> to vector<1x128xbf16>
    %c14_446 = arith.constant 14 : index
    %c0_447 = arith.constant 0 : index
    %753 = vector.load %arg5[%c14_446, %c0_447] : memref<36x128xbf16, #tpu.memory_space<vmem>>, vector<1x128xbf16>
    tpu.vector_store %arg5[%c14_446, %c0_447], %752 {strides = array<i32>} : memref<36x128xbf16, #tpu.memory_space<vmem>>, vector<1x128xbf16>,
    %c106_448 = arith.constant 106 : index
    %c0_449 = arith.constant 0 : index
    %754 = vector.load %arg4[%c106_448, %c0_449] : memref<128x256xf32, #tpu.memory_space<vmem>>, vector<1x128xf32>
    %c116_i32_450 = arith.constant 116 : i32
    %755 = tpu.dynamic_rotate %754 by %c116_i32_450 dim 1 : vector<1x128xf32>, i32 -> vector<1x128xf32>
    %c107 = arith.constant 107 : index
    %c0_451 = arith.constant 0 : index
    %756 = vector.load %arg4[%c107, %c0_451] : memref<128x256xf32, #tpu.memory_space<vmem>>, vector<1x128xf32>
    %c6_i32_452 = arith.constant 6 : i32
    %757 = tpu.dynamic_rotate %756 by %c6_i32_452 dim 1 : vector<1x128xf32>, i32 -> vector<1x128xf32>
    %c6_i32_453 = arith.constant 6 : i32
    %758 = vector.broadcast %c6_i32_453 : i32 to vector<1x128xi32>
    %759 = arith.cmpi sge, %170, %758 : vector<1x128xi32>
    %760 = arith.select %759, %757, %755 : vector<1x128xi1>, vector<1x128xf32>
    %c108 = arith.constant 108 : index
    %c0_454 = arith.constant 0 : index
    %761 = vector.load %arg4[%c108, %c0_454] : memref<128x256xf32, #tpu.memory_space<vmem>>, vector<1x128xf32>
    %c24_i32_455 = arith.constant 24 : i32
    %762 = tpu.dynamic_rotate %761 by %c24_i32_455 dim 1 : vector<1x128xf32>, i32 -> vector<1x128xf32>
    %c24_i32_456 = arith.constant 24 : i32
    %763 = vector.broadcast %c24_i32_456 : i32 to vector<1x128xi32>
    %764 = arith.cmpi sge, %170, %763 : vector<1x128xi32>
    %765 = arith.select %764, %762, %760 : vector<1x128xi1>, vector<1x128xf32>
    %c109 = arith.constant 109 : index
    %c0_457 = arith.constant 0 : index
    %766 = vector.load %arg4[%c109, %c0_457] : memref<128x256xf32, #tpu.memory_space<vmem>>, vector<1x128xf32>
    %c42_i32_458 = arith.constant 42 : i32
    %767 = tpu.dynamic_rotate %766 by %c42_i32_458 dim 1 : vector<1x128xf32>, i32 -> vector<1x128xf32>
    %c42_i32_459 = arith.constant 42 : i32
    %768 = vector.broadcast %c42_i32_459 : i32 to vector<1x128xi32>
    %769 = arith.cmpi sge, %170, %768 : vector<1x128xi32>
    %770 = arith.select %769, %767, %765 : vector<1x128xi1>, vector<1x128xf32>
    %c110 = arith.constant 110 : index
    %c0_460 = arith.constant 0 : index
    %771 = vector.load %arg4[%c110, %c0_460] : memref<128x256xf32, #tpu.memory_space<vmem>>, vector<1x128xf32>
    %c60_i32_461 = arith.constant 60 : i32
    %772 = tpu.dynamic_rotate %771 by %c60_i32_461 dim 1 : vector<1x128xf32>, i32 -> vector<1x128xf32>
    %c60_i32_462 = arith.constant 60 : i32
    %773 = vector.broadcast %c60_i32_462 : i32 to vector<1x128xi32>
    %774 = arith.cmpi sge, %170, %773 : vector<1x128xi32>
    %775 = arith.select %774, %772, %770 : vector<1x128xi1>, vector<1x128xf32>
    %c111 = arith.constant 111 : index
    %c0_463 = arith.constant 0 : index
    %776 = vector.load %arg4[%c111, %c0_463] : memref<128x256xf32, #tpu.memory_space<vmem>>, vector<1x128xf32>
    %c78_i32_464 = arith.constant 78 : i32
    %777 = tpu.dynamic_rotate %776 by %c78_i32_464 dim 1 : vector<1x128xf32>, i32 -> vector<1x128xf32>
    %c78_i32_465 = arith.constant 78 : i32
    %778 = vector.broadcast %c78_i32_465 : i32 to vector<1x128xi32>
    %779 = arith.cmpi sge, %170, %778 : vector<1x128xi32>
    %780 = arith.select %779, %777, %775 : vector<1x128xi1>, vector<1x128xf32>
    %c112 = arith.constant 112 : index
    %c0_466 = arith.constant 0 : index
    %781 = vector.load %arg4[%c112, %c0_466] : memref<128x256xf32, #tpu.memory_space<vmem>>, vector<1x128xf32>
    %c96_i32_467 = arith.constant 96 : i32
    %782 = tpu.dynamic_rotate %781 by %c96_i32_467 dim 1 : vector<1x128xf32>, i32 -> vector<1x128xf32>
    %c96_i32_468 = arith.constant 96 : i32
    %783 = vector.broadcast %c96_i32_468 : i32 to vector<1x128xi32>
    %784 = arith.cmpi sge, %170, %783 : vector<1x128xi32>
    %785 = arith.select %784, %782, %780 : vector<1x128xi1>, vector<1x128xf32>
    %c113 = arith.constant 113 : index
    %c0_469 = arith.constant 0 : index
    %786 = vector.load %arg4[%c113, %c0_469] : memref<128x256xf32, #tpu.memory_space<vmem>>, vector<1x128xf32>
    %c114_i32_470 = arith.constant 114 : i32
    %787 = tpu.dynamic_rotate %786 by %c114_i32_470 dim 1 : vector<1x128xf32>, i32 -> vector<1x128xf32>
    %c114_i32_471 = arith.constant 114 : i32
    %788 = vector.broadcast %c114_i32_471 : i32 to vector<1x128xi32>
    %789 = arith.cmpi sge, %170, %788 : vector<1x128xi32>
    %790 = arith.select %789, %787, %785 : vector<1x128xi1>, vector<1x128xf32>
    %791 = arith.truncf %790 : vector<1x128xf32> to vector<1x128xbf16>
    %c15_472 = arith.constant 15 : index
    %c0_473 = arith.constant 0 : index
    %792 = vector.load %arg5[%c15_472, %c0_473] : memref<36x128xbf16, #tpu.memory_space<vmem>>, vector<1x128xbf16>
    tpu.vector_store %arg5[%c15_472, %c0_473], %791 {strides = array<i32>} : memref<36x128xbf16, #tpu.memory_space<vmem>>, vector<1x128xbf16>,
    %c113_474 = arith.constant 113 : index
    %c0_475 = arith.constant 0 : index
    %793 = vector.load %arg4[%c113_474, %c0_475] : memref<128x256xf32, #tpu.memory_space<vmem>>, vector<1x128xf32>
    %c114_i32_476 = arith.constant 114 : i32
    %794 = tpu.dynamic_rotate %793 by %c114_i32_476 dim 1 : vector<1x128xf32>, i32 -> vector<1x128xf32>
    %c114 = arith.constant 114 : index
    %c0_477 = arith.constant 0 : index
    %795 = vector.load %arg4[%c114, %c0_477] : memref<128x256xf32, #tpu.memory_space<vmem>>, vector<1x128xf32>
    %c4_i32_478 = arith.constant 4 : i32
    %796 = tpu.dynamic_rotate %795 by %c4_i32_478 dim 1 : vector<1x128xf32>, i32 -> vector<1x128xf32>
    %c4_i32_479 = arith.constant 4 : i32
    %797 = vector.broadcast %c4_i32_479 : i32 to vector<1x128xi32>
    %798 = arith.cmpi sge, %170, %797 : vector<1x128xi32>
    %799 = arith.select %798, %796, %794 : vector<1x128xi1>, vector<1x128xf32>
    %c115 = arith.constant 115 : index
    %c0_480 = arith.constant 0 : index
    %800 = vector.load %arg4[%c115, %c0_480] : memref<128x256xf32, #tpu.memory_space<vmem>>, vector<1x128xf32>
    %c22_i32_481 = arith.constant 22 : i32
    %801 = tpu.dynamic_rotate %800 by %c22_i32_481 dim 1 : vector<1x128xf32>, i32 -> vector<1x128xf32>
    %c22_i32_482 = arith.constant 22 : i32
    %802 = vector.broadcast %c22_i32_482 : i32 to vector<1x128xi32>
    %803 = arith.cmpi sge, %170, %802 : vector<1x128xi32>
    %804 = arith.select %803, %801, %799 : vector<1x128xi1>, vector<1x128xf32>
    %c116 = arith.constant 116 : index
    %c0_483 = arith.constant 0 : index
    %805 = vector.load %arg4[%c116, %c0_483] : memref<128x256xf32, #tpu.memory_space<vmem>>, vector<1x128xf32>
    %c40_i32_484 = arith.constant 40 : i32
    %806 = tpu.dynamic_rotate %805 by %c40_i32_484 dim 1 : vector<1x128xf32>, i32 -> vector<1x128xf32>
    %c40_i32_485 = arith.constant 40 : i32
    %807 = vector.broadcast %c40_i32_485 : i32 to vector<1x128xi32>
    %808 = arith.cmpi sge, %170, %807 : vector<1x128xi32>
    %809 = arith.select %808, %806, %804 : vector<1x128xi1>, vector<1x128xf32>
    %c117 = arith.constant 117 : index
    %c0_486 = arith.constant 0 : index
    %810 = vector.load %arg4[%c117, %c0_486] : memref<128x256xf32, #tpu.memory_space<vmem>>, vector<1x128xf32>
    %c58_i32_487 = arith.constant 58 : i32
    %811 = tpu.dynamic_rotate %810 by %c58_i32_487 dim 1 : vector<1x128xf32>, i32 -> vector<1x128xf32>
    %c58_i32_488 = arith.constant 58 : i32
    %812 = vector.broadcast %c58_i32_488 : i32 to vector<1x128xi32>
    %813 = arith.cmpi sge, %170, %812 : vector<1x128xi32>
    %814 = arith.select %813, %811, %809 : vector<1x128xi1>, vector<1x128xf32>
    %c118 = arith.constant 118 : index
    %c0_489 = arith.constant 0 : index
    %815 = vector.load %arg4[%c118, %c0_489] : memref<128x256xf32, #tpu.memory_space<vmem>>, vector<1x128xf32>
    %c76_i32_490 = arith.constant 76 : i32
    %816 = tpu.dynamic_rotate %815 by %c76_i32_490 dim 1 : vector<1x128xf32>, i32 -> vector<1x128xf32>
    %c76_i32_491 = arith.constant 76 : i32
    %817 = vector.broadcast %c76_i32_491 : i32 to vector<1x128xi32>
    %818 = arith.cmpi sge, %170, %817 : vector<1x128xi32>
    %819 = arith.select %818, %816, %814 : vector<1x128xi1>, vector<1x128xf32>
    %c119 = arith.constant 119 : index
    %c0_492 = arith.constant 0 : index
    %820 = vector.load %arg4[%c119, %c0_492] : memref<128x256xf32, #tpu.memory_space<vmem>>, vector<1x128xf32>
    %c94_i32_493 = arith.constant 94 : i32
    %821 = tpu.dynamic_rotate %820 by %c94_i32_493 dim 1 : vector<1x128xf32>, i32 -> vector<1x128xf32>
    %c94_i32_494 = arith.constant 94 : i32
    %822 = vector.broadcast %c94_i32_494 : i32 to vector<1x128xi32>
    %823 = arith.cmpi sge, %170, %822 : vector<1x128xi32>
    %824 = arith.select %823, %821, %819 : vector<1x128xi1>, vector<1x128xf32>
    %c120 = arith.constant 120 : index
    %c0_495 = arith.constant 0 : index
    %825 = vector.load %arg4[%c120, %c0_495] : memref<128x256xf32, #tpu.memory_space<vmem>>, vector<1x128xf32>
    %c112_i32_496 = arith.constant 112 : i32
    %826 = tpu.dynamic_rotate %825 by %c112_i32_496 dim 1 : vector<1x128xf32>, i32 -> vector<1x128xf32>
    %c112_i32_497 = arith.constant 112 : i32
    %827 = vector.broadcast %c112_i32_497 : i32 to vector<1x128xi32>
    %828 = arith.cmpi sge, %170, %827 : vector<1x128xi32>
    %829 = arith.select %828, %826, %824 : vector<1x128xi1>, vector<1x128xf32>
    %830 = arith.truncf %829 : vector<1x128xf32> to vector<1x128xbf16>
    %c16_498 = arith.constant 16 : index
    %c0_499 = arith.constant 0 : index
    %831 = vector.load %arg5[%c16_498, %c0_499] : memref<36x128xbf16, #tpu.memory_space<vmem>>, vector<1x128xbf16>
    tpu.vector_store %arg5[%c16_498, %c0_499], %830 {strides = array<i32>} : memref<36x128xbf16, #tpu.memory_space<vmem>>, vector<1x128xbf16>,
    %c120_500 = arith.constant 120 : index
    %c0_501 = arith.constant 0 : index
    %832 = vector.load %arg4[%c120_500, %c0_501] : memref<128x256xf32, #tpu.memory_space<vmem>>, vector<1x128xf32>
    %c112_i32_502 = arith.constant 112 : i32
    %833 = tpu.dynamic_rotate %832 by %c112_i32_502 dim 1 : vector<1x128xf32>, i32 -> vector<1x128xf32>
    %c121 = arith.constant 121 : index
    %c0_503 = arith.constant 0 : index
    %834 = vector.load %arg4[%c121, %c0_503] : memref<128x256xf32, #tpu.memory_space<vmem>>, vector<1x128xf32>
    %c2_i32_504 = arith.constant 2 : i32
    %835 = tpu.dynamic_rotate %834 by %c2_i32_504 dim 1 : vector<1x128xf32>, i32 -> vector<1x128xf32>
    %c2_i32_505 = arith.constant 2 : i32
    %836 = vector.broadcast %c2_i32_505 : i32 to vector<1x128xi32>
    %837 = arith.cmpi sge, %170, %836 : vector<1x128xi32>
    %838 = arith.select %837, %835, %833 : vector<1x128xi1>, vector<1x128xf32>
    %c122 = arith.constant 122 : index
    %c0_506 = arith.constant 0 : index
    %839 = vector.load %arg4[%c122, %c0_506] : memref<128x256xf32, #tpu.memory_space<vmem>>, vector<1x128xf32>
    %c20_i32_507 = arith.constant 20 : i32
    %840 = tpu.dynamic_rotate %839 by %c20_i32_507 dim 1 : vector<1x128xf32>, i32 -> vector<1x128xf32>
    %c20_i32_508 = arith.constant 20 : i32
    %841 = vector.broadcast %c20_i32_508 : i32 to vector<1x128xi32>
    %842 = arith.cmpi sge, %170, %841 : vector<1x128xi32>
    %843 = arith.select %842, %840, %838 : vector<1x128xi1>, vector<1x128xf32>
    %c123 = arith.constant 123 : index
    %c0_509 = arith.constant 0 : index
    %844 = vector.load %arg4[%c123, %c0_509] : memref<128x256xf32, #tpu.memory_space<vmem>>, vector<1x128xf32>
    %c38_i32_510 = arith.constant 38 : i32
    %845 = tpu.dynamic_rotate %844 by %c38_i32_510 dim 1 : vector<1x128xf32>, i32 -> vector<1x128xf32>
    %c38_i32_511 = arith.constant 38 : i32
    %846 = vector.broadcast %c38_i32_511 : i32 to vector<1x128xi32>
    %847 = arith.cmpi sge, %170, %846 : vector<1x128xi32>
    %848 = arith.select %847, %845, %843 : vector<1x128xi1>, vector<1x128xf32>
    %c124 = arith.constant 124 : index
    %c0_512 = arith.constant 0 : index
    %849 = vector.load %arg4[%c124, %c0_512] : memref<128x256xf32, #tpu.memory_space<vmem>>, vector<1x128xf32>
    %c56_i32_513 = arith.constant 56 : i32
    %850 = tpu.dynamic_rotate %849 by %c56_i32_513 dim 1 : vector<1x128xf32>, i32 -> vector<1x128xf32>
    %c56_i32_514 = arith.constant 56 : i32
    %851 = vector.broadcast %c56_i32_514 : i32 to vector<1x128xi32>
    %852 = arith.cmpi sge, %170, %851 : vector<1x128xi32>
    %853 = arith.select %852, %850, %848 : vector<1x128xi1>, vector<1x128xf32>
    %c125 = arith.constant 125 : index
    %c0_515 = arith.constant 0 : index
    %854 = vector.load %arg4[%c125, %c0_515] : memref<128x256xf32, #tpu.memory_space<vmem>>, vector<1x128xf32>
    %c74_i32_516 = arith.constant 74 : i32
    %855 = tpu.dynamic_rotate %854 by %c74_i32_516 dim 1 : vector<1x128xf32>, i32 -> vector<1x128xf32>
    %c74_i32_517 = arith.constant 74 : i32
    %856 = vector.broadcast %c74_i32_517 : i32 to vector<1x128xi32>
    %857 = arith.cmpi sge, %170, %856 : vector<1x128xi32>
    %858 = arith.select %857, %855, %853 : vector<1x128xi1>, vector<1x128xf32>
    %c126 = arith.constant 126 : index
    %c0_518 = arith.constant 0 : index
    %859 = vector.load %arg4[%c126, %c0_518] : memref<128x256xf32, #tpu.memory_space<vmem>>, vector<1x128xf32>
    %c92_i32_519 = arith.constant 92 : i32
    %860 = tpu.dynamic_rotate %859 by %c92_i32_519 dim 1 : vector<1x128xf32>, i32 -> vector<1x128xf32>
    %c92_i32_520 = arith.constant 92 : i32
    %861 = vector.broadcast %c92_i32_520 : i32 to vector<1x128xi32>
    %862 = arith.cmpi sge, %170, %861 : vector<1x128xi32>
    %863 = arith.select %862, %860, %858 : vector<1x128xi1>, vector<1x128xf32>
    %c127 = arith.constant 127 : index
    %c0_521 = arith.constant 0 : index
    %864 = vector.load %arg4[%c127, %c0_521] : memref<128x256xf32, #tpu.memory_space<vmem>>, vector<1x128xf32>
    %c110_i32_522 = arith.constant 110 : i32
    %865 = tpu.dynamic_rotate %864 by %c110_i32_522 dim 1 : vector<1x128xf32>, i32 -> vector<1x128xf32>
    %c110_i32_523 = arith.constant 110 : i32
    %866 = vector.broadcast %c110_i32_523 : i32 to vector<1x128xi32>
    %867 = arith.cmpi sge, %170, %866 : vector<1x128xi32>
    %868 = arith.select %867, %865, %863 : vector<1x128xi1>, vector<1x128xf32>
    %869 = arith.truncf %868 : vector<1x128xf32> to vector<1x128xbf16>
    %c17_524 = arith.constant 17 : index
    %c0_525 = arith.constant 0 : index
    %870 = vector.load %arg5[%c17_524, %c0_525] : memref<36x128xbf16, #tpu.memory_space<vmem>>, vector<1x128xbf16>
    tpu.vector_store %arg5[%c17_524, %c0_525], %869 {strides = array<i32>} : memref<36x128xbf16, #tpu.memory_space<vmem>>, vector<1x128xbf16>,
    %c0_526 = arith.constant 0 : index
    %c128_527 = arith.constant 128 : index
    %871 = vector.load %arg4[%c0_526, %c128_527] : memref<128x256xf32, #tpu.memory_space<vmem>>, vector<1x128xf32>
    %c1_528 = arith.constant 1 : index
    %c128_529 = arith.constant 128 : index
    %872 = vector.load %arg4[%c1_528, %c128_529] : memref<128x256xf32, #tpu.memory_space<vmem>>, vector<1x128xf32>
    %c18_i32_530 = arith.constant 18 : i32
    %873 = tpu.dynamic_rotate %872 by %c18_i32_530 dim 1 : vector<1x128xf32>, i32 -> vector<1x128xf32>
    %c18_i32_531 = arith.constant 18 : i32
    %874 = vector.broadcast %c18_i32_531 : i32 to vector<1x128xi32>
    %875 = arith.cmpi sge, %170, %874 : vector<1x128xi32>
    %876 = arith.select %875, %873, %871 : vector<1x128xi1>, vector<1x128xf32>
    %c2_532 = arith.constant 2 : index
    %c128_533 = arith.constant 128 : index
    %877 = vector.load %arg4[%c2_532, %c128_533] : memref<128x256xf32, #tpu.memory_space<vmem>>, vector<1x128xf32>
    %c36_i32_534 = arith.constant 36 : i32
    %878 = tpu.dynamic_rotate %877 by %c36_i32_534 dim 1 : vector<1x128xf32>, i32 -> vector<1x128xf32>
    %c36_i32_535 = arith.constant 36 : i32
    %879 = vector.broadcast %c36_i32_535 : i32 to vector<1x128xi32>
    %880 = arith.cmpi sge, %170, %879 : vector<1x128xi32>
    %881 = arith.select %880, %878, %876 : vector<1x128xi1>, vector<1x128xf32>
    %c3_536 = arith.constant 3 : index
    %c128_537 = arith.constant 128 : index
    %882 = vector.load %arg4[%c3_536, %c128_537] : memref<128x256xf32, #tpu.memory_space<vmem>>, vector<1x128xf32>
    %c54_i32_538 = arith.constant 54 : i32
    %883 = tpu.dynamic_rotate %882 by %c54_i32_538 dim 1 : vector<1x128xf32>, i32 -> vector<1x128xf32>
    %c54_i32_539 = arith.constant 54 : i32
    %884 = vector.broadcast %c54_i32_539 : i32 to vector<1x128xi32>
    %885 = arith.cmpi sge, %170, %884 : vector<1x128xi32>
    %886 = arith.select %885, %883, %881 : vector<1x128xi1>, vector<1x128xf32>
    %c4_540 = arith.constant 4 : index
    %c128_541 = arith.constant 128 : index
    %887 = vector.load %arg4[%c4_540, %c128_541] : memref<128x256xf32, #tpu.memory_space<vmem>>, vector<1x128xf32>
    %c72_i32_542 = arith.constant 72 : i32
    %888 = tpu.dynamic_rotate %887 by %c72_i32_542 dim 1 : vector<1x128xf32>, i32 -> vector<1x128xf32>
    %c72_i32_543 = arith.constant 72 : i32
    %889 = vector.broadcast %c72_i32_543 : i32 to vector<1x128xi32>
    %890 = arith.cmpi sge, %170, %889 : vector<1x128xi32>
    %891 = arith.select %890, %888, %886 : vector<1x128xi1>, vector<1x128xf32>
    %c5_544 = arith.constant 5 : index
    %c128_545 = arith.constant 128 : index
    %892 = vector.load %arg4[%c5_544, %c128_545] : memref<128x256xf32, #tpu.memory_space<vmem>>, vector<1x128xf32>
    %c90_i32_546 = arith.constant 90 : i32
    %893 = tpu.dynamic_rotate %892 by %c90_i32_546 dim 1 : vector<1x128xf32>, i32 -> vector<1x128xf32>
    %c90_i32_547 = arith.constant 90 : i32
    %894 = vector.broadcast %c90_i32_547 : i32 to vector<1x128xi32>
    %895 = arith.cmpi sge, %170, %894 : vector<1x128xi32>
    %896 = arith.select %895, %893, %891 : vector<1x128xi1>, vector<1x128xf32>
    %c6_548 = arith.constant 6 : index
    %c128_549 = arith.constant 128 : index
    %897 = vector.load %arg4[%c6_548, %c128_549] : memref<128x256xf32, #tpu.memory_space<vmem>>, vector<1x128xf32>
    %c108_i32_550 = arith.constant 108 : i32
    %898 = tpu.dynamic_rotate %897 by %c108_i32_550 dim 1 : vector<1x128xf32>, i32 -> vector<1x128xf32>
    %c108_i32_551 = arith.constant 108 : i32
    %899 = vector.broadcast %c108_i32_551 : i32 to vector<1x128xi32>
    %900 = arith.cmpi sge, %170, %899 : vector<1x128xi32>
    %901 = arith.select %900, %898, %896 : vector<1x128xi1>, vector<1x128xf32>
    %c7_552 = arith.constant 7 : index
    %c128_553 = arith.constant 128 : index
    %902 = vector.load %arg4[%c7_552, %c128_553] : memref<128x256xf32, #tpu.memory_space<vmem>>, vector<1x128xf32>
    %c126_i32_554 = arith.constant 126 : i32
    %903 = tpu.dynamic_rotate %902 by %c126_i32_554 dim 1 : vector<1x128xf32>, i32 -> vector<1x128xf32>
    %c126_i32_555 = arith.constant 126 : i32
    %904 = vector.broadcast %c126_i32_555 : i32 to vector<1x128xi32>
    %905 = arith.cmpi sge, %170, %904 : vector<1x128xi32>
    %906 = arith.select %905, %903, %901 : vector<1x128xi1>, vector<1x128xf32>
    %907 = arith.truncf %906 : vector<1x128xf32> to vector<1x128xbf16>
    %c18_556 = arith.constant 18 : index
    %c0_557 = arith.constant 0 : index
    %908 = vector.load %arg5[%c18_556, %c0_557] : memref<36x128xbf16, #tpu.memory_space<vmem>>, vector<1x128xbf16>
    tpu.vector_store %arg5[%c18_556, %c0_557], %907 {strides = array<i32>} : memref<36x128xbf16, #tpu.memory_space<vmem>>, vector<1x128xbf16>,
    %c7_558 = arith.constant 7 : index
    %c128_559 = arith.constant 128 : index
    %909 = vector.load %arg4[%c7_558, %c128_559] : memref<128x256xf32, #tpu.memory_space<vmem>>, vector<1x128xf32>
    %c126_i32_560 = arith.constant 126 : i32
    %910 = tpu.dynamic_rotate %909 by %c126_i32_560 dim 1 : vector<1x128xf32>, i32 -> vector<1x128xf32>
    %c8_561 = arith.constant 8 : index
    %c128_562 = arith.constant 128 : index
    %911 = vector.load %arg4[%c8_561, %c128_562] : memref<128x256xf32, #tpu.memory_space<vmem>>, vector<1x128xf32>
    %c16_i32_563 = arith.constant 16 : i32
    %912 = tpu.dynamic_rotate %911 by %c16_i32_563 dim 1 : vector<1x128xf32>, i32 -> vector<1x128xf32>
    %c16_i32_564 = arith.constant 16 : i32
    %913 = vector.broadcast %c16_i32_564 : i32 to vector<1x128xi32>
    %914 = arith.cmpi sge, %170, %913 : vector<1x128xi32>
    %915 = arith.select %914, %912, %910 : vector<1x128xi1>, vector<1x128xf32>
    %c9_565 = arith.constant 9 : index
    %c128_566 = arith.constant 128 : index
    %916 = vector.load %arg4[%c9_565, %c128_566] : memref<128x256xf32, #tpu.memory_space<vmem>>, vector<1x128xf32>
    %c34_i32_567 = arith.constant 34 : i32
    %917 = tpu.dynamic_rotate %916 by %c34_i32_567 dim 1 : vector<1x128xf32>, i32 -> vector<1x128xf32>
    %c34_i32_568 = arith.constant 34 : i32
    %918 = vector.broadcast %c34_i32_568 : i32 to vector<1x128xi32>
    %919 = arith.cmpi sge, %170, %918 : vector<1x128xi32>
    %920 = arith.select %919, %917, %915 : vector<1x128xi1>, vector<1x128xf32>
    %c10_569 = arith.constant 10 : index
    %c128_570 = arith.constant 128 : index
    %921 = vector.load %arg4[%c10_569, %c128_570] : memref<128x256xf32, #tpu.memory_space<vmem>>, vector<1x128xf32>
    %c52_i32_571 = arith.constant 52 : i32
    %922 = tpu.dynamic_rotate %921 by %c52_i32_571 dim 1 : vector<1x128xf32>, i32 -> vector<1x128xf32>
    %c52_i32_572 = arith.constant 52 : i32
    %923 = vector.broadcast %c52_i32_572 : i32 to vector<1x128xi32>
    %924 = arith.cmpi sge, %170, %923 : vector<1x128xi32>
    %925 = arith.select %924, %922, %920 : vector<1x128xi1>, vector<1x128xf32>
    %c11_573 = arith.constant 11 : index
    %c128_574 = arith.constant 128 : index
    %926 = vector.load %arg4[%c11_573, %c128_574] : memref<128x256xf32, #tpu.memory_space<vmem>>, vector<1x128xf32>
    %c70_i32_575 = arith.constant 70 : i32
    %927 = tpu.dynamic_rotate %926 by %c70_i32_575 dim 1 : vector<1x128xf32>, i32 -> vector<1x128xf32>
    %c70_i32_576 = arith.constant 70 : i32
    %928 = vector.broadcast %c70_i32_576 : i32 to vector<1x128xi32>
    %929 = arith.cmpi sge, %170, %928 : vector<1x128xi32>
    %930 = arith.select %929, %927, %925 : vector<1x128xi1>, vector<1x128xf32>
    %c12_577 = arith.constant 12 : index
    %c128_578 = arith.constant 128 : index
    %931 = vector.load %arg4[%c12_577, %c128_578] : memref<128x256xf32, #tpu.memory_space<vmem>>, vector<1x128xf32>
    %c88_i32_579 = arith.constant 88 : i32
    %932 = tpu.dynamic_rotate %931 by %c88_i32_579 dim 1 : vector<1x128xf32>, i32 -> vector<1x128xf32>
    %c88_i32_580 = arith.constant 88 : i32
    %933 = vector.broadcast %c88_i32_580 : i32 to vector<1x128xi32>
    %934 = arith.cmpi sge, %170, %933 : vector<1x128xi32>
    %935 = arith.select %934, %932, %930 : vector<1x128xi1>, vector<1x128xf32>
    %c13_581 = arith.constant 13 : index
    %c128_582 = arith.constant 128 : index
    %936 = vector.load %arg4[%c13_581, %c128_582] : memref<128x256xf32, #tpu.memory_space<vmem>>, vector<1x128xf32>
    %c106_i32_583 = arith.constant 106 : i32
    %937 = tpu.dynamic_rotate %936 by %c106_i32_583 dim 1 : vector<1x128xf32>, i32 -> vector<1x128xf32>
    %c106_i32_584 = arith.constant 106 : i32
    %938 = vector.broadcast %c106_i32_584 : i32 to vector<1x128xi32>
    %939 = arith.cmpi sge, %170, %938 : vector<1x128xi32>
    %940 = arith.select %939, %937, %935 : vector<1x128xi1>, vector<1x128xf32>
    %c14_585 = arith.constant 14 : index
    %c128_586 = arith.constant 128 : index
    %941 = vector.load %arg4[%c14_585, %c128_586] : memref<128x256xf32, #tpu.memory_space<vmem>>, vector<1x128xf32>
    %c124_i32_587 = arith.constant 124 : i32
    %942 = tpu.dynamic_rotate %941 by %c124_i32_587 dim 1 : vector<1x128xf32>, i32 -> vector<1x128xf32>
    %c124_i32_588 = arith.constant 124 : i32
    %943 = vector.broadcast %c124_i32_588 : i32 to vector<1x128xi32>
    %944 = arith.cmpi sge, %170, %943 : vector<1x128xi32>
    %945 = arith.select %944, %942, %940 : vector<1x128xi1>, vector<1x128xf32>
    %946 = arith.truncf %945 : vector<1x128xf32> to vector<1x128xbf16>
    %c19_589 = arith.constant 19 : index
    %c0_590 = arith.constant 0 : index
    %947 = vector.load %arg5[%c19_589, %c0_590] : memref<36x128xbf16, #tpu.memory_space<vmem>>, vector<1x128xbf16>
    tpu.vector_store %arg5[%c19_589, %c0_590], %946 {strides = array<i32>} : memref<36x128xbf16, #tpu.memory_space<vmem>>, vector<1x128xbf16>,
    %c14_591 = arith.constant 14 : index
    %c128_592 = arith.constant 128 : index
    %948 = vector.load %arg4[%c14_591, %c128_592] : memref<128x256xf32, #tpu.memory_space<vmem>>, vector<1x128xf32>
    %c124_i32_593 = arith.constant 124 : i32
    %949 = tpu.dynamic_rotate %948 by %c124_i32_593 dim 1 : vector<1x128xf32>, i32 -> vector<1x128xf32>
    %c15_594 = arith.constant 15 : index
    %c128_595 = arith.constant 128 : index
    %950 = vector.load %arg4[%c15_594, %c128_595] : memref<128x256xf32, #tpu.memory_space<vmem>>, vector<1x128xf32>
    %c14_i32_596 = arith.constant 14 : i32
    %951 = tpu.dynamic_rotate %950 by %c14_i32_596 dim 1 : vector<1x128xf32>, i32 -> vector<1x128xf32>
    %c14_i32_597 = arith.constant 14 : i32
    %952 = vector.broadcast %c14_i32_597 : i32 to vector<1x128xi32>
    %953 = arith.cmpi sge, %170, %952 : vector<1x128xi32>
    %954 = arith.select %953, %951, %949 : vector<1x128xi1>, vector<1x128xf32>
    %c16_598 = arith.constant 16 : index
    %c128_599 = arith.constant 128 : index
    %955 = vector.load %arg4[%c16_598, %c128_599] : memref<128x256xf32, #tpu.memory_space<vmem>>, vector<1x128xf32>
    %c32_i32_600 = arith.constant 32 : i32
    %956 = tpu.dynamic_rotate %955 by %c32_i32_600 dim 1 : vector<1x128xf32>, i32 -> vector<1x128xf32>
    %c32_i32_601 = arith.constant 32 : i32
    %957 = vector.broadcast %c32_i32_601 : i32 to vector<1x128xi32>
    %958 = arith.cmpi sge, %170, %957 : vector<1x128xi32>
    %959 = arith.select %958, %956, %954 : vector<1x128xi1>, vector<1x128xf32>
    %c17_602 = arith.constant 17 : index
    %c128_603 = arith.constant 128 : index
    %960 = vector.load %arg4[%c17_602, %c128_603] : memref<128x256xf32, #tpu.memory_space<vmem>>, vector<1x128xf32>
    %c50_i32_604 = arith.constant 50 : i32
    %961 = tpu.dynamic_rotate %960 by %c50_i32_604 dim 1 : vector<1x128xf32>, i32 -> vector<1x128xf32>
    %c50_i32_605 = arith.constant 50 : i32
    %962 = vector.broadcast %c50_i32_605 : i32 to vector<1x128xi32>
    %963 = arith.cmpi sge, %170, %962 : vector<1x128xi32>
    %964 = arith.select %963, %961, %959 : vector<1x128xi1>, vector<1x128xf32>
    %c18_606 = arith.constant 18 : index
    %c128_607 = arith.constant 128 : index
    %965 = vector.load %arg4[%c18_606, %c128_607] : memref<128x256xf32, #tpu.memory_space<vmem>>, vector<1x128xf32>
    %c68_i32_608 = arith.constant 68 : i32
    %966 = tpu.dynamic_rotate %965 by %c68_i32_608 dim 1 : vector<1x128xf32>, i32 -> vector<1x128xf32>
    %c68_i32_609 = arith.constant 68 : i32
    %967 = vector.broadcast %c68_i32_609 : i32 to vector<1x128xi32>
    %968 = arith.cmpi sge, %170, %967 : vector<1x128xi32>
    %969 = arith.select %968, %966, %964 : vector<1x128xi1>, vector<1x128xf32>
    %c19_610 = arith.constant 19 : index
    %c128_611 = arith.constant 128 : index
    %970 = vector.load %arg4[%c19_610, %c128_611] : memref<128x256xf32, #tpu.memory_space<vmem>>, vector<1x128xf32>
    %c86_i32_612 = arith.constant 86 : i32
    %971 = tpu.dynamic_rotate %970 by %c86_i32_612 dim 1 : vector<1x128xf32>, i32 -> vector<1x128xf32>
    %c86_i32_613 = arith.constant 86 : i32
    %972 = vector.broadcast %c86_i32_613 : i32 to vector<1x128xi32>
    %973 = arith.cmpi sge, %170, %972 : vector<1x128xi32>
    %974 = arith.select %973, %971, %969 : vector<1x128xi1>, vector<1x128xf32>
    %c20_614 = arith.constant 20 : index
    %c128_615 = arith.constant 128 : index
    %975 = vector.load %arg4[%c20_614, %c128_615] : memref<128x256xf32, #tpu.memory_space<vmem>>, vector<1x128xf32>
    %c104_i32_616 = arith.constant 104 : i32
    %976 = tpu.dynamic_rotate %975 by %c104_i32_616 dim 1 : vector<1x128xf32>, i32 -> vector<1x128xf32>
    %c104_i32_617 = arith.constant 104 : i32
    %977 = vector.broadcast %c104_i32_617 : i32 to vector<1x128xi32>
    %978 = arith.cmpi sge, %170, %977 : vector<1x128xi32>
    %979 = arith.select %978, %976, %974 : vector<1x128xi1>, vector<1x128xf32>
    %c21_618 = arith.constant 21 : index
    %c128_619 = arith.constant 128 : index
    %980 = vector.load %arg4[%c21_618, %c128_619] : memref<128x256xf32, #tpu.memory_space<vmem>>, vector<1x128xf32>
    %c122_i32_620 = arith.constant 122 : i32
    %981 = tpu.dynamic_rotate %980 by %c122_i32_620 dim 1 : vector<1x128xf32>, i32 -> vector<1x128xf32>
    %c122_i32_621 = arith.constant 122 : i32
    %982 = vector.broadcast %c122_i32_621 : i32 to vector<1x128xi32>
    %983 = arith.cmpi sge, %170, %982 : vector<1x128xi32>
    %984 = arith.select %983, %981, %979 : vector<1x128xi1>, vector<1x128xf32>
    %985 = arith.truncf %984 : vector<1x128xf32> to vector<1x128xbf16>
    %c20_622 = arith.constant 20 : index
    %c0_623 = arith.constant 0 : index
    %986 = vector.load %arg5[%c20_622, %c0_623] : memref<36x128xbf16, #tpu.memory_space<vmem>>, vector<1x128xbf16>
    tpu.vector_store %arg5[%c20_622, %c0_623], %985 {strides = array<i32>} : memref<36x128xbf16, #tpu.memory_space<vmem>>, vector<1x128xbf16>,
    %c21_624 = arith.constant 21 : index
    %c128_625 = arith.constant 128 : index
    %987 = vector.load %arg4[%c21_624, %c128_625] : memref<128x256xf32, #tpu.memory_space<vmem>>, vector<1x128xf32>
    %c122_i32_626 = arith.constant 122 : i32
    %988 = tpu.dynamic_rotate %987 by %c122_i32_626 dim 1 : vector<1x128xf32>, i32 -> vector<1x128xf32>
    %c22_627 = arith.constant 22 : index
    %c128_628 = arith.constant 128 : index
    %989 = vector.load %arg4[%c22_627, %c128_628] : memref<128x256xf32, #tpu.memory_space<vmem>>, vector<1x128xf32>
    %c12_i32_629 = arith.constant 12 : i32
    %990 = tpu.dynamic_rotate %989 by %c12_i32_629 dim 1 : vector<1x128xf32>, i32 -> vector<1x128xf32>
    %c12_i32_630 = arith.constant 12 : i32
    %991 = vector.broadcast %c12_i32_630 : i32 to vector<1x128xi32>
    %992 = arith.cmpi sge, %170, %991 : vector<1x128xi32>
    %993 = arith.select %992, %990, %988 : vector<1x128xi1>, vector<1x128xf32>
    %c23_631 = arith.constant 23 : index
    %c128_632 = arith.constant 128 : index
    %994 = vector.load %arg4[%c23_631, %c128_632] : memref<128x256xf32, #tpu.memory_space<vmem>>, vector<1x128xf32>
    %c30_i32_633 = arith.constant 30 : i32
    %995 = tpu.dynamic_rotate %994 by %c30_i32_633 dim 1 : vector<1x128xf32>, i32 -> vector<1x128xf32>
    %c30_i32_634 = arith.constant 30 : i32
    %996 = vector.broadcast %c30_i32_634 : i32 to vector<1x128xi32>
    %997 = arith.cmpi sge, %170, %996 : vector<1x128xi32>
    %998 = arith.select %997, %995, %993 : vector<1x128xi1>, vector<1x128xf32>
    %c24_635 = arith.constant 24 : index
    %c128_636 = arith.constant 128 : index
    %999 = vector.load %arg4[%c24_635, %c128_636] : memref<128x256xf32, #tpu.memory_space<vmem>>, vector<1x128xf32>
    %c48_i32_637 = arith.constant 48 : i32
    %1000 = tpu.dynamic_rotate %999 by %c48_i32_637 dim 1 : vector<1x128xf32>, i32 -> vector<1x128xf32>
    %c48_i32_638 = arith.constant 48 : i32
    %1001 = vector.broadcast %c48_i32_638 : i32 to vector<1x128xi32>
    %1002 = arith.cmpi sge, %170, %1001 : vector<1x128xi32>
    %1003 = arith.select %1002, %1000, %998 : vector<1x128xi1>, vector<1x128xf32>
    %c25_639 = arith.constant 25 : index
    %c128_640 = arith.constant 128 : index
    %1004 = vector.load %arg4[%c25_639, %c128_640] : memref<128x256xf32, #tpu.memory_space<vmem>>, vector<1x128xf32>
    %c66_i32_641 = arith.constant 66 : i32
    %1005 = tpu.dynamic_rotate %1004 by %c66_i32_641 dim 1 : vector<1x128xf32>, i32 -> vector<1x128xf32>
    %c66_i32_642 = arith.constant 66 : i32
    %1006 = vector.broadcast %c66_i32_642 : i32 to vector<1x128xi32>
    %1007 = arith.cmpi sge, %170, %1006 : vector<1x128xi32>
    %1008 = arith.select %1007, %1005, %1003 : vector<1x128xi1>, vector<1x128xf32>
    %c26_643 = arith.constant 26 : index
    %c128_644 = arith.constant 128 : index
    %1009 = vector.load %arg4[%c26_643, %c128_644] : memref<128x256xf32, #tpu.memory_space<vmem>>, vector<1x128xf32>
    %c84_i32_645 = arith.constant 84 : i32
    %1010 = tpu.dynamic_rotate %1009 by %c84_i32_645 dim 1 : vector<1x128xf32>, i32 -> vector<1x128xf32>
    %c84_i32_646 = arith.constant 84 : i32
    %1011 = vector.broadcast %c84_i32_646 : i32 to vector<1x128xi32>
    %1012 = arith.cmpi sge, %170, %1011 : vector<1x128xi32>
    %1013 = arith.select %1012, %1010, %1008 : vector<1x128xi1>, vector<1x128xf32>
    %c27_647 = arith.constant 27 : index
    %c128_648 = arith.constant 128 : index
    %1014 = vector.load %arg4[%c27_647, %c128_648] : memref<128x256xf32, #tpu.memory_space<vmem>>, vector<1x128xf32>
    %c102_i32_649 = arith.constant 102 : i32
    %1015 = tpu.dynamic_rotate %1014 by %c102_i32_649 dim 1 : vector<1x128xf32>, i32 -> vector<1x128xf32>
    %c102_i32_650 = arith.constant 102 : i32
    %1016 = vector.broadcast %c102_i32_650 : i32 to vector<1x128xi32>
    %1017 = arith.cmpi sge, %170, %1016 : vector<1x128xi32>
    %1018 = arith.select %1017, %1015, %1013 : vector<1x128xi1>, vector<1x128xf32>
    %c28_651 = arith.constant 28 : index
    %c128_652 = arith.constant 128 : index
    %1019 = vector.load %arg4[%c28_651, %c128_652] : memref<128x256xf32, #tpu.memory_space<vmem>>, vector<1x128xf32>
    %c120_i32_653 = arith.constant 120 : i32
    %1020 = tpu.dynamic_rotate %1019 by %c120_i32_653 dim 1 : vector<1x128xf32>, i32 -> vector<1x128xf32>
    %c120_i32_654 = arith.constant 120 : i32
    %1021 = vector.broadcast %c120_i32_654 : i32 to vector<1x128xi32>
    %1022 = arith.cmpi sge, %170, %1021 : vector<1x128xi32>
    %1023 = arith.select %1022, %1020, %1018 : vector<1x128xi1>, vector<1x128xf32>
    %1024 = arith.truncf %1023 : vector<1x128xf32> to vector<1x128xbf16>
    %c21_655 = arith.constant 21 : index
    %c0_656 = arith.constant 0 : index
    %1025 = vector.load %arg5[%c21_655, %c0_656] : memref<36x128xbf16, #tpu.memory_space<vmem>>, vector<1x128xbf16>
    tpu.vector_store %arg5[%c21_655, %c0_656], %1024 {strides = array<i32>} : memref<36x128xbf16, #tpu.memory_space<vmem>>, vector<1x128xbf16>,
    %c28_657 = arith.constant 28 : index
    %c128_658 = arith.constant 128 : index
    %1026 = vector.load %arg4[%c28_657, %c128_658] : memref<128x256xf32, #tpu.memory_space<vmem>>, vector<1x128xf32>
    %c120_i32_659 = arith.constant 120 : i32
    %1027 = tpu.dynamic_rotate %1026 by %c120_i32_659 dim 1 : vector<1x128xf32>, i32 -> vector<1x128xf32>
    %c29_660 = arith.constant 29 : index
    %c128_661 = arith.constant 128 : index
    %1028 = vector.load %arg4[%c29_660, %c128_661] : memref<128x256xf32, #tpu.memory_space<vmem>>, vector<1x128xf32>
    %c10_i32_662 = arith.constant 10 : i32
    %1029 = tpu.dynamic_rotate %1028 by %c10_i32_662 dim 1 : vector<1x128xf32>, i32 -> vector<1x128xf32>
    %c10_i32_663 = arith.constant 10 : i32
    %1030 = vector.broadcast %c10_i32_663 : i32 to vector<1x128xi32>
    %1031 = arith.cmpi sge, %170, %1030 : vector<1x128xi32>
    %1032 = arith.select %1031, %1029, %1027 : vector<1x128xi1>, vector<1x128xf32>
    %c30_664 = arith.constant 30 : index
    %c128_665 = arith.constant 128 : index
    %1033 = vector.load %arg4[%c30_664, %c128_665] : memref<128x256xf32, #tpu.memory_space<vmem>>, vector<1x128xf32>
    %c28_i32_666 = arith.constant 28 : i32
    %1034 = tpu.dynamic_rotate %1033 by %c28_i32_666 dim 1 : vector<1x128xf32>, i32 -> vector<1x128xf32>
    %c28_i32_667 = arith.constant 28 : i32
    %1035 = vector.broadcast %c28_i32_667 : i32 to vector<1x128xi32>
    %1036 = arith.cmpi sge, %170, %1035 : vector<1x128xi32>
    %1037 = arith.select %1036, %1034, %1032 : vector<1x128xi1>, vector<1x128xf32>
    %c31_668 = arith.constant 31 : index
    %c128_669 = arith.constant 128 : index
    %1038 = vector.load %arg4[%c31_668, %c128_669] : memref<128x256xf32, #tpu.memory_space<vmem>>, vector<1x128xf32>
    %c46_i32_670 = arith.constant 46 : i32
    %1039 = tpu.dynamic_rotate %1038 by %c46_i32_670 dim 1 : vector<1x128xf32>, i32 -> vector<1x128xf32>
    %c46_i32_671 = arith.constant 46 : i32
    %1040 = vector.broadcast %c46_i32_671 : i32 to vector<1x128xi32>
    %1041 = arith.cmpi sge, %170, %1040 : vector<1x128xi32>
    %1042 = arith.select %1041, %1039, %1037 : vector<1x128xi1>, vector<1x128xf32>
    %c32_672 = arith.constant 32 : index
    %c128_673 = arith.constant 128 : index
    %1043 = vector.load %arg4[%c32_672, %c128_673] : memref<128x256xf32, #tpu.memory_space<vmem>>, vector<1x128xf32>
    %c64_i32_674 = arith.constant 64 : i32
    %1044 = tpu.dynamic_rotate %1043 by %c64_i32_674 dim 1 : vector<1x128xf32>, i32 -> vector<1x128xf32>
    %c64_i32_675 = arith.constant 64 : i32
    %1045 = vector.broadcast %c64_i32_675 : i32 to vector<1x128xi32>
    %1046 = arith.cmpi sge, %170, %1045 : vector<1x128xi32>
    %1047 = arith.select %1046, %1044, %1042 : vector<1x128xi1>, vector<1x128xf32>
    %c33_676 = arith.constant 33 : index
    %c128_677 = arith.constant 128 : index
    %1048 = vector.load %arg4[%c33_676, %c128_677] : memref<128x256xf32, #tpu.memory_space<vmem>>, vector<1x128xf32>
    %c82_i32_678 = arith.constant 82 : i32
    %1049 = tpu.dynamic_rotate %1048 by %c82_i32_678 dim 1 : vector<1x128xf32>, i32 -> vector<1x128xf32>
    %c82_i32_679 = arith.constant 82 : i32
    %1050 = vector.broadcast %c82_i32_679 : i32 to vector<1x128xi32>
    %1051 = arith.cmpi sge, %170, %1050 : vector<1x128xi32>
    %1052 = arith.select %1051, %1049, %1047 : vector<1x128xi1>, vector<1x128xf32>
    %c34_680 = arith.constant 34 : index
    %c128_681 = arith.constant 128 : index
    %1053 = vector.load %arg4[%c34_680, %c128_681] : memref<128x256xf32, #tpu.memory_space<vmem>>, vector<1x128xf32>
    %c100_i32_682 = arith.constant 100 : i32
    %1054 = tpu.dynamic_rotate %1053 by %c100_i32_682 dim 1 : vector<1x128xf32>, i32 -> vector<1x128xf32>
    %c100_i32_683 = arith.constant 100 : i32
    %1055 = vector.broadcast %c100_i32_683 : i32 to vector<1x128xi32>
    %1056 = arith.cmpi sge, %170, %1055 : vector<1x128xi32>
    %1057 = arith.select %1056, %1054, %1052 : vector<1x128xi1>, vector<1x128xf32>
    %c35_684 = arith.constant 35 : index
    %c128_685 = arith.constant 128 : index
    %1058 = vector.load %arg4[%c35_684, %c128_685] : memref<128x256xf32, #tpu.memory_space<vmem>>, vector<1x128xf32>
    %c118_i32_686 = arith.constant 118 : i32
    %1059 = tpu.dynamic_rotate %1058 by %c118_i32_686 dim 1 : vector<1x128xf32>, i32 -> vector<1x128xf32>
    %c118_i32_687 = arith.constant 118 : i32
    %1060 = vector.broadcast %c118_i32_687 : i32 to vector<1x128xi32>
    %1061 = arith.cmpi sge, %170, %1060 : vector<1x128xi32>
    %1062 = arith.select %1061, %1059, %1057 : vector<1x128xi1>, vector<1x128xf32>
    %1063 = arith.truncf %1062 : vector<1x128xf32> to vector<1x128xbf16>
    %c22_688 = arith.constant 22 : index
    %c0_689 = arith.constant 0 : index
    %1064 = vector.load %arg5[%c22_688, %c0_689] : memref<36x128xbf16, #tpu.memory_space<vmem>>, vector<1x128xbf16>
    tpu.vector_store %arg5[%c22_688, %c0_689], %1063 {strides = array<i32>} : memref<36x128xbf16, #tpu.memory_space<vmem>>, vector<1x128xbf16>,
    %c35_690 = arith.constant 35 : index
    %c128_691 = arith.constant 128 : index
    %1065 = vector.load %arg4[%c35_690, %c128_691] : memref<128x256xf32, #tpu.memory_space<vmem>>, vector<1x128xf32>
    %c118_i32_692 = arith.constant 118 : i32
    %1066 = tpu.dynamic_rotate %1065 by %c118_i32_692 dim 1 : vector<1x128xf32>, i32 -> vector<1x128xf32>
    %c36_693 = arith.constant 36 : index
    %c128_694 = arith.constant 128 : index
    %1067 = vector.load %arg4[%c36_693, %c128_694] : memref<128x256xf32, #tpu.memory_space<vmem>>, vector<1x128xf32>
    %c8_i32_695 = arith.constant 8 : i32
    %1068 = tpu.dynamic_rotate %1067 by %c8_i32_695 dim 1 : vector<1x128xf32>, i32 -> vector<1x128xf32>
    %c8_i32_696 = arith.constant 8 : i32
    %1069 = vector.broadcast %c8_i32_696 : i32 to vector<1x128xi32>
    %1070 = arith.cmpi sge, %170, %1069 : vector<1x128xi32>
    %1071 = arith.select %1070, %1068, %1066 : vector<1x128xi1>, vector<1x128xf32>
    %c37_697 = arith.constant 37 : index
    %c128_698 = arith.constant 128 : index
    %1072 = vector.load %arg4[%c37_697, %c128_698] : memref<128x256xf32, #tpu.memory_space<vmem>>, vector<1x128xf32>
    %c26_i32_699 = arith.constant 26 : i32
    %1073 = tpu.dynamic_rotate %1072 by %c26_i32_699 dim 1 : vector<1x128xf32>, i32 -> vector<1x128xf32>
    %c26_i32_700 = arith.constant 26 : i32
    %1074 = vector.broadcast %c26_i32_700 : i32 to vector<1x128xi32>
    %1075 = arith.cmpi sge, %170, %1074 : vector<1x128xi32>
    %1076 = arith.select %1075, %1073, %1071 : vector<1x128xi1>, vector<1x128xf32>
    %c38_701 = arith.constant 38 : index
    %c128_702 = arith.constant 128 : index
    %1077 = vector.load %arg4[%c38_701, %c128_702] : memref<128x256xf32, #tpu.memory_space<vmem>>, vector<1x128xf32>
    %c44_i32_703 = arith.constant 44 : i32
    %1078 = tpu.dynamic_rotate %1077 by %c44_i32_703 dim 1 : vector<1x128xf32>, i32 -> vector<1x128xf32>
    %c44_i32_704 = arith.constant 44 : i32
    %1079 = vector.broadcast %c44_i32_704 : i32 to vector<1x128xi32>
    %1080 = arith.cmpi sge, %170, %1079 : vector<1x128xi32>
    %1081 = arith.select %1080, %1078, %1076 : vector<1x128xi1>, vector<1x128xf32>
    %c39_705 = arith.constant 39 : index
    %c128_706 = arith.constant 128 : index
    %1082 = vector.load %arg4[%c39_705, %c128_706] : memref<128x256xf32, #tpu.memory_space<vmem>>, vector<1x128xf32>
    %c62_i32_707 = arith.constant 62 : i32
    %1083 = tpu.dynamic_rotate %1082 by %c62_i32_707 dim 1 : vector<1x128xf32>, i32 -> vector<1x128xf32>
    %c62_i32_708 = arith.constant 62 : i32
    %1084 = vector.broadcast %c62_i32_708 : i32 to vector<1x128xi32>
    %1085 = arith.cmpi sge, %170, %1084 : vector<1x128xi32>
    %1086 = arith.select %1085, %1083, %1081 : vector<1x128xi1>, vector<1x128xf32>
    %c40_709 = arith.constant 40 : index
    %c128_710 = arith.constant 128 : index
    %1087 = vector.load %arg4[%c40_709, %c128_710] : memref<128x256xf32, #tpu.memory_space<vmem>>, vector<1x128xf32>
    %c80_i32_711 = arith.constant 80 : i32
    %1088 = tpu.dynamic_rotate %1087 by %c80_i32_711 dim 1 : vector<1x128xf32>, i32 -> vector<1x128xf32>
    %c80_i32_712 = arith.constant 80 : i32
    %1089 = vector.broadcast %c80_i32_712 : i32 to vector<1x128xi32>
    %1090 = arith.cmpi sge, %170, %1089 : vector<1x128xi32>
    %1091 = arith.select %1090, %1088, %1086 : vector<1x128xi1>, vector<1x128xf32>
    %c41_713 = arith.constant 41 : index
    %c128_714 = arith.constant 128 : index
    %1092 = vector.load %arg4[%c41_713, %c128_714] : memref<128x256xf32, #tpu.memory_space<vmem>>, vector<1x128xf32>
    %c98_i32_715 = arith.constant 98 : i32
    %1093 = tpu.dynamic_rotate %1092 by %c98_i32_715 dim 1 : vector<1x128xf32>, i32 -> vector<1x128xf32>
    %c98_i32_716 = arith.constant 98 : i32
    %1094 = vector.broadcast %c98_i32_716 : i32 to vector<1x128xi32>
    %1095 = arith.cmpi sge, %170, %1094 : vector<1x128xi32>
    %1096 = arith.select %1095, %1093, %1091 : vector<1x128xi1>, vector<1x128xf32>
    %c42_717 = arith.constant 42 : index
    %c128_718 = arith.constant 128 : index
    %1097 = vector.load %arg4[%c42_717, %c128_718] : memref<128x256xf32, #tpu.memory_space<vmem>>, vector<1x128xf32>
    %c116_i32_719 = arith.constant 116 : i32
    %1098 = tpu.dynamic_rotate %1097 by %c116_i32_719 dim 1 : vector<1x128xf32>, i32 -> vector<1x128xf32>
    %c116_i32_720 = arith.constant 116 : i32
    %1099 = vector.broadcast %c116_i32_720 : i32 to vector<1x128xi32>
    %1100 = arith.cmpi sge, %170, %1099 : vector<1x128xi32>
    %1101 = arith.select %1100, %1098, %1096 : vector<1x128xi1>, vector<1x128xf32>
    %1102 = arith.truncf %1101 : vector<1x128xf32> to vector<1x128xbf16>
    %c23_721 = arith.constant 23 : index
    %c0_722 = arith.constant 0 : index
    %1103 = vector.load %arg5[%c23_721, %c0_722] : memref<36x128xbf16, #tpu.memory_space<vmem>>, vector<1x128xbf16>
    tpu.vector_store %arg5[%c23_721, %c0_722], %1102 {strides = array<i32>} : memref<36x128xbf16, #tpu.memory_space<vmem>>, vector<1x128xbf16>,
    %c42_723 = arith.constant 42 : index
    %c128_724 = arith.constant 128 : index
    %1104 = vector.load %arg4[%c42_723, %c128_724] : memref<128x256xf32, #tpu.memory_space<vmem>>, vector<1x128xf32>
    %c116_i32_725 = arith.constant 116 : i32
    %1105 = tpu.dynamic_rotate %1104 by %c116_i32_725 dim 1 : vector<1x128xf32>, i32 -> vector<1x128xf32>
    %c43_726 = arith.constant 43 : index
    %c128_727 = arith.constant 128 : index
    %1106 = vector.load %arg4[%c43_726, %c128_727] : memref<128x256xf32, #tpu.memory_space<vmem>>, vector<1x128xf32>
    %c6_i32_728 = arith.constant 6 : i32
    %1107 = tpu.dynamic_rotate %1106 by %c6_i32_728 dim 1 : vector<1x128xf32>, i32 -> vector<1x128xf32>
    %c6_i32_729 = arith.constant 6 : i32
    %1108 = vector.broadcast %c6_i32_729 : i32 to vector<1x128xi32>
    %1109 = arith.cmpi sge, %170, %1108 : vector<1x128xi32>
    %1110 = arith.select %1109, %1107, %1105 : vector<1x128xi1>, vector<1x128xf32>
    %c44_730 = arith.constant 44 : index
    %c128_731 = arith.constant 128 : index
    %1111 = vector.load %arg4[%c44_730, %c128_731] : memref<128x256xf32, #tpu.memory_space<vmem>>, vector<1x128xf32>
    %c24_i32_732 = arith.constant 24 : i32
    %1112 = tpu.dynamic_rotate %1111 by %c24_i32_732 dim 1 : vector<1x128xf32>, i32 -> vector<1x128xf32>
    %c24_i32_733 = arith.constant 24 : i32
    %1113 = vector.broadcast %c24_i32_733 : i32 to vector<1x128xi32>
    %1114 = arith.cmpi sge, %170, %1113 : vector<1x128xi32>
    %1115 = arith.select %1114, %1112, %1110 : vector<1x128xi1>, vector<1x128xf32>
    %c45_734 = arith.constant 45 : index
    %c128_735 = arith.constant 128 : index
    %1116 = vector.load %arg4[%c45_734, %c128_735] : memref<128x256xf32, #tpu.memory_space<vmem>>, vector<1x128xf32>
    %c42_i32_736 = arith.constant 42 : i32
    %1117 = tpu.dynamic_rotate %1116 by %c42_i32_736 dim 1 : vector<1x128xf32>, i32 -> vector<1x128xf32>
    %c42_i32_737 = arith.constant 42 : i32
    %1118 = vector.broadcast %c42_i32_737 : i32 to vector<1x128xi32>
    %1119 = arith.cmpi sge, %170, %1118 : vector<1x128xi32>
    %1120 = arith.select %1119, %1117, %1115 : vector<1x128xi1>, vector<1x128xf32>
    %c46_738 = arith.constant 46 : index
    %c128_739 = arith.constant 128 : index
    %1121 = vector.load %arg4[%c46_738, %c128_739] : memref<128x256xf32, #tpu.memory_space<vmem>>, vector<1x128xf32>
    %c60_i32_740 = arith.constant 60 : i32
    %1122 = tpu.dynamic_rotate %1121 by %c60_i32_740 dim 1 : vector<1x128xf32>, i32 -> vector<1x128xf32>
    %c60_i32_741 = arith.constant 60 : i32
    %1123 = vector.broadcast %c60_i32_741 : i32 to vector<1x128xi32>
    %1124 = arith.cmpi sge, %170, %1123 : vector<1x128xi32>
    %1125 = arith.select %1124, %1122, %1120 : vector<1x128xi1>, vector<1x128xf32>
    %c47_742 = arith.constant 47 : index
    %c128_743 = arith.constant 128 : index
    %1126 = vector.load %arg4[%c47_742, %c128_743] : memref<128x256xf32, #tpu.memory_space<vmem>>, vector<1x128xf32>
    %c78_i32_744 = arith.constant 78 : i32
    %1127 = tpu.dynamic_rotate %1126 by %c78_i32_744 dim 1 : vector<1x128xf32>, i32 -> vector<1x128xf32>
    %c78_i32_745 = arith.constant 78 : i32
    %1128 = vector.broadcast %c78_i32_745 : i32 to vector<1x128xi32>
    %1129 = arith.cmpi sge, %170, %1128 : vector<1x128xi32>
    %1130 = arith.select %1129, %1127, %1125 : vector<1x128xi1>, vector<1x128xf32>
    %c48_746 = arith.constant 48 : index
    %c128_747 = arith.constant 128 : index
    %1131 = vector.load %arg4[%c48_746, %c128_747] : memref<128x256xf32, #tpu.memory_space<vmem>>, vector<1x128xf32>
    %c96_i32_748 = arith.constant 96 : i32
    %1132 = tpu.dynamic_rotate %1131 by %c96_i32_748 dim 1 : vector<1x128xf32>, i32 -> vector<1x128xf32>
    %c96_i32_749 = arith.constant 96 : i32
    %1133 = vector.broadcast %c96_i32_749 : i32 to vector<1x128xi32>
    %1134 = arith.cmpi sge, %170, %1133 : vector<1x128xi32>
    %1135 = arith.select %1134, %1132, %1130 : vector<1x128xi1>, vector<1x128xf32>
    %c49_750 = arith.constant 49 : index
    %c128_751 = arith.constant 128 : index
    %1136 = vector.load %arg4[%c49_750, %c128_751] : memref<128x256xf32, #tpu.memory_space<vmem>>, vector<1x128xf32>
    %c114_i32_752 = arith.constant 114 : i32
    %1137 = tpu.dynamic_rotate %1136 by %c114_i32_752 dim 1 : vector<1x128xf32>, i32 -> vector<1x128xf32>
    %c114_i32_753 = arith.constant 114 : i32
    %1138 = vector.broadcast %c114_i32_753 : i32 to vector<1x128xi32>
    %1139 = arith.cmpi sge, %170, %1138 : vector<1x128xi32>
    %1140 = arith.select %1139, %1137, %1135 : vector<1x128xi1>, vector<1x128xf32>
    %1141 = arith.truncf %1140 : vector<1x128xf32> to vector<1x128xbf16>
    %c24_754 = arith.constant 24 : index
    %c0_755 = arith.constant 0 : index
    %1142 = vector.load %arg5[%c24_754, %c0_755] : memref<36x128xbf16, #tpu.memory_space<vmem>>, vector<1x128xbf16>
    tpu.vector_store %arg5[%c24_754, %c0_755], %1141 {strides = array<i32>} : memref<36x128xbf16, #tpu.memory_space<vmem>>, vector<1x128xbf16>,
    %c49_756 = arith.constant 49 : index
    %c128_757 = arith.constant 128 : index
    %1143 = vector.load %arg4[%c49_756, %c128_757] : memref<128x256xf32, #tpu.memory_space<vmem>>, vector<1x128xf32>
    %c114_i32_758 = arith.constant 114 : i32
    %1144 = tpu.dynamic_rotate %1143 by %c114_i32_758 dim 1 : vector<1x128xf32>, i32 -> vector<1x128xf32>
    %c50_759 = arith.constant 50 : index
    %c128_760 = arith.constant 128 : index
    %1145 = vector.load %arg4[%c50_759, %c128_760] : memref<128x256xf32, #tpu.memory_space<vmem>>, vector<1x128xf32>
    %c4_i32_761 = arith.constant 4 : i32
    %1146 = tpu.dynamic_rotate %1145 by %c4_i32_761 dim 1 : vector<1x128xf32>, i32 -> vector<1x128xf32>
    %c4_i32_762 = arith.constant 4 : i32
    %1147 = vector.broadcast %c4_i32_762 : i32 to vector<1x128xi32>
    %1148 = arith.cmpi sge, %170, %1147 : vector<1x128xi32>
    %1149 = arith.select %1148, %1146, %1144 : vector<1x128xi1>, vector<1x128xf32>
    %c51_763 = arith.constant 51 : index
    %c128_764 = arith.constant 128 : index
    %1150 = vector.load %arg4[%c51_763, %c128_764] : memref<128x256xf32, #tpu.memory_space<vmem>>, vector<1x128xf32>
    %c22_i32_765 = arith.constant 22 : i32
    %1151 = tpu.dynamic_rotate %1150 by %c22_i32_765 dim 1 : vector<1x128xf32>, i32 -> vector<1x128xf32>
    %c22_i32_766 = arith.constant 22 : i32
    %1152 = vector.broadcast %c22_i32_766 : i32 to vector<1x128xi32>
    %1153 = arith.cmpi sge, %170, %1152 : vector<1x128xi32>
    %1154 = arith.select %1153, %1151, %1149 : vector<1x128xi1>, vector<1x128xf32>
    %c52_767 = arith.constant 52 : index
    %c128_768 = arith.constant 128 : index
    %1155 = vector.load %arg4[%c52_767, %c128_768] : memref<128x256xf32, #tpu.memory_space<vmem>>, vector<1x128xf32>
    %c40_i32_769 = arith.constant 40 : i32
    %1156 = tpu.dynamic_rotate %1155 by %c40_i32_769 dim 1 : vector<1x128xf32>, i32 -> vector<1x128xf32>
    %c40_i32_770 = arith.constant 40 : i32
    %1157 = vector.broadcast %c40_i32_770 : i32 to vector<1x128xi32>
    %1158 = arith.cmpi sge, %170, %1157 : vector<1x128xi32>
    %1159 = arith.select %1158, %1156, %1154 : vector<1x128xi1>, vector<1x128xf32>
    %c53_771 = arith.constant 53 : index
    %c128_772 = arith.constant 128 : index
    %1160 = vector.load %arg4[%c53_771, %c128_772] : memref<128x256xf32, #tpu.memory_space<vmem>>, vector<1x128xf32>
    %c58_i32_773 = arith.constant 58 : i32
    %1161 = tpu.dynamic_rotate %1160 by %c58_i32_773 dim 1 : vector<1x128xf32>, i32 -> vector<1x128xf32>
    %c58_i32_774 = arith.constant 58 : i32
    %1162 = vector.broadcast %c58_i32_774 : i32 to vector<1x128xi32>
    %1163 = arith.cmpi sge, %170, %1162 : vector<1x128xi32>
    %1164 = arith.select %1163, %1161, %1159 : vector<1x128xi1>, vector<1x128xf32>
    %c54_775 = arith.constant 54 : index
    %c128_776 = arith.constant 128 : index
    %1165 = vector.load %arg4[%c54_775, %c128_776] : memref<128x256xf32, #tpu.memory_space<vmem>>, vector<1x128xf32>
    %c76_i32_777 = arith.constant 76 : i32
    %1166 = tpu.dynamic_rotate %1165 by %c76_i32_777 dim 1 : vector<1x128xf32>, i32 -> vector<1x128xf32>
    %c76_i32_778 = arith.constant 76 : i32
    %1167 = vector.broadcast %c76_i32_778 : i32 to vector<1x128xi32>
    %1168 = arith.cmpi sge, %170, %1167 : vector<1x128xi32>
    %1169 = arith.select %1168, %1166, %1164 : vector<1x128xi1>, vector<1x128xf32>
    %c55_779 = arith.constant 55 : index
    %c128_780 = arith.constant 128 : index
    %1170 = vector.load %arg4[%c55_779, %c128_780] : memref<128x256xf32, #tpu.memory_space<vmem>>, vector<1x128xf32>
    %c94_i32_781 = arith.constant 94 : i32
    %1171 = tpu.dynamic_rotate %1170 by %c94_i32_781 dim 1 : vector<1x128xf32>, i32 -> vector<1x128xf32>
    %c94_i32_782 = arith.constant 94 : i32
    %1172 = vector.broadcast %c94_i32_782 : i32 to vector<1x128xi32>
    %1173 = arith.cmpi sge, %170, %1172 : vector<1x128xi32>
    %1174 = arith.select %1173, %1171, %1169 : vector<1x128xi1>, vector<1x128xf32>
    %c56_783 = arith.constant 56 : index
    %c128_784 = arith.constant 128 : index
    %1175 = vector.load %arg4[%c56_783, %c128_784] : memref<128x256xf32, #tpu.memory_space<vmem>>, vector<1x128xf32>
    %c112_i32_785 = arith.constant 112 : i32
    %1176 = tpu.dynamic_rotate %1175 by %c112_i32_785 dim 1 : vector<1x128xf32>, i32 -> vector<1x128xf32>
    %c112_i32_786 = arith.constant 112 : i32
    %1177 = vector.broadcast %c112_i32_786 : i32 to vector<1x128xi32>
    %1178 = arith.cmpi sge, %170, %1177 : vector<1x128xi32>
    %1179 = arith.select %1178, %1176, %1174 : vector<1x128xi1>, vector<1x128xf32>
    %1180 = arith.truncf %1179 : vector<1x128xf32> to vector<1x128xbf16>
    %c25_787 = arith.constant 25 : index
    %c0_788 = arith.constant 0 : index
    %1181 = vector.load %arg5[%c25_787, %c0_788] : memref<36x128xbf16, #tpu.memory_space<vmem>>, vector<1x128xbf16>
    tpu.vector_store %arg5[%c25_787, %c0_788], %1180 {strides = array<i32>} : memref<36x128xbf16, #tpu.memory_space<vmem>>, vector<1x128xbf16>,
    %c56_789 = arith.constant 56 : index
    %c128_790 = arith.constant 128 : index
    %1182 = vector.load %arg4[%c56_789, %c128_790] : memref<128x256xf32, #tpu.memory_space<vmem>>, vector<1x128xf32>
    %c112_i32_791 = arith.constant 112 : i32
    %1183 = tpu.dynamic_rotate %1182 by %c112_i32_791 dim 1 : vector<1x128xf32>, i32 -> vector<1x128xf32>
    %c57_792 = arith.constant 57 : index
    %c128_793 = arith.constant 128 : index
    %1184 = vector.load %arg4[%c57_792, %c128_793] : memref<128x256xf32, #tpu.memory_space<vmem>>, vector<1x128xf32>
    %c2_i32_794 = arith.constant 2 : i32
    %1185 = tpu.dynamic_rotate %1184 by %c2_i32_794 dim 1 : vector<1x128xf32>, i32 -> vector<1x128xf32>
    %c2_i32_795 = arith.constant 2 : i32
    %1186 = vector.broadcast %c2_i32_795 : i32 to vector<1x128xi32>
    %1187 = arith.cmpi sge, %170, %1186 : vector<1x128xi32>
    %1188 = arith.select %1187, %1185, %1183 : vector<1x128xi1>, vector<1x128xf32>
    %c58_796 = arith.constant 58 : index
    %c128_797 = arith.constant 128 : index
    %1189 = vector.load %arg4[%c58_796, %c128_797] : memref<128x256xf32, #tpu.memory_space<vmem>>, vector<1x128xf32>
    %c20_i32_798 = arith.constant 20 : i32
    %1190 = tpu.dynamic_rotate %1189 by %c20_i32_798 dim 1 : vector<1x128xf32>, i32 -> vector<1x128xf32>
    %c20_i32_799 = arith.constant 20 : i32
    %1191 = vector.broadcast %c20_i32_799 : i32 to vector<1x128xi32>
    %1192 = arith.cmpi sge, %170, %1191 : vector<1x128xi32>
    %1193 = arith.select %1192, %1190, %1188 : vector<1x128xi1>, vector<1x128xf32>
    %c59_800 = arith.constant 59 : index
    %c128_801 = arith.constant 128 : index
    %1194 = vector.load %arg4[%c59_800, %c128_801] : memref<128x256xf32, #tpu.memory_space<vmem>>, vector<1x128xf32>
    %c38_i32_802 = arith.constant 38 : i32
    %1195 = tpu.dynamic_rotate %1194 by %c38_i32_802 dim 1 : vector<1x128xf32>, i32 -> vector<1x128xf32>
    %c38_i32_803 = arith.constant 38 : i32
    %1196 = vector.broadcast %c38_i32_803 : i32 to vector<1x128xi32>
    %1197 = arith.cmpi sge, %170, %1196 : vector<1x128xi32>
    %1198 = arith.select %1197, %1195, %1193 : vector<1x128xi1>, vector<1x128xf32>
    %c60_804 = arith.constant 60 : index
    %c128_805 = arith.constant 128 : index
    %1199 = vector.load %arg4[%c60_804, %c128_805] : memref<128x256xf32, #tpu.memory_space<vmem>>, vector<1x128xf32>
    %c56_i32_806 = arith.constant 56 : i32
    %1200 = tpu.dynamic_rotate %1199 by %c56_i32_806 dim 1 : vector<1x128xf32>, i32 -> vector<1x128xf32>
    %c56_i32_807 = arith.constant 56 : i32
    %1201 = vector.broadcast %c56_i32_807 : i32 to vector<1x128xi32>
    %1202 = arith.cmpi sge, %170, %1201 : vector<1x128xi32>
    %1203 = arith.select %1202, %1200, %1198 : vector<1x128xi1>, vector<1x128xf32>
    %c61_808 = arith.constant 61 : index
    %c128_809 = arith.constant 128 : index
    %1204 = vector.load %arg4[%c61_808, %c128_809] : memref<128x256xf32, #tpu.memory_space<vmem>>, vector<1x128xf32>
    %c74_i32_810 = arith.constant 74 : i32
    %1205 = tpu.dynamic_rotate %1204 by %c74_i32_810 dim 1 : vector<1x128xf32>, i32 -> vector<1x128xf32>
    %c74_i32_811 = arith.constant 74 : i32
    %1206 = vector.broadcast %c74_i32_811 : i32 to vector<1x128xi32>
    %1207 = arith.cmpi sge, %170, %1206 : vector<1x128xi32>
    %1208 = arith.select %1207, %1205, %1203 : vector<1x128xi1>, vector<1x128xf32>
    %c62_812 = arith.constant 62 : index
    %c128_813 = arith.constant 128 : index
    %1209 = vector.load %arg4[%c62_812, %c128_813] : memref<128x256xf32, #tpu.memory_space<vmem>>, vector<1x128xf32>
    %c92_i32_814 = arith.constant 92 : i32
    %1210 = tpu.dynamic_rotate %1209 by %c92_i32_814 dim 1 : vector<1x128xf32>, i32 -> vector<1x128xf32>
    %c92_i32_815 = arith.constant 92 : i32
    %1211 = vector.broadcast %c92_i32_815 : i32 to vector<1x128xi32>
    %1212 = arith.cmpi sge, %170, %1211 : vector<1x128xi32>
    %1213 = arith.select %1212, %1210, %1208 : vector<1x128xi1>, vector<1x128xf32>
    %c63_816 = arith.constant 63 : index
    %c128_817 = arith.constant 128 : index
    %1214 = vector.load %arg4[%c63_816, %c128_817] : memref<128x256xf32, #tpu.memory_space<vmem>>, vector<1x128xf32>
    %c110_i32_818 = arith.constant 110 : i32
    %1215 = tpu.dynamic_rotate %1214 by %c110_i32_818 dim 1 : vector<1x128xf32>, i32 -> vector<1x128xf32>
    %c110_i32_819 = arith.constant 110 : i32
    %1216 = vector.broadcast %c110_i32_819 : i32 to vector<1x128xi32>
    %1217 = arith.cmpi sge, %170, %1216 : vector<1x128xi32>
    %1218 = arith.select %1217, %1215, %1213 : vector<1x128xi1>, vector<1x128xf32>
    %1219 = arith.truncf %1218 : vector<1x128xf32> to vector<1x128xbf16>
    %c26_820 = arith.constant 26 : index
    %c0_821 = arith.constant 0 : index
    %1220 = vector.load %arg5[%c26_820, %c0_821] : memref<36x128xbf16, #tpu.memory_space<vmem>>, vector<1x128xbf16>
    tpu.vector_store %arg5[%c26_820, %c0_821], %1219 {strides = array<i32>} : memref<36x128xbf16, #tpu.memory_space<vmem>>, vector<1x128xbf16>,
    %c64_822 = arith.constant 64 : index
    %c128_823 = arith.constant 128 : index
    %1221 = vector.load %arg4[%c64_822, %c128_823] : memref<128x256xf32, #tpu.memory_space<vmem>>, vector<1x128xf32>
    %c65_824 = arith.constant 65 : index
    %c128_825 = arith.constant 128 : index
    %1222 = vector.load %arg4[%c65_824, %c128_825] : memref<128x256xf32, #tpu.memory_space<vmem>>, vector<1x128xf32>
    %c18_i32_826 = arith.constant 18 : i32
    %1223 = tpu.dynamic_rotate %1222 by %c18_i32_826 dim 1 : vector<1x128xf32>, i32 -> vector<1x128xf32>
    %c18_i32_827 = arith.constant 18 : i32
    %1224 = vector.broadcast %c18_i32_827 : i32 to vector<1x128xi32>
    %1225 = arith.cmpi sge, %170, %1224 : vector<1x128xi32>
    %1226 = arith.select %1225, %1223, %1221 : vector<1x128xi1>, vector<1x128xf32>
    %c66_828 = arith.constant 66 : index
    %c128_829 = arith.constant 128 : index
    %1227 = vector.load %arg4[%c66_828, %c128_829] : memref<128x256xf32, #tpu.memory_space<vmem>>, vector<1x128xf32>
    %c36_i32_830 = arith.constant 36 : i32
    %1228 = tpu.dynamic_rotate %1227 by %c36_i32_830 dim 1 : vector<1x128xf32>, i32 -> vector<1x128xf32>
    %c36_i32_831 = arith.constant 36 : i32
    %1229 = vector.broadcast %c36_i32_831 : i32 to vector<1x128xi32>
    %1230 = arith.cmpi sge, %170, %1229 : vector<1x128xi32>
    %1231 = arith.select %1230, %1228, %1226 : vector<1x128xi1>, vector<1x128xf32>
    %c67_832 = arith.constant 67 : index
    %c128_833 = arith.constant 128 : index
    %1232 = vector.load %arg4[%c67_832, %c128_833] : memref<128x256xf32, #tpu.memory_space<vmem>>, vector<1x128xf32>
    %c54_i32_834 = arith.constant 54 : i32
    %1233 = tpu.dynamic_rotate %1232 by %c54_i32_834 dim 1 : vector<1x128xf32>, i32 -> vector<1x128xf32>
    %c54_i32_835 = arith.constant 54 : i32
    %1234 = vector.broadcast %c54_i32_835 : i32 to vector<1x128xi32>
    %1235 = arith.cmpi sge, %170, %1234 : vector<1x128xi32>
    %1236 = arith.select %1235, %1233, %1231 : vector<1x128xi1>, vector<1x128xf32>
    %c68_836 = arith.constant 68 : index
    %c128_837 = arith.constant 128 : index
    %1237 = vector.load %arg4[%c68_836, %c128_837] : memref<128x256xf32, #tpu.memory_space<vmem>>, vector<1x128xf32>
    %c72_i32_838 = arith.constant 72 : i32
    %1238 = tpu.dynamic_rotate %1237 by %c72_i32_838 dim 1 : vector<1x128xf32>, i32 -> vector<1x128xf32>
    %c72_i32_839 = arith.constant 72 : i32
    %1239 = vector.broadcast %c72_i32_839 : i32 to vector<1x128xi32>
    %1240 = arith.cmpi sge, %170, %1239 : vector<1x128xi32>
    %1241 = arith.select %1240, %1238, %1236 : vector<1x128xi1>, vector<1x128xf32>
    %c69_840 = arith.constant 69 : index
    %c128_841 = arith.constant 128 : index
    %1242 = vector.load %arg4[%c69_840, %c128_841] : memref<128x256xf32, #tpu.memory_space<vmem>>, vector<1x128xf32>
    %c90_i32_842 = arith.constant 90 : i32
    %1243 = tpu.dynamic_rotate %1242 by %c90_i32_842 dim 1 : vector<1x128xf32>, i32 -> vector<1x128xf32>
    %c90_i32_843 = arith.constant 90 : i32
    %1244 = vector.broadcast %c90_i32_843 : i32 to vector<1x128xi32>
    %1245 = arith.cmpi sge, %170, %1244 : vector<1x128xi32>
    %1246 = arith.select %1245, %1243, %1241 : vector<1x128xi1>, vector<1x128xf32>
    %c70_844 = arith.constant 70 : index
    %c128_845 = arith.constant 128 : index
    %1247 = vector.load %arg4[%c70_844, %c128_845] : memref<128x256xf32, #tpu.memory_space<vmem>>, vector<1x128xf32>
    %c108_i32_846 = arith.constant 108 : i32
    %1248 = tpu.dynamic_rotate %1247 by %c108_i32_846 dim 1 : vector<1x128xf32>, i32 -> vector<1x128xf32>
    %c108_i32_847 = arith.constant 108 : i32
    %1249 = vector.broadcast %c108_i32_847 : i32 to vector<1x128xi32>
    %1250 = arith.cmpi sge, %170, %1249 : vector<1x128xi32>
    %1251 = arith.select %1250, %1248, %1246 : vector<1x128xi1>, vector<1x128xf32>
    %c71_848 = arith.constant 71 : index
    %c128_849 = arith.constant 128 : index
    %1252 = vector.load %arg4[%c71_848, %c128_849] : memref<128x256xf32, #tpu.memory_space<vmem>>, vector<1x128xf32>
    %c126_i32_850 = arith.constant 126 : i32
    %1253 = tpu.dynamic_rotate %1252 by %c126_i32_850 dim 1 : vector<1x128xf32>, i32 -> vector<1x128xf32>
    %c126_i32_851 = arith.constant 126 : i32
    %1254 = vector.broadcast %c126_i32_851 : i32 to vector<1x128xi32>
    %1255 = arith.cmpi sge, %170, %1254 : vector<1x128xi32>
    %1256 = arith.select %1255, %1253, %1251 : vector<1x128xi1>, vector<1x128xf32>
    %1257 = arith.truncf %1256 : vector<1x128xf32> to vector<1x128xbf16>
    %c27_852 = arith.constant 27 : index
    %c0_853 = arith.constant 0 : index
    %1258 = vector.load %arg5[%c27_852, %c0_853] : memref<36x128xbf16, #tpu.memory_space<vmem>>, vector<1x128xbf16>
    tpu.vector_store %arg5[%c27_852, %c0_853], %1257 {strides = array<i32>} : memref<36x128xbf16, #tpu.memory_space<vmem>>, vector<1x128xbf16>,
    %c71_854 = arith.constant 71 : index
    %c128_855 = arith.constant 128 : index
    %1259 = vector.load %arg4[%c71_854, %c128_855] : memref<128x256xf32, #tpu.memory_space<vmem>>, vector<1x128xf32>
    %c126_i32_856 = arith.constant 126 : i32
    %1260 = tpu.dynamic_rotate %1259 by %c126_i32_856 dim 1 : vector<1x128xf32>, i32 -> vector<1x128xf32>
    %c72_857 = arith.constant 72 : index
    %c128_858 = arith.constant 128 : index
    %1261 = vector.load %arg4[%c72_857, %c128_858] : memref<128x256xf32, #tpu.memory_space<vmem>>, vector<1x128xf32>
    %c16_i32_859 = arith.constant 16 : i32
    %1262 = tpu.dynamic_rotate %1261 by %c16_i32_859 dim 1 : vector<1x128xf32>, i32 -> vector<1x128xf32>
    %c16_i32_860 = arith.constant 16 : i32
    %1263 = vector.broadcast %c16_i32_860 : i32 to vector<1x128xi32>
    %1264 = arith.cmpi sge, %170, %1263 : vector<1x128xi32>
    %1265 = arith.select %1264, %1262, %1260 : vector<1x128xi1>, vector<1x128xf32>
    %c73_861 = arith.constant 73 : index
    %c128_862 = arith.constant 128 : index
    %1266 = vector.load %arg4[%c73_861, %c128_862] : memref<128x256xf32, #tpu.memory_space<vmem>>, vector<1x128xf32>
    %c34_i32_863 = arith.constant 34 : i32
    %1267 = tpu.dynamic_rotate %1266 by %c34_i32_863 dim 1 : vector<1x128xf32>, i32 -> vector<1x128xf32>
    %c34_i32_864 = arith.constant 34 : i32
    %1268 = vector.broadcast %c34_i32_864 : i32 to vector<1x128xi32>
    %1269 = arith.cmpi sge, %170, %1268 : vector<1x128xi32>
    %1270 = arith.select %1269, %1267, %1265 : vector<1x128xi1>, vector<1x128xf32>
    %c74_865 = arith.constant 74 : index
    %c128_866 = arith.constant 128 : index
    %1271 = vector.load %arg4[%c74_865, %c128_866] : memref<128x256xf32, #tpu.memory_space<vmem>>, vector<1x128xf32>
    %c52_i32_867 = arith.constant 52 : i32
    %1272 = tpu.dynamic_rotate %1271 by %c52_i32_867 dim 1 : vector<1x128xf32>, i32 -> vector<1x128xf32>
    %c52_i32_868 = arith.constant 52 : i32
    %1273 = vector.broadcast %c52_i32_868 : i32 to vector<1x128xi32>
    %1274 = arith.cmpi sge, %170, %1273 : vector<1x128xi32>
    %1275 = arith.select %1274, %1272, %1270 : vector<1x128xi1>, vector<1x128xf32>
    %c75_869 = arith.constant 75 : index
    %c128_870 = arith.constant 128 : index
    %1276 = vector.load %arg4[%c75_869, %c128_870] : memref<128x256xf32, #tpu.memory_space<vmem>>, vector<1x128xf32>
    %c70_i32_871 = arith.constant 70 : i32
    %1277 = tpu.dynamic_rotate %1276 by %c70_i32_871 dim 1 : vector<1x128xf32>, i32 -> vector<1x128xf32>
    %c70_i32_872 = arith.constant 70 : i32
    %1278 = vector.broadcast %c70_i32_872 : i32 to vector<1x128xi32>
    %1279 = arith.cmpi sge, %170, %1278 : vector<1x128xi32>
    %1280 = arith.select %1279, %1277, %1275 : vector<1x128xi1>, vector<1x128xf32>
    %c76_873 = arith.constant 76 : index
    %c128_874 = arith.constant 128 : index
    %1281 = vector.load %arg4[%c76_873, %c128_874] : memref<128x256xf32, #tpu.memory_space<vmem>>, vector<1x128xf32>
    %c88_i32_875 = arith.constant 88 : i32
    %1282 = tpu.dynamic_rotate %1281 by %c88_i32_875 dim 1 : vector<1x128xf32>, i32 -> vector<1x128xf32>
    %c88_i32_876 = arith.constant 88 : i32
    %1283 = vector.broadcast %c88_i32_876 : i32 to vector<1x128xi32>
    %1284 = arith.cmpi sge, %170, %1283 : vector<1x128xi32>
    %1285 = arith.select %1284, %1282, %1280 : vector<1x128xi1>, vector<1x128xf32>
    %c77_877 = arith.constant 77 : index
    %c128_878 = arith.constant 128 : index
    %1286 = vector.load %arg4[%c77_877, %c128_878] : memref<128x256xf32, #tpu.memory_space<vmem>>, vector<1x128xf32>
    %c106_i32_879 = arith.constant 106 : i32
    %1287 = tpu.dynamic_rotate %1286 by %c106_i32_879 dim 1 : vector<1x128xf32>, i32 -> vector<1x128xf32>
    %c106_i32_880 = arith.constant 106 : i32
    %1288 = vector.broadcast %c106_i32_880 : i32 to vector<1x128xi32>
    %1289 = arith.cmpi sge, %170, %1288 : vector<1x128xi32>
    %1290 = arith.select %1289, %1287, %1285 : vector<1x128xi1>, vector<1x128xf32>
    %c78_881 = arith.constant 78 : index
    %c128_882 = arith.constant 128 : index
    %1291 = vector.load %arg4[%c78_881, %c128_882] : memref<128x256xf32, #tpu.memory_space<vmem>>, vector<1x128xf32>
    %c124_i32_883 = arith.constant 124 : i32
    %1292 = tpu.dynamic_rotate %1291 by %c124_i32_883 dim 1 : vector<1x128xf32>, i32 -> vector<1x128xf32>
    %c124_i32_884 = arith.constant 124 : i32
    %1293 = vector.broadcast %c124_i32_884 : i32 to vector<1x128xi32>
    %1294 = arith.cmpi sge, %170, %1293 : vector<1x128xi32>
    %1295 = arith.select %1294, %1292, %1290 : vector<1x128xi1>, vector<1x128xf32>
    %1296 = arith.truncf %1295 : vector<1x128xf32> to vector<1x128xbf16>
    %c28_885 = arith.constant 28 : index
    %c0_886 = arith.constant 0 : index
    %1297 = vector.load %arg5[%c28_885, %c0_886] : memref<36x128xbf16, #tpu.memory_space<vmem>>, vector<1x128xbf16>
    tpu.vector_store %arg5[%c28_885, %c0_886], %1296 {strides = array<i32>} : memref<36x128xbf16, #tpu.memory_space<vmem>>, vector<1x128xbf16>,
    %c78_887 = arith.constant 78 : index
    %c128_888 = arith.constant 128 : index
    %1298 = vector.load %arg4[%c78_887, %c128_888] : memref<128x256xf32, #tpu.memory_space<vmem>>, vector<1x128xf32>
    %c124_i32_889 = arith.constant 124 : i32
    %1299 = tpu.dynamic_rotate %1298 by %c124_i32_889 dim 1 : vector<1x128xf32>, i32 -> vector<1x128xf32>
    %c79_890 = arith.constant 79 : index
    %c128_891 = arith.constant 128 : index
    %1300 = vector.load %arg4[%c79_890, %c128_891] : memref<128x256xf32, #tpu.memory_space<vmem>>, vector<1x128xf32>
    %c14_i32_892 = arith.constant 14 : i32
    %1301 = tpu.dynamic_rotate %1300 by %c14_i32_892 dim 1 : vector<1x128xf32>, i32 -> vector<1x128xf32>
    %c14_i32_893 = arith.constant 14 : i32
    %1302 = vector.broadcast %c14_i32_893 : i32 to vector<1x128xi32>
    %1303 = arith.cmpi sge, %170, %1302 : vector<1x128xi32>
    %1304 = arith.select %1303, %1301, %1299 : vector<1x128xi1>, vector<1x128xf32>
    %c80_894 = arith.constant 80 : index
    %c128_895 = arith.constant 128 : index
    %1305 = vector.load %arg4[%c80_894, %c128_895] : memref<128x256xf32, #tpu.memory_space<vmem>>, vector<1x128xf32>
    %c32_i32_896 = arith.constant 32 : i32
    %1306 = tpu.dynamic_rotate %1305 by %c32_i32_896 dim 1 : vector<1x128xf32>, i32 -> vector<1x128xf32>
    %c32_i32_897 = arith.constant 32 : i32
    %1307 = vector.broadcast %c32_i32_897 : i32 to vector<1x128xi32>
    %1308 = arith.cmpi sge, %170, %1307 : vector<1x128xi32>
    %1309 = arith.select %1308, %1306, %1304 : vector<1x128xi1>, vector<1x128xf32>
    %c81_898 = arith.constant 81 : index
    %c128_899 = arith.constant 128 : index
    %1310 = vector.load %arg4[%c81_898, %c128_899] : memref<128x256xf32, #tpu.memory_space<vmem>>, vector<1x128xf32>
    %c50_i32_900 = arith.constant 50 : i32
    %1311 = tpu.dynamic_rotate %1310 by %c50_i32_900 dim 1 : vector<1x128xf32>, i32 -> vector<1x128xf32>
    %c50_i32_901 = arith.constant 50 : i32
    %1312 = vector.broadcast %c50_i32_901 : i32 to vector<1x128xi32>
    %1313 = arith.cmpi sge, %170, %1312 : vector<1x128xi32>
    %1314 = arith.select %1313, %1311, %1309 : vector<1x128xi1>, vector<1x128xf32>
    %c82_902 = arith.constant 82 : index
    %c128_903 = arith.constant 128 : index
    %1315 = vector.load %arg4[%c82_902, %c128_903] : memref<128x256xf32, #tpu.memory_space<vmem>>, vector<1x128xf32>
    %c68_i32_904 = arith.constant 68 : i32
    %1316 = tpu.dynamic_rotate %1315 by %c68_i32_904 dim 1 : vector<1x128xf32>, i32 -> vector<1x128xf32>
    %c68_i32_905 = arith.constant 68 : i32
    %1317 = vector.broadcast %c68_i32_905 : i32 to vector<1x128xi32>
    %1318 = arith.cmpi sge, %170, %1317 : vector<1x128xi32>
    %1319 = arith.select %1318, %1316, %1314 : vector<1x128xi1>, vector<1x128xf32>
    %c83_906 = arith.constant 83 : index
    %c128_907 = arith.constant 128 : index
    %1320 = vector.load %arg4[%c83_906, %c128_907] : memref<128x256xf32, #tpu.memory_space<vmem>>, vector<1x128xf32>
    %c86_i32_908 = arith.constant 86 : i32
    %1321 = tpu.dynamic_rotate %1320 by %c86_i32_908 dim 1 : vector<1x128xf32>, i32 -> vector<1x128xf32>
    %c86_i32_909 = arith.constant 86 : i32
    %1322 = vector.broadcast %c86_i32_909 : i32 to vector<1x128xi32>
    %1323 = arith.cmpi sge, %170, %1322 : vector<1x128xi32>
    %1324 = arith.select %1323, %1321, %1319 : vector<1x128xi1>, vector<1x128xf32>
    %c84_910 = arith.constant 84 : index
    %c128_911 = arith.constant 128 : index
    %1325 = vector.load %arg4[%c84_910, %c128_911] : memref<128x256xf32, #tpu.memory_space<vmem>>, vector<1x128xf32>
    %c104_i32_912 = arith.constant 104 : i32
    %1326 = tpu.dynamic_rotate %1325 by %c104_i32_912 dim 1 : vector<1x128xf32>, i32 -> vector<1x128xf32>
    %c104_i32_913 = arith.constant 104 : i32
    %1327 = vector.broadcast %c104_i32_913 : i32 to vector<1x128xi32>
    %1328 = arith.cmpi sge, %170, %1327 : vector<1x128xi32>
    %1329 = arith.select %1328, %1326, %1324 : vector<1x128xi1>, vector<1x128xf32>
    %c85_914 = arith.constant 85 : index
    %c128_915 = arith.constant 128 : index
    %1330 = vector.load %arg4[%c85_914, %c128_915] : memref<128x256xf32, #tpu.memory_space<vmem>>, vector<1x128xf32>
    %c122_i32_916 = arith.constant 122 : i32
    %1331 = tpu.dynamic_rotate %1330 by %c122_i32_916 dim 1 : vector<1x128xf32>, i32 -> vector<1x128xf32>
    %c122_i32_917 = arith.constant 122 : i32
    %1332 = vector.broadcast %c122_i32_917 : i32 to vector<1x128xi32>
    %1333 = arith.cmpi sge, %170, %1332 : vector<1x128xi32>
    %1334 = arith.select %1333, %1331, %1329 : vector<1x128xi1>, vector<1x128xf32>
    %1335 = arith.truncf %1334 : vector<1x128xf32> to vector<1x128xbf16>
    %c29_918 = arith.constant 29 : index
    %c0_919 = arith.constant 0 : index
    %1336 = vector.load %arg5[%c29_918, %c0_919] : memref<36x128xbf16, #tpu.memory_space<vmem>>, vector<1x128xbf16>
    tpu.vector_store %arg5[%c29_918, %c0_919], %1335 {strides = array<i32>} : memref<36x128xbf16, #tpu.memory_space<vmem>>, vector<1x128xbf16>,
    %c85_920 = arith.constant 85 : index
    %c128_921 = arith.constant 128 : index
    %1337 = vector.load %arg4[%c85_920, %c128_921] : memref<128x256xf32, #tpu.memory_space<vmem>>, vector<1x128xf32>
    %c122_i32_922 = arith.constant 122 : i32
    %1338 = tpu.dynamic_rotate %1337 by %c122_i32_922 dim 1 : vector<1x128xf32>, i32 -> vector<1x128xf32>
    %c86_923 = arith.constant 86 : index
    %c128_924 = arith.constant 128 : index
    %1339 = vector.load %arg4[%c86_923, %c128_924] : memref<128x256xf32, #tpu.memory_space<vmem>>, vector<1x128xf32>
    %c12_i32_925 = arith.constant 12 : i32
    %1340 = tpu.dynamic_rotate %1339 by %c12_i32_925 dim 1 : vector<1x128xf32>, i32 -> vector<1x128xf32>
    %c12_i32_926 = arith.constant 12 : i32
    %1341 = vector.broadcast %c12_i32_926 : i32 to vector<1x128xi32>
    %1342 = arith.cmpi sge, %170, %1341 : vector<1x128xi32>
    %1343 = arith.select %1342, %1340, %1338 : vector<1x128xi1>, vector<1x128xf32>
    %c87_927 = arith.constant 87 : index
    %c128_928 = arith.constant 128 : index
    %1344 = vector.load %arg4[%c87_927, %c128_928] : memref<128x256xf32, #tpu.memory_space<vmem>>, vector<1x128xf32>
    %c30_i32_929 = arith.constant 30 : i32
    %1345 = tpu.dynamic_rotate %1344 by %c30_i32_929 dim 1 : vector<1x128xf32>, i32 -> vector<1x128xf32>
    %c30_i32_930 = arith.constant 30 : i32
    %1346 = vector.broadcast %c30_i32_930 : i32 to vector<1x128xi32>
    %1347 = arith.cmpi sge, %170, %1346 : vector<1x128xi32>
    %1348 = arith.select %1347, %1345, %1343 : vector<1x128xi1>, vector<1x128xf32>
    %c88_931 = arith.constant 88 : index
    %c128_932 = arith.constant 128 : index
    %1349 = vector.load %arg4[%c88_931, %c128_932] : memref<128x256xf32, #tpu.memory_space<vmem>>, vector<1x128xf32>
    %c48_i32_933 = arith.constant 48 : i32
    %1350 = tpu.dynamic_rotate %1349 by %c48_i32_933 dim 1 : vector<1x128xf32>, i32 -> vector<1x128xf32>
    %c48_i32_934 = arith.constant 48 : i32
    %1351 = vector.broadcast %c48_i32_934 : i32 to vector<1x128xi32>
    %1352 = arith.cmpi sge, %170, %1351 : vector<1x128xi32>
    %1353 = arith.select %1352, %1350, %1348 : vector<1x128xi1>, vector<1x128xf32>
    %c89_935 = arith.constant 89 : index
    %c128_936 = arith.constant 128 : index
    %1354 = vector.load %arg4[%c89_935, %c128_936] : memref<128x256xf32, #tpu.memory_space<vmem>>, vector<1x128xf32>
    %c66_i32_937 = arith.constant 66 : i32
    %1355 = tpu.dynamic_rotate %1354 by %c66_i32_937 dim 1 : vector<1x128xf32>, i32 -> vector<1x128xf32>
    %c66_i32_938 = arith.constant 66 : i32
    %1356 = vector.broadcast %c66_i32_938 : i32 to vector<1x128xi32>
    %1357 = arith.cmpi sge, %170, %1356 : vector<1x128xi32>
    %1358 = arith.select %1357, %1355, %1353 : vector<1x128xi1>, vector<1x128xf32>
    %c90_939 = arith.constant 90 : index
    %c128_940 = arith.constant 128 : index
    %1359 = vector.load %arg4[%c90_939, %c128_940] : memref<128x256xf32, #tpu.memory_space<vmem>>, vector<1x128xf32>
    %c84_i32_941 = arith.constant 84 : i32
    %1360 = tpu.dynamic_rotate %1359 by %c84_i32_941 dim 1 : vector<1x128xf32>, i32 -> vector<1x128xf32>
    %c84_i32_942 = arith.constant 84 : i32
    %1361 = vector.broadcast %c84_i32_942 : i32 to vector<1x128xi32>
    %1362 = arith.cmpi sge, %170, %1361 : vector<1x128xi32>
    %1363 = arith.select %1362, %1360, %1358 : vector<1x128xi1>, vector<1x128xf32>
    %c91_943 = arith.constant 91 : index
    %c128_944 = arith.constant 128 : index
    %1364 = vector.load %arg4[%c91_943, %c128_944] : memref<128x256xf32, #tpu.memory_space<vmem>>, vector<1x128xf32>
    %c102_i32_945 = arith.constant 102 : i32
    %1365 = tpu.dynamic_rotate %1364 by %c102_i32_945 dim 1 : vector<1x128xf32>, i32 -> vector<1x128xf32>
    %c102_i32_946 = arith.constant 102 : i32
    %1366 = vector.broadcast %c102_i32_946 : i32 to vector<1x128xi32>
    %1367 = arith.cmpi sge, %170, %1366 : vector<1x128xi32>
    %1368 = arith.select %1367, %1365, %1363 : vector<1x128xi1>, vector<1x128xf32>
    %c92_947 = arith.constant 92 : index
    %c128_948 = arith.constant 128 : index
    %1369 = vector.load %arg4[%c92_947, %c128_948] : memref<128x256xf32, #tpu.memory_space<vmem>>, vector<1x128xf32>
    %c120_i32_949 = arith.constant 120 : i32
    %1370 = tpu.dynamic_rotate %1369 by %c120_i32_949 dim 1 : vector<1x128xf32>, i32 -> vector<1x128xf32>
    %c120_i32_950 = arith.constant 120 : i32
    %1371 = vector.broadcast %c120_i32_950 : i32 to vector<1x128xi32>
    %1372 = arith.cmpi sge, %170, %1371 : vector<1x128xi32>
    %1373 = arith.select %1372, %1370, %1368 : vector<1x128xi1>, vector<1x128xf32>
    %1374 = arith.truncf %1373 : vector<1x128xf32> to vector<1x128xbf16>
    %c30_951 = arith.constant 30 : index
    %c0_952 = arith.constant 0 : index
    %1375 = vector.load %arg5[%c30_951, %c0_952] : memref<36x128xbf16, #tpu.memory_space<vmem>>, vector<1x128xbf16>
    tpu.vector_store %arg5[%c30_951, %c0_952], %1374 {strides = array<i32>} : memref<36x128xbf16, #tpu.memory_space<vmem>>, vector<1x128xbf16>,
    %c92_953 = arith.constant 92 : index
    %c128_954 = arith.constant 128 : index
    %1376 = vector.load %arg4[%c92_953, %c128_954] : memref<128x256xf32, #tpu.memory_space<vmem>>, vector<1x128xf32>
    %c120_i32_955 = arith.constant 120 : i32
    %1377 = tpu.dynamic_rotate %1376 by %c120_i32_955 dim 1 : vector<1x128xf32>, i32 -> vector<1x128xf32>
    %c93_956 = arith.constant 93 : index
    %c128_957 = arith.constant 128 : index
    %1378 = vector.load %arg4[%c93_956, %c128_957] : memref<128x256xf32, #tpu.memory_space<vmem>>, vector<1x128xf32>
    %c10_i32_958 = arith.constant 10 : i32
    %1379 = tpu.dynamic_rotate %1378 by %c10_i32_958 dim 1 : vector<1x128xf32>, i32 -> vector<1x128xf32>
    %c10_i32_959 = arith.constant 10 : i32
    %1380 = vector.broadcast %c10_i32_959 : i32 to vector<1x128xi32>
    %1381 = arith.cmpi sge, %170, %1380 : vector<1x128xi32>
    %1382 = arith.select %1381, %1379, %1377 : vector<1x128xi1>, vector<1x128xf32>
    %c94_960 = arith.constant 94 : index
    %c128_961 = arith.constant 128 : index
    %1383 = vector.load %arg4[%c94_960, %c128_961] : memref<128x256xf32, #tpu.memory_space<vmem>>, vector<1x128xf32>
    %c28_i32_962 = arith.constant 28 : i32
    %1384 = tpu.dynamic_rotate %1383 by %c28_i32_962 dim 1 : vector<1x128xf32>, i32 -> vector<1x128xf32>
    %c28_i32_963 = arith.constant 28 : i32
    %1385 = vector.broadcast %c28_i32_963 : i32 to vector<1x128xi32>
    %1386 = arith.cmpi sge, %170, %1385 : vector<1x128xi32>
    %1387 = arith.select %1386, %1384, %1382 : vector<1x128xi1>, vector<1x128xf32>
    %c95_964 = arith.constant 95 : index
    %c128_965 = arith.constant 128 : index
    %1388 = vector.load %arg4[%c95_964, %c128_965] : memref<128x256xf32, #tpu.memory_space<vmem>>, vector<1x128xf32>
    %c46_i32_966 = arith.constant 46 : i32
    %1389 = tpu.dynamic_rotate %1388 by %c46_i32_966 dim 1 : vector<1x128xf32>, i32 -> vector<1x128xf32>
    %c46_i32_967 = arith.constant 46 : i32
    %1390 = vector.broadcast %c46_i32_967 : i32 to vector<1x128xi32>
    %1391 = arith.cmpi sge, %170, %1390 : vector<1x128xi32>
    %1392 = arith.select %1391, %1389, %1387 : vector<1x128xi1>, vector<1x128xf32>
    %c96_968 = arith.constant 96 : index
    %c128_969 = arith.constant 128 : index
    %1393 = vector.load %arg4[%c96_968, %c128_969] : memref<128x256xf32, #tpu.memory_space<vmem>>, vector<1x128xf32>
    %c64_i32_970 = arith.constant 64 : i32
    %1394 = tpu.dynamic_rotate %1393 by %c64_i32_970 dim 1 : vector<1x128xf32>, i32 -> vector<1x128xf32>
    %c64_i32_971 = arith.constant 64 : i32
    %1395 = vector.broadcast %c64_i32_971 : i32 to vector<1x128xi32>
    %1396 = arith.cmpi sge, %170, %1395 : vector<1x128xi32>
    %1397 = arith.select %1396, %1394, %1392 : vector<1x128xi1>, vector<1x128xf32>
    %c97_972 = arith.constant 97 : index
    %c128_973 = arith.constant 128 : index
    %1398 = vector.load %arg4[%c97_972, %c128_973] : memref<128x256xf32, #tpu.memory_space<vmem>>, vector<1x128xf32>
    %c82_i32_974 = arith.constant 82 : i32
    %1399 = tpu.dynamic_rotate %1398 by %c82_i32_974 dim 1 : vector<1x128xf32>, i32 -> vector<1x128xf32>
    %c82_i32_975 = arith.constant 82 : i32
    %1400 = vector.broadcast %c82_i32_975 : i32 to vector<1x128xi32>
    %1401 = arith.cmpi sge, %170, %1400 : vector<1x128xi32>
    %1402 = arith.select %1401, %1399, %1397 : vector<1x128xi1>, vector<1x128xf32>
    %c98_976 = arith.constant 98 : index
    %c128_977 = arith.constant 128 : index
    %1403 = vector.load %arg4[%c98_976, %c128_977] : memref<128x256xf32, #tpu.memory_space<vmem>>, vector<1x128xf32>
    %c100_i32_978 = arith.constant 100 : i32
    %1404 = tpu.dynamic_rotate %1403 by %c100_i32_978 dim 1 : vector<1x128xf32>, i32 -> vector<1x128xf32>
    %c100_i32_979 = arith.constant 100 : i32
    %1405 = vector.broadcast %c100_i32_979 : i32 to vector<1x128xi32>
    %1406 = arith.cmpi sge, %170, %1405 : vector<1x128xi32>
    %1407 = arith.select %1406, %1404, %1402 : vector<1x128xi1>, vector<1x128xf32>
    %c99_980 = arith.constant 99 : index
    %c128_981 = arith.constant 128 : index
    %1408 = vector.load %arg4[%c99_980, %c128_981] : memref<128x256xf32, #tpu.memory_space<vmem>>, vector<1x128xf32>
    %c118_i32_982 = arith.constant 118 : i32
    %1409 = tpu.dynamic_rotate %1408 by %c118_i32_982 dim 1 : vector<1x128xf32>, i32 -> vector<1x128xf32>
    %c118_i32_983 = arith.constant 118 : i32
    %1410 = vector.broadcast %c118_i32_983 : i32 to vector<1x128xi32>
    %1411 = arith.cmpi sge, %170, %1410 : vector<1x128xi32>
    %1412 = arith.select %1411, %1409, %1407 : vector<1x128xi1>, vector<1x128xf32>
    %1413 = arith.truncf %1412 : vector<1x128xf32> to vector<1x128xbf16>
    %c31_984 = arith.constant 31 : index
    %c0_985 = arith.constant 0 : index
    %1414 = vector.load %arg5[%c31_984, %c0_985] : memref<36x128xbf16, #tpu.memory_space<vmem>>, vector<1x128xbf16>
    tpu.vector_store %arg5[%c31_984, %c0_985], %1413 {strides = array<i32>} : memref<36x128xbf16, #tpu.memory_space<vmem>>, vector<1x128xbf16>,
    %c99_986 = arith.constant 99 : index
    %c128_987 = arith.constant 128 : index
    %1415 = vector.load %arg4[%c99_986, %c128_987] : memref<128x256xf32, #tpu.memory_space<vmem>>, vector<1x128xf32>
    %c118_i32_988 = arith.constant 118 : i32
    %1416 = tpu.dynamic_rotate %1415 by %c118_i32_988 dim 1 : vector<1x128xf32>, i32 -> vector<1x128xf32>
    %c100_989 = arith.constant 100 : index
    %c128_990 = arith.constant 128 : index
    %1417 = vector.load %arg4[%c100_989, %c128_990] : memref<128x256xf32, #tpu.memory_space<vmem>>, vector<1x128xf32>
    %c8_i32_991 = arith.constant 8 : i32
    %1418 = tpu.dynamic_rotate %1417 by %c8_i32_991 dim 1 : vector<1x128xf32>, i32 -> vector<1x128xf32>
    %c8_i32_992 = arith.constant 8 : i32
    %1419 = vector.broadcast %c8_i32_992 : i32 to vector<1x128xi32>
    %1420 = arith.cmpi sge, %170, %1419 : vector<1x128xi32>
    %1421 = arith.select %1420, %1418, %1416 : vector<1x128xi1>, vector<1x128xf32>
    %c101_993 = arith.constant 101 : index
    %c128_994 = arith.constant 128 : index
    %1422 = vector.load %arg4[%c101_993, %c128_994] : memref<128x256xf32, #tpu.memory_space<vmem>>, vector<1x128xf32>
    %c26_i32_995 = arith.constant 26 : i32
    %1423 = tpu.dynamic_rotate %1422 by %c26_i32_995 dim 1 : vector<1x128xf32>, i32 -> vector<1x128xf32>
    %c26_i32_996 = arith.constant 26 : i32
    %1424 = vector.broadcast %c26_i32_996 : i32 to vector<1x128xi32>
    %1425 = arith.cmpi sge, %170, %1424 : vector<1x128xi32>
    %1426 = arith.select %1425, %1423, %1421 : vector<1x128xi1>, vector<1x128xf32>
    %c102_997 = arith.constant 102 : index
    %c128_998 = arith.constant 128 : index
    %1427 = vector.load %arg4[%c102_997, %c128_998] : memref<128x256xf32, #tpu.memory_space<vmem>>, vector<1x128xf32>
    %c44_i32_999 = arith.constant 44 : i32
    %1428 = tpu.dynamic_rotate %1427 by %c44_i32_999 dim 1 : vector<1x128xf32>, i32 -> vector<1x128xf32>
    %c44_i32_1000 = arith.constant 44 : i32
    %1429 = vector.broadcast %c44_i32_1000 : i32 to vector<1x128xi32>
    %1430 = arith.cmpi sge, %170, %1429 : vector<1x128xi32>
    %1431 = arith.select %1430, %1428, %1426 : vector<1x128xi1>, vector<1x128xf32>
    %c103_1001 = arith.constant 103 : index
    %c128_1002 = arith.constant 128 : index
    %1432 = vector.load %arg4[%c103_1001, %c128_1002] : memref<128x256xf32, #tpu.memory_space<vmem>>, vector<1x128xf32>
    %c62_i32_1003 = arith.constant 62 : i32
    %1433 = tpu.dynamic_rotate %1432 by %c62_i32_1003 dim 1 : vector<1x128xf32>, i32 -> vector<1x128xf32>
    %c62_i32_1004 = arith.constant 62 : i32
    %1434 = vector.broadcast %c62_i32_1004 : i32 to vector<1x128xi32>
    %1435 = arith.cmpi sge, %170, %1434 : vector<1x128xi32>
    %1436 = arith.select %1435, %1433, %1431 : vector<1x128xi1>, vector<1x128xf32>
    %c104_1005 = arith.constant 104 : index
    %c128_1006 = arith.constant 128 : index
    %1437 = vector.load %arg4[%c104_1005, %c128_1006] : memref<128x256xf32, #tpu.memory_space<vmem>>, vector<1x128xf32>
    %c80_i32_1007 = arith.constant 80 : i32
    %1438 = tpu.dynamic_rotate %1437 by %c80_i32_1007 dim 1 : vector<1x128xf32>, i32 -> vector<1x128xf32>
    %c80_i32_1008 = arith.constant 80 : i32
    %1439 = vector.broadcast %c80_i32_1008 : i32 to vector<1x128xi32>
    %1440 = arith.cmpi sge, %170, %1439 : vector<1x128xi32>
    %1441 = arith.select %1440, %1438, %1436 : vector<1x128xi1>, vector<1x128xf32>
    %c105_1009 = arith.constant 105 : index
    %c128_1010 = arith.constant 128 : index
    %1442 = vector.load %arg4[%c105_1009, %c128_1010] : memref<128x256xf32, #tpu.memory_space<vmem>>, vector<1x128xf32>
    %c98_i32_1011 = arith.constant 98 : i32
    %1443 = tpu.dynamic_rotate %1442 by %c98_i32_1011 dim 1 : vector<1x128xf32>, i32 -> vector<1x128xf32>
    %c98_i32_1012 = arith.constant 98 : i32
    %1444 = vector.broadcast %c98_i32_1012 : i32 to vector<1x128xi32>
    %1445 = arith.cmpi sge, %170, %1444 : vector<1x128xi32>
    %1446 = arith.select %1445, %1443, %1441 : vector<1x128xi1>, vector<1x128xf32>
    %c106_1013 = arith.constant 106 : index
    %c128_1014 = arith.constant 128 : index
    %1447 = vector.load %arg4[%c106_1013, %c128_1014] : memref<128x256xf32, #tpu.memory_space<vmem>>, vector<1x128xf32>
    %c116_i32_1015 = arith.constant 116 : i32
    %1448 = tpu.dynamic_rotate %1447 by %c116_i32_1015 dim 1 : vector<1x128xf32>, i32 -> vector<1x128xf32>
    %c116_i32_1016 = arith.constant 116 : i32
    %1449 = vector.broadcast %c116_i32_1016 : i32 to vector<1x128xi32>
    %1450 = arith.cmpi sge, %170, %1449 : vector<1x128xi32>
    %1451 = arith.select %1450, %1448, %1446 : vector<1x128xi1>, vector<1x128xf32>
    %1452 = arith.truncf %1451 : vector<1x128xf32> to vector<1x128xbf16>
    %c32_1017 = arith.constant 32 : index
    %c0_1018 = arith.constant 0 : index
    %1453 = vector.load %arg5[%c32_1017, %c0_1018] : memref<36x128xbf16, #tpu.memory_space<vmem>>, vector<1x128xbf16>
    tpu.vector_store %arg5[%c32_1017, %c0_1018], %1452 {strides = array<i32>} : memref<36x128xbf16, #tpu.memory_space<vmem>>, vector<1x128xbf16>,
    %c106_1019 = arith.constant 106 : index
    %c128_1020 = arith.constant 128 : index
    %1454 = vector.load %arg4[%c106_1019, %c128_1020] : memref<128x256xf32, #tpu.memory_space<vmem>>, vector<1x128xf32>
    %c116_i32_1021 = arith.constant 116 : i32
    %1455 = tpu.dynamic_rotate %1454 by %c116_i32_1021 dim 1 : vector<1x128xf32>, i32 -> vector<1x128xf32>
    %c107_1022 = arith.constant 107 : index
    %c128_1023 = arith.constant 128 : index
    %1456 = vector.load %arg4[%c107_1022, %c128_1023] : memref<128x256xf32, #tpu.memory_space<vmem>>, vector<1x128xf32>
    %c6_i32_1024 = arith.constant 6 : i32
    %1457 = tpu.dynamic_rotate %1456 by %c6_i32_1024 dim 1 : vector<1x128xf32>, i32 -> vector<1x128xf32>
    %c6_i32_1025 = arith.constant 6 : i32
    %1458 = vector.broadcast %c6_i32_1025 : i32 to vector<1x128xi32>
    %1459 = arith.cmpi sge, %170, %1458 : vector<1x128xi32>
    %1460 = arith.select %1459, %1457, %1455 : vector<1x128xi1>, vector<1x128xf32>
    %c108_1026 = arith.constant 108 : index
    %c128_1027 = arith.constant 128 : index
    %1461 = vector.load %arg4[%c108_1026, %c128_1027] : memref<128x256xf32, #tpu.memory_space<vmem>>, vector<1x128xf32>
    %c24_i32_1028 = arith.constant 24 : i32
    %1462 = tpu.dynamic_rotate %1461 by %c24_i32_1028 dim 1 : vector<1x128xf32>, i32 -> vector<1x128xf32>
    %c24_i32_1029 = arith.constant 24 : i32
    %1463 = vector.broadcast %c24_i32_1029 : i32 to vector<1x128xi32>
    %1464 = arith.cmpi sge, %170, %1463 : vector<1x128xi32>
    %1465 = arith.select %1464, %1462, %1460 : vector<1x128xi1>, vector<1x128xf32>
    %c109_1030 = arith.constant 109 : index
    %c128_1031 = arith.constant 128 : index
    %1466 = vector.load %arg4[%c109_1030, %c128_1031] : memref<128x256xf32, #tpu.memory_space<vmem>>, vector<1x128xf32>
    %c42_i32_1032 = arith.constant 42 : i32
    %1467 = tpu.dynamic_rotate %1466 by %c42_i32_1032 dim 1 : vector<1x128xf32>, i32 -> vector<1x128xf32>
    %c42_i32_1033 = arith.constant 42 : i32
    %1468 = vector.broadcast %c42_i32_1033 : i32 to vector<1x128xi32>
    %1469 = arith.cmpi sge, %170, %1468 : vector<1x128xi32>
    %1470 = arith.select %1469, %1467, %1465 : vector<1x128xi1>, vector<1x128xf32>
    %c110_1034 = arith.constant 110 : index
    %c128_1035 = arith.constant 128 : index
    %1471 = vector.load %arg4[%c110_1034, %c128_1035] : memref<128x256xf32, #tpu.memory_space<vmem>>, vector<1x128xf32>
    %c60_i32_1036 = arith.constant 60 : i32
    %1472 = tpu.dynamic_rotate %1471 by %c60_i32_1036 dim 1 : vector<1x128xf32>, i32 -> vector<1x128xf32>
    %c60_i32_1037 = arith.constant 60 : i32
    %1473 = vector.broadcast %c60_i32_1037 : i32 to vector<1x128xi32>
    %1474 = arith.cmpi sge, %170, %1473 : vector<1x128xi32>
    %1475 = arith.select %1474, %1472, %1470 : vector<1x128xi1>, vector<1x128xf32>
    %c111_1038 = arith.constant 111 : index
    %c128_1039 = arith.constant 128 : index
    %1476 = vector.load %arg4[%c111_1038, %c128_1039] : memref<128x256xf32, #tpu.memory_space<vmem>>, vector<1x128xf32>
    %c78_i32_1040 = arith.constant 78 : i32
    %1477 = tpu.dynamic_rotate %1476 by %c78_i32_1040 dim 1 : vector<1x128xf32>, i32 -> vector<1x128xf32>
    %c78_i32_1041 = arith.constant 78 : i32
    %1478 = vector.broadcast %c78_i32_1041 : i32 to vector<1x128xi32>
    %1479 = arith.cmpi sge, %170, %1478 : vector<1x128xi32>
    %1480 = arith.select %1479, %1477, %1475 : vector<1x128xi1>, vector<1x128xf32>
    %c112_1042 = arith.constant 112 : index
    %c128_1043 = arith.constant 128 : index
    %1481 = vector.load %arg4[%c112_1042, %c128_1043] : memref<128x256xf32, #tpu.memory_space<vmem>>, vector<1x128xf32>
    %c96_i32_1044 = arith.constant 96 : i32
    %1482 = tpu.dynamic_rotate %1481 by %c96_i32_1044 dim 1 : vector<1x128xf32>, i32 -> vector<1x128xf32>
    %c96_i32_1045 = arith.constant 96 : i32
    %1483 = vector.broadcast %c96_i32_1045 : i32 to vector<1x128xi32>
    %1484 = arith.cmpi sge, %170, %1483 : vector<1x128xi32>
    %1485 = arith.select %1484, %1482, %1480 : vector<1x128xi1>, vector<1x128xf32>
    %c113_1046 = arith.constant 113 : index
    %c128_1047 = arith.constant 128 : index
    %1486 = vector.load %arg4[%c113_1046, %c128_1047] : memref<128x256xf32, #tpu.memory_space<vmem>>, vector<1x128xf32>
    %c114_i32_1048 = arith.constant 114 : i32
    %1487 = tpu.dynamic_rotate %1486 by %c114_i32_1048 dim 1 : vector<1x128xf32>, i32 -> vector<1x128xf32>
    %c114_i32_1049 = arith.constant 114 : i32
    %1488 = vector.broadcast %c114_i32_1049 : i32 to vector<1x128xi32>
    %1489 = arith.cmpi sge, %170, %1488 : vector<1x128xi32>
    %1490 = arith.select %1489, %1487, %1485 : vector<1x128xi1>, vector<1x128xf32>
    %1491 = arith.truncf %1490 : vector<1x128xf32> to vector<1x128xbf16>
    %c33_1050 = arith.constant 33 : index
    %c0_1051 = arith.constant 0 : index
    %1492 = vector.load %arg5[%c33_1050, %c0_1051] : memref<36x128xbf16, #tpu.memory_space<vmem>>, vector<1x128xbf16>
    tpu.vector_store %arg5[%c33_1050, %c0_1051], %1491 {strides = array<i32>} : memref<36x128xbf16, #tpu.memory_space<vmem>>, vector<1x128xbf16>,
    %c113_1052 = arith.constant 113 : index
    %c128_1053 = arith.constant 128 : index
    %1493 = vector.load %arg4[%c113_1052, %c128_1053] : memref<128x256xf32, #tpu.memory_space<vmem>>, vector<1x128xf32>
    %c114_i32_1054 = arith.constant 114 : i32
    %1494 = tpu.dynamic_rotate %1493 by %c114_i32_1054 dim 1 : vector<1x128xf32>, i32 -> vector<1x128xf32>
    %c114_1055 = arith.constant 114 : index
    %c128_1056 = arith.constant 128 : index
    %1495 = vector.load %arg4[%c114_1055, %c128_1056] : memref<128x256xf32, #tpu.memory_space<vmem>>, vector<1x128xf32>
    %c4_i32_1057 = arith.constant 4 : i32
    %1496 = tpu.dynamic_rotate %1495 by %c4_i32_1057 dim 1 : vector<1x128xf32>, i32 -> vector<1x128xf32>
    %c4_i32_1058 = arith.constant 4 : i32
    %1497 = vector.broadcast %c4_i32_1058 : i32 to vector<1x128xi32>
    %1498 = arith.cmpi sge, %170, %1497 : vector<1x128xi32>
    %1499 = arith.select %1498, %1496, %1494 : vector<1x128xi1>, vector<1x128xf32>
    %c115_1059 = arith.constant 115 : index
    %c128_1060 = arith.constant 128 : index
    %1500 = vector.load %arg4[%c115_1059, %c128_1060] : memref<128x256xf32, #tpu.memory_space<vmem>>, vector<1x128xf32>
    %c22_i32_1061 = arith.constant 22 : i32
    %1501 = tpu.dynamic_rotate %1500 by %c22_i32_1061 dim 1 : vector<1x128xf32>, i32 -> vector<1x128xf32>
    %c22_i32_1062 = arith.constant 22 : i32
    %1502 = vector.broadcast %c22_i32_1062 : i32 to vector<1x128xi32>
    %1503 = arith.cmpi sge, %170, %1502 : vector<1x128xi32>
    %1504 = arith.select %1503, %1501, %1499 : vector<1x128xi1>, vector<1x128xf32>
    %c116_1063 = arith.constant 116 : index
    %c128_1064 = arith.constant 128 : index
    %1505 = vector.load %arg4[%c116_1063, %c128_1064] : memref<128x256xf32, #tpu.memory_space<vmem>>, vector<1x128xf32>
    %c40_i32_1065 = arith.constant 40 : i32
    %1506 = tpu.dynamic_rotate %1505 by %c40_i32_1065 dim 1 : vector<1x128xf32>, i32 -> vector<1x128xf32>
    %c40_i32_1066 = arith.constant 40 : i32
    %1507 = vector.broadcast %c40_i32_1066 : i32 to vector<1x128xi32>
    %1508 = arith.cmpi sge, %170, %1507 : vector<1x128xi32>
    %1509 = arith.select %1508, %1506, %1504 : vector<1x128xi1>, vector<1x128xf32>
    %c117_1067 = arith.constant 117 : index
    %c128_1068 = arith.constant 128 : index
    %1510 = vector.load %arg4[%c117_1067, %c128_1068] : memref<128x256xf32, #tpu.memory_space<vmem>>, vector<1x128xf32>
    %c58_i32_1069 = arith.constant 58 : i32
    %1511 = tpu.dynamic_rotate %1510 by %c58_i32_1069 dim 1 : vector<1x128xf32>, i32 -> vector<1x128xf32>
    %c58_i32_1070 = arith.constant 58 : i32
    %1512 = vector.broadcast %c58_i32_1070 : i32 to vector<1x128xi32>
    %1513 = arith.cmpi sge, %170, %1512 : vector<1x128xi32>
    %1514 = arith.select %1513, %1511, %1509 : vector<1x128xi1>, vector<1x128xf32>
    %c118_1071 = arith.constant 118 : index
    %c128_1072 = arith.constant 128 : index
    %1515 = vector.load %arg4[%c118_1071, %c128_1072] : memref<128x256xf32, #tpu.memory_space<vmem>>, vector<1x128xf32>
    %c76_i32_1073 = arith.constant 76 : i32
    %1516 = tpu.dynamic_rotate %1515 by %c76_i32_1073 dim 1 : vector<1x128xf32>, i32 -> vector<1x128xf32>
    %c76_i32_1074 = arith.constant 76 : i32
    %1517 = vector.broadcast %c76_i32_1074 : i32 to vector<1x128xi32>
    %1518 = arith.cmpi sge, %170, %1517 : vector<1x128xi32>
    %1519 = arith.select %1518, %1516, %1514 : vector<1x128xi1>, vector<1x128xf32>
    %c119_1075 = arith.constant 119 : index
    %c128_1076 = arith.constant 128 : index
    %1520 = vector.load %arg4[%c119_1075, %c128_1076] : memref<128x256xf32, #tpu.memory_space<vmem>>, vector<1x128xf32>
    %c94_i32_1077 = arith.constant 94 : i32
    %1521 = tpu.dynamic_rotate %1520 by %c94_i32_1077 dim 1 : vector<1x128xf32>, i32 -> vector<1x128xf32>
    %c94_i32_1078 = arith.constant 94 : i32
    %1522 = vector.broadcast %c94_i32_1078 : i32 to vector<1x128xi32>
    %1523 = arith.cmpi sge, %170, %1522 : vector<1x128xi32>
    %1524 = arith.select %1523, %1521, %1519 : vector<1x128xi1>, vector<1x128xf32>
    %c120_1079 = arith.constant 120 : index
    %c128_1080 = arith.constant 128 : index
    %1525 = vector.load %arg4[%c120_1079, %c128_1080] : memref<128x256xf32, #tpu.memory_space<vmem>>, vector<1x128xf32>
    %c112_i32_1081 = arith.constant 112 : i32
    %1526 = tpu.dynamic_rotate %1525 by %c112_i32_1081 dim 1 : vector<1x128xf32>, i32 -> vector<1x128xf32>
    %c112_i32_1082 = arith.constant 112 : i32
    %1527 = vector.broadcast %c112_i32_1082 : i32 to vector<1x128xi32>
    %1528 = arith.cmpi sge, %170, %1527 : vector<1x128xi32>
    %1529 = arith.select %1528, %1526, %1524 : vector<1x128xi1>, vector<1x128xf32>
    %1530 = arith.truncf %1529 : vector<1x128xf32> to vector<1x128xbf16>
    %c34_1083 = arith.constant 34 : index
    %c0_1084 = arith.constant 0 : index
    %1531 = vector.load %arg5[%c34_1083, %c0_1084] : memref<36x128xbf16, #tpu.memory_space<vmem>>, vector<1x128xbf16>
    tpu.vector_store %arg5[%c34_1083, %c0_1084], %1530 {strides = array<i32>} : memref<36x128xbf16, #tpu.memory_space<vmem>>, vector<1x128xbf16>,
    %c120_1085 = arith.constant 120 : index
    %c128_1086 = arith.constant 128 : index
    %1532 = vector.load %arg4[%c120_1085, %c128_1086] : memref<128x256xf32, #tpu.memory_space<vmem>>, vector<1x128xf32>
    %c112_i32_1087 = arith.constant 112 : i32
    %1533 = tpu.dynamic_rotate %1532 by %c112_i32_1087 dim 1 : vector<1x128xf32>, i32 -> vector<1x128xf32>
    %c121_1088 = arith.constant 121 : index
    %c128_1089 = arith.constant 128 : index
    %1534 = vector.load %arg4[%c121_1088, %c128_1089] : memref<128x256xf32, #tpu.memory_space<vmem>>, vector<1x128xf32>
    %c2_i32_1090 = arith.constant 2 : i32
    %1535 = tpu.dynamic_rotate %1534 by %c2_i32_1090 dim 1 : vector<1x128xf32>, i32 -> vector<1x128xf32>
    %c2_i32_1091 = arith.constant 2 : i32
    %1536 = vector.broadcast %c2_i32_1091 : i32 to vector<1x128xi32>
    %1537 = arith.cmpi sge, %170, %1536 : vector<1x128xi32>
    %1538 = arith.select %1537, %1535, %1533 : vector<1x128xi1>, vector<1x128xf32>
    %c122_1092 = arith.constant 122 : index
    %c128_1093 = arith.constant 128 : index
    %1539 = vector.load %arg4[%c122_1092, %c128_1093] : memref<128x256xf32, #tpu.memory_space<vmem>>, vector<1x128xf32>
    %c20_i32_1094 = arith.constant 20 : i32
    %1540 = tpu.dynamic_rotate %1539 by %c20_i32_1094 dim 1 : vector<1x128xf32>, i32 -> vector<1x128xf32>
    %c20_i32_1095 = arith.constant 20 : i32
    %1541 = vector.broadcast %c20_i32_1095 : i32 to vector<1x128xi32>
    %1542 = arith.cmpi sge, %170, %1541 : vector<1x128xi32>
    %1543 = arith.select %1542, %1540, %1538 : vector<1x128xi1>, vector<1x128xf32>
    %c123_1096 = arith.constant 123 : index
    %c128_1097 = arith.constant 128 : index
    %1544 = vector.load %arg4[%c123_1096, %c128_1097] : memref<128x256xf32, #tpu.memory_space<vmem>>, vector<1x128xf32>
    %c38_i32_1098 = arith.constant 38 : i32
    %1545 = tpu.dynamic_rotate %1544 by %c38_i32_1098 dim 1 : vector<1x128xf32>, i32 -> vector<1x128xf32>
    %c38_i32_1099 = arith.constant 38 : i32
    %1546 = vector.broadcast %c38_i32_1099 : i32 to vector<1x128xi32>
    %1547 = arith.cmpi sge, %170, %1546 : vector<1x128xi32>
    %1548 = arith.select %1547, %1545, %1543 : vector<1x128xi1>, vector<1x128xf32>
    %c124_1100 = arith.constant 124 : index
    %c128_1101 = arith.constant 128 : index
    %1549 = vector.load %arg4[%c124_1100, %c128_1101] : memref<128x256xf32, #tpu.memory_space<vmem>>, vector<1x128xf32>
    %c56_i32_1102 = arith.constant 56 : i32
    %1550 = tpu.dynamic_rotate %1549 by %c56_i32_1102 dim 1 : vector<1x128xf32>, i32 -> vector<1x128xf32>
    %c56_i32_1103 = arith.constant 56 : i32
    %1551 = vector.broadcast %c56_i32_1103 : i32 to vector<1x128xi32>
    %1552 = arith.cmpi sge, %170, %1551 : vector<1x128xi32>
    %1553 = arith.select %1552, %1550, %1548 : vector<1x128xi1>, vector<1x128xf32>
    %c125_1104 = arith.constant 125 : index
    %c128_1105 = arith.constant 128 : index
    %1554 = vector.load %arg4[%c125_1104, %c128_1105] : memref<128x256xf32, #tpu.memory_space<vmem>>, vector<1x128xf32>
    %c74_i32_1106 = arith.constant 74 : i32
    %1555 = tpu.dynamic_rotate %1554 by %c74_i32_1106 dim 1 : vector<1x128xf32>, i32 -> vector<1x128xf32>
    %c74_i32_1107 = arith.constant 74 : i32
    %1556 = vector.broadcast %c74_i32_1107 : i32 to vector<1x128xi32>
    %1557 = arith.cmpi sge, %170, %1556 : vector<1x128xi32>
    %1558 = arith.select %1557, %1555, %1553 : vector<1x128xi1>, vector<1x128xf32>
    %c126_1108 = arith.constant 126 : index
    %c128_1109 = arith.constant 128 : index
    %1559 = vector.load %arg4[%c126_1108, %c128_1109] : memref<128x256xf32, #tpu.memory_space<vmem>>, vector<1x128xf32>
    %c92_i32_1110 = arith.constant 92 : i32
    %1560 = tpu.dynamic_rotate %1559 by %c92_i32_1110 dim 1 : vector<1x128xf32>, i32 -> vector<1x128xf32>
    %c92_i32_1111 = arith.constant 92 : i32
    %1561 = vector.broadcast %c92_i32_1111 : i32 to vector<1x128xi32>
    %1562 = arith.cmpi sge, %170, %1561 : vector<1x128xi32>
    %1563 = arith.select %1562, %1560, %1558 : vector<1x128xi1>, vector<1x128xf32>
    %c127_1112 = arith.constant 127 : index
    %c128_1113 = arith.constant 128 : index
    %1564 = vector.load %arg4[%c127_1112, %c128_1113] : memref<128x256xf32, #tpu.memory_space<vmem>>, vector<1x128xf32>
    %c110_i32_1114 = arith.constant 110 : i32
    %1565 = tpu.dynamic_rotate %1564 by %c110_i32_1114 dim 1 : vector<1x128xf32>, i32 -> vector<1x128xf32>
    %c110_i32_1115 = arith.constant 110 : i32
    %1566 = vector.broadcast %c110_i32_1115 : i32 to vector<1x128xi32>
    %1567 = arith.cmpi sge, %170, %1566 : vector<1x128xi32>
    %1568 = arith.select %1567, %1565, %1563 : vector<1x128xi1>, vector<1x128xf32>
    %1569 = arith.truncf %1568 : vector<1x128xf32> to vector<1x128xbf16>
    %c35_1116 = arith.constant 35 : index
    %c0_1117 = arith.constant 0 : index
    %1570 = vector.load %arg5[%c35_1116, %c0_1117] : memref<36x128xbf16, #tpu.memory_space<vmem>>, vector<1x128xbf16>
    tpu.vector_store %arg5[%c35_1116, %c0_1117], %1569 {strides = array<i32>} : memref<36x128xbf16, #tpu.memory_space<vmem>>, vector<1x128xbf16>,
    %c0_1118 = arith.constant 0 : index
    %c0_1119 = arith.constant 0 : index
    %1571 = vector.load %arg5[%c0_1118, %c0_1119] : memref<36x128xbf16, #tpu.memory_space<vmem>>, vector<36x128xbf16>
    %c240_1120 = arith.constant 240 : index
    %c0_1121 = arith.constant 0 : index
    %1572 = vector.load %arg1[%c240_1120, %c0_1121] : memref<368x256xbf16, #tpu.memory_space<vmem>>, vector<128x32xbf16>
    %c234 = arith.constant 234 : index
    %c0_1122 = arith.constant 0 : index
    %1573 = vector.load %arg1[%c234, %c0_1122] : memref<368x256xbf16, #tpu.memory_space<vmem>>, vector<1x32xbf16>
    %1574 = arith.extf %1573 : vector<1x32xbf16> to vector<1x32xf32>
    %cst_1123 = arith.constant dense<0.000000e+00> : vector<36x32xf32>
    %1575 = tpu.matmul %1571, %1572, %cst_1123 {dimension_numbers = #tpu.dot_dimension_numbers<[1], [0], [0], [1], [0, 0, 1, 1], [], []>} : vector<36x128xbf16>, vector<128x32xbf16>, vector<36x32xf32> -> vector<36x32xf32>
    %1576 = vector.broadcast %1574 : vector<1x32xf32> to vector<36x32xf32>
    %1577 = arith.addf %1575, %1576 : vector<36x32xf32>
    %cst_1124 = arith.constant 0.000000e+00 : f32
    %1578 = vector.broadcast %cst_1124 : f32 to vector<36x32xf32>
    %1579 = arith.maximumf %1577, %1578 : vector<36x32xf32>
    %c235 = arith.constant 235 : index
    %c0_1125 = arith.constant 0 : index
    %1580 = vector.load %arg1[%c235, %c0_1125] : memref<368x256xbf16, #tpu.memory_space<vmem>>, vector<1x32xbf16>
    %1581 = arith.extf %1580 : vector<1x32xbf16> to vector<1x32xf32>
    %c236 = arith.constant 236 : index
    %c0_1126 = arith.constant 0 : index
    %1582 = vector.load %arg1[%c236, %c0_1126] : memref<368x256xbf16, #tpu.memory_space<vmem>>, vector<1x1xbf16>
    %1583 = arith.extf %1582 : vector<1x1xbf16> to vector<1x1xf32>
    %1584 = vector.broadcast %1581 : vector<1x32xf32> to vector<36x32xf32>
    %1585 = arith.mulf %1579, %1584 : vector<36x32xf32>
    %cst_1127 = arith.constant dense<0.000000e+00> : vector<36xf32>
    %1586 = vector.multi_reduction <add>, %1585, %cst_1127 [1] : vector<36x32xf32> to vector<36xf32>
    %1587 = vector.shape_cast %1586 : vector<36xf32> to vector<36x1xf32>
    %1588 = vector.broadcast %1583 : vector<1x1xf32> to vector<36x1xf32>
    %1589 = arith.addf %1587, %1588 : vector<36x1xf32>
    %cst_1128 = arith.constant 0.000000e+00 : f32
    %1590 = vector.broadcast %cst_1128 : f32 to vector<36x1xf32>
    %1591 = arith.maximumf %1589, %1590 : vector<36x1xf32>
    %c0_1129 = arith.constant 0 : index
    %c0_1130 = arith.constant 0 : index
    %1592 = vector.load %arg2[%c0_1129, %c0_1130] : memref<36x1xf32, #tpu.memory_space<vmem>>, vector<36x1xf32>
    tpu.vector_store %arg2[%c0_1129, %c0_1130], %1591 {strides = array<i32>} : memref<36x1xf32, #tpu.memory_space<vmem>>, vector<36x1xf32>,
    return
  }
}

</mosaic_0001>

<llo_original>
// kernel: cnn2_forward.1
$region0: #{cnn2_forward.1}
  #allocation0 [shape = 'u32[]', space=smem, size = 0x4, offset = 0x4, fixed_abs, tag = 'smem constant byte address 0x4 - core index']
  #allocation1 [shape = 'u32[144,128]{1,0:T(1,128)}', space=vmem, size = 0x12000, scoped, tag = 'internal scratch']
  #allocation2 [shape = 'bf16[256,256]{1,0:T(16,128)(2,1)}', space=vmem, size = 0x20000, scoped, tag = 'scratch operand']
  #allocation3 [shape = 'f32[128,256]{1,0:T(8,128)}', space=vmem, size = 0x20000, scoped, tag = 'scratch operand']
  #allocation4 [shape = 'bf16[36,128]{1,0:T(8,128)(2,1)}', space=vmem, size = 0x2800, scoped, tag = 'scratch operand']
  %s0 = inlined_call_operand.hbm [shape: f32[8,64], index: 0, kind: input, shape index: {}]
  %s1 = inlined_call_operand.hbm [shape: bf16[368,256], index: 1, kind: input, shape index: {}]
  %s2 = inlined_call_operand.vmem [shape: f32[36,1], index: 2, kind: output, shape index: {}]
  %s3 = sld [smem:[#allocation0]]
  $region26: #{cnn2_forward.1} parent=0
    _
  %s5 = ssub.s32 1, %s3
  %s6 = scalar_select 0, %s5, %s3
  $region1: #{cnn2_forward.1} parent=0
    #allocation5 [shape = 'u8[4096]{0}', space=vmem, size = 0x1000, scoped, tag = 'input window, operand 0, single buffered']
    #allocation6 [shape = 's32[1]{0}', space=sflag, size = 0x4, scoped, tag = 'scoped memory for cnn2_forward.1']
    #allocation7 [shape = 'u8[188416]{0}', space=vmem, size = 0x2e000, scoped, tag = 'input window, operand 1, single buffered']
    #allocation8 [shape = 's32[1]{0}', space=sflag, size = 0x4, scoped, tag = 'scoped memory for cnn2_forward.1']
    %7 = vsyncpa [#allocation6], 0
    %8 = vsyncpa [#allocation8], 0
    // Predicated region
    $region2: #{cnn2_forward.1} parent=1 // pred_check
      _
    $region3: #{cnn2_forward.1} parent=1 // pred_check_branch
      %10 = sbr.rel (0) target = $region5
    $region4: #{cnn2_forward.1} parent=1 // pred_region
      %s12 = ssub.s32 128, 128
      %13 = vsyncadd [#allocation6], %s12
      %s15 = sshll.u32 [#allocation5], 4
      %s16 = int_to_ptr.vmem [resolvable:$true] %s15
      %18 = dma.hbm_to_vmem [thread:$0]  %s0, 128, %s16, [#allocation6]
    $region5: #{cnn2_forward.1} parent=1 // pred_fallthru
      _
    // Predicated region
    $region6: #{cnn2_forward.1} parent=1 // pred_check
      _
    $region7: #{cnn2_forward.1} parent=1 // pred_check_branch
      %20 = sbr.rel (0) target = $region9
    $region8: #{cnn2_forward.1} parent=1 // pred_region
      %s22 = ssub.s32 5888, 5888
      %23 = vsyncadd [#allocation8], %s22
      %s24 = sshll.u32 [#allocation7], 4
      %s25 = int_to_ptr.vmem [resolvable:$true] %s24
      %30 = dma.hbm_to_vmem [thread:$0]  %s1, 5888, %s25, [#allocation8], 128, 128, 8
    $region9: #{cnn2_forward.1} parent=1 // pred_fallthru
      _
    // Predicated region
    $region10: #{cnn2_forward.1} parent=1 // pred_check
      _
    $region11: #{cnn2_forward.1} parent=1 // pred_check_branch
      %32 = sbr.rel (0) target = $region13
    $region12: #{cnn2_forward.1} parent=1 // pred_region
      %33 = dma.done [#allocation6], 128
    $region13: #{cnn2_forward.1} parent=1 // pred_fallthru
      _
    // Predicated region
    $region14: #{cnn2_forward.1} parent=1 // pred_check
      _
    $region15: #{cnn2_forward.1} parent=1 // pred_check_branch
      %35 = sbr.rel (0) target = $region17
    $region16: #{cnn2_forward.1} parent=1 // pred_region
      %36 = dma.done [#allocation8], 5888
    $region17: #{cnn2_forward.1} parent=1 // pred_fallthru
      _
    %vm39 = vcmask 1041409
    %vm40 = vsmask.f32 1280
    %vm41 = vmand %vm39, %vm40
    %v42 = vld [vmem:[#allocation2 + $0x30] sm:$0x2]
    %v43 = vsel %vm41, 1065369472, %v42
    %44 = vst [vmem:[#allocation2 + $0x30] sm:$0x2] %v43
    %v45 = vld [vmem:[#allocation2 + $0x38] sm:$0x2]
    %v46 = vsel %vm41, 1065369472, %v45
    %47 = vst [vmem:[#allocation2 + $0x38] sm:$0x2] %v46
    %vm48 = vcmask 1040384
    %vm49 = vsmask.f32 256
    %vm50 = vmand %vm48, %vm49
    %v51 = vld [vmem:[#allocation2 + $0x80] sm:$0x1]
    %v52 = vsel %vm50, 1065369472, %v51
    %53 = vst [vmem:[#allocation2 + $0x80] sm:$0x1] %v52
    %v54 = vld [vmem:[#allocation2 + $0x88] sm:$0x1]
    %v55 = vsel %vm50, 1065369472, %v54
    %56 = vst [vmem:[#allocation2 + $0x88] sm:$0x1] %v55
    %v57 = vld [vmem:[#allocation7 + $0x84] sm:$0xf]
    %v58 = vld [vmem:[#allocation7 + $0x8c] sm:$0xf]
    %v59 = vld [vmem:[#allocation7 + $0x94] sm:$0xf]
    %v60 = vld [vmem:[#allocation7 + $0x9c] sm:$0xf]
    %v61 = vld [vmem:[#allocation7 + $0xa4] sm:$0xf]
    %v62 = vld [vmem:[#allocation7 + $0xac] sm:$0xf]
    %v63 = vld [vmem:[#allocation7 + $0xb4] sm:$0xf]
    %v64 = vld [vmem:[#allocation7 + $0xbc] sm:$0xf]
    %v65 = vld [vmem:[#allocation5] sm:$0xff]
    %v66 = vpack.c.bf16 %v65, %v65
    %v75 = vunpack.c.l.b16 %v57
    %v76 = vunpack.c.l.b16 %v58
    %v77 = vunpack.c.l.b16 %v59
    %v78 = vunpack.c.l.b16 %v60
    %v79 = vunpack.c.l.b16 %v61
    %v80 = vunpack.c.l.b16 %v62
    %v81 = vunpack.c.l.b16 %v63
    %v82 = vunpack.c.l.b16 %v64
    %v83 = vpack.c.b16 %v76, %v75
    %v84 = vpack.c.b16 %v78, %v77
    %v85 = vpack.c.b16 %v80, %v79
    %v86 = vpack.c.b16 %v82, %v81
    %87 = vrot.lane.b32.xlu0 %v83, 64
    %v88 = vpop.permute.xlu0 %87
    %89 = vrot.lane.b32.xlu0 %v84, 64
    %v90 = vpop.permute.xlu0 %89
    %91 = vrot.lane.b32.xlu0 %v85, 64
    %v92 = vpop.permute.xlu0 %91
    %93 = vrot.lane.b32.xlu0 %v86, 64
    %v94 = vpop.permute.xlu0 %93
    %vm99 = vcmask 523264
    %v101 = vsel %vm99, %v66, 0
    %103 = vmatprep.subr.bf16.mxu0 0
    %104 = vmatpush1.bf16.msra.mxu0 %v88
    %105 = vmatprep.subr.bf16.mxu0 0
    %106 = vmatpush1.bf16.msra.mxu0 %v90
    %107 = vmatprep.subr.bf16.mxu0 0
    %108 = vmatpush1.bf16.msra.mxu0 %v92
    %109 = vmatprep.subr.bf16.mxu0 0
    %110 = vmatpush1.bf16.msra.mxu0 %v94
    %111 = vmatprep.subr.bf16.mxu0 0
    %112 = vmatpush1.bf16.msra.mxu0 0
    %113 = vmatprep.subr.bf16.mxu0 0
    %114 = vmatpush1.bf16.msra.mxu0 0
    %115 = vmatprep.subr.bf16.mxu0 0
    %116 = vmatpush1.bf16.msra.mxu0 0
    %117 = vmatprep.subr.bf16.mxu0 0
    %118 = vmatpush1.bf16.msra.mxu0 0
    %119 = vmatprep.subr.bf16.mxu0 0
    %120 = vmatpush1.bf16.msra.mxu0 0
    %121 = vmatprep.subr.bf16.mxu0 0
    %122 = vmatpush1.bf16.msra.mxu0 0
    %123 = vmatprep.subr.bf16.mxu0 0
    %124 = vmatpush1.bf16.msra.mxu0 0
    %125 = vmatprep.subr.bf16.mxu0 0
    %126 = vmatpush1.bf16.msra.mxu0 0
    %127 = vmatprep.subr.bf16.mxu0 0
    %128 = vmatpush1.bf16.msra.mxu0 0
    %129 = vmatprep.subr.bf16.mxu0 0
    %130 = vmatpush1.bf16.msra.mxu0 0
    %131 = vmatprep.subr.bf16.mxu0 0
    %132 = vmatpush1.bf16.msra.mxu0 0
    %133 = vmatprep.subr.bf16.mxu0 0
    %134 = vmatpush1.bf16.msra.mxu0 0
    %135 = vmatprep.mubr.bf16.mxu0 0
    %136 = vmatmul.mubr.bf16.gmra.mrb[0].mxu0 %v101
    %v137 = vpop.f32.mrb[0].mxu0
    %v138 = vadd.f32 0.0, %v137
    %v139 = vpop.f32.mrb[0].mxu0
    %v140 = vpop.f32.mrb[0].mxu0
    %v141 = vpop.f32.mrb[0].mxu0
    %142 = vdwg.mxu0
    %v143 = vpack.c.bf16 %v138, %v138
    %vm144 = vcmask 222208
    %145 = vst.msk [vmem:[#allocation2] sm:$0x3] %vm144, %v143
    %v147 = vrot.slane %v143, 2
    %149 = vst.msk [vmem:[#allocation2 + $0x8] sm:$0x3] %vm144, %v147
    %v150 = vrot.slane %v143, 6
    %151 = vrot.lane.b32.xlu0 %v150, 127
    %v152 = vpop.permute.xlu0 %151
    %vm154 = vcmask 224258
    %155 = vst.msk [vmem:[#allocation2] sm:$0xc] %vm154, %v152
    %156 = vrot.lane.b32.xlu0 %v143, 127
    %v157 = vpop.permute.xlu0 %156
    %159 = vst.msk [vmem:[#allocation2 + $0x8] sm:$0xc] %vm154, %v157
    %v160 = vrot.slane %v143, 4
    %161 = vrot.lane.b32.xlu0 %v160, 126
    %v162 = vpop.permute.xlu0 %161
    %vm164 = vcmask 226308
    %165 = vst.msk [vmem:[#allocation2] sm:$0x30] %vm164, %v162
    %166 = vrot.lane.b32.xlu0 %v150, 126
    %v167 = vpop.permute.xlu0 %166
    %169 = vst.msk [vmem:[#allocation2 + $0x8] sm:$0x30] %vm164, %v167
    %170 = vrot.lane.b32.xlu0 %v147, 125
    %v171 = vpop.permute.xlu0 %170
    %vm173 = vcmask 228358
    %174 = vst.msk [vmem:[#allocation2] sm:$0xc0] %vm173, %v171
    %175 = vrot.lane.b32.xlu0 %v160, 125
    %v176 = vpop.permute.xlu0 %175
    %178 = vst.msk [vmem:[#allocation2 + $0x8] sm:$0xc0] %vm173, %v176
    %179 = vrot.lane.b32.xlu0 %v143, 124
    %v180 = vpop.permute.xlu0 %179
    %182 = vst.msk [vmem:[#allocation2 + $0x10] sm:$0x3] %vm144, %v180
    %183 = vrot.lane.b32.xlu0 %v147, 124
    %v184 = vpop.permute.xlu0 %183
    %186 = vst.msk [vmem:[#allocation2 + $0x18] sm:$0x3] %vm144, %v184
    %187 = vrot.lane.b32.xlu0 %v150, 96
    %v188 = vpop.permute.xlu0 %187
    %190 = vst.msk [vmem:[#allocation2 + $0x10] sm:$0xc] %vm154, %v188
    %191 = vrot.lane.b32.xlu0 %v143, 96
    %v192 = vpop.permute.xlu0 %191
    %194 = vst.msk [vmem:[#allocation2 + $0x18] sm:$0xc] %vm154, %v192
    %195 = vrot.lane.b32.xlu0 %v160, 95
    %v196 = vpop.permute.xlu0 %195
    %198 = vst.msk [vmem:[#allocation2 + $0x10] sm:$0x30] %vm164, %v196
    %199 = vrot.lane.b32.xlu0 %v150, 95
    %v200 = vpop.permute.xlu0 %199
    %202 = vst.msk [vmem:[#allocation2 + $0x18] sm:$0x30] %vm164, %v200
    %203 = vrot.lane.b32.xlu0 %v147, 94
    %v204 = vpop.permute.xlu0 %203
    %206 = vst.msk [vmem:[#allocation2 + $0x10] sm:$0xc0] %vm173, %v204
    %207 = vrot.lane.b32.xlu0 %v160, 94
    %v208 = vpop.permute.xlu0 %207
    %210 = vst.msk [vmem:[#allocation2 + $0x18] sm:$0xc0] %vm173, %v208
    %211 = vrot.lane.b32.xlu0 %v143, 93
    %v212 = vpop.permute.xlu0 %211
    %214 = vst.msk [vmem:[#allocation2 + $0x20] sm:$0x3] %vm144, %v212
    %215 = vrot.lane.b32.xlu0 %v147, 93
    %v216 = vpop.permute.xlu0 %215
    %218 = vst.msk [vmem:[#allocation2 + $0x28] sm:$0x3] %vm144, %v216
    %219 = vrot.lane.b32.xlu0 %v150, 92
    %v220 = vpop.permute.xlu0 %219
    %222 = vst.msk [vmem:[#allocation2 + $0x20] sm:$0xc] %vm154, %v220
    %223 = vrot.lane.b32.xlu0 %v143, 92
    %v224 = vpop.permute.xlu0 %223
    %226 = vst.msk [vmem:[#allocation2 + $0x28] sm:$0xc] %vm154, %v224
    %v227 = vld [vmem:[#allocation7 + $0xe0] sm:$0xf]
    %v228 = vld [vmem:[#allocation7 + $0xe8] sm:$0x1]
    %v229 = vld [vmem:[#allocation2] sm:$0xff]
    %v230 = vld [vmem:[#allocation2 + $0x8] sm:$0xff]
    %v231 = vld [vmem:[#allocation2 + $0x10] sm:$0xff]
    %v232 = vld [vmem:[#allocation2 + $0x18] sm:$0xff]
    %v233 = vld [vmem:[#allocation2 + $0x20] sm:$0xf]
    %v234 = vld [vmem:[#allocation2 + $0x28] sm:$0xf]
    %v237 = vunpack.c.l.b16 %v227
    %v238 = vunpack.c.l.b16 %v228
    %v239 = vpack.c.b16 %v238, %v237
    %vm240 = vcmask 326656
    %v242 = vsel %vm240, %v239, 0
    %vm244 = vcmask 1043456
    %v246 = vsel %vm244, %v233, 0
    %v249 = vsel %vm244, %v234, 0
    %251 = vmatprep.subr.bf16.mxu0 %v230
    %252 = vmatpush1.bf16.msra.mxu0 %v229
    %253 = vmatprep.subr.bf16.mxu0 %v232
    %254 = vmatpush1.bf16.msra.mxu0 %v231
    %255 = vmatprep.subr.bf16.mxu0 %v249
    %256 = vmatpush1.bf16.msra.mxu0 %v246
    %257 = vmatprep.subr.bf16.mxu0 0
    %258 = vmatpush1.bf16.msra.mxu0 0
    %259 = vmatprep.subr.bf16.mxu0 0
    %260 = vmatpush1.bf16.msra.mxu0 0
    %261 = vmatprep.subr.bf16.mxu0 0
    %262 = vmatpush1.bf16.msra.mxu0 0
    %263 = vmatprep.subr.bf16.mxu0 0
    %264 = vmatpush1.bf16.msra.mxu0 0
    %265 = vmatprep.subr.bf16.mxu0 0
    %266 = vmatpush1.bf16.msra.mxu0 0
    %267 = vmatprep.subr.bf16.mxu0 0
    %268 = vmatpush1.bf16.msra.mxu0 0
    %269 = vmatprep.subr.bf16.mxu0 0
    %270 = vmatpush1.bf16.msra.mxu0 0
    %271 = vmatprep.subr.bf16.mxu0 0
    %272 = vmatpush1.bf16.msra.mxu0 0
    %273 = vmatprep.subr.bf16.mxu0 0
    %274 = vmatpush1.bf16.msra.mxu0 0
    %275 = vmatprep.subr.bf16.mxu0 0
    %276 = vmatpush1.bf16.msra.mxu0 0
    %277 = vmatprep.subr.bf16.mxu0 0
    %278 = vmatpush1.bf16.msra.mxu0 0
    %279 = vmatprep.subr.bf16.mxu0 0
    %280 = vmatpush1.bf16.msra.mxu0 0
    %281 = vmatprep.subr.bf16.mxu0 0
    %282 = vmatpush1.bf16.msra.mxu0 0
    %283 = vmatprep.mubr.bf16.mxu0 0
    %284 = vmatmul.mubr.bf16.gmra.mrb[0].mxu0 %v242
    %v285 = vpop.f32.mrb[0].mxu0
    %v286 = vadd.f32 0.0, %v285
    %v287 = vpop.f32.mrb[0].mxu0
    %v288 = vadd.f32 0.0, %v287
    %v289 = vpop.f32.mrb[0].mxu0
    %v290 = vadd.f32 0.0, %v289
    %v291 = vpop.f32.mrb[0].mxu0
    %v292 = vadd.f32 0.0, %v291
    %293 = vdwg.mxu0
    %v294 = vmax.f32 %v286, 0.0
    %v295 = vmax.f32 %v288, 0.0
    %v296 = vmax.f32 %v290, 0.0
    %v297 = vmax.f32 %v292, 0.0
    %v298 = vpack.c.bf16 %v296, %v294
    %vm299 = vcmask 192512
    %300 = vst.msk [vmem:[#allocation2] sm:$0x1f] %vm299, %v298
    %v301 = vpack.c.bf16 %v297, %v295
    %302 = vst.msk [vmem:[#allocation2 + $0x8] sm:$0x1f] %vm299, %v301
    %v304 = vrot.slane %v298, 3
    %305 = vrot.lane.b32.xlu0 %v304, 127
    %v306 = vpop.permute.xlu0 %305
    %vm308 = vcmask 195589
    %309 = vst.msk [vmem:[#allocation2] sm:$0xe0] %vm308, %v306
    %vm310 = vcmask 189440
    %311 = vst.msk [vmem:[#allocation2 + $0x10] sm:$0x3] %vm310, %v306
    %v313 = vrot.slane %v301, 3
    %314 = vrot.lane.b32.xlu0 %v313, 127
    %v315 = vpop.permute.xlu0 %314
    %317 = vst.msk [vmem:[#allocation2 + $0x8] sm:$0xe0] %vm308, %v315
    %318 = vst.msk [vmem:[#allocation2 + $0x18] sm:$0x3] %vm310, %v315
    %v319 = vrot.slane %v298, 6
    %320 = vrot.lane.b32.xlu0 %v319, 126
    %v321 = vpop.permute.xlu0 %320
    %vm323 = vcmask 194562
    %324 = vst.msk [vmem:[#allocation2 + $0x10] sm:$0x7c] %vm323, %v321
    %v325 = vrot.slane %v301, 6
    %326 = vrot.lane.b32.xlu0 %v325, 126
    %v327 = vpop.permute.xlu0 %326
    %329 = vst.msk [vmem:[#allocation2 + $0x18] sm:$0x7c] %vm323, %v327
    %v330 = vrot.slane %v298, 1
    %331 = vrot.lane.b32.xlu0 %v330, 125
    %v332 = vpop.permute.xlu0 %331
    %vm334 = vcmask 195591
    %335 = vst.msk [vmem:[#allocation2 + $0x10] sm:$0x80] %vm334, %v332
    %vm336 = vcmask 191488
    %337 = vst.msk [vmem:[#allocation2 + $0x20] sm:$0xf] %vm336, %v332
    %v338 = vrot.slane %v301, 1
    %339 = vrot.lane.b32.xlu0 %v338, 125
    %v340 = vpop.permute.xlu0 %339
    %342 = vst.msk [vmem:[#allocation2 + $0x18] sm:$0x80] %vm334, %v340
    %343 = vst.msk [vmem:[#allocation2 + $0x28] sm:$0xf] %vm336, %v340
    %v344 = vrot.slane %v298, 4
    %345 = vrot.lane.b32.xlu0 %v344, 124
    %v346 = vpop.permute.xlu0 %345
    %vm348 = vcmask 195588
    %349 = vst.msk [vmem:[#allocation2 + $0x20] sm:$0xf0] %vm348, %v346
    %vm350 = vcmask 188416
    %351 = vst.msk [vmem:[#allocation2 + $0x30] sm:$0x1] %vm350, %v346
    %v352 = vrot.slane %v301, 4
    %353 = vrot.lane.b32.xlu0 %v352, 124
    %v354 = vpop.permute.xlu0 %353
    %356 = vst.msk [vmem:[#allocation2 + $0x28] sm:$0xf0] %vm348, %v354
    %357 = vst.msk [vmem:[#allocation2 + $0x38] sm:$0x1] %vm350, %v354
    %v358 = vld [vmem:[#allocation7 + $0xc0] sm:$0xf]
    %v359 = vld [vmem:[#allocation7 + $0xc8] sm:$0xf]
    %v360 = vld [vmem:[#allocation7 + $0xd0] sm:$0xf]
    %v361 = vld [vmem:[#allocation7 + $0xd8] sm:$0xf]
    %v362 = vld [vmem:[#allocation2] sm:$0xff]
    %v363 = vld [vmem:[#allocation2 + $0x8] sm:$0xff]
    %v364 = vld [vmem:[#allocation2 + $0x10] sm:$0xff]
    %v365 = vld [vmem:[#allocation2 + $0x18] sm:$0xff]
    %v366 = vld [vmem:[#allocation2 + $0x20] sm:$0xff]
    %v367 = vld [vmem:[#allocation2 + $0x28] sm:$0xff]
    %v368 = vld [vmem:[#allocation2 + $0x30] sm:$0x3]
    %v369 = vld [vmem:[#allocation2 + $0x38] sm:$0x3]
    %v374 = vunpack.c.l.b16 %v358
    %v375 = vunpack.c.l.b16 %v359
    %v376 = vunpack.c.l.b16 %v360
    %v377 = vunpack.c.l.b16 %v361
    %v378 = vpack.c.b16 %v375, %v374
    %v379 = vpack.c.b16 %v377, %v376
    %vm380 = vcmask 416768
    %v382 = vsel %vm380, %v378, 0
    %v385 = vsel %vm380, %v379, 0
    %vm387 = vcmask 1040384
    %vm388 = vcmask 1041408
    %v389 = vsel %vm387, 4294967295, 65535
    %v390 = vsel %vm388, %v389, 0
    %v392 = vand.u32 %v368, %v390
    %v395 = vand.u32 %v369, %v390
    %397 = vmatprep.subr.bf16.mxu0 %v363
    %398 = vmatpush1.bf16.msra.mxu0 %v362
    %399 = vmatprep.subr.bf16.mxu0 %v365
    %400 = vmatpush1.bf16.msra.mxu0 %v364
    %401 = vmatprep.subr.bf16.mxu0 %v367
    %402 = vmatpush1.bf16.msra.mxu0 %v366
    %403 = vmatprep.subr.bf16.mxu0 %v395
    %404 = vmatpush1.bf16.msra.mxu0 %v392
    %405 = vmatprep.subr.bf16.mxu0 0
    %406 = vmatpush1.bf16.msra.mxu0 0
    %407 = vmatprep.subr.bf16.mxu0 0
    %408 = vmatpush1.bf16.msra.mxu0 0
    %409 = vmatprep.subr.bf16.mxu0 0
    %410 = vmatpush1.bf16.msra.mxu0 0
    %411 = vmatprep.subr.bf16.mxu0 0
    %412 = vmatpush1.bf16.msra.mxu0 0
    %413 = vmatprep.subr.bf16.mxu0 0
    %414 = vmatpush1.bf16.msra.mxu0 0
    %415 = vmatprep.subr.bf16.mxu0 0
    %416 = vmatpush1.bf16.msra.mxu0 0
    %417 = vmatprep.subr.bf16.mxu0 0
    %418 = vmatpush1.bf16.msra.mxu0 0
    %419 = vmatprep.subr.bf16.mxu0 0
    %420 = vmatpush1.bf16.msra.mxu0 0
    %421 = vmatprep.subr.bf16.mxu0 0
    %422 = vmatpush1.bf16.msra.mxu0 0
    %423 = vmatprep.subr.bf16.mxu0 0
    %424 = vmatpush1.bf16.msra.mxu0 0
    %425 = vmatprep.subr.bf16.mxu0 0
    %426 = vmatpush1.bf16.msra.mxu0 0
    %427 = vmatprep.subr.bf16.mxu0 0
    %428 = vmatpush1.bf16.msra.mxu0 0
    %429 = vmatprep.mubr.bf16.mxu0 0
    %430 = vmatmul.mubr.bf16.gmra.mrb[0].mxu0 %v382
    %v431 = vpop.f32.mrb[0].mxu0
    %v432 = vadd.f32 0.0, %v431
    %v433 = vpop.f32.mrb[0].mxu0
    %v434 = vadd.f32 0.0, %v433
    %v435 = vpop.f32.mrb[0].mxu0
    %v436 = vadd.f32 0.0, %v435
    %v437 = vpop.f32.mrb[0].mxu0
    %v438 = vadd.f32 0.0, %v437
    %439 = vmatprep.mubr.bf16.mxu0 0
    %440 = vmatmul.mubr.bf16.gmra.mrb[0].mxu0 %v385
    %v441 = vpop.f32.mrb[0].mxu0
    %v442 = vadd.f32 0.0, %v441
    %v443 = vpop.f32.mrb[0].mxu0
    %v444 = vadd.f32 0.0, %v443
    %v445 = vpop.f32.mrb[0].mxu0
    %v446 = vadd.f32 0.0, %v445
    %v447 = vpop.f32.mrb[0].mxu0
    %v448 = vadd.f32 0.0, %v447
    %449 = vdwg.mxu0
    %v450 = vmax.f32 %v432, 0.0
    %v451 = vmax.f32 %v434, 0.0
    %v452 = vmax.f32 %v436, 0.0
    %v453 = vmax.f32 %v438, 0.0
    %v454 = vmax.f32 %v442, 0.0
    %v455 = vmax.f32 %v444, 0.0
    %v456 = vmax.f32 %v446, 0.0
    %v457 = vmax.f32 %v448, 0.0
    %v458 = vpack.c.bf16 %v452, %v450
    %v459 = vpack.c.bf16 %v456, %v454
    %vm460 = vcmask 171008
    %461 = vst.msk [vmem:[#allocation2] sm:$0xff] %vm460, %v458
    %462 = vst.msk [vmem:[#allocation2 + $0x10] sm:$0xff] %vm460, %v459
    %v463 = vpack.c.bf16 %v453, %v451
    %v464 = vpack.c.bf16 %v457, %v455
    %465 = vst.msk [vmem:[#allocation2 + $0x8] sm:$0xff] %vm460, %v463
    %466 = vst.msk [vmem:[#allocation2 + $0x18] sm:$0xff] %vm460, %v464
    %469 = vrot.lane.b32.xlu0 %v458, 127
    %v470 = vpop.permute.xlu0 %469
    %471 = vrot.lane.b32.xlu0 %v459, 127
    %v472 = vpop.permute.xlu0 %471
    %475 = vst.msk [vmem:[#allocation2 + $0x20] sm:$0xff] %vm460, %v470
    %476 = vst.msk [vmem:[#allocation2 + $0x30] sm:$0xff] %vm460, %v472
    %479 = vrot.lane.b32.xlu0 %v463, 127
    %v480 = vpop.permute.xlu0 %479
    %481 = vrot.lane.b32.xlu0 %v464, 127
    %v482 = vpop.permute.xlu0 %481
    %485 = vst.msk [vmem:[#allocation2 + $0x28] sm:$0xff] %vm460, %v480
    %486 = vst.msk [vmem:[#allocation2 + $0x38] sm:$0xff] %vm460, %v482
    %487 = vrot.lane.b32.xlu0 %v458, 126
    %v488 = vpop.permute.xlu0 %487
    %489 = vrot.lane.b32.xlu0 %v459, 126
    %v490 = vpop.permute.xlu0 %489
    %493 = vst.msk [vmem:[#allocation2 + $0x40] sm:$0xff] %vm460, %v488
    %494 = vst.msk [vmem:[#allocation2 + $0x50] sm:$0xff] %vm460, %v490
    %495 = vrot.lane.b32.xlu0 %v463, 126
    %v496 = vpop.permute.xlu0 %495
    %497 = vrot.lane.b32.xlu0 %v464, 126
    %v498 = vpop.permute.xlu0 %497
    %501 = vst.msk [vmem:[#allocation2 + $0x48] sm:$0xff] %vm460, %v496
    %502 = vst.msk [vmem:[#allocation2 + $0x58] sm:$0xff] %vm460, %v498
    %503 = vrot.lane.b32.xlu0 %v458, 125
    %v504 = vpop.permute.xlu0 %503
    %505 = vrot.lane.b32.xlu0 %v459, 125
    %v506 = vpop.permute.xlu0 %505
    %509 = vst.msk [vmem:[#allocation2 + $0x60] sm:$0xff] %vm460, %v504
    %510 = vst.msk [vmem:[#allocation2 + $0x70] sm:$0xff] %vm460, %v506
    %511 = vrot.lane.b32.xlu0 %v463, 125
    %v512 = vpop.permute.xlu0 %511
    %513 = vrot.lane.b32.xlu0 %v464, 125
    %v514 = vpop.permute.xlu0 %513
    %517 = vst.msk [vmem:[#allocation2 + $0x68] sm:$0xff] %vm460, %v512
    %518 = vst.msk [vmem:[#allocation2 + $0x78] sm:$0xff] %vm460, %v514
    %v519 = vld [vmem:[#allocation7 + $0x80] sm:$0xff]
    %v520 = vld [vmem:[#allocation7 + $0x88] sm:$0xff]
    %v521 = vld [vmem:[#allocation7 + $0x90] sm:$0xff]
    %v522 = vld [vmem:[#allocation7 + $0x98] sm:$0xff]
    %v523 = vld [vmem:[#allocation7 + $0xa0] sm:$0xff]
    %v524 = vld [vmem:[#allocation7 + $0xa8] sm:$0xff]
    %v525 = vld [vmem:[#allocation7 + $0xb0] sm:$0xff]
    %v526 = vld [vmem:[#allocation7 + $0xb8] sm:$0xff]
    %v527 = vld [vmem:[#allocation2] sm:$0xff]
    %v528 = vld [vmem:[#allocation2 + $0x8] sm:$0xff]
    %v529 = vld [vmem:[#allocation2 + $0x10] sm:$0xff]
    %v530 = vld [vmem:[#allocation2 + $0x18] sm:$0xff]
    %v531 = vld [vmem:[#allocation2 + $0x20] sm:$0xff]
    %v532 = vld [vmem:[#allocation2 + $0x28] sm:$0xff]
    %v533 = vld [vmem:[#allocation2 + $0x30] sm:$0xff]
    %v534 = vld [vmem:[#allocation2 + $0x38] sm:$0xff]
    %v535 = vld [vmem:[#allocation2 + $0x40] sm:$0xff]
    %v536 = vld [vmem:[#allocation2 + $0x48] sm:$0xff]
    %v537 = vld [vmem:[#allocation2 + $0x50] sm:$0xff]
    %v538 = vld [vmem:[#allocation2 + $0x58] sm:$0xff]
    %v539 = vld [vmem:[#allocation2 + $0x60] sm:$0xff]
    %v540 = vld [vmem:[#allocation2 + $0x68] sm:$0xff]
    %v541 = vld [vmem:[#allocation2 + $0x70] sm:$0xff]
    %v542 = vld [vmem:[#allocation2 + $0x78] sm:$0xff]
    %v543 = vld [vmem:[#allocation2 + $0x80] sm:$0x1]
    %v544 = vld [vmem:[#allocation2 + $0x88] sm:$0x1]
    %v553 = vunpack.c.l.b16 %v519
    %v554 = vunpack.c.h.b16 %v519
    %v555 = vunpack.c.l.b16 %v520
    %v556 = vunpack.c.h.b16 %v520
    %v557 = vunpack.c.l.b16 %v521
    %v558 = vunpack.c.h.b16 %v521
    %v559 = vunpack.c.l.b16 %v522
    %v560 = vunpack.c.h.b16 %v522
    %v561 = vunpack.c.l.b16 %v523
    %v562 = vunpack.c.h.b16 %v523
    %v563 = vunpack.c.l.b16 %v524
    %v564 = vunpack.c.h.b16 %v524
    %v565 = vunpack.c.l.b16 %v525
    %v566 = vunpack.c.h.b16 %v525
    %v567 = vunpack.c.l.b16 %v526
    %v568 = vunpack.c.h.b16 %v526
    %v569 = vpack.c.b16 %v555, %v553
    %v570 = vpack.c.b16 %v556, %v554
    %v571 = vpack.c.b16 %v559, %v557
    %v572 = vpack.c.b16 %v560, %v558
    %v573 = vpack.c.b16 %v563, %v561
    %v574 = vpack.c.b16 %v564, %v562
    %v575 = vpack.c.b16 %v567, %v565
    %v576 = vpack.c.b16 %v568, %v566
    %vm581 = vcmask 7168
    %v583 = vsel %vm581, %v570, 0
    %v586 = vsel %vm581, %v572, 0
    %v589 = vsel %vm581, %v574, 0
    %v592 = vsel %vm581, %v576, 0
    %v594 = vsel 0, 4294967295, 65535
    %v595 = vsel %vm387, %v594, 0
    %v597 = vand.u32 %v543, %v595
    %v600 = vand.u32 %v544, %v595
    %602 = vmatprep.subr.bf16.mxu0 %v528
    %603 = vmatpush1.bf16.msra.mxu0 %v527
    %604 = vmatprep.subr.bf16.mxu0 %v530
    %605 = vmatpush1.bf16.msra.mxu0 %v529
    %606 = vmatprep.subr.bf16.mxu0 %v532
    %607 = vmatpush1.bf16.msra.mxu0 %v531
    %608 = vmatprep.subr.bf16.mxu0 %v534
    %609 = vmatpush1.bf16.msra.mxu0 %v533
    %610 = vmatprep.subr.bf16.mxu0 %v536
    %611 = vmatpush1.bf16.msra.mxu0 %v535
    %612 = vmatprep.subr.bf16.mxu0 %v538
    %613 = vmatpush1.bf16.msra.mxu0 %v537
    %614 = vmatprep.subr.bf16.mxu0 %v540
    %615 = vmatpush1.bf16.msra.mxu0 %v539
    %616 = vmatprep.subr.bf16.mxu0 %v542
    %617 = vmatpush1.bf16.msra.mxu0 %v541
    %618 = vmatprep.subr.bf16.mxu0 %v600
    %619 = vmatpush1.bf16.msra.mxu0 %v597
    %620 = vmatprep.subr.bf16.mxu0 0
    %621 = vmatpush1.bf16.msra.mxu0 0
    %622 = vmatprep.subr.bf16.mxu0 0
    %623 = vmatpush1.bf16.msra.mxu0 0
    %624 = vmatprep.subr.bf16.mxu0 0
    %625 = vmatpush1.bf16.msra.mxu0 0
    %626 = vmatprep.subr.bf16.mxu0 0
    %627 = vmatpush1.bf16.msra.mxu0 0
    %628 = vmatprep.subr.bf16.mxu0 0
    %629 = vmatpush1.bf16.msra.mxu0 0
    %630 = vmatprep.subr.bf16.mxu0 0
    %631 = vmatpush1.bf16.msra.mxu0 0
    %632 = vmatprep.subr.bf16.mxu0 0
    %633 = vmatpush1.bf16.msra.mxu0 0
    %634 = vmatprep.mubr.bf16.mxu0 %v583
    %635 = vmatmul.mubr.bf16.gmra.mrb[0].mxu0 %v569
    %v636 = vpop.f32.mrb[0].mxu0
    %v637 = vadd.f32 0.0, %v636
    %v638 = vpop.f32.mrb[0].mxu0
    %v639 = vadd.f32 0.0, %v638
    %v640 = vpop.f32.mrb[0].mxu0
    %v641 = vadd.f32 0.0, %v640
    %v642 = vpop.f32.mrb[0].mxu0
    %v643 = vadd.f32 0.0, %v642
    %644 = vmatprep.mubr.bf16.mxu0 %v586
    %645 = vmatmul.mubr.bf16.gmra.mrb[0].mxu0 %v571
    %v646 = vpop.f32.mrb[0].mxu0
    %v647 = vadd.f32 0.0, %v646
    %v648 = vpop.f32.mrb[0].mxu0
    %v649 = vadd.f32 0.0, %v648
    %v650 = vpop.f32.mrb[0].mxu0
    %v651 = vadd.f32 0.0, %v650
    %v652 = vpop.f32.mrb[0].mxu0
    %v653 = vadd.f32 0.0, %v652
    %654 = vmatprep.mubr.bf16.mxu0 %v589
    %655 = vmatmul.mubr.bf16.gmra.mrb[0].mxu0 %v573
    %v656 = vpop.f32.mrb[0].mxu0
    %v657 = vadd.f32 0.0, %v656
    %v658 = vpop.f32.mrb[0].mxu0
    %v659 = vadd.f32 0.0, %v658
    %v660 = vpop.f32.mrb[0].mxu0
    %v661 = vadd.f32 0.0, %v660
    %v662 = vpop.f32.mrb[0].mxu0
    %v663 = vadd.f32 0.0, %v662
    %664 = vmatprep.mubr.bf16.mxu0 %v592
    %665 = vmatmul.mubr.bf16.gmra.mrb[0].mxu0 %v575
    %v666 = vpop.f32.mrb[0].mxu0
    %v667 = vadd.f32 0.0, %v666
    %v668 = vpop.f32.mrb[0].mxu0
    %v669 = vadd.f32 0.0, %v668
    %v670 = vpop.f32.mrb[0].mxu0
    %v671 = vadd.f32 0.0, %v670
    %v672 = vpop.f32.mrb[0].mxu0
    %v673 = vadd.f32 0.0, %v672
    %674 = vdwg.mxu0
    %v675 = vmax.f32 %v637, 0.0
    %v676 = vmax.f32 %v639, 0.0
    %v677 = vmax.f32 %v641, 0.0
    %v678 = vmax.f32 %v643, 0.0
    %v679 = vmax.f32 %v647, 0.0
    %v680 = vmax.f32 %v649, 0.0
    %v681 = vmax.f32 %v651, 0.0
    %v682 = vmax.f32 %v653, 0.0
    %v683 = vmax.f32 %v657, 0.0
    %v684 = vmax.f32 %v659, 0.0
    %v685 = vmax.f32 %v661, 0.0
    %v686 = vmax.f32 %v663, 0.0
    %v687 = vmax.f32 %v667, 0.0
    %v688 = vmax.f32 %v669, 0.0
    %v689 = vmax.f32 %v671, 0.0
    %v690 = vmax.f32 %v673, 0.0
    %v691 = vpack.c.bf16 %v677, %v675
    %v692 = vpack.c.bf16 %v681, %v679
    %v693 = vpack.c.bf16 %v685, %v683
    %v694 = vpack.c.bf16 %v689, %v687
    %vm695 = vcmask 146432
    %696 = vst.msk [vmem:[#allocation2] sm:$0xff] %vm695, %v691
    %697 = vst.msk [vmem:[#allocation2 + $0x10] sm:$0xff] %vm695, %v692
    %698 = vst.msk [vmem:[#allocation2 + $0x20] sm:$0xff] %vm695, %v693
    %699 = vst.msk [vmem:[#allocation2 + $0x30] sm:$0xff] %vm695, %v694
    %v700 = vpack.c.bf16 %v678, %v676
    %v701 = vpack.c.bf16 %v682, %v680
    %v702 = vpack.c.bf16 %v686, %v684
    %v703 = vpack.c.bf16 %v690, %v688
    %704 = vst.msk [vmem:[#allocation2 + $0x8] sm:$0xff] %vm695, %v700
    %705 = vst.msk [vmem:[#allocation2 + $0x18] sm:$0xff] %vm695, %v701
    %706 = vst.msk [vmem:[#allocation2 + $0x28] sm:$0xff] %vm695, %v702
    %707 = vst.msk [vmem:[#allocation2 + $0x38] sm:$0xff] %vm695, %v703
    %712 = vrot.lane.b32.xlu0 %v691, 127
    %v713 = vpop.permute.xlu0 %712
    %714 = vrot.lane.b32.xlu0 %v692, 127
    %v715 = vpop.permute.xlu0 %714
    %716 = vrot.lane.b32.xlu0 %v693, 127
    %v717 = vpop.permute.xlu0 %716
    %718 = vrot.lane.b32.xlu0 %v694, 127
    %v719 = vpop.permute.xlu0 %718
    %724 = vst.msk [vmem:[#allocation2 + $0x40] sm:$0xff] %vm695, %v713
    %725 = vst.msk [vmem:[#allocation2 + $0x50] sm:$0xff] %vm695, %v715
    %726 = vst.msk [vmem:[#allocation2 + $0x60] sm:$0xff] %vm695, %v717
    %727 = vst.msk [vmem:[#allocation2 + $0x70] sm:$0xff] %vm695, %v719
    %732 = vrot.lane.b32.xlu0 %v700, 127
    %v733 = vpop.permute.xlu0 %732
    %734 = vrot.lane.b32.xlu0 %v701, 127
    %v735 = vpop.permute.xlu0 %734
    %736 = vrot.lane.b32.xlu0 %v702, 127
    %v737 = vpop.permute.xlu0 %736
    %738 = vrot.lane.b32.xlu0 %v703, 127
    %v739 = vpop.permute.xlu0 %738
    %744 = vst.msk [vmem:[#allocation2 + $0x48] sm:$0xff] %vm695, %v733
    %745 = vst.msk [vmem:[#allocation2 + $0x58] sm:$0xff] %vm695, %v735
    %746 = vst.msk [vmem:[#allocation2 + $0x68] sm:$0xff] %vm695, %v737
    %747 = vst.msk [vmem:[#allocation2 + $0x78] sm:$0xff] %vm695, %v739
    %748 = vrot.lane.b32.xlu0 %v691, 126
    %v749 = vpop.permute.xlu0 %748
    %750 = vrot.lane.b32.xlu0 %v692, 126
    %v751 = vpop.permute.xlu0 %750
    %752 = vrot.lane.b32.xlu0 %v693, 126
    %v753 = vpop.permute.xlu0 %752
    %754 = vrot.lane.b32.xlu0 %v694, 126
    %v755 = vpop.permute.xlu0 %754
    %760 = vst.msk [vmem:[#allocation2 + $0x80] sm:$0xff] %vm695, %v749
    %761 = vst.msk [vmem:[#allocation2 + $0x90] sm:$0xff] %vm695, %v751
    %762 = vst.msk [vmem:[#allocation2 + $0xa0] sm:$0xff] %vm695, %v753
    %763 = vst.msk [vmem:[#allocation2 + $0xb0] sm:$0xff] %vm695, %v755
    %764 = vrot.lane.b32.xlu0 %v700, 126
    %v765 = vpop.permute.xlu0 %764
    %766 = vrot.lane.b32.xlu0 %v701, 126
    %v767 = vpop.permute.xlu0 %766
    %768 = vrot.lane.b32.xlu0 %v702, 126
    %v769 = vpop.permute.xlu0 %768
    %770 = vrot.lane.b32.xlu0 %v703, 126
    %v771 = vpop.permute.xlu0 %770
    %776 = vst.msk [vmem:[#allocation2 + $0x88] sm:$0xff] %vm695, %v765
    %777 = vst.msk [vmem:[#allocation2 + $0x98] sm:$0xff] %vm695, %v767
    %778 = vst.msk [vmem:[#allocation2 + $0xa8] sm:$0xff] %vm695, %v769
    %779 = vst.msk [vmem:[#allocation2 + $0xb8] sm:$0xff] %vm695, %v771
    %780 = vrot.lane.b32.xlu0 %v691, 125
    %v781 = vpop.permute.xlu0 %780
    %782 = vrot.lane.b32.xlu0 %v692, 125
    %v783 = vpop.permute.xlu0 %782
    %784 = vrot.lane.b32.xlu0 %v693, 125
    %v785 = vpop.permute.xlu0 %784
    %786 = vrot.lane.b32.xlu0 %v694, 125
    %v787 = vpop.permute.xlu0 %786
    %792 = vst.msk [vmem:[#allocation2 + $0xc0] sm:$0xff] %vm695, %v781
    %793 = vst.msk [vmem:[#allocation2 + $0xd0] sm:$0xff] %vm695, %v783
    %794 = vst.msk [vmem:[#allocation2 + $0xe0] sm:$0xff] %vm695, %v785
    %795 = vst.msk [vmem:[#allocation2 + $0xf0] sm:$0xff] %vm695, %v787
    %796 = vrot.lane.b32.xlu0 %v700, 125
    %v797 = vpop.permute.xlu0 %796
    %798 = vrot.lane.b32.xlu0 %v701, 125
    %v799 = vpop.permute.xlu0 %798
    %800 = vrot.lane.b32.xlu0 %v702, 125
    %v801 = vpop.permute.xlu0 %800
    %802 = vrot.lane.b32.xlu0 %v703, 125
    %v803 = vpop.permute.xlu0 %802
    %808 = vst.msk [vmem:[#allocation2 + $0xc8] sm:$0xff] %vm695, %v797
    %809 = vst.msk [vmem:[#allocation2 + $0xd8] sm:$0xff] %vm695, %v799
    %810 = vst.msk [vmem:[#allocation2 + $0xe8] sm:$0xff] %vm695, %v801
    %811 = vst.msk [vmem:[#allocation2 + $0xf8] sm:$0xff] %vm695, %v803
    %v812 = vld [vmem:[#allocation7] sm:$0xff]
    %v813 = vld [vmem:[#allocation7 + $0x8] sm:$0xff]
    %v814 = vld [vmem:[#allocation7 + $0x10] sm:$0xff]
    %v815 = vld [vmem:[#allocation7 + $0x18] sm:$0xff]
    %v816 = vld [vmem:[#allocation7 + $0x20] sm:$0xff]
    %v817 = vld [vmem:[#allocation7 + $0x28] sm:$0xff]
    %v818 = vld [vmem:[#allocation7 + $0x30] sm:$0xff]
    %v819 = vld [vmem:[#allocation7 + $0x38] sm:$0xff]
    %v820 = vld [vmem:[#allocation7 + $0x40] sm:$0xff]
    %v821 = vld [vmem:[#allocation7 + $0x48] sm:$0xff]
    %v822 = vld [vmem:[#allocation7 + $0x50] sm:$0xff]
    %v823 = vld [vmem:[#allocation7 + $0x58] sm:$0xff]
    %v824 = vld [vmem:[#allocation7 + $0x60] sm:$0xff]
    %v825 = vld [vmem:[#allocation7 + $0x68] sm:$0xff]
    %v826 = vld [vmem:[#allocation7 + $0x70] sm:$0xff]
    %v827 = vld [vmem:[#allocation7 + $0x78] sm:$0xff]
    %v828 = vld [vmem:[#allocation7 + $0xf0] sm:$0xf]
    %v829 = vld [vmem:[#allocation7 + $0xf8] sm:$0xf]
    %v830 = vld [vmem:[#allocation7 + $0x100] sm:$0xf]
    %v831 = vld [vmem:[#allocation7 + $0x108] sm:$0xf]
    %v832 = vld [vmem:[#allocation7 + $0x110] sm:$0xf]
    %v833 = vld [vmem:[#allocation7 + $0x118] sm:$0xf]
    %v834 = vld [vmem:[#allocation7 + $0x120] sm:$0xf]
    %v835 = vld [vmem:[#allocation7 + $0x128] sm:$0xf]
    %v836 = vld [vmem:[#allocation7 + $0x130] sm:$0xf]
    %v837 = vld [vmem:[#allocation7 + $0x138] sm:$0xf]
    %v838 = vld [vmem:[#allocation7 + $0x140] sm:$0xf]
    %v839 = vld [vmem:[#allocation7 + $0x148] sm:$0xf]
    %v840 = vld [vmem:[#allocation7 + $0x150] sm:$0xf]
    %v841 = vld [vmem:[#allocation7 + $0x158] sm:$0xf]
    %v842 = vld [vmem:[#allocation7 + $0x160] sm:$0xf]
    %v843 = vld [vmem:[#allocation7 + $0x168] sm:$0xf]
    %v844 = vunpack.c.l.bf16 %v828
    %v845 = vunpack.c.l.bf16 %v829
    %v846 = vunpack.c.l.bf16 %v830
    %v847 = vunpack.c.l.bf16 %v831
    %v848 = vunpack.c.l.bf16 %v832
    %v849 = vunpack.c.l.bf16 %v833
    %v850 = vunpack.c.l.bf16 %v834
    %v851 = vunpack.c.l.bf16 %v835
    %v852 = vunpack.c.l.bf16 %v836
    %v853 = vunpack.c.l.bf16 %v837
    %v854 = vunpack.c.l.bf16 %v838
    %v855 = vunpack.c.l.bf16 %v839
    %v856 = vunpack.c.l.bf16 %v840
    %v857 = vunpack.c.l.bf16 %v841
    %v858 = vunpack.c.l.bf16 %v842
    %v859 = vunpack.c.l.bf16 %v843
    %v860 = vld [vmem:[#allocation2] sm:$0xff]
    %v861 = vld [vmem:[#allocation2 + $0x8] sm:$0xff]
    %v862 = vld [vmem:[#allocation2 + $0x10] sm:$0xff]
    %v863 = vld [vmem:[#allocation2 + $0x18] sm:$0xff]
    %v864 = vld [vmem:[#allocation2 + $0x20] sm:$0xff]
    %v865 = vld [vmem:[#allocation2 + $0x28] sm:$0xff]
    %v866 = vld [vmem:[#allocation2 + $0x30] sm:$0xff]
    %v867 = vld [vmem:[#allocation2 + $0x38] sm:$0xff]
    %v868 = vld [vmem:[#allocation2 + $0x40] sm:$0xff]
    %v869 = vld [vmem:[#allocation2 + $0x48] sm:$0xff]
    %v870 = vld [vmem:[#allocation2 + $0x50] sm:$0xff]
    %v871 = vld [vmem:[#allocation2 + $0x58] sm:$0xff]
    %v872 = vld [vmem:[#allocation2 + $0x60] sm:$0xff]
    %v873 = vld [vmem:[#allocation2 + $0x68] sm:$0xff]
    %v874 = vld [vmem:[#allocation2 + $0x70] sm:$0xff]
    %v875 = vld [vmem:[#allocation2 + $0x78] sm:$0xff]
    %v876 = vld [vmem:[#allocation2 + $0x80] sm:$0xff]
    %v877 = vld [vmem:[#allocation2 + $0x88] sm:$0xff]
    %v878 = vld [vmem:[#allocation2 + $0x90] sm:$0xff]
    %v879 = vld [vmem:[#allocation2 + $0x98] sm:$0xff]
    %v880 = vld [vmem:[#allocation2 + $0xa0] sm:$0xff]
    %v881 = vld [vmem:[#allocation2 + $0xa8] sm:$0xff]
    %v882 = vld [vmem:[#allocation2 + $0xb0] sm:$0xff]
    %v883 = vld [vmem:[#allocation2 + $0xb8] sm:$0xff]
    %v884 = vld [vmem:[#allocation2 + $0xc0] sm:$0xff]
    %v885 = vld [vmem:[#allocation2 + $0xc8] sm:$0xff]
    %v886 = vld [vmem:[#allocation2 + $0xd0] sm:$0xff]
    %v887 = vld [vmem:[#allocation2 + $0xd8] sm:$0xff]
    %v888 = vld [vmem:[#allocation2 + $0xe0] sm:$0xff]
    %v889 = vld [vmem:[#allocation2 + $0xe8] sm:$0xff]
    %v890 = vld [vmem:[#allocation2 + $0xf0] sm:$0xff]
    %v891 = vld [vmem:[#allocation2 + $0xf8] sm:$0xff]
    %893 = vset.pattern.permute.xlu0 32
    %894 = vperm.xlu0 %893, %v844
    %v895 = vpop.permute.xlu0 %894
    %898 = vset.pattern.permute.xlu0 32
    %899 = vperm.xlu0 %898, %v845
    %v900 = vpop.permute.xlu0 %899
    %903 = vset.pattern.permute.xlu0 32
    %904 = vperm.xlu0 %903, %v846
    %v905 = vpop.permute.xlu0 %904
    %908 = vset.pattern.permute.xlu0 32
    %909 = vperm.xlu0 %908, %v847
    %v910 = vpop.permute.xlu0 %909
    %913 = vset.pattern.permute.xlu0 32
    %914 = vperm.xlu0 %913, %v848
    %v915 = vpop.permute.xlu0 %914
    %918 = vset.pattern.permute.xlu0 32
    %919 = vperm.xlu0 %918, %v849
    %v920 = vpop.permute.xlu0 %919
    %923 = vset.pattern.permute.xlu0 32
    %924 = vperm.xlu0 %923, %v850
    %v925 = vpop.permute.xlu0 %924
    %928 = vset.pattern.permute.xlu0 32
    %929 = vperm.xlu0 %928, %v851
    %v930 = vpop.permute.xlu0 %929
    %933 = vset.pattern.permute.xlu0 32
    %934 = vperm.xlu0 %933, %v852
    %v935 = vpop.permute.xlu0 %934
    %938 = vset.pattern.permute.xlu0 32
    %939 = vperm.xlu0 %938, %v853
    %v940 = vpop.permute.xlu0 %939
    %943 = vset.pattern.permute.xlu0 32
    %944 = vperm.xlu0 %943, %v854
    %v945 = vpop.permute.xlu0 %944
    %948 = vset.pattern.permute.xlu0 32
    %949 = vperm.xlu0 %948, %v855
    %v950 = vpop.permute.xlu0 %949
    %953 = vset.pattern.permute.xlu0 32
    %954 = vperm.xlu0 %953, %v856
    %v955 = vpop.permute.xlu0 %954
    %958 = vset.pattern.permute.xlu0 32
    %959 = vperm.xlu0 %958, %v857
    %v960 = vpop.permute.xlu0 %959
    %963 = vset.pattern.permute.xlu0 32
    %964 = vperm.xlu0 %963, %v858
    %v965 = vpop.permute.xlu0 %964
    %968 = vset.pattern.permute.xlu0 32
    %969 = vperm.xlu0 %968, %v859
    %v970 = vpop.permute.xlu0 %969
    %v988 = vunpack.c.l.b16 %v812
    %v989 = vunpack.c.h.b16 %v812
    %v990 = vunpack.c.l.b16 %v813
    %v991 = vunpack.c.h.b16 %v813
    %v992 = vunpack.c.l.b16 %v814
    %v993 = vunpack.c.h.b16 %v814
    %v994 = vunpack.c.l.b16 %v815
    %v995 = vunpack.c.h.b16 %v815
    %v996 = vunpack.c.l.b16 %v816
    %v997 = vunpack.c.h.b16 %v816
    %v998 = vunpack.c.l.b16 %v817
    %v999 = vunpack.c.h.b16 %v817
    %v1000 = vunpack.c.l.b16 %v818
    %v1001 = vunpack.c.h.b16 %v818
    %v1002 = vunpack.c.l.b16 %v819
    %v1003 = vunpack.c.h.b16 %v819
    %v1004 = vunpack.c.l.b16 %v820
    %v1005 = vunpack.c.h.b16 %v820
    %v1006 = vunpack.c.l.b16 %v821
    %v1007 = vunpack.c.h.b16 %v821
    %v1008 = vunpack.c.l.b16 %v822
    %v1009 = vunpack.c.h.b16 %v822
    %v1010 = vunpack.c.l.b16 %v823
    %v1011 = vunpack.c.h.b16 %v823
    %v1012 = vunpack.c.l.b16 %v824
    %v1013 = vunpack.c.h.b16 %v824
    %v1014 = vunpack.c.l.b16 %v825
    %v1015 = vunpack.c.h.b16 %v825
    %v1016 = vunpack.c.l.b16 %v826
    %v1017 = vunpack.c.h.b16 %v826
    %v1018 = vunpack.c.l.b16 %v827
    %v1019 = vunpack.c.h.b16 %v827
    %v1020 = vpack.c.b16 %v990, %v988
    %v1021 = vpack.c.b16 %v991, %v989
    %v1022 = vpack.c.b16 %v994, %v992
    %v1023 = vpack.c.b16 %v995, %v993
    %v1024 = vpack.c.b16 %v998, %v996
    %v1025 = vpack.c.b16 %v999, %v997
    %v1026 = vpack.c.b16 %v1002, %v1000
    %v1027 = vpack.c.b16 %v1003, %v1001
    %v1028 = vpack.c.b16 %v1006, %v1004
    %v1029 = vpack.c.b16 %v1007, %v1005
    %v1030 = vpack.c.b16 %v1010, %v1008
    %v1031 = vpack.c.b16 %v1011, %v1009
    %v1032 = vpack.c.b16 %v1014, %v1012
    %v1033 = vpack.c.b16 %v1015, %v1013
    %v1034 = vpack.c.b16 %v1018, %v1016
    %v1035 = vpack.c.b16 %v1019, %v1017
    %1052 = vmatprep.subr.bf16.mxu0 %v861
    %1053 = vmatpush1.bf16.msra.mxu0 %v860
    %1054 = vmatprep.subr.bf16.mxu0 %v863
    %1055 = vmatpush1.bf16.msra.mxu0 %v862
    %1056 = vmatprep.subr.bf16.mxu0 %v865
    %1057 = vmatpush1.bf16.msra.mxu0 %v864
    %1058 = vmatprep.subr.bf16.mxu0 %v867
    %1059 = vmatpush1.bf16.msra.mxu0 %v866
    %1060 = vmatprep.subr.bf16.mxu0 %v869
    %1061 = vmatpush1.bf16.msra.mxu0 %v868
    %1062 = vmatprep.subr.bf16.mxu0 %v871
    %1063 = vmatpush1.bf16.msra.mxu0 %v870
    %1064 = vmatprep.subr.bf16.mxu0 %v873
    %1065 = vmatpush1.bf16.msra.mxu0 %v872
    %1066 = vmatprep.subr.bf16.mxu0 %v875
    %1067 = vmatpush1.bf16.msra.mxu0 %v874
    %1068 = vmatprep.subr.bf16.mxu0 %v877
    %1069 = vmatpush1.bf16.msra.mxu0 %v876
    %1070 = vmatprep.subr.bf16.mxu0 %v879
    %1071 = vmatpush1.bf16.msra.mxu0 %v878
    %1072 = vmatprep.subr.bf16.mxu0 %v881
    %1073 = vmatpush1.bf16.msra.mxu0 %v880
    %1074 = vmatprep.subr.bf16.mxu0 %v883
    %1075 = vmatpush1.bf16.msra.mxu0 %v882
    %1076 = vmatprep.subr.bf16.mxu0 %v885
    %1077 = vmatpush1.bf16.msra.mxu0 %v884
    %1078 = vmatprep.subr.bf16.mxu0 %v887
    %1079 = vmatpush1.bf16.msra.mxu0 %v886
    %1080 = vmatprep.subr.bf16.mxu0 %v889
    %1081 = vmatpush1.bf16.msra.mxu0 %v888
    %1082 = vmatprep.subr.bf16.mxu0 %v891
    %1083 = vmatpush1.bf16.msra.mxu0 %v890
    %1084 = vmatprep.mubr.bf16.mxu0 %v1021
    %1085 = vmatmul.mubr.bf16.gmra.mrb[0].mxu0 %v1020
    %v1086 = vpop.f32.mrb[0].mxu0
    %v1087 = vadd.f32 %v895, %v1086
    %v1088 = vpop.f32.mrb[0].mxu0
    %v1089 = vadd.f32 %v895, %v1088
    %v1090 = vpop.f32.mrb[0].mxu0
    %v1091 = vadd.f32 %v900, %v1090
    %v1092 = vpop.f32.mrb[0].mxu0
    %v1093 = vadd.f32 %v900, %v1092
    %1094 = vmatprep.mubr.bf16.mxu0 %v1023
    %1095 = vmatmul.mubr.bf16.gmra.mrb[0].mxu0 %v1022
    %v1096 = vpop.f32.mrb[0].mxu0
    %v1097 = vadd.f32 %v905, %v1096
    %v1098 = vpop.f32.mrb[0].mxu0
    %v1099 = vadd.f32 %v905, %v1098
    %v1100 = vpop.f32.mrb[0].mxu0
    %v1101 = vadd.f32 %v910, %v1100
    %v1102 = vpop.f32.mrb[0].mxu0
    %v1103 = vadd.f32 %v910, %v1102
    %1104 = vmatprep.mubr.bf16.mxu0 %v1025
    %1105 = vmatmul.mubr.bf16.gmra.mrb[0].mxu0 %v1024
    %v1106 = vpop.f32.mrb[0].mxu0
    %v1107 = vadd.f32 %v915, %v1106
    %v1108 = vpop.f32.mrb[0].mxu0
    %v1109 = vadd.f32 %v915, %v1108
    %v1110 = vpop.f32.mrb[0].mxu0
    %v1111 = vadd.f32 %v920, %v1110
    %v1112 = vpop.f32.mrb[0].mxu0
    %v1113 = vadd.f32 %v920, %v1112
    %1114 = vmatprep.mubr.bf16.mxu0 %v1027
    %1115 = vmatmul.mubr.bf16.gmra.mrb[0].mxu0 %v1026
    %v1116 = vpop.f32.mrb[0].mxu0
    %v1117 = vadd.f32 %v925, %v1116
    %v1118 = vpop.f32.mrb[0].mxu0
    %v1119 = vadd.f32 %v925, %v1118
    %v1120 = vpop.f32.mrb[0].mxu0
    %v1121 = vadd.f32 %v930, %v1120
    %v1122 = vpop.f32.mrb[0].mxu0
    %v1123 = vadd.f32 %v930, %v1122
    %1124 = vmatprep.mubr.bf16.mxu0 %v1029
    %1125 = vmatmul.mubr.bf16.gmra.mrb[0].mxu0 %v1028
    %v1126 = vpop.f32.mrb[0].mxu0
    %v1127 = vadd.f32 %v935, %v1126
    %v1128 = vpop.f32.mrb[0].mxu0
    %v1129 = vadd.f32 %v935, %v1128
    %v1130 = vpop.f32.mrb[0].mxu0
    %v1131 = vadd.f32 %v940, %v1130
    %v1132 = vpop.f32.mrb[0].mxu0
    %v1133 = vadd.f32 %v940, %v1132
    %1134 = vmatprep.mubr.bf16.mxu0 %v1031
    %1135 = vmatmul.mubr.bf16.gmra.mrb[0].mxu0 %v1030
    %v1136 = vpop.f32.mrb[0].mxu0
    %v1137 = vadd.f32 %v945, %v1136
    %v1138 = vpop.f32.mrb[0].mxu0
    %v1139 = vadd.f32 %v945, %v1138
    %v1140 = vpop.f32.mrb[0].mxu0
    %v1141 = vadd.f32 %v950, %v1140
    %v1142 = vpop.f32.mrb[0].mxu0
    %v1143 = vadd.f32 %v950, %v1142
    %1144 = vmatprep.mubr.bf16.mxu0 %v1033
    %1145 = vmatmul.mubr.bf16.gmra.mrb[0].mxu0 %v1032
    %v1146 = vpop.f32.mrb[0].mxu0
    %v1147 = vadd.f32 %v955, %v1146
    %v1148 = vpop.f32.mrb[0].mxu0
    %v1149 = vadd.f32 %v955, %v1148
    %v1150 = vpop.f32.mrb[0].mxu0
    %v1151 = vadd.f32 %v960, %v1150
    %v1152 = vpop.f32.mrb[0].mxu0
    %v1153 = vadd.f32 %v960, %v1152
    %1154 = vmatprep.mubr.bf16.mxu0 %v1035
    %1155 = vmatmul.mubr.bf16.gmra.mrb[0].mxu0 %v1034
    %v1156 = vpop.f32.mrb[0].mxu0
    %v1157 = vadd.f32 %v965, %v1156
    %v1158 = vpop.f32.mrb[0].mxu0
    %v1159 = vadd.f32 %v965, %v1158
    %v1160 = vpop.f32.mrb[0].mxu0
    %v1161 = vadd.f32 %v970, %v1160
    %v1162 = vpop.f32.mrb[0].mxu0
    %v1163 = vadd.f32 %v970, %v1162
    %1164 = vdwg.mxu0
    %v1165 = vmax.f32 %v1087, 0.0
    %v1166 = vmax.f32 %v1089, 0.0
    %v1167 = vmax.f32 %v1091, 0.0
    %v1168 = vmax.f32 %v1093, 0.0
    %v1169 = vmax.f32 %v1097, 0.0
    %v1170 = vmax.f32 %v1099, 0.0
    %v1171 = vmax.f32 %v1101, 0.0
    %v1172 = vmax.f32 %v1103, 0.0
    %v1173 = vmax.f32 %v1107, 0.0
    %v1174 = vmax.f32 %v1109, 0.0
    %v1175 = vmax.f32 %v1111, 0.0
    %v1176 = vmax.f32 %v1113, 0.0
    %v1177 = vmax.f32 %v1117, 0.0
    %v1178 = vmax.f32 %v1119, 0.0
    %v1179 = vmax.f32 %v1121, 0.0
    %v1180 = vmax.f32 %v1123, 0.0
    %v1181 = vmax.f32 %v1127, 0.0
    %v1182 = vmax.f32 %v1129, 0.0
    %v1183 = vmax.f32 %v1131, 0.0
    %v1184 = vmax.f32 %v1133, 0.0
    %v1185 = vmax.f32 %v1137, 0.0
    %v1186 = vmax.f32 %v1139, 0.0
    %v1187 = vmax.f32 %v1141, 0.0
    %v1188 = vmax.f32 %v1143, 0.0
    %v1189 = vmax.f32 %v1147, 0.0
    %v1190 = vmax.f32 %v1149, 0.0
    %v1191 = vmax.f32 %v1151, 0.0
    %v1192 = vmax.f32 %v1153, 0.0
    %v1193 = vmax.f32 %v1157, 0.0
    %v1194 = vmax.f32 %v1159, 0.0
    %v1195 = vmax.f32 %v1161, 0.0
    %v1196 = vmax.f32 %v1163, 0.0
    %1197 = vst [vmem:[#allocation3] sm:$0xff] %v1165
    %1198 = vst [vmem:[#allocation3 + $0x8] sm:$0xff] %v1166
    %1199 = vst [vmem:[#allocation3 + $0x10] sm:$0xff] %v1167
    %1200 = vst [vmem:[#allocation3 + $0x18] sm:$0xff] %v1168
    %1201 = vst [vmem:[#allocation3 + $0x20] sm:$0xff] %v1169
    %1202 = vst [vmem:[#allocation3 + $0x28] sm:$0xff] %v1170
    %1203 = vst [vmem:[#allocation3 + $0x30] sm:$0xff] %v1171
    %1204 = vst [vmem:[#allocation3 + $0x38] sm:$0xff] %v1172
    %1205 = vst [vmem:[#allocation3 + $0x40] sm:$0xff] %v1173
    %1206 = vst [vmem:[#allocation3 + $0x48] sm:$0xff] %v1174
    %1207 = vst [vmem:[#allocation3 + $0x50] sm:$0xff] %v1175
    %1208 = vst [vmem:[#allocation3 + $0x58] sm:$0xff] %v1176
    %1209 = vst [vmem:[#allocation3 + $0x60] sm:$0xff] %v1177
    %1210 = vst [vmem:[#allocation3 + $0x68] sm:$0xff] %v1178
    %1211 = vst [vmem:[#allocation3 + $0x70] sm:$0xff] %v1179
    %1212 = vst [vmem:[#allocation3 + $0x78] sm:$0xff] %v1180
    %1213 = vst [vmem:[#allocation3 + $0x80] sm:$0xff] %v1181
    %1214 = vst [vmem:[#allocation3 + $0x88] sm:$0xff] %v1182
    %1215 = vst [vmem:[#allocation3 + $0x90] sm:$0xff] %v1183
    %1216 = vst [vmem:[#allocation3 + $0x98] sm:$0xff] %v1184
    %1217 = vst [vmem:[#allocation3 + $0xa0] sm:$0xff] %v1185
    %1218 = vst [vmem:[#allocation3 + $0xa8] sm:$0xff] %v1186
    %1219 = vst [vmem:[#allocation3 + $0xb0] sm:$0xff] %v1187
    %1220 = vst [vmem:[#allocation3 + $0xb8] sm:$0xff] %v1188
    %1221 = vst [vmem:[#allocation3 + $0xc0] sm:$0xff] %v1189
    %1222 = vst [vmem:[#allocation3 + $0xc8] sm:$0xff] %v1190
    %1223 = vst [vmem:[#allocation3 + $0xd0] sm:$0xff] %v1191
    %1224 = vst [vmem:[#allocation3 + $0xd8] sm:$0xff] %v1192
    %1225 = vst [vmem:[#allocation3 + $0xe0] sm:$0xff] %v1193
    %1226 = vst [vmem:[#allocation3 + $0xe8] sm:$0xff] %v1194
    %1227 = vst [vmem:[#allocation3 + $0xf0] sm:$0xff] %v1195
    %1228 = vst [vmem:[#allocation3 + $0xf8] sm:$0xff] %v1196
    %v1229 = vlaneseq
    %v1230 = vand.u32 %v1229, 127
    %v1231 = vld [vmem:[#allocation3] ss:$0 sm:$0xff]
    %v1232 = vld [vmem:[#allocation3 + $0x1] ss:$0 sm:$0xff]
    %1233 = vrot.lane.b32.xlu0 %v1232, 18
    %v1234 = vpop.permute.xlu0 %1233
    %vm1235 = vcmp.ge.s32.totalorder %v1230, 18
    %v1236 = vsel %vm1235, %v1234, %v1231
    %v1237 = vld [vmem:[#allocation3 + $0x2] ss:$0 sm:$0xff]
    %1238 = vrot.lane.b32.xlu0 %v1237, 36
    %v1239 = vpop.permute.xlu0 %1238
    %vm1240 = vcmp.ge.s32.totalorder %v1230, 36
    %v1241 = vsel %vm1240, %v1239, %v1236
    %v1242 = vld [vmem:[#allocation3 + $0x3] ss:$0 sm:$0xff]
    %1243 = vrot.lane.b32.xlu0 %v1242, 54
    %v1244 = vpop.permute.xlu0 %1243
    %vm1245 = vcmp.ge.s32.totalorder %v1230, 54
    %v1246 = vsel %vm1245, %v1244, %v1241
    %v1247 = vld [vmem:[#allocation3 + $0x4] ss:$0 sm:$0xff]
    %1248 = vrot.lane.b32.xlu0 %v1247, 72
    %v1249 = vpop.permute.xlu0 %1248
    %vm1250 = vcmp.ge.s32.totalorder %v1230, 72
    %v1251 = vsel %vm1250, %v1249, %v1246
    %v1252 = vld [vmem:[#allocation3 + $0x5] ss:$0 sm:$0xff]
    %1253 = vrot.lane.b32.xlu0 %v1252, 90
    %v1254 = vpop.permute.xlu0 %1253
    %vm1255 = vcmp.ge.s32.totalorder %v1230, 90
    %v1256 = vsel %vm1255, %v1254, %v1251
    %v1257 = vld [vmem:[#allocation3 + $0x6] ss:$0 sm:$0xff]
    %1258 = vrot.lane.b32.xlu0 %v1257, 108
    %v1259 = vpop.permute.xlu0 %1258
    %vm1260 = vcmp.ge.s32.totalorder %v1230, 108
    %v1261 = vsel %vm1260, %v1259, %v1256
    %v1262 = vld [vmem:[#allocation3 + $0x7] ss:$0 sm:$0xff]
    %1263 = vrot.lane.b32.xlu0 %v1262, 126
    %v1264 = vpop.permute.xlu0 %1263
    %vm1265 = vcmp.ge.s32.totalorder %v1230, 126
    %v1266 = vsel %vm1265, %v1264, %v1261
    %v1267 = vpack.c.bf16 %v1266, %v1266
    %v1268 = vld [vmem:[#allocation4] sm:$0x1]
    %v1269 = vsel %vm50, %v1267, %v1268
    %1270 = vst [vmem:[#allocation4] sm:$0x1] %v1269
    %v1271 = vld [vmem:[#allocation3 + $0x7] ss:$0 sm:$0xff]
    %1272 = vrot.lane.b32.xlu0 %v1271, 126
    %v1273 = vpop.permute.xlu0 %1272
    %v1274 = vld [vmem:[#allocation3 + $0x10] ss:$0 sm:$0xff]
    %1275 = vrot.lane.b32.xlu0 %v1274, 16
    %v1276 = vpop.permute.xlu0 %1275
    %vm1277 = vcmp.ge.s32.totalorder %v1230, 16
    %v1278 = vsel %vm1277, %v1276, %v1273
    %v1279 = vld [vmem:[#allocation3 + $0x11] ss:$0 sm:$0xff]
    %1280 = vrot.lane.b32.xlu0 %v1279, 34
    %v1281 = vpop.permute.xlu0 %1280
    %vm1282 = vcmp.ge.s32.totalorder %v1230, 34
    %v1283 = vsel %vm1282, %v1281, %v1278
    %v1284 = vld [vmem:[#allocation3 + $0x12] ss:$0 sm:$0xff]
    %1285 = vrot.lane.b32.xlu0 %v1284, 52
    %v1286 = vpop.permute.xlu0 %1285
    %vm1287 = vcmp.ge.s32.totalorder %v1230, 52
    %v1288 = vsel %vm1287, %v1286, %v1283
    %v1289 = vld [vmem:[#allocation3 + $0x13] ss:$0 sm:$0xff]
    %1290 = vrot.lane.b32.xlu0 %v1289, 70
    %v1291 = vpop.permute.xlu0 %1290
    %vm1292 = vcmp.ge.s32.totalorder %v1230, 70
    %v1293 = vsel %vm1292, %v1291, %v1288
    %v1294 = vld [vmem:[#allocation3 + $0x14] ss:$0 sm:$0xff]
    %1295 = vrot.lane.b32.xlu0 %v1294, 88
    %v1296 = vpop.permute.xlu0 %1295
    %vm1297 = vcmp.ge.s32.totalorder %v1230, 88
    %v1298 = vsel %vm1297, %v1296, %v1293
    %v1299 = vld [vmem:[#allocation3 + $0x15] ss:$0 sm:$0xff]
    %1300 = vrot.lane.b32.xlu0 %v1299, 106
    %v1301 = vpop.permute.xlu0 %1300
    %vm1302 = vcmp.ge.s32.totalorder %v1230, 106
    %v1303 = vsel %vm1302, %v1301, %v1298
    %v1304 = vld [vmem:[#allocation3 + $0x16] ss:$0 sm:$0xff]
    %1305 = vrot.lane.b32.xlu0 %v1304, 124
    %v1306 = vpop.permute.xlu0 %1305
    %vm1307 = vcmp.ge.s32.totalorder %v1230, 124
    %v1308 = vsel %vm1307, %v1306, %v1303
    %v1309 = vpack.c.bf16 %v1308, %v1308
    %v1311 = vunpack.c.l.b16 %v1309
    %v1312 = vpack.c.b16 %v1311, %v1311
    %v1314 = vshll.u32 %v1312, 16
    %vm1317 = vsmask.f32 7938
    %vm1318 = vmand %vm48, %vm1317
    %v1319 = vld [vmem:[#allocation4] sm:$0x1]
    %v1320 = vsel %vm1318, %v1314, %v1319
    %1321 = vst [vmem:[#allocation4] sm:$0x1] %v1320
    %v1322 = vld [vmem:[#allocation3 + $0x16] ss:$0 sm:$0xff]
    %1323 = vrot.lane.b32.xlu0 %v1322, 124
    %v1324 = vpop.permute.xlu0 %1323
    %v1325 = vld [vmem:[#allocation3 + $0x17] ss:$0 sm:$0xff]
    %1326 = vrot.lane.b32.xlu0 %v1325, 14
    %v1327 = vpop.permute.xlu0 %1326
    %vm1328 = vcmp.ge.s32.totalorder %v1230, 14
    %v1329 = vsel %vm1328, %v1327, %v1324
    %v1330 = vld [vmem:[#allocation3 + $0x20] ss:$0 sm:$0xff]
    %1331 = vrot.lane.b32.xlu0 %v1330, 32
    %v1332 = vpop.permute.xlu0 %1331
    %vm1333 = vcmp.ge.s32.totalorder %v1230, 32
    %v1334 = vsel %vm1333, %v1332, %v1329
    %v1335 = vld [vmem:[#allocation3 + $0x21] ss:$0 sm:$0xff]
    %1336 = vrot.lane.b32.xlu0 %v1335, 50
    %v1337 = vpop.permute.xlu0 %1336
    %vm1338 = vcmp.ge.s32.totalorder %v1230, 50
    %v1339 = vsel %vm1338, %v1337, %v1334
    %v1340 = vld [vmem:[#allocation3 + $0x22] ss:$0 sm:$0xff]
    %1341 = vrot.lane.b32.xlu0 %v1340, 68
    %v1342 = vpop.permute.xlu0 %1341
    %vm1343 = vcmp.ge.s32.totalorder %v1230, 68
    %v1344 = vsel %vm1343, %v1342, %v1339
    %v1345 = vld [vmem:[#allocation3 + $0x23] ss:$0 sm:$0xff]
    %1346 = vrot.lane.b32.xlu0 %v1345, 86
    %v1347 = vpop.permute.xlu0 %1346
    %vm1348 = vcmp.ge.s32.totalorder %v1230, 86
    %v1349 = vsel %vm1348, %v1347, %v1344
    %v1350 = vld [vmem:[#allocation3 + $0x24] ss:$0 sm:$0xff]
    %1351 = vrot.lane.b32.xlu0 %v1350, 104
    %v1352 = vpop.permute.xlu0 %1351
    %vm1353 = vcmp.ge.s32.totalorder %v1230, 104
    %v1354 = vsel %vm1353, %v1352, %v1349
    %v1355 = vld [vmem:[#allocation3 + $0x25] ss:$0 sm:$0xff]
    %1356 = vrot.lane.b32.xlu0 %v1355, 122
    %v1357 = vpop.permute.xlu0 %1356
    %vm1358 = vcmp.ge.s32.totalorder %v1230, 122
    %v1359 = vsel %vm1358, %v1357, %v1354
    %v1360 = vpack.c.bf16 %v1359, %v1359
    %v1362 = vunpack.c.l.b16 %v1360
    %v1363 = vpack.c.b16 %v1362, %v1362
    %v1364 = vrot.slane %v1363, 7
    %v1366 = vld [vmem:[#allocation4] sm:$0x2]
    %v1367 = vsel %vm41, %v1364, %v1366
    %1368 = vst [vmem:[#allocation4] sm:$0x2] %v1367
    %v1369 = vld [vmem:[#allocation3 + $0x25] ss:$0 sm:$0xff]
    %1370 = vrot.lane.b32.xlu0 %v1369, 122
    %v1371 = vpop.permute.xlu0 %1370
    %v1372 = vld [vmem:[#allocation3 + $0x26] ss:$0 sm:$0xff]
    %1373 = vrot.lane.b32.xlu0 %v1372, 12
    %v1374 = vpop.permute.xlu0 %1373
    %vm1375 = vcmp.ge.s32.totalorder %v1230, 12
    %v1376 = vsel %vm1375, %v1374, %v1371
    %v1377 = vld [vmem:[#allocation3 + $0x27] ss:$0 sm:$0xff]
    %1378 = vrot.lane.b32.xlu0 %v1377, 30
    %v1379 = vpop.permute.xlu0 %1378
    %vm1380 = vcmp.ge.s32.totalorder %v1230, 30
    %v1381 = vsel %vm1380, %v1379, %v1376
    %v1382 = vld [vmem:[#allocation3 + $0x30] ss:$0 sm:$0xff]
    %1383 = vrot.lane.b32.xlu0 %v1382, 48
    %v1384 = vpop.permute.xlu0 %1383
    %vm1385 = vcmp.ge.s32.totalorder %v1230, 48
    %v1386 = vsel %vm1385, %v1384, %v1381
    %v1387 = vld [vmem:[#allocation3 + $0x31] ss:$0 sm:$0xff]
    %1388 = vrot.lane.b32.xlu0 %v1387, 66
    %v1389 = vpop.permute.xlu0 %1388
    %vm1390 = vcmp.ge.s32.totalorder %v1230, 66
    %v1391 = vsel %vm1390, %v1389, %v1386
    %v1392 = vld [vmem:[#allocation3 + $0x32] ss:$0 sm:$0xff]
    %1393 = vrot.lane.b32.xlu0 %v1392, 84
    %v1394 = vpop.permute.xlu0 %1393
    %vm1395 = vcmp.ge.s32.totalorder %v1230, 84
    %v1396 = vsel %vm1395, %v1394, %v1391
    %v1397 = vld [vmem:[#allocation3 + $0x33] ss:$0 sm:$0xff]
    %1398 = vrot.lane.b32.xlu0 %v1397, 102
    %v1399 = vpop.permute.xlu0 %1398
    %vm1400 = vcmp.ge.s32.totalorder %v1230, 102
    %v1401 = vsel %vm1400, %v1399, %v1396
    %v1402 = vld [vmem:[#allocation3 + $0x34] ss:$0 sm:$0xff]
    %1403 = vrot.lane.b32.xlu0 %v1402, 120
    %v1404 = vpop.permute.xlu0 %1403
    %vm1405 = vcmp.ge.s32.totalorder %v1230, 120
    %v1406 = vsel %vm1405, %v1404, %v1401
    %v1407 = vpack.c.bf16 %v1406, %v1406
    %v1409 = vunpack.c.l.b16 %v1407
    %v1410 = vpack.c.b16 %v1409, %v1409
    %v1412 = vshll.u32 %v1410, 16
    %v1414 = vrot.slane %v1412, 7
    %vm1416 = vsmask.f32 7942
    %vm1417 = vmand %vm39, %vm1416
    %v1418 = vld [vmem:[#allocation4] sm:$0x2]
    %v1419 = vsel %vm1417, %v1414, %v1418
    %1420 = vst [vmem:[#allocation4] sm:$0x2] %v1419
    %v1421 = vld [vmem:[#allocation3 + $0x34] ss:$0 sm:$0xff]
    %1422 = vrot.lane.b32.xlu0 %v1421, 120
    %v1423 = vpop.permute.xlu0 %1422
    %v1424 = vld [vmem:[#allocation3 + $0x35] ss:$0 sm:$0xff]
    %1425 = vrot.lane.b32.xlu0 %v1424, 10
    %v1426 = vpop.permute.xlu0 %1425
    %vm1427 = vcmp.ge.s32.totalorder %v1230, 10
    %v1428 = vsel %vm1427, %v1426, %v1423
    %v1429 = vld [vmem:[#allocation3 + $0x36] ss:$0 sm:$0xff]
    %1430 = vrot.lane.b32.xlu0 %v1429, 28
    %v1431 = vpop.permute.xlu0 %1430
    %vm1432 = vcmp.ge.s32.totalorder %v1230, 28
    %v1433 = vsel %vm1432, %v1431, %v1428
    %v1434 = vld [vmem:[#allocation3 + $0x37] ss:$0 sm:$0xff]
    %1435 = vrot.lane.b32.xlu0 %v1434, 46
    %v1436 = vpop.permute.xlu0 %1435
    %vm1437 = vcmp.ge.s32.totalorder %v1230, 46
    %v1438 = vsel %vm1437, %v1436, %v1433
    %v1439 = vld [vmem:[#allocation3 + $0x40] ss:$0 sm:$0xff]
    %1440 = vrot.lane.b32.xlu0 %v1439, 64
    %v1441 = vpop.permute.xlu0 %1440
    %vm1442 = vcmp.ge.s32.totalorder %v1230, 64
    %v1443 = vsel %vm1442, %v1441, %v1438
    %v1444 = vld [vmem:[#allocation3 + $0x41] ss:$0 sm:$0xff]
    %1445 = vrot.lane.b32.xlu0 %v1444, 82
    %v1446 = vpop.permute.xlu0 %1445
    %vm1447 = vcmp.ge.s32.totalorder %v1230, 82
    %v1448 = vsel %vm1447, %v1446, %v1443
    %v1449 = vld [vmem:[#allocation3 + $0x42] ss:$0 sm:$0xff]
    %1450 = vrot.lane.b32.xlu0 %v1449, 100
    %v1451 = vpop.permute.xlu0 %1450
    %vm1452 = vcmp.ge.s32.totalorder %v1230, 100
    %v1453 = vsel %vm1452, %v1451, %v1448
    %v1454 = vld [vmem:[#allocation3 + $0x43] ss:$0 sm:$0xff]
    %1455 = vrot.lane.b32.xlu0 %v1454, 118
    %v1456 = vpop.permute.xlu0 %1455
    %vm1457 = vcmp.ge.s32.totalorder %v1230, 118
    %v1458 = vsel %vm1457, %v1456, %v1453
    %v1459 = vpack.c.bf16 %v1458, %v1458
    %v1461 = vunpack.c.l.b16 %v1459
    %v1462 = vpack.c.b16 %v1461, %v1461
    %v1463 = vrot.slane %v1462, 6
    %vm1465 = vcmask 1042434
    %vm1466 = vsmask.f32 2304
    %vm1467 = vmand %vm1465, %vm1466
    %v1468 = vld [vmem:[#allocation4] sm:$0x4]
    %v1469 = vsel %vm1467, %v1463, %v1468
    %1470 = vst [vmem:[#allocation4] sm:$0x4] %v1469
    %v1471 = vld [vmem:[#allocation3 + $0x43] ss:$0 sm:$0xff]
    %1472 = vrot.lane.b32.xlu0 %v1471, 118
    %v1473 = vpop.permute.xlu0 %1472
    %v1474 = vld [vmem:[#allocation3 + $0x44] ss:$0 sm:$0xff]
    %1475 = vrot.lane.b32.xlu0 %v1474, 8
    %v1476 = vpop.permute.xlu0 %1475
    %vm1477 = vcmp.ge.s32.totalorder %v1230, 8
    %v1478 = vsel %vm1477, %v1476, %v1473
    %v1479 = vld [vmem:[#allocation3 + $0x45] ss:$0 sm:$0xff]
    %1480 = vrot.lane.b32.xlu0 %v1479, 26
    %v1481 = vpop.permute.xlu0 %1480
    %vm1482 = vcmp.ge.s32.totalorder %v1230, 26
    %v1483 = vsel %vm1482, %v1481, %v1478
    %v1484 = vld [vmem:[#allocation3 + $0x46] ss:$0 sm:$0xff]
    %1485 = vrot.lane.b32.xlu0 %v1484, 44
    %v1486 = vpop.permute.xlu0 %1485
    %vm1487 = vcmp.ge.s32.totalorder %v1230, 44
    %v1488 = vsel %vm1487, %v1486, %v1483
    %v1489 = vld [vmem:[#allocation3 + $0x47] ss:$0 sm:$0xff]
    %1490 = vrot.lane.b32.xlu0 %v1489, 62
    %v1491 = vpop.permute.xlu0 %1490
    %vm1492 = vcmp.ge.s32.totalorder %v1230, 62
    %v1493 = vsel %vm1492, %v1491, %v1488
    %v1494 = vld [vmem:[#allocation3 + $0x50] ss:$0 sm:$0xff]
    %1495 = vrot.lane.b32.xlu0 %v1494, 80
    %v1496 = vpop.permute.xlu0 %1495
    %vm1497 = vcmp.ge.s32.totalorder %v1230, 80
    %v1498 = vsel %vm1497, %v1496, %v1493
    %v1499 = vld [vmem:[#allocation3 + $0x51] ss:$0 sm:$0xff]
    %1500 = vrot.lane.b32.xlu0 %v1499, 98
    %v1501 = vpop.permute.xlu0 %1500
    %vm1502 = vcmp.ge.s32.totalorder %v1230, 98
    %v1503 = vsel %vm1502, %v1501, %v1498
    %v1504 = vld [vmem:[#allocation3 + $0x52] ss:$0 sm:$0xff]
    %1505 = vrot.lane.b32.xlu0 %v1504, 116
    %v1506 = vpop.permute.xlu0 %1505
    %vm1507 = vcmp.ge.s32.totalorder %v1230, 116
    %v1508 = vsel %vm1507, %v1506, %v1503
    %v1509 = vpack.c.bf16 %v1508, %v1508
    %v1511 = vunpack.c.l.b16 %v1509
    %v1512 = vpack.c.b16 %v1511, %v1511
    %v1514 = vshll.u32 %v1512, 16
    %v1516 = vrot.slane %v1514, 6
    %vm1518 = vsmask.f32 7946
    %vm1519 = vmand %vm1465, %vm1518
    %v1520 = vld [vmem:[#allocation4] sm:$0x4]
    %v1521 = vsel %vm1519, %v1516, %v1520
    %1522 = vst [vmem:[#allocation4] sm:$0x4] %v1521
    %v1523 = vld [vmem:[#allocation3 + $0x52] ss:$0 sm:$0xff]
    %1524 = vrot.lane.b32.xlu0 %v1523, 116
    %v1525 = vpop.permute.xlu0 %1524
    %v1526 = vld [vmem:[#allocation3 + $0x53] ss:$0 sm:$0xff]
    %1527 = vrot.lane.b32.xlu0 %v1526, 6
    %v1528 = vpop.permute.xlu0 %1527
    %vm1529 = vcmp.ge.s32.totalorder %v1230, 6
    %v1530 = vsel %vm1529, %v1528, %v1525
    %v1531 = vld [vmem:[#allocation3 + $0x54] ss:$0 sm:$0xff]
    %1532 = vrot.lane.b32.xlu0 %v1531, 24
    %v1533 = vpop.permute.xlu0 %1532
    %vm1534 = vcmp.ge.s32.totalorder %v1230, 24
    %v1535 = vsel %vm1534, %v1533, %v1530
    %v1536 = vld [vmem:[#allocation3 + $0x55] ss:$0 sm:$0xff]
    %1537 = vrot.lane.b32.xlu0 %v1536, 42
    %v1538 = vpop.permute.xlu0 %1537
    %vm1539 = vcmp.ge.s32.totalorder %v1230, 42
    %v1540 = vsel %vm1539, %v1538, %v1535
    %v1541 = vld [vmem:[#allocation3 + $0x56] ss:$0 sm:$0xff]
    %1542 = vrot.lane.b32.xlu0 %v1541, 60
    %v1543 = vpop.permute.xlu0 %1542
    %vm1544 = vcmp.ge.s32.totalorder %v1230, 60
    %v1545 = vsel %vm1544, %v1543, %v1540
    %v1546 = vld [vmem:[#allocation3 + $0x57] ss:$0 sm:$0xff]
    %1547 = vrot.lane.b32.xlu0 %v1546, 78
    %v1548 = vpop.permute.xlu0 %1547
    %vm1549 = vcmp.ge.s32.totalorder %v1230, 78
    %v1550 = vsel %vm1549, %v1548, %v1545
    %v1551 = vld [vmem:[#allocation3 + $0x60] ss:$0 sm:$0xff]
    %1552 = vrot.lane.b32.xlu0 %v1551, 96
    %v1553 = vpop.permute.xlu0 %1552
    %vm1554 = vcmp.ge.s32.totalorder %v1230, 96
    %v1555 = vsel %vm1554, %v1553, %v1550
    %v1556 = vld [vmem:[#allocation3 + $0x61] ss:$0 sm:$0xff]
    %1557 = vrot.lane.b32.xlu0 %v1556, 114
    %v1558 = vpop.permute.xlu0 %1557
    %vm1559 = vcmp.ge.s32.totalorder %v1230, 114
    %v1560 = vsel %vm1559, %v1558, %v1555
    %v1561 = vpack.c.bf16 %v1560, %v1560
    %v1563 = vunpack.c.l.b16 %v1561
    %v1564 = vpack.c.b16 %v1563, %v1563
    %v1565 = vrot.slane %v1564, 5
    %vm1567 = vcmask 1043459
    %vm1568 = vsmask.f32 3328
    %vm1569 = vmand %vm1567, %vm1568
    %v1570 = vld [vmem:[#allocation4] sm:$0x8]
    %v1571 = vsel %vm1569, %v1565, %v1570
    %1572 = vst [vmem:[#allocation4] sm:$0x8] %v1571
    %v1573 = vld [vmem:[#allocation3 + $0x61] ss:$0 sm:$0xff]
    %1574 = vrot.lane.b32.xlu0 %v1573, 114
    %v1575 = vpop.permute.xlu0 %1574
    %v1576 = vld [vmem:[#allocation3 + $0x62] ss:$0 sm:$0xff]
    %1577 = vrot.lane.b32.xlu0 %v1576, 4
    %v1578 = vpop.permute.xlu0 %1577
    %vm1579 = vcmp.ge.s32.totalorder %v1230, 4
    %v1580 = vsel %vm1579, %v1578, %v1575
    %v1581 = vld [vmem:[#allocation3 + $0x63] ss:$0 sm:$0xff]
    %1582 = vrot.lane.b32.xlu0 %v1581, 22
    %v1583 = vpop.permute.xlu0 %1582
    %vm1584 = vcmp.ge.s32.totalorder %v1230, 22
    %v1585 = vsel %vm1584, %v1583, %v1580
    %v1586 = vld [vmem:[#allocation3 + $0x64] ss:$0 sm:$0xff]
    %1587 = vrot.lane.b32.xlu0 %v1586, 40
    %v1588 = vpop.permute.xlu0 %1587
    %vm1589 = vcmp.ge.s32.totalorder %v1230, 40
    %v1590 = vsel %vm1589, %v1588, %v1585
    %v1591 = vld [vmem:[#allocation3 + $0x65] ss:$0 sm:$0xff]
    %1592 = vrot.lane.b32.xlu0 %v1591, 58
    %v1593 = vpop.permute.xlu0 %1592
    %vm1594 = vcmp.ge.s32.totalorder %v1230, 58
    %v1595 = vsel %vm1594, %v1593, %v1590
    %v1596 = vld [vmem:[#allocation3 + $0x66] ss:$0 sm:$0xff]
    %1597 = vrot.lane.b32.xlu0 %v1596, 76
    %v1598 = vpop.permute.xlu0 %1597
    %vm1599 = vcmp.ge.s32.totalorder %v1230, 76
    %v1600 = vsel %vm1599, %v1598, %v1595
    %v1601 = vld [vmem:[#allocation3 + $0x67] ss:$0 sm:$0xff]
    %1602 = vrot.lane.b32.xlu0 %v1601, 94
    %v1603 = vpop.permute.xlu0 %1602
    %vm1604 = vcmp.ge.s32.totalorder %v1230, 94
    %v1605 = vsel %vm1604, %v1603, %v1600
    %v1606 = vld [vmem:[#allocation3 + $0x70] ss:$0 sm:$0xff]
    %1607 = vrot.lane.b32.xlu0 %v1606, 112
    %v1608 = vpop.permute.xlu0 %1607
    %vm1609 = vcmp.ge.s32.totalorder %v1230, 112
    %v1610 = vsel %vm1609, %v1608, %v1605
    %v1611 = vpack.c.bf16 %v1610, %v1610
    %v1613 = vunpack.c.l.b16 %v1611
    %v1614 = vpack.c.b16 %v1613, %v1613
    %v1616 = vshll.u32 %v1614, 16
    %v1618 = vrot.slane %v1616, 5
    %vm1620 = vsmask.f32 7950
    %vm1621 = vmand %vm1567, %vm1620
    %v1622 = vld [vmem:[#allocation4] sm:$0x8]
    %v1623 = vsel %vm1621, %v1618, %v1622
    %1624 = vst [vmem:[#allocation4] sm:$0x8] %v1623
    %v1625 = vld [vmem:[#allocation3 + $0x70] ss:$0 sm:$0xff]
    %1626 = vrot.lane.b32.xlu0 %v1625, 112
    %v1627 = vpop.permute.xlu0 %1626
    %v1628 = vld [vmem:[#allocation3 + $0x71] ss:$0 sm:$0xff]
    %1629 = vrot.lane.b32.xlu0 %v1628, 2
    %v1630 = vpop.permute.xlu0 %1629
    %vm1631 = vcmp.ge.s32.totalorder %v1230, 2
    %v1632 = vsel %vm1631, %v1630, %v1627
    %v1633 = vld [vmem:[#allocation3 + $0x72] ss:$0 sm:$0xff]
    %1634 = vrot.lane.b32.xlu0 %v1633, 20
    %v1635 = vpop.permute.xlu0 %1634
    %vm1636 = vcmp.ge.s32.totalorder %v1230, 20
    %v1637 = vsel %vm1636, %v1635, %v1632
    %v1638 = vld [vmem:[#allocation3 + $0x73] ss:$0 sm:$0xff]
    %1639 = vrot.lane.b32.xlu0 %v1638, 38
    %v1640 = vpop.permute.xlu0 %1639
    %vm1641 = vcmp.ge.s32.totalorder %v1230, 38
    %v1642 = vsel %vm1641, %v1640, %v1637
    %v1643 = vld [vmem:[#allocation3 + $0x74] ss:$0 sm:$0xff]
    %1644 = vrot.lane.b32.xlu0 %v1643, 56
    %v1645 = vpop.permute.xlu0 %1644
    %vm1646 = vcmp.ge.s32.totalorder %v1230, 56
    %v1647 = vsel %vm1646, %v1645, %v1642
    %v1648 = vld [vmem:[#allocation3 + $0x75] ss:$0 sm:$0xff]
    %1649 = vrot.lane.b32.xlu0 %v1648, 74
    %v1650 = vpop.permute.xlu0 %1649
    %vm1651 = vcmp.ge.s32.totalorder %v1230, 74
    %v1652 = vsel %vm1651, %v1650, %v1647
    %v1653 = vld [vmem:[#allocation3 + $0x76] ss:$0 sm:$0xff]
    %1654 = vrot.lane.b32.xlu0 %v1653, 92
    %v1655 = vpop.permute.xlu0 %1654
    %vm1656 = vcmp.ge.s32.totalorder %v1230, 92
    %v1657 = vsel %vm1656, %v1655, %v1652
    %v1658 = vld [vmem:[#allocation3 + $0x77] ss:$0 sm:$0xff]
    %1659 = vrot.lane.b32.xlu0 %v1658, 110
    %v1660 = vpop.permute.xlu0 %1659
    %vm1661 = vcmp.ge.s32.totalorder %v1230, 110
    %v1662 = vsel %vm1661, %v1660, %v1657
    %v1663 = vpack.c.bf16 %v1662, %v1662
    %v1664 = vld [vmem:[#allocation4 + $0x4] sm:$0x1]
    %v1665 = vsel %vm50, %v1663, %v1664
    %1666 = vst [vmem:[#allocation4 + $0x4] sm:$0x1] %v1665
    %v1667 = vld [vmem:[#allocation3 + $0x80] ss:$0 sm:$0xff]
    %v1668 = vld [vmem:[#allocation3 + $0x81] ss:$0 sm:$0xff]
    %1669 = vrot.lane.b32.xlu0 %v1668, 18
    %v1670 = vpop.permute.xlu0 %1669
    %v1671 = vsel %vm1235, %v1670, %v1667
    %v1672 = vld [vmem:[#allocation3 + $0x82] ss:$0 sm:$0xff]
    %1673 = vrot.lane.b32.xlu0 %v1672, 36
    %v1674 = vpop.permute.xlu0 %1673
    %v1675 = vsel %vm1240, %v1674, %v1671
    %v1676 = vld [vmem:[#allocation3 + $0x83] ss:$0 sm:$0xff]
    %1677 = vrot.lane.b32.xlu0 %v1676, 54
    %v1678 = vpop.permute.xlu0 %1677
    %v1679 = vsel %vm1245, %v1678, %v1675
    %v1680 = vld [vmem:[#allocation3 + $0x84] ss:$0 sm:$0xff]
    %1681 = vrot.lane.b32.xlu0 %v1680, 72
    %v1682 = vpop.permute.xlu0 %1681
    %v1683 = vsel %vm1250, %v1682, %v1679
    %v1684 = vld [vmem:[#allocation3 + $0x85] ss:$0 sm:$0xff]
    %1685 = vrot.lane.b32.xlu0 %v1684, 90
    %v1686 = vpop.permute.xlu0 %1685
    %v1687 = vsel %vm1255, %v1686, %v1683
    %v1688 = vld [vmem:[#allocation3 + $0x86] ss:$0 sm:$0xff]
    %1689 = vrot.lane.b32.xlu0 %v1688, 108
    %v1690 = vpop.permute.xlu0 %1689
    %v1691 = vsel %vm1260, %v1690, %v1687
    %v1692 = vld [vmem:[#allocation3 + $0x87] ss:$0 sm:$0xff]
    %1693 = vrot.lane.b32.xlu0 %v1692, 126
    %v1694 = vpop.permute.xlu0 %1693
    %v1695 = vsel %vm1265, %v1694, %v1691
    %v1696 = vpack.c.bf16 %v1695, %v1695
    %v1698 = vunpack.c.l.b16 %v1696
    %v1699 = vpack.c.b16 %v1698, %v1698
    %v1701 = vshll.u32 %v1699, 16
    %v1704 = vld [vmem:[#allocation4 + $0x4] sm:$0x1]
    %v1705 = vsel %vm1318, %v1701, %v1704
    %1706 = vst [vmem:[#allocation4 + $0x4] sm:$0x1] %v1705
    %v1707 = vld [vmem:[#allocation3 + $0x87] ss:$0 sm:$0xff]
    %1708 = vrot.lane.b32.xlu0 %v1707, 126
    %v1709 = vpop.permute.xlu0 %1708
    %v1710 = vld [vmem:[#allocation3 + $0x90] ss:$0 sm:$0xff]
    %1711 = vrot.lane.b32.xlu0 %v1710, 16
    %v1712 = vpop.permute.xlu0 %1711
    %v1713 = vsel %vm1277, %v1712, %v1709
    %v1714 = vld [vmem:[#allocation3 + $0x91] ss:$0 sm:$0xff]
    %1715 = vrot.lane.b32.xlu0 %v1714, 34
    %v1716 = vpop.permute.xlu0 %1715
    %v1717 = vsel %vm1282, %v1716, %v1713
    %v1718 = vld [vmem:[#allocation3 + $0x92] ss:$0 sm:$0xff]
    %1719 = vrot.lane.b32.xlu0 %v1718, 52
    %v1720 = vpop.permute.xlu0 %1719
    %v1721 = vsel %vm1287, %v1720, %v1717
    %v1722 = vld [vmem:[#allocation3 + $0x93] ss:$0 sm:$0xff]
    %1723 = vrot.lane.b32.xlu0 %v1722, 70
    %v1724 = vpop.permute.xlu0 %1723
    %v1725 = vsel %vm1292, %v1724, %v1721
    %v1726 = vld [vmem:[#allocation3 + $0x94] ss:$0 sm:$0xff]
    %1727 = vrot.lane.b32.xlu0 %v1726, 88
    %v1728 = vpop.permute.xlu0 %1727
    %v1729 = vsel %vm1297, %v1728, %v1725
    %v1730 = vld [vmem:[#allocation3 + $0x95] ss:$0 sm:$0xff]
    %1731 = vrot.lane.b32.xlu0 %v1730, 106
    %v1732 = vpop.permute.xlu0 %1731
    %v1733 = vsel %vm1302, %v1732, %v1729
    %v1734 = vld [vmem:[#allocation3 + $0x96] ss:$0 sm:$0xff]
    %1735 = vrot.lane.b32.xlu0 %v1734, 124
    %v1736 = vpop.permute.xlu0 %1735
    %v1737 = vsel %vm1307, %v1736, %v1733
    %v1738 = vpack.c.bf16 %v1737, %v1737
    %v1740 = vunpack.c.l.b16 %v1738
    %v1741 = vpack.c.b16 %v1740, %v1740
    %v1742 = vrot.slane %v1741, 7
    %v1744 = vld [vmem:[#allocation4 + $0x4] sm:$0x2]
    %v1745 = vsel %vm41, %v1742, %v1744
    %1746 = vst [vmem:[#allocation4 + $0x4] sm:$0x2] %v1745
    %v1747 = vld [vmem:[#allocation3 + $0x96] ss:$0 sm:$0xff]
    %1748 = vrot.lane.b32.xlu0 %v1747, 124
    %v1749 = vpop.permute.xlu0 %1748
    %v1750 = vld [vmem:[#allocation3 + $0x97] ss:$0 sm:$0xff]
    %1751 = vrot.lane.b32.xlu0 %v1750, 14
    %v1752 = vpop.permute.xlu0 %1751
    %v1753 = vsel %vm1328, %v1752, %v1749
    %v1754 = vld [vmem:[#allocation3 + $0xa0] ss:$0 sm:$0xff]
    %1755 = vrot.lane.b32.xlu0 %v1754, 32
    %v1756 = vpop.permute.xlu0 %1755
    %v1757 = vsel %vm1333, %v1756, %v1753
    %v1758 = vld [vmem:[#allocation3 + $0xa1] ss:$0 sm:$0xff]
    %1759 = vrot.lane.b32.xlu0 %v1758, 50
    %v1760 = vpop.permute.xlu0 %1759
    %v1761 = vsel %vm1338, %v1760, %v1757
    %v1762 = vld [vmem:[#allocation3 + $0xa2] ss:$0 sm:$0xff]
    %1763 = vrot.lane.b32.xlu0 %v1762, 68
    %v1764 = vpop.permute.xlu0 %1763
    %v1765 = vsel %vm1343, %v1764, %v1761
    %v1766 = vld [vmem:[#allocation3 + $0xa3] ss:$0 sm:$0xff]
    %1767 = vrot.lane.b32.xlu0 %v1766, 86
    %v1768 = vpop.permute.xlu0 %1767
    %v1769 = vsel %vm1348, %v1768, %v1765
    %v1770 = vld [vmem:[#allocation3 + $0xa4] ss:$0 sm:$0xff]
    %1771 = vrot.lane.b32.xlu0 %v1770, 104
    %v1772 = vpop.permute.xlu0 %1771
    %v1773 = vsel %vm1353, %v1772, %v1769
    %v1774 = vld [vmem:[#allocation3 + $0xa5] ss:$0 sm:$0xff]
    %1775 = vrot.lane.b32.xlu0 %v1774, 122
    %v1776 = vpop.permute.xlu0 %1775
    %v1777 = vsel %vm1358, %v1776, %v1773
    %v1778 = vpack.c.bf16 %v1777, %v1777
    %v1780 = vunpack.c.l.b16 %v1778
    %v1781 = vpack.c.b16 %v1780, %v1780
    %v1783 = vshll.u32 %v1781, 16
    %v1785 = vrot.slane %v1783, 7
    %v1787 = vld [vmem:[#allocation4 + $0x4] sm:$0x2]
    %v1788 = vsel %vm1417, %v1785, %v1787
    %1789 = vst [vmem:[#allocation4 + $0x4] sm:$0x2] %v1788
    %v1790 = vld [vmem:[#allocation3 + $0xa5] ss:$0 sm:$0xff]
    %1791 = vrot.lane.b32.xlu0 %v1790, 122
    %v1792 = vpop.permute.xlu0 %1791
    %v1793 = vld [vmem:[#allocation3 + $0xa6] ss:$0 sm:$0xff]
    %1794 = vrot.lane.b32.xlu0 %v1793, 12
    %v1795 = vpop.permute.xlu0 %1794
    %v1796 = vsel %vm1375, %v1795, %v1792
    %v1797 = vld [vmem:[#allocation3 + $0xa7] ss:$0 sm:$0xff]
    %1798 = vrot.lane.b32.xlu0 %v1797, 30
    %v1799 = vpop.permute.xlu0 %1798
    %v1800 = vsel %vm1380, %v1799, %v1796
    %v1801 = vld [vmem:[#allocation3 + $0xb0] ss:$0 sm:$0xff]
    %1802 = vrot.lane.b32.xlu0 %v1801, 48
    %v1803 = vpop.permute.xlu0 %1802
    %v1804 = vsel %vm1385, %v1803, %v1800
    %v1805 = vld [vmem:[#allocation3 + $0xb1] ss:$0 sm:$0xff]
    %1806 = vrot.lane.b32.xlu0 %v1805, 66
    %v1807 = vpop.permute.xlu0 %1806
    %v1808 = vsel %vm1390, %v1807, %v1804
    %v1809 = vld [vmem:[#allocation3 + $0xb2] ss:$0 sm:$0xff]
    %1810 = vrot.lane.b32.xlu0 %v1809, 84
    %v1811 = vpop.permute.xlu0 %1810
    %v1812 = vsel %vm1395, %v1811, %v1808
    %v1813 = vld [vmem:[#allocation3 + $0xb3] ss:$0 sm:$0xff]
    %1814 = vrot.lane.b32.xlu0 %v1813, 102
    %v1815 = vpop.permute.xlu0 %1814
    %v1816 = vsel %vm1400, %v1815, %v1812
    %v1817 = vld [vmem:[#allocation3 + $0xb4] ss:$0 sm:$0xff]
    %1818 = vrot.lane.b32.xlu0 %v1817, 120
    %v1819 = vpop.permute.xlu0 %1818
    %v1820 = vsel %vm1405, %v1819, %v1816
    %v1821 = vpack.c.bf16 %v1820, %v1820
    %v1823 = vunpack.c.l.b16 %v1821
    %v1824 = vpack.c.b16 %v1823, %v1823
    %v1825 = vrot.slane %v1824, 6
    %v1827 = vld [vmem:[#allocation4 + $0x4] sm:$0x4]
    %v1828 = vsel %vm1467, %v1825, %v1827
    %1829 = vst [vmem:[#allocation4 + $0x4] sm:$0x4] %v1828
    %v1830 = vld [vmem:[#allocation3 + $0xb4] ss:$0 sm:$0xff]
    %1831 = vrot.lane.b32.xlu0 %v1830, 120
    %v1832 = vpop.permute.xlu0 %1831
    %v1833 = vld [vmem:[#allocation3 + $0xb5] ss:$0 sm:$0xff]
    %1834 = vrot.lane.b32.xlu0 %v1833, 10
    %v1835 = vpop.permute.xlu0 %1834
    %v1836 = vsel %vm1427, %v1835, %v1832
    %v1837 = vld [vmem:[#allocation3 + $0xb6] ss:$0 sm:$0xff]
    %1838 = vrot.lane.b32.xlu0 %v1837, 28
    %v1839 = vpop.permute.xlu0 %1838
    %v1840 = vsel %vm1432, %v1839, %v1836
    %v1841 = vld [vmem:[#allocation3 + $0xb7] ss:$0 sm:$0xff]
    %1842 = vrot.lane.b32.xlu0 %v1841, 46
    %v1843 = vpop.permute.xlu0 %1842
    %v1844 = vsel %vm1437, %v1843, %v1840
    %v1845 = vld [vmem:[#allocation3 + $0xc0] ss:$0 sm:$0xff]
    %1846 = vrot.lane.b32.xlu0 %v1845, 64
    %v1847 = vpop.permute.xlu0 %1846
    %v1848 = vsel %vm1442, %v1847, %v1844
    %v1849 = vld [vmem:[#allocation3 + $0xc1] ss:$0 sm:$0xff]
    %1850 = vrot.lane.b32.xlu0 %v1849, 82
    %v1851 = vpop.permute.xlu0 %1850
    %v1852 = vsel %vm1447, %v1851, %v1848
    %v1853 = vld [vmem:[#allocation3 + $0xc2] ss:$0 sm:$0xff]
    %1854 = vrot.lane.b32.xlu0 %v1853, 100
    %v1855 = vpop.permute.xlu0 %1854
    %v1856 = vsel %vm1452, %v1855, %v1852
    %v1857 = vld [vmem:[#allocation3 + $0xc3] ss:$0 sm:$0xff]
    %1858 = vrot.lane.b32.xlu0 %v1857, 118
    %v1859 = vpop.permute.xlu0 %1858
    %v1860 = vsel %vm1457, %v1859, %v1856
    %v1861 = vpack.c.bf16 %v1860, %v1860
    %v1863 = vunpack.c.l.b16 %v1861
    %v1864 = vpack.c.b16 %v1863, %v1863
    %v1866 = vshll.u32 %v1864, 16
    %v1868 = vrot.slane %v1866, 6
    %v1870 = vld [vmem:[#allocation4 + $0x4] sm:$0x4]
    %v1871 = vsel %vm1519, %v1868, %v1870
    %1872 = vst [vmem:[#allocation4 + $0x4] sm:$0x4] %v1871
    %v1873 = vld [vmem:[#allocation3 + $0xc3] ss:$0 sm:$0xff]
    %1874 = vrot.lane.b32.xlu0 %v1873, 118
    %v1875 = vpop.permute.xlu0 %1874
    %v1876 = vld [vmem:[#allocation3 + $0xc4] ss:$0 sm:$0xff]
    %1877 = vrot.lane.b32.xlu0 %v1876, 8
    %v1878 = vpop.permute.xlu0 %1877
    %v1879 = vsel %vm1477, %v1878, %v1875
    %v1880 = vld [vmem:[#allocation3 + $0xc5] ss:$0 sm:$0xff]
    %1881 = vrot.lane.b32.xlu0 %v1880, 26
    %v1882 = vpop.permute.xlu0 %1881
    %v1883 = vsel %vm1482, %v1882, %v1879
    %v1884 = vld [vmem:[#allocation3 + $0xc6] ss:$0 sm:$0xff]
    %1885 = vrot.lane.b32.xlu0 %v1884, 44
    %v1886 = vpop.permute.xlu0 %1885
    %v1887 = vsel %vm1487, %v1886, %v1883
    %v1888 = vld [vmem:[#allocation3 + $0xc7] ss:$0 sm:$0xff]
    %1889 = vrot.lane.b32.xlu0 %v1888, 62
    %v1890 = vpop.permute.xlu0 %1889
    %v1891 = vsel %vm1492, %v1890, %v1887
    %v1892 = vld [vmem:[#allocation3 + $0xd0] ss:$0 sm:$0xff]
    %1893 = vrot.lane.b32.xlu0 %v1892, 80
    %v1894 = vpop.permute.xlu0 %1893
    %v1895 = vsel %vm1497, %v1894, %v1891
    %v1896 = vld [vmem:[#allocation3 + $0xd1] ss:$0 sm:$0xff]
    %1897 = vrot.lane.b32.xlu0 %v1896, 98
    %v1898 = vpop.permute.xlu0 %1897
    %v1899 = vsel %vm1502, %v1898, %v1895
    %v1900 = vld [vmem:[#allocation3 + $0xd2] ss:$0 sm:$0xff]
    %1901 = vrot.lane.b32.xlu0 %v1900, 116
    %v1902 = vpop.permute.xlu0 %1901
    %v1903 = vsel %vm1507, %v1902, %v1899
    %v1904 = vpack.c.bf16 %v1903, %v1903
    %v1906 = vunpack.c.l.b16 %v1904
    %v1907 = vpack.c.b16 %v1906, %v1906
    %v1908 = vrot.slane %v1907, 5
    %v1910 = vld [vmem:[#allocation4 + $0x4] sm:$0x8]
    %v1911 = vsel %vm1569, %v1908, %v1910
    %1912 = vst [vmem:[#allocation4 + $0x4] sm:$0x8] %v1911
    %v1913 = vld [vmem:[#allocation3 + $0xd2] ss:$0 sm:$0xff]
    %1914 = vrot.lane.b32.xlu0 %v1913, 116
    %v1915 = vpop.permute.xlu0 %1914
    %v1916 = vld [vmem:[#allocation3 + $0xd3] ss:$0 sm:$0xff]
    %1917 = vrot.lane.b32.xlu0 %v1916, 6
    %v1918 = vpop.permute.xlu0 %1917
    %v1919 = vsel %vm1529, %v1918, %v1915
    %v1920 = vld [vmem:[#allocation3 + $0xd4] ss:$0 sm:$0xff]
    %1921 = vrot.lane.b32.xlu0 %v1920, 24
    %v1922 = vpop.permute.xlu0 %1921
    %v1923 = vsel %vm1534, %v1922, %v1919
    %v1924 = vld [vmem:[#allocation3 + $0xd5] ss:$0 sm:$0xff]
    %1925 = vrot.lane.b32.xlu0 %v1924, 42
    %v1926 = vpop.permute.xlu0 %1925
    %v1927 = vsel %vm1539, %v1926, %v1923
    %v1928 = vld [vmem:[#allocation3 + $0xd6] ss:$0 sm:$0xff]
    %1929 = vrot.lane.b32.xlu0 %v1928, 60
    %v1930 = vpop.permute.xlu0 %1929
    %v1931 = vsel %vm1544, %v1930, %v1927
    %v1932 = vld [vmem:[#allocation3 + $0xd7] ss:$0 sm:$0xff]
    %1933 = vrot.lane.b32.xlu0 %v1932, 78
    %v1934 = vpop.permute.xlu0 %1933
    %v1935 = vsel %vm1549, %v1934, %v1931
    %v1936 = vld [vmem:[#allocation3 + $0xe0] ss:$0 sm:$0xff]
    %1937 = vrot.lane.b32.xlu0 %v1936, 96
    %v1938 = vpop.permute.xlu0 %1937
    %v1939 = vsel %vm1554, %v1938, %v1935
    %v1940 = vld [vmem:[#allocation3 + $0xe1] ss:$0 sm:$0xff]
    %1941 = vrot.lane.b32.xlu0 %v1940, 114
    %v1942 = vpop.permute.xlu0 %1941
    %v1943 = vsel %vm1559, %v1942, %v1939
    %v1944 = vpack.c.bf16 %v1943, %v1943
    %v1946 = vunpack.c.l.b16 %v1944
    %v1947 = vpack.c.b16 %v1946, %v1946
    %v1949 = vshll.u32 %v1947, 16
    %v1951 = vrot.slane %v1949, 5
    %v1953 = vld [vmem:[#allocation4 + $0x4] sm:$0x8]
    %v1954 = vsel %vm1621, %v1951, %v1953
    %1955 = vst [vmem:[#allocation4 + $0x4] sm:$0x8] %v1954
    %v1956 = vld [vmem:[#allocation3 + $0xe1] ss:$0 sm:$0xff]
    %1957 = vrot.lane.b32.xlu0 %v1956, 114
    %v1958 = vpop.permute.xlu0 %1957
    %v1959 = vld [vmem:[#allocation3 + $0xe2] ss:$0 sm:$0xff]
    %1960 = vrot.lane.b32.xlu0 %v1959, 4
    %v1961 = vpop.permute.xlu0 %1960
    %v1962 = vsel %vm1579, %v1961, %v1958
    %v1963 = vld [vmem:[#allocation3 + $0xe3] ss:$0 sm:$0xff]
    %1964 = vrot.lane.b32.xlu0 %v1963, 22
    %v1965 = vpop.permute.xlu0 %1964
    %v1966 = vsel %vm1584, %v1965, %v1962
    %v1967 = vld [vmem:[#allocation3 + $0xe4] ss:$0 sm:$0xff]
    %1968 = vrot.lane.b32.xlu0 %v1967, 40
    %v1969 = vpop.permute.xlu0 %1968
    %v1970 = vsel %vm1589, %v1969, %v1966
    %v1971 = vld [vmem:[#allocation3 + $0xe5] ss:$0 sm:$0xff]
    %1972 = vrot.lane.b32.xlu0 %v1971, 58
    %v1973 = vpop.permute.xlu0 %1972
    %v1974 = vsel %vm1594, %v1973, %v1970
    %v1975 = vld [vmem:[#allocation3 + $0xe6] ss:$0 sm:$0xff]
    %1976 = vrot.lane.b32.xlu0 %v1975, 76
    %v1977 = vpop.permute.xlu0 %1976
    %v1978 = vsel %vm1599, %v1977, %v1974
    %v1979 = vld [vmem:[#allocation3 + $0xe7] ss:$0 sm:$0xff]
    %1980 = vrot.lane.b32.xlu0 %v1979, 94
    %v1981 = vpop.permute.xlu0 %1980
    %v1982 = vsel %vm1604, %v1981, %v1978
    %v1983 = vld [vmem:[#allocation3 + $0xf0] ss:$0 sm:$0xff]
    %1984 = vrot.lane.b32.xlu0 %v1983, 112
    %v1985 = vpop.permute.xlu0 %1984
    %v1986 = vsel %vm1609, %v1985, %v1982
    %v1987 = vpack.c.bf16 %v1986, %v1986
    %v1988 = vld [vmem:[#allocation4 + $0x8] sm:$0x1]
    %v1989 = vsel %vm50, %v1987, %v1988
    %1990 = vst [vmem:[#allocation4 + $0x8] sm:$0x1] %v1989
    %v1991 = vld [vmem:[#allocation3 + $0xf0] ss:$0 sm:$0xff]
    %1992 = vrot.lane.b32.xlu0 %v1991, 112
    %v1993 = vpop.permute.xlu0 %1992
    %v1994 = vld [vmem:[#allocation3 + $0xf1] ss:$0 sm:$0xff]
    %1995 = vrot.lane.b32.xlu0 %v1994, 2
    %v1996 = vpop.permute.xlu0 %1995
    %v1997 = vsel %vm1631, %v1996, %v1993
    %v1998 = vld [vmem:[#allocation3 + $0xf2] ss:$0 sm:$0xff]
    %1999 = vrot.lane.b32.xlu0 %v1998, 20
    %v2000 = vpop.permute.xlu0 %1999
    %v2001 = vsel %vm1636, %v2000, %v1997
    %v2002 = vld [vmem:[#allocation3 + $0xf3] ss:$0 sm:$0xff]
    %2003 = vrot.lane.b32.xlu0 %v2002, 38
    %v2004 = vpop.permute.xlu0 %2003
    %v2005 = vsel %vm1641, %v2004, %v2001
    %v2006 = vld [vmem:[#allocation3 + $0xf4] ss:$0 sm:$0xff]
    %2007 = vrot.lane.b32.xlu0 %v2006, 56
    %v2008 = vpop.permute.xlu0 %2007
    %v2009 = vsel %vm1646, %v2008, %v2005
    %v2010 = vld [vmem:[#allocation3 + $0xf5] ss:$0 sm:$0xff]
    %2011 = vrot.lane.b32.xlu0 %v2010, 74
    %v2012 = vpop.permute.xlu0 %2011
    %v2013 = vsel %vm1651, %v2012, %v2009
    %v2014 = vld [vmem:[#allocation3 + $0xf6] ss:$0 sm:$0xff]
    %2015 = vrot.lane.b32.xlu0 %v2014, 92
    %v2016 = vpop.permute.xlu0 %2015
    %v2017 = vsel %vm1656, %v2016, %v2013
    %v2018 = vld [vmem:[#allocation3 + $0xf7] ss:$0 sm:$0xff]
    %2019 = vrot.lane.b32.xlu0 %v2018, 110
    %v2020 = vpop.permute.xlu0 %2019
    %v2021 = vsel %vm1661, %v2020, %v2017
    %v2022 = vpack.c.bf16 %v2021, %v2021
    %v2024 = vunpack.c.l.b16 %v2022
    %v2025 = vpack.c.b16 %v2024, %v2024
    %v2027 = vshll.u32 %v2025, 16
    %v2030 = vld [vmem:[#allocation4 + $0x8] sm:$0x1]
    %v2031 = vsel %vm1318, %v2027, %v2030
    %2032 = vst [vmem:[#allocation4 + $0x8] sm:$0x1] %v2031
    %v2033 = vld [vmem:[#allocation3 + $0x8] ss:$0 sm:$0xff]
    %v2034 = vld [vmem:[#allocation3 + $0x9] ss:$0 sm:$0xff]
    %2035 = vrot.lane.b32.xlu0 %v2034, 18
    %v2036 = vpop.permute.xlu0 %2035
    %v2037 = vsel %vm1235, %v2036, %v2033
    %v2038 = vld [vmem:[#allocation3 + $0xa] ss:$0 sm:$0xff]
    %2039 = vrot.lane.b32.xlu0 %v2038, 36
    %v2040 = vpop.permute.xlu0 %2039
    %v2041 = vsel %vm1240, %v2040, %v2037
    %v2042 = vld [vmem:[#allocation3 + $0xb] ss:$0 sm:$0xff]
    %2043 = vrot.lane.b32.xlu0 %v2042, 54
    %v2044 = vpop.permute.xlu0 %2043
    %v2045 = vsel %vm1245, %v2044, %v2041
    %v2046 = vld [vmem:[#allocation3 + $0xc] ss:$0 sm:$0xff]
    %2047 = vrot.lane.b32.xlu0 %v2046, 72
    %v2048 = vpop.permute.xlu0 %2047
    %v2049 = vsel %vm1250, %v2048, %v2045
    %v2050 = vld [vmem:[#allocation3 + $0xd] ss:$0 sm:$0xff]
    %2051 = vrot.lane.b32.xlu0 %v2050, 90
    %v2052 = vpop.permute.xlu0 %2051
    %v2053 = vsel %vm1255, %v2052, %v2049
    %v2054 = vld [vmem:[#allocation3 + $0xe] ss:$0 sm:$0xff]
    %2055 = vrot.lane.b32.xlu0 %v2054, 108
    %v2056 = vpop.permute.xlu0 %2055
    %v2057 = vsel %vm1260, %v2056, %v2053
    %v2058 = vld [vmem:[#allocation3 + $0xf] ss:$0 sm:$0xff]
    %2059 = vrot.lane.b32.xlu0 %v2058, 126
    %v2060 = vpop.permute.xlu0 %2059
    %v2061 = vsel %vm1265, %v2060, %v2057
    %v2062 = vpack.c.bf16 %v2061, %v2061
    %v2064 = vunpack.c.l.b16 %v2062
    %v2065 = vpack.c.b16 %v2064, %v2064
    %v2066 = vrot.slane %v2065, 7
    %v2068 = vld [vmem:[#allocation4 + $0x8] sm:$0x2]
    %v2069 = vsel %vm41, %v2066, %v2068
    %2070 = vst [vmem:[#allocation4 + $0x8] sm:$0x2] %v2069
    %v2071 = vld [vmem:[#allocation3 + $0xf] ss:$0 sm:$0xff]
    %2072 = vrot.lane.b32.xlu0 %v2071, 126
    %v2073 = vpop.permute.xlu0 %2072
    %v2074 = vld [vmem:[#allocation3 + $0x18] ss:$0 sm:$0xff]
    %2075 = vrot.lane.b32.xlu0 %v2074, 16
    %v2076 = vpop.permute.xlu0 %2075
    %v2077 = vsel %vm1277, %v2076, %v2073
    %v2078 = vld [vmem:[#allocation3 + $0x19] ss:$0 sm:$0xff]
    %2079 = vrot.lane.b32.xlu0 %v2078, 34
    %v2080 = vpop.permute.xlu0 %2079
    %v2081 = vsel %vm1282, %v2080, %v2077
    %v2082 = vld [vmem:[#allocation3 + $0x1a] ss:$0 sm:$0xff]
    %2083 = vrot.lane.b32.xlu0 %v2082, 52
    %v2084 = vpop.permute.xlu0 %2083
    %v2085 = vsel %vm1287, %v2084, %v2081
    %v2086 = vld [vmem:[#allocation3 + $0x1b] ss:$0 sm:$0xff]
    %2087 = vrot.lane.b32.xlu0 %v2086, 70
    %v2088 = vpop.permute.xlu0 %2087
    %v2089 = vsel %vm1292, %v2088, %v2085
    %v2090 = vld [vmem:[#allocation3 + $0x1c] ss:$0 sm:$0xff]
    %2091 = vrot.lane.b32.xlu0 %v2090, 88
    %v2092 = vpop.permute.xlu0 %2091
    %v2093 = vsel %vm1297, %v2092, %v2089
    %v2094 = vld [vmem:[#allocation3 + $0x1d] ss:$0 sm:$0xff]
    %2095 = vrot.lane.b32.xlu0 %v2094, 106
    %v2096 = vpop.permute.xlu0 %2095
    %v2097 = vsel %vm1302, %v2096, %v2093
    %v2098 = vld [vmem:[#allocation3 + $0x1e] ss:$0 sm:$0xff]
    %2099 = vrot.lane.b32.xlu0 %v2098, 124
    %v2100 = vpop.permute.xlu0 %2099
    %v2101 = vsel %vm1307, %v2100, %v2097
    %v2102 = vpack.c.bf16 %v2101, %v2101
    %v2104 = vunpack.c.l.b16 %v2102
    %v2105 = vpack.c.b16 %v2104, %v2104
    %v2107 = vshll.u32 %v2105, 16
    %v2109 = vrot.slane %v2107, 7
    %v2111 = vld [vmem:[#allocation4 + $0x8] sm:$0x2]
    %v2112 = vsel %vm1417, %v2109, %v2111
    %2113 = vst [vmem:[#allocation4 + $0x8] sm:$0x2] %v2112
    %v2114 = vld [vmem:[#allocation3 + $0x1e] ss:$0 sm:$0xff]
    %2115 = vrot.lane.b32.xlu0 %v2114, 124
    %v2116 = vpop.permute.xlu0 %2115
    %v2117 = vld [vmem:[#allocation3 + $0x1f] ss:$0 sm:$0xff]
    %2118 = vrot.lane.b32.xlu0 %v2117, 14
    %v2119 = vpop.permute.xlu0 %2118
    %v2120 = vsel %vm1328, %v2119, %v2116
    %v2121 = vld [vmem:[#allocation3 + $0x28] ss:$0 sm:$0xff]
    %2122 = vrot.lane.b32.xlu0 %v2121, 32
    %v2123 = vpop.permute.xlu0 %2122
    %v2124 = vsel %vm1333, %v2123, %v2120
    %v2125 = vld [vmem:[#allocation3 + $0x29] ss:$0 sm:$0xff]
    %2126 = vrot.lane.b32.xlu0 %v2125, 50
    %v2127 = vpop.permute.xlu0 %2126
    %v2128 = vsel %vm1338, %v2127, %v2124
    %v2129 = vld [vmem:[#allocation3 + $0x2a] ss:$0 sm:$0xff]
    %2130 = vrot.lane.b32.xlu0 %v2129, 68
    %v2131 = vpop.permute.xlu0 %2130
    %v2132 = vsel %vm1343, %v2131, %v2128
    %v2133 = vld [vmem:[#allocation3 + $0x2b] ss:$0 sm:$0xff]
    %2134 = vrot.lane.b32.xlu0 %v2133, 86
    %v2135 = vpop.permute.xlu0 %2134
    %v2136 = vsel %vm1348, %v2135, %v2132
    %v2137 = vld [vmem:[#allocation3 + $0x2c] ss:$0 sm:$0xff]
    %2138 = vrot.lane.b32.xlu0 %v2137, 104
    %v2139 = vpop.permute.xlu0 %2138
    %v2140 = vsel %vm1353, %v2139, %v2136
    %v2141 = vld [vmem:[#allocation3 + $0x2d] ss:$0 sm:$0xff]
    %2142 = vrot.lane.b32.xlu0 %v2141, 122
    %v2143 = vpop.permute.xlu0 %2142
    %v2144 = vsel %vm1358, %v2143, %v2140
    %v2145 = vpack.c.bf16 %v2144, %v2144
    %v2147 = vunpack.c.l.b16 %v2145
    %v2148 = vpack.c.b16 %v2147, %v2147
    %v2149 = vrot.slane %v2148, 6
    %v2151 = vld [vmem:[#allocation4 + $0x8] sm:$0x4]
    %v2152 = vsel %vm1467, %v2149, %v2151
    %2153 = vst [vmem:[#allocation4 + $0x8] sm:$0x4] %v2152
    %v2154 = vld [vmem:[#allocation3 + $0x2d] ss:$0 sm:$0xff]
    %2155 = vrot.lane.b32.xlu0 %v2154, 122
    %v2156 = vpop.permute.xlu0 %2155
    %v2157 = vld [vmem:[#allocation3 + $0x2e] ss:$0 sm:$0xff]
    %2158 = vrot.lane.b32.xlu0 %v2157, 12
    %v2159 = vpop.permute.xlu0 %2158
    %v2160 = vsel %vm1375, %v2159, %v2156
    %v2161 = vld [vmem:[#allocation3 + $0x2f] ss:$0 sm:$0xff]
    %2162 = vrot.lane.b32.xlu0 %v2161, 30
    %v2163 = vpop.permute.xlu0 %2162
    %v2164 = vsel %vm1380, %v2163, %v2160
    %v2165 = vld [vmem:[#allocation3 + $0x38] ss:$0 sm:$0xff]
    %2166 = vrot.lane.b32.xlu0 %v2165, 48
    %v2167 = vpop.permute.xlu0 %2166
    %v2168 = vsel %vm1385, %v2167, %v2164
    %v2169 = vld [vmem:[#allocation3 + $0x39] ss:$0 sm:$0xff]
    %2170 = vrot.lane.b32.xlu0 %v2169, 66
    %v2171 = vpop.permute.xlu0 %2170
    %v2172 = vsel %vm1390, %v2171, %v2168
    %v2173 = vld [vmem:[#allocation3 + $0x3a] ss:$0 sm:$0xff]
    %2174 = vrot.lane.b32.xlu0 %v2173, 84
    %v2175 = vpop.permute.xlu0 %2174
    %v2176 = vsel %vm1395, %v2175, %v2172
    %v2177 = vld [vmem:[#allocation3 + $0x3b] ss:$0 sm:$0xff]
    %2178 = vrot.lane.b32.xlu0 %v2177, 102
    %v2179 = vpop.permute.xlu0 %2178
    %v2180 = vsel %vm1400, %v2179, %v2176
    %v2181 = vld [vmem:[#allocation3 + $0x3c] ss:$0 sm:$0xff]
    %2182 = vrot.lane.b32.xlu0 %v2181, 120
    %v2183 = vpop.permute.xlu0 %2182
    %v2184 = vsel %vm1405, %v2183, %v2180
    %v2185 = vpack.c.bf16 %v2184, %v2184
    %v2187 = vunpack.c.l.b16 %v2185
    %v2188 = vpack.c.b16 %v2187, %v2187
    %v2190 = vshll.u32 %v2188, 16
    %v2192 = vrot.slane %v2190, 6
    %v2194 = vld [vmem:[#allocation4 + $0x8] sm:$0x4]
    %v2195 = vsel %vm1519, %v2192, %v2194
    %2196 = vst [vmem:[#allocation4 + $0x8] sm:$0x4] %v2195
    %v2197 = vld [vmem:[#allocation3 + $0x3c] ss:$0 sm:$0xff]
    %2198 = vrot.lane.b32.xlu0 %v2197, 120
    %v2199 = vpop.permute.xlu0 %2198
    %v2200 = vld [vmem:[#allocation3 + $0x3d] ss:$0 sm:$0xff]
    %2201 = vrot.lane.b32.xlu0 %v2200, 10
    %v2202 = vpop.permute.xlu0 %2201
    %v2203 = vsel %vm1427, %v2202, %v2199
    %v2204 = vld [vmem:[#allocation3 + $0x3e] ss:$0 sm:$0xff]
    %2205 = vrot.lane.b32.xlu0 %v2204, 28
    %v2206 = vpop.permute.xlu0 %2205
    %v2207 = vsel %vm1432, %v2206, %v2203
    %v2208 = vld [vmem:[#allocation3 + $0x3f] ss:$0 sm:$0xff]
    %2209 = vrot.lane.b32.xlu0 %v2208, 46
    %v2210 = vpop.permute.xlu0 %2209
    %v2211 = vsel %vm1437, %v2210, %v2207
    %v2212 = vld [vmem:[#allocation3 + $0x48] ss:$0 sm:$0xff]
    %2213 = vrot.lane.b32.xlu0 %v2212, 64
    %v2214 = vpop.permute.xlu0 %2213
    %v2215 = vsel %vm1442, %v2214, %v2211
    %v2216 = vld [vmem:[#allocation3 + $0x49] ss:$0 sm:$0xff]
    %2217 = vrot.lane.b32.xlu0 %v2216, 82
    %v2218 = vpop.permute.xlu0 %2217
    %v2219 = vsel %vm1447, %v2218, %v2215
    %v2220 = vld [vmem:[#allocation3 + $0x4a] ss:$0 sm:$0xff]
    %2221 = vrot.lane.b32.xlu0 %v2220, 100
    %v2222 = vpop.permute.xlu0 %2221
    %v2223 = vsel %vm1452, %v2222, %v2219
    %v2224 = vld [vmem:[#allocation3 + $0x4b] ss:$0 sm:$0xff]
    %2225 = vrot.lane.b32.xlu0 %v2224, 118
    %v2226 = vpop.permute.xlu0 %2225
    %v2227 = vsel %vm1457, %v2226, %v2223
    %v2228 = vpack.c.bf16 %v2227, %v2227
    %v2230 = vunpack.c.l.b16 %v2228
    %v2231 = vpack.c.b16 %v2230, %v2230
    %v2232 = vrot.slane %v2231, 5
    %v2234 = vld [vmem:[#allocation4 + $0x8] sm:$0x8]
    %v2235 = vsel %vm1569, %v2232, %v2234
    %2236 = vst [vmem:[#allocation4 + $0x8] sm:$0x8] %v2235
    %v2237 = vld [vmem:[#allocation3 + $0x4b] ss:$0 sm:$0xff]
    %2238 = vrot.lane.b32.xlu0 %v2237, 118
    %v2239 = vpop.permute.xlu0 %2238
    %v2240 = vld [vmem:[#allocation3 + $0x4c] ss:$0 sm:$0xff]
    %2241 = vrot.lane.b32.xlu0 %v2240, 8
    %v2242 = vpop.permute.xlu0 %2241
    %v2243 = vsel %vm1477, %v2242, %v2239
    %v2244 = vld [vmem:[#allocation3 + $0x4d] ss:$0 sm:$0xff]
    %2245 = vrot.lane.b32.xlu0 %v2244, 26
    %v2246 = vpop.permute.xlu0 %2245
    %v2247 = vsel %vm1482, %v2246, %v2243
    %v2248 = vld [vmem:[#allocation3 + $0x4e] ss:$0 sm:$0xff]
    %2249 = vrot.lane.b32.xlu0 %v2248, 44
    %v2250 = vpop.permute.xlu0 %2249
    %v2251 = vsel %vm1487, %v2250, %v2247
    %v2252 = vld [vmem:[#allocation3 + $0x4f] ss:$0 sm:$0xff]
    %2253 = vrot.lane.b32.xlu0 %v2252, 62
    %v2254 = vpop.permute.xlu0 %2253
    %v2255 = vsel %vm1492, %v2254, %v2251
    %v2256 = vld [vmem:[#allocation3 + $0x58] ss:$0 sm:$0xff]
    %2257 = vrot.lane.b32.xlu0 %v2256, 80
    %v2258 = vpop.permute.xlu0 %2257
    %v2259 = vsel %vm1497, %v2258, %v2255
    %v2260 = vld [vmem:[#allocation3 + $0x59] ss:$0 sm:$0xff]
    %2261 = vrot.lane.b32.xlu0 %v2260, 98
    %v2262 = vpop.permute.xlu0 %2261
    %v2263 = vsel %vm1502, %v2262, %v2259
    %v2264 = vld [vmem:[#allocation3 + $0x5a] ss:$0 sm:$0xff]
    %2265 = vrot.lane.b32.xlu0 %v2264, 116
    %v2266 = vpop.permute.xlu0 %2265
    %v2267 = vsel %vm1507, %v2266, %v2263
    %v2268 = vpack.c.bf16 %v2267, %v2267
    %v2270 = vunpack.c.l.b16 %v2268
    %v2271 = vpack.c.b16 %v2270, %v2270
    %v2273 = vshll.u32 %v2271, 16
    %v2275 = vrot.slane %v2273, 5
    %v2277 = vld [vmem:[#allocation4 + $0x8] sm:$0x8]
    %v2278 = vsel %vm1621, %v2275, %v2277
    %2279 = vst [vmem:[#allocation4 + $0x8] sm:$0x8] %v2278
    %v2280 = vld [vmem:[#allocation3 + $0x5a] ss:$0 sm:$0xff]
    %2281 = vrot.lane.b32.xlu0 %v2280, 116
    %v2282 = vpop.permute.xlu0 %2281
    %v2283 = vld [vmem:[#allocation3 + $0x5b] ss:$0 sm:$0xff]
    %2284 = vrot.lane.b32.xlu0 %v2283, 6
    %v2285 = vpop.permute.xlu0 %2284
    %v2286 = vsel %vm1529, %v2285, %v2282
    %v2287 = vld [vmem:[#allocation3 + $0x5c] ss:$0 sm:$0xff]
    %2288 = vrot.lane.b32.xlu0 %v2287, 24
    %v2289 = vpop.permute.xlu0 %2288
    %v2290 = vsel %vm1534, %v2289, %v2286
    %v2291 = vld [vmem:[#allocation3 + $0x5d] ss:$0 sm:$0xff]
    %2292 = vrot.lane.b32.xlu0 %v2291, 42
    %v2293 = vpop.permute.xlu0 %2292
    %v2294 = vsel %vm1539, %v2293, %v2290
    %v2295 = vld [vmem:[#allocation3 + $0x5e] ss:$0 sm:$0xff]
    %2296 = vrot.lane.b32.xlu0 %v2295, 60
    %v2297 = vpop.permute.xlu0 %2296
    %v2298 = vsel %vm1544, %v2297, %v2294
    %v2299 = vld [vmem:[#allocation3 + $0x5f] ss:$0 sm:$0xff]
    %2300 = vrot.lane.b32.xlu0 %v2299, 78
    %v2301 = vpop.permute.xlu0 %2300
    %v2302 = vsel %vm1549, %v2301, %v2298
    %v2303 = vld [vmem:[#allocation3 + $0x68] ss:$0 sm:$0xff]
    %2304 = vrot.lane.b32.xlu0 %v2303, 96
    %v2305 = vpop.permute.xlu0 %2304
    %v2306 = vsel %vm1554, %v2305, %v2302
    %v2307 = vld [vmem:[#allocation3 + $0x69] ss:$0 sm:$0xff]
    %2308 = vrot.lane.b32.xlu0 %v2307, 114
    %v2309 = vpop.permute.xlu0 %2308
    %v2310 = vsel %vm1559, %v2309, %v2306
    %v2311 = vpack.c.bf16 %v2310, %v2310
    %v2312 = vld [vmem:[#allocation4 + $0xc] sm:$0x1]
    %v2313 = vsel %vm50, %v2311, %v2312
    %2314 = vst [vmem:[#allocation4 + $0xc] sm:$0x1] %v2313
    %v2315 = vld [vmem:[#allocation3 + $0x69] ss:$0 sm:$0xff]
    %2316 = vrot.lane.b32.xlu0 %v2315, 114
    %v2317 = vpop.permute.xlu0 %2316
    %v2318 = vld [vmem:[#allocation3 + $0x6a] ss:$0 sm:$0xff]
    %2319 = vrot.lane.b32.xlu0 %v2318, 4
    %v2320 = vpop.permute.xlu0 %2319
    %v2321 = vsel %vm1579, %v2320, %v2317
    %v2322 = vld [vmem:[#allocation3 + $0x6b] ss:$0 sm:$0xff]
    %2323 = vrot.lane.b32.xlu0 %v2322, 22
    %v2324 = vpop.permute.xlu0 %2323
    %v2325 = vsel %vm1584, %v2324, %v2321
    %v2326 = vld [vmem:[#allocation3 + $0x6c] ss:$0 sm:$0xff]
    %2327 = vrot.lane.b32.xlu0 %v2326, 40
    %v2328 = vpop.permute.xlu0 %2327
    %v2329 = vsel %vm1589, %v2328, %v2325
    %v2330 = vld [vmem:[#allocation3 + $0x6d] ss:$0 sm:$0xff]
    %2331 = vrot.lane.b32.xlu0 %v2330, 58
    %v2332 = vpop.permute.xlu0 %2331
    %v2333 = vsel %vm1594, %v2332, %v2329
    %v2334 = vld [vmem:[#allocation3 + $0x6e] ss:$0 sm:$0xff]
    %2335 = vrot.lane.b32.xlu0 %v2334, 76
    %v2336 = vpop.permute.xlu0 %2335
    %v2337 = vsel %vm1599, %v2336, %v2333
    %v2338 = vld [vmem:[#allocation3 + $0x6f] ss:$0 sm:$0xff]
    %2339 = vrot.lane.b32.xlu0 %v2338, 94
    %v2340 = vpop.permute.xlu0 %2339
    %v2341 = vsel %vm1604, %v2340, %v2337
    %v2342 = vld [vmem:[#allocation3 + $0x78] ss:$0 sm:$0xff]
    %2343 = vrot.lane.b32.xlu0 %v2342, 112
    %v2344 = vpop.permute.xlu0 %2343
    %v2345 = vsel %vm1609, %v2344, %v2341
    %v2346 = vpack.c.bf16 %v2345, %v2345
    %v2348 = vunpack.c.l.b16 %v2346
    %v2349 = vpack.c.b16 %v2348, %v2348
    %v2351 = vshll.u32 %v2349, 16
    %v2354 = vld [vmem:[#allocation4 + $0xc] sm:$0x1]
    %v2355 = vsel %vm1318, %v2351, %v2354
    %2356 = vst [vmem:[#allocation4 + $0xc] sm:$0x1] %v2355
    %v2357 = vld [vmem:[#allocation3 + $0x78] ss:$0 sm:$0xff]
    %2358 = vrot.lane.b32.xlu0 %v2357, 112
    %v2359 = vpop.permute.xlu0 %2358
    %v2360 = vld [vmem:[#allocation3 + $0x79] ss:$0 sm:$0xff]
    %2361 = vrot.lane.b32.xlu0 %v2360, 2
    %v2362 = vpop.permute.xlu0 %2361
    %v2363 = vsel %vm1631, %v2362, %v2359
    %v2364 = vld [vmem:[#allocation3 + $0x7a] ss:$0 sm:$0xff]
    %2365 = vrot.lane.b32.xlu0 %v2364, 20
    %v2366 = vpop.permute.xlu0 %2365
    %v2367 = vsel %vm1636, %v2366, %v2363
    %v2368 = vld [vmem:[#allocation3 + $0x7b] ss:$0 sm:$0xff]
    %2369 = vrot.lane.b32.xlu0 %v2368, 38
    %v2370 = vpop.permute.xlu0 %2369
    %v2371 = vsel %vm1641, %v2370, %v2367
    %v2372 = vld [vmem:[#allocation3 + $0x7c] ss:$0 sm:$0xff]
    %2373 = vrot.lane.b32.xlu0 %v2372, 56
    %v2374 = vpop.permute.xlu0 %2373
    %v2375 = vsel %vm1646, %v2374, %v2371
    %v2376 = vld [vmem:[#allocation3 + $0x7d] ss:$0 sm:$0xff]
    %2377 = vrot.lane.b32.xlu0 %v2376, 74
    %v2378 = vpop.permute.xlu0 %2377
    %v2379 = vsel %vm1651, %v2378, %v2375
    %v2380 = vld [vmem:[#allocation3 + $0x7e] ss:$0 sm:$0xff]
    %2381 = vrot.lane.b32.xlu0 %v2380, 92
    %v2382 = vpop.permute.xlu0 %2381
    %v2383 = vsel %vm1656, %v2382, %v2379
    %v2384 = vld [vmem:[#allocation3 + $0x7f] ss:$0 sm:$0xff]
    %2385 = vrot.lane.b32.xlu0 %v2384, 110
    %v2386 = vpop.permute.xlu0 %2385
    %v2387 = vsel %vm1661, %v2386, %v2383
    %v2388 = vpack.c.bf16 %v2387, %v2387
    %v2390 = vunpack.c.l.b16 %v2388
    %v2391 = vpack.c.b16 %v2390, %v2390
    %v2392 = vrot.slane %v2391, 7
    %v2394 = vld [vmem:[#allocation4 + $0xc] sm:$0x2]
    %v2395 = vsel %vm41, %v2392, %v2394
    %2396 = vst [vmem:[#allocation4 + $0xc] sm:$0x2] %v2395
    %v2397 = vld [vmem:[#allocation3 + $0x88] ss:$0 sm:$0xff]
    %v2398 = vld [vmem:[#allocation3 + $0x89] ss:$0 sm:$0xff]
    %2399 = vrot.lane.b32.xlu0 %v2398, 18
    %v2400 = vpop.permute.xlu0 %2399
    %v2401 = vsel %vm1235, %v2400, %v2397
    %v2402 = vld [vmem:[#allocation3 + $0x8a] ss:$0 sm:$0xff]
    %2403 = vrot.lane.b32.xlu0 %v2402, 36
    %v2404 = vpop.permute.xlu0 %2403
    %v2405 = vsel %vm1240, %v2404, %v2401
    %v2406 = vld [vmem:[#allocation3 + $0x8b] ss:$0 sm:$0xff]
    %2407 = vrot.lane.b32.xlu0 %v2406, 54
    %v2408 = vpop.permute.xlu0 %2407
    %v2409 = vsel %vm1245, %v2408, %v2405
    %v2410 = vld [vmem:[#allocation3 + $0x8c] ss:$0 sm:$0xff]
    %2411 = vrot.lane.b32.xlu0 %v2410, 72
    %v2412 = vpop.permute.xlu0 %2411
    %v2413 = vsel %vm1250, %v2412, %v2409
    %v2414 = vld [vmem:[#allocation3 + $0x8d] ss:$0 sm:$0xff]
    %2415 = vrot.lane.b32.xlu0 %v2414, 90
    %v2416 = vpop.permute.xlu0 %2415
    %v2417 = vsel %vm1255, %v2416, %v2413
    %v2418 = vld [vmem:[#allocation3 + $0x8e] ss:$0 sm:$0xff]
    %2419 = vrot.lane.b32.xlu0 %v2418, 108
    %v2420 = vpop.permute.xlu0 %2419
    %v2421 = vsel %vm1260, %v2420, %v2417
    %v2422 = vld [vmem:[#allocation3 + $0x8f] ss:$0 sm:$0xff]
    %2423 = vrot.lane.b32.xlu0 %v2422, 126
    %v2424 = vpop.permute.xlu0 %2423
    %v2425 = vsel %vm1265, %v2424, %v2421
    %v2426 = vpack.c.bf16 %v2425, %v2425
    %v2428 = vunpack.c.l.b16 %v2426
    %v2429 = vpack.c.b16 %v2428, %v2428
    %v2431 = vshll.u32 %v2429, 16
    %v2433 = vrot.slane %v2431, 7
    %v2435 = vld [vmem:[#allocation4 + $0xc] sm:$0x2]
    %v2436 = vsel %vm1417, %v2433, %v2435
    %2437 = vst [vmem:[#allocation4 + $0xc] sm:$0x2] %v2436
    %v2438 = vld [vmem:[#allocation3 + $0x8f] ss:$0 sm:$0xff]
    %2439 = vrot.lane.b32.xlu0 %v2438, 126
    %v2440 = vpop.permute.xlu0 %2439
    %v2441 = vld [vmem:[#allocation3 + $0x98] ss:$0 sm:$0xff]
    %2442 = vrot.lane.b32.xlu0 %v2441, 16
    %v2443 = vpop.permute.xlu0 %2442
    %v2444 = vsel %vm1277, %v2443, %v2440
    %v2445 = vld [vmem:[#allocation3 + $0x99] ss:$0 sm:$0xff]
    %2446 = vrot.lane.b32.xlu0 %v2445, 34
    %v2447 = vpop.permute.xlu0 %2446
    %v2448 = vsel %vm1282, %v2447, %v2444
    %v2449 = vld [vmem:[#allocation3 + $0x9a] ss:$0 sm:$0xff]
    %2450 = vrot.lane.b32.xlu0 %v2449, 52
    %v2451 = vpop.permute.xlu0 %2450
    %v2452 = vsel %vm1287, %v2451, %v2448
    %v2453 = vld [vmem:[#allocation3 + $0x9b] ss:$0 sm:$0xff]
    %2454 = vrot.lane.b32.xlu0 %v2453, 70
    %v2455 = vpop.permute.xlu0 %2454
    %v2456 = vsel %vm1292, %v2455, %v2452
    %v2457 = vld [vmem:[#allocation3 + $0x9c] ss:$0 sm:$0xff]
    %2458 = vrot.lane.b32.xlu0 %v2457, 88
    %v2459 = vpop.permute.xlu0 %2458
    %v2460 = vsel %vm1297, %v2459, %v2456
    %v2461 = vld [vmem:[#allocation3 + $0x9d] ss:$0 sm:$0xff]
    %2462 = vrot.lane.b32.xlu0 %v2461, 106
    %v2463 = vpop.permute.xlu0 %2462
    %v2464 = vsel %vm1302, %v2463, %v2460
    %v2465 = vld [vmem:[#allocation3 + $0x9e] ss:$0 sm:$0xff]
    %2466 = vrot.lane.b32.xlu0 %v2465, 124
    %v2467 = vpop.permute.xlu0 %2466
    %v2468 = vsel %vm1307, %v2467, %v2464
    %v2469 = vpack.c.bf16 %v2468, %v2468
    %v2471 = vunpack.c.l.b16 %v2469
    %v2472 = vpack.c.b16 %v2471, %v2471
    %v2473 = vrot.slane %v2472, 6
    %v2475 = vld [vmem:[#allocation4 + $0xc] sm:$0x4]
    %v2476 = vsel %vm1467, %v2473, %v2475
    %2477 = vst [vmem:[#allocation4 + $0xc] sm:$0x4] %v2476
    %v2478 = vld [vmem:[#allocation3 + $0x9e] ss:$0 sm:$0xff]
    %2479 = vrot.lane.b32.xlu0 %v2478, 124
    %v2480 = vpop.permute.xlu0 %2479
    %v2481 = vld [vmem:[#allocation3 + $0x9f] ss:$0 sm:$0xff]
    %2482 = vrot.lane.b32.xlu0 %v2481, 14
    %v2483 = vpop.permute.xlu0 %2482
    %v2484 = vsel %vm1328, %v2483, %v2480
    %v2485 = vld [vmem:[#allocation3 + $0xa8] ss:$0 sm:$0xff]
    %2486 = vrot.lane.b32.xlu0 %v2485, 32
    %v2487 = vpop.permute.xlu0 %2486
    %v2488 = vsel %vm1333, %v2487, %v2484
    %v2489 = vld [vmem:[#allocation3 + $0xa9] ss:$0 sm:$0xff]
    %2490 = vrot.lane.b32.xlu0 %v2489, 50
    %v2491 = vpop.permute.xlu0 %2490
    %v2492 = vsel %vm1338, %v2491, %v2488
    %v2493 = vld [vmem:[#allocation3 + $0xaa] ss:$0 sm:$0xff]
    %2494 = vrot.lane.b32.xlu0 %v2493, 68
    %v2495 = vpop.permute.xlu0 %2494
    %v2496 = vsel %vm1343, %v2495, %v2492
    %v2497 = vld [vmem:[#allocation3 + $0xab] ss:$0 sm:$0xff]
    %2498 = vrot.lane.b32.xlu0 %v2497, 86
    %v2499 = vpop.permute.xlu0 %2498
    %v2500 = vsel %vm1348, %v2499, %v2496
    %v2501 = vld [vmem:[#allocation3 + $0xac] ss:$0 sm:$0xff]
    %2502 = vrot.lane.b32.xlu0 %v2501, 104
    %v2503 = vpop.permute.xlu0 %2502
    %v2504 = vsel %vm1353, %v2503, %v2500
    %v2505 = vld [vmem:[#allocation3 + $0xad] ss:$0 sm:$0xff]
    %2506 = vrot.lane.b32.xlu0 %v2505, 122
    %v2507 = vpop.permute.xlu0 %2506
    %v2508 = vsel %vm1358, %v2507, %v2504
    %v2509 = vpack.c.bf16 %v2508, %v2508
    %v2511 = vunpack.c.l.b16 %v2509
    %v2512 = vpack.c.b16 %v2511, %v2511
    %v2514 = vshll.u32 %v2512, 16
    %v2516 = vrot.slane %v2514, 6
    %v2518 = vld [vmem:[#allocation4 + $0xc] sm:$0x4]
    %v2519 = vsel %vm1519, %v2516, %v2518
    %2520 = vst [vmem:[#allocation4 + $0xc] sm:$0x4] %v2519
    %v2521 = vld [vmem:[#allocation3 + $0xad] ss:$0 sm:$0xff]
    %2522 = vrot.lane.b32.xlu0 %v2521, 122
    %v2523 = vpop.permute.xlu0 %2522
    %v2524 = vld [vmem:[#allocation3 + $0xae] ss:$0 sm:$0xff]
    %2525 = vrot.lane.b32.xlu0 %v2524, 12
    %v2526 = vpop.permute.xlu0 %2525
    %v2527 = vsel %vm1375, %v2526, %v2523
    %v2528 = vld [vmem:[#allocation3 + $0xaf] ss:$0 sm:$0xff]
    %2529 = vrot.lane.b32.xlu0 %v2528, 30
    %v2530 = vpop.permute.xlu0 %2529
    %v2531 = vsel %vm1380, %v2530, %v2527
    %v2532 = vld [vmem:[#allocation3 + $0xb8] ss:$0 sm:$0xff]
    %2533 = vrot.lane.b32.xlu0 %v2532, 48
    %v2534 = vpop.permute.xlu0 %2533
    %v2535 = vsel %vm1385, %v2534, %v2531
    %v2536 = vld [vmem:[#allocation3 + $0xb9] ss:$0 sm:$0xff]
    %2537 = vrot.lane.b32.xlu0 %v2536, 66
    %v2538 = vpop.permute.xlu0 %2537
    %v2539 = vsel %vm1390, %v2538, %v2535
    %v2540 = vld [vmem:[#allocation3 + $0xba] ss:$0 sm:$0xff]
    %2541 = vrot.lane.b32.xlu0 %v2540, 84
    %v2542 = vpop.permute.xlu0 %2541
    %v2543 = vsel %vm1395, %v2542, %v2539
    %v2544 = vld [vmem:[#allocation3 + $0xbb] ss:$0 sm:$0xff]
    %2545 = vrot.lane.b32.xlu0 %v2544, 102
    %v2546 = vpop.permute.xlu0 %2545
    %v2547 = vsel %vm1400, %v2546, %v2543
    %v2548 = vld [vmem:[#allocation3 + $0xbc] ss:$0 sm:$0xff]
    %2549 = vrot.lane.b32.xlu0 %v2548, 120
    %v2550 = vpop.permute.xlu0 %2549
    %v2551 = vsel %vm1405, %v2550, %v2547
    %v2552 = vpack.c.bf16 %v2551, %v2551
    %v2554 = vunpack.c.l.b16 %v2552
    %v2555 = vpack.c.b16 %v2554, %v2554
    %v2556 = vrot.slane %v2555, 5
    %v2558 = vld [vmem:[#allocation4 + $0xc] sm:$0x8]
    %v2559 = vsel %vm1569, %v2556, %v2558
    %2560 = vst [vmem:[#allocation4 + $0xc] sm:$0x8] %v2559
    %v2561 = vld [vmem:[#allocation3 + $0xbc] ss:$0 sm:$0xff]
    %2562 = vrot.lane.b32.xlu0 %v2561, 120
    %v2563 = vpop.permute.xlu0 %2562
    %v2564 = vld [vmem:[#allocation3 + $0xbd] ss:$0 sm:$0xff]
    %2565 = vrot.lane.b32.xlu0 %v2564, 10
    %v2566 = vpop.permute.xlu0 %2565
    %v2567 = vsel %vm1427, %v2566, %v2563
    %v2568 = vld [vmem:[#allocation3 + $0xbe] ss:$0 sm:$0xff]
    %2569 = vrot.lane.b32.xlu0 %v2568, 28
    %v2570 = vpop.permute.xlu0 %2569
    %v2571 = vsel %vm1432, %v2570, %v2567
    %v2572 = vld [vmem:[#allocation3 + $0xbf] ss:$0 sm:$0xff]
    %2573 = vrot.lane.b32.xlu0 %v2572, 46
    %v2574 = vpop.permute.xlu0 %2573
    %v2575 = vsel %vm1437, %v2574, %v2571
    %v2576 = vld [vmem:[#allocation3 + $0xc8] ss:$0 sm:$0xff]
    %2577 = vrot.lane.b32.xlu0 %v2576, 64
    %v2578 = vpop.permute.xlu0 %2577
    %v2579 = vsel %vm1442, %v2578, %v2575
    %v2580 = vld [vmem:[#allocation3 + $0xc9] ss:$0 sm:$0xff]
    %2581 = vrot.lane.b32.xlu0 %v2580, 82
    %v2582 = vpop.permute.xlu0 %2581
    %v2583 = vsel %vm1447, %v2582, %v2579
    %v2584 = vld [vmem:[#allocation3 + $0xca] ss:$0 sm:$0xff]
    %2585 = vrot.lane.b32.xlu0 %v2584, 100
    %v2586 = vpop.permute.xlu0 %2585
    %v2587 = vsel %vm1452, %v2586, %v2583
    %v2588 = vld [vmem:[#allocation3 + $0xcb] ss:$0 sm:$0xff]
    %2589 = vrot.lane.b32.xlu0 %v2588, 118
    %v2590 = vpop.permute.xlu0 %2589
    %v2591 = vsel %vm1457, %v2590, %v2587
    %v2592 = vpack.c.bf16 %v2591, %v2591
    %v2594 = vunpack.c.l.b16 %v2592
    %v2595 = vpack.c.b16 %v2594, %v2594
    %v2597 = vshll.u32 %v2595, 16
    %v2599 = vrot.slane %v2597, 5
    %v2601 = vld [vmem:[#allocation4 + $0xc] sm:$0x8]
    %v2602 = vsel %vm1621, %v2599, %v2601
    %2603 = vst [vmem:[#allocation4 + $0xc] sm:$0x8] %v2602
    %v2604 = vld [vmem:[#allocation3 + $0xcb] ss:$0 sm:$0xff]
    %2605 = vrot.lane.b32.xlu0 %v2604, 118
    %v2606 = vpop.permute.xlu0 %2605
    %v2607 = vld [vmem:[#allocation3 + $0xcc] ss:$0 sm:$0xff]
    %2608 = vrot.lane.b32.xlu0 %v2607, 8
    %v2609 = vpop.permute.xlu0 %2608
    %v2610 = vsel %vm1477, %v2609, %v2606
    %v2611 = vld [vmem:[#allocation3 + $0xcd] ss:$0 sm:$0xff]
    %2612 = vrot.lane.b32.xlu0 %v2611, 26
    %v2613 = vpop.permute.xlu0 %2612
    %v2614 = vsel %vm1482, %v2613, %v2610
    %v2615 = vld [vmem:[#allocation3 + $0xce] ss:$0 sm:$0xff]
    %2616 = vrot.lane.b32.xlu0 %v2615, 44
    %v2617 = vpop.permute.xlu0 %2616
    %v2618 = vsel %vm1487, %v2617, %v2614
    %v2619 = vld [vmem:[#allocation3 + $0xcf] ss:$0 sm:$0xff]
    %2620 = vrot.lane.b32.xlu0 %v2619, 62
    %v2621 = vpop.permute.xlu0 %2620
    %v2622 = vsel %vm1492, %v2621, %v2618
    %v2623 = vld [vmem:[#allocation3 + $0xd8] ss:$0 sm:$0xff]
    %2624 = vrot.lane.b32.xlu0 %v2623, 80
    %v2625 = vpop.permute.xlu0 %2624
    %v2626 = vsel %vm1497, %v2625, %v2622
    %v2627 = vld [vmem:[#allocation3 + $0xd9] ss:$0 sm:$0xff]
    %2628 = vrot.lane.b32.xlu0 %v2627, 98
    %v2629 = vpop.permute.xlu0 %2628
    %v2630 = vsel %vm1502, %v2629, %v2626
    %v2631 = vld [vmem:[#allocation3 + $0xda] ss:$0 sm:$0xff]
    %2632 = vrot.lane.b32.xlu0 %v2631, 116
    %v2633 = vpop.permute.xlu0 %2632
    %v2634 = vsel %vm1507, %v2633, %v2630
    %v2635 = vpack.c.bf16 %v2634, %v2634
    %v2636 = vld [vmem:[#allocation4 + $0x10] sm:$0x1]
    %v2637 = vsel %vm50, %v2635, %v2636
    %2638 = vst [vmem:[#allocation4 + $0x10] sm:$0x1] %v2637
    %v2639 = vld [vmem:[#allocation3 + $0xda] ss:$0 sm:$0xff]
    %2640 = vrot.lane.b32.xlu0 %v2639, 116
    %v2641 = vpop.permute.xlu0 %2640
    %v2642 = vld [vmem:[#allocation3 + $0xdb] ss:$0 sm:$0xff]
    %2643 = vrot.lane.b32.xlu0 %v2642, 6
    %v2644 = vpop.permute.xlu0 %2643
    %v2645 = vsel %vm1529, %v2644, %v2641
    %v2646 = vld [vmem:[#allocation3 + $0xdc] ss:$0 sm:$0xff]
    %2647 = vrot.lane.b32.xlu0 %v2646, 24
    %v2648 = vpop.permute.xlu0 %2647
    %v2649 = vsel %vm1534, %v2648, %v2645
    %v2650 = vld [vmem:[#allocation3 + $0xdd] ss:$0 sm:$0xff]
    %2651 = vrot.lane.b32.xlu0 %v2650, 42
    %v2652 = vpop.permute.xlu0 %2651
    %v2653 = vsel %vm1539, %v2652, %v2649
    %v2654 = vld [vmem:[#allocation3 + $0xde] ss:$0 sm:$0xff]
    %2655 = vrot.lane.b32.xlu0 %v2654, 60
    %v2656 = vpop.permute.xlu0 %2655
    %v2657 = vsel %vm1544, %v2656, %v2653
    %v2658 = vld [vmem:[#allocation3 + $0xdf] ss:$0 sm:$0xff]
    %2659 = vrot.lane.b32.xlu0 %v2658, 78
    %v2660 = vpop.permute.xlu0 %2659
    %v2661 = vsel %vm1549, %v2660, %v2657
    %v2662 = vld [vmem:[#allocation3 + $0xe8] ss:$0 sm:$0xff]
    %2663 = vrot.lane.b32.xlu0 %v2662, 96
    %v2664 = vpop.permute.xlu0 %2663
    %v2665 = vsel %vm1554, %v2664, %v2661
    %v2666 = vld [vmem:[#allocation3 + $0xe9] ss:$0 sm:$0xff]
    %2667 = vrot.lane.b32.xlu0 %v2666, 114
    %v2668 = vpop.permute.xlu0 %2667
    %v2669 = vsel %vm1559, %v2668, %v2665
    %v2670 = vpack.c.bf16 %v2669, %v2669
    %v2672 = vunpack.c.l.b16 %v2670
    %v2673 = vpack.c.b16 %v2672, %v2672
    %v2675 = vshll.u32 %v2673, 16
    %v2678 = vld [vmem:[#allocation4 + $0x10] sm:$0x1]
    %v2679 = vsel %vm1318, %v2675, %v2678
    %2680 = vst [vmem:[#allocation4 + $0x10] sm:$0x1] %v2679
    %v2681 = vld [vmem:[#allocation3 + $0xe9] ss:$0 sm:$0xff]
    %2682 = vrot.lane.b32.xlu0 %v2681, 114
    %v2683 = vpop.permute.xlu0 %2682
    %v2684 = vld [vmem:[#allocation3 + $0xea] ss:$0 sm:$0xff]
    %2685 = vrot.lane.b32.xlu0 %v2684, 4
    %v2686 = vpop.permute.xlu0 %2685
    %v2687 = vsel %vm1579, %v2686, %v2683
    %v2688 = vld [vmem:[#allocation3 + $0xeb] ss:$0 sm:$0xff]
    %2689 = vrot.lane.b32.xlu0 %v2688, 22
    %v2690 = vpop.permute.xlu0 %2689
    %v2691 = vsel %vm1584, %v2690, %v2687
    %v2692 = vld [vmem:[#allocation3 + $0xec] ss:$0 sm:$0xff]
    %2693 = vrot.lane.b32.xlu0 %v2692, 40
    %v2694 = vpop.permute.xlu0 %2693
    %v2695 = vsel %vm1589, %v2694, %v2691
    %v2696 = vld [vmem:[#allocation3 + $0xed] ss:$0 sm:$0xff]
    %2697 = vrot.lane.b32.xlu0 %v2696, 58
    %v2698 = vpop.permute.xlu0 %2697
    %v2699 = vsel %vm1594, %v2698, %v2695
    %v2700 = vld [vmem:[#allocation3 + $0xee] ss:$0 sm:$0xff]
    %2701 = vrot.lane.b32.xlu0 %v2700, 76
    %v2702 = vpop.permute.xlu0 %2701
    %v2703 = vsel %vm1599, %v2702, %v2699
    %v2704 = vld [vmem:[#allocation3 + $0xef] ss:$0 sm:$0xff]
    %2705 = vrot.lane.b32.xlu0 %v2704, 94
    %v2706 = vpop.permute.xlu0 %2705
    %v2707 = vsel %vm1604, %v2706, %v2703
    %v2708 = vld [vmem:[#allocation3 + $0xf8] ss:$0 sm:$0xff]
    %2709 = vrot.lane.b32.xlu0 %v2708, 112
    %v2710 = vpop.permute.xlu0 %2709
    %v2711 = vsel %vm1609, %v2710, %v2707
    %v2712 = vpack.c.bf16 %v2711, %v2711
    %v2714 = vunpack.c.l.b16 %v2712
    %v2715 = vpack.c.b16 %v2714, %v2714
    %v2716 = vrot.slane %v2715, 7
    %v2718 = vld [vmem:[#allocation4 + $0x10] sm:$0x2]
    %v2719 = vsel %vm41, %v2716, %v2718
    %2720 = vst [vmem:[#allocation4 + $0x10] sm:$0x2] %v2719
    %v2721 = vld [vmem:[#allocation3 + $0xf8] ss:$0 sm:$0xff]
    %2722 = vrot.lane.b32.xlu0 %v2721, 112
    %v2723 = vpop.permute.xlu0 %2722
    %v2724 = vld [vmem:[#allocation3 + $0xf9] ss:$0 sm:$0xff]
    %2725 = vrot.lane.b32.xlu0 %v2724, 2
    %v2726 = vpop.permute.xlu0 %2725
    %v2727 = vsel %vm1631, %v2726, %v2723
    %v2728 = vld [vmem:[#allocation3 + $0xfa] ss:$0 sm:$0xff]
    %2729 = vrot.lane.b32.xlu0 %v2728, 20
    %v2730 = vpop.permute.xlu0 %2729
    %v2731 = vsel %vm1636, %v2730, %v2727
    %v2732 = vld [vmem:[#allocation3 + $0xfb] ss:$0 sm:$0xff]
    %2733 = vrot.lane.b32.xlu0 %v2732, 38
    %v2734 = vpop.permute.xlu0 %2733
    %v2735 = vsel %vm1641, %v2734, %v2731
    %v2736 = vld [vmem:[#allocation3 + $0xfc] ss:$0 sm:$0xff]
    %2737 = vrot.lane.b32.xlu0 %v2736, 56
    %v2738 = vpop.permute.xlu0 %2737
    %v2739 = vsel %vm1646, %v2738, %v2735
    %v2740 = vld [vmem:[#allocation3 + $0xfd] ss:$0 sm:$0xff]
    %2741 = vrot.lane.b32.xlu0 %v2740, 74
    %v2742 = vpop.permute.xlu0 %2741
    %v2743 = vsel %vm1651, %v2742, %v2739
    %v2744 = vld [vmem:[#allocation3 + $0xfe] ss:$0 sm:$0xff]
    %2745 = vrot.lane.b32.xlu0 %v2744, 92
    %v2746 = vpop.permute.xlu0 %2745
    %v2747 = vsel %vm1656, %v2746, %v2743
    %v2748 = vld [vmem:[#allocation3 + $0xff] ss:$0 sm:$0xff]
    %2749 = vrot.lane.b32.xlu0 %v2748, 110
    %v2750 = vpop.permute.xlu0 %2749
    %v2751 = vsel %vm1661, %v2750, %v2747
    %v2752 = vpack.c.bf16 %v2751, %v2751
    %v2754 = vunpack.c.l.b16 %v2752
    %v2755 = vpack.c.b16 %v2754, %v2754
    %v2757 = vshll.u32 %v2755, 16
    %v2759 = vrot.slane %v2757, 7
    %v2761 = vld [vmem:[#allocation4 + $0x10] sm:$0x2]
    %v2762 = vsel %vm1417, %v2759, %v2761
    %2763 = vst [vmem:[#allocation4 + $0x10] sm:$0x2] %v2762
    %v2764 = vld [vmem:[#allocation4] sm:$0xf]
    %v2765 = vld [vmem:[#allocation4 + $0x4] sm:$0xf]
    %v2766 = vld [vmem:[#allocation4 + $0x8] sm:$0xf]
    %v2767 = vld [vmem:[#allocation4 + $0xc] sm:$0xf]
    %v2768 = vld [vmem:[#allocation4 + $0x10] sm:$0x3]
    %v2769 = vld [vmem:[#allocation7 + $0xf0] sm:$0xf]
    %v2770 = vld [vmem:[#allocation7 + $0xf8] sm:$0xf]
    %v2771 = vld [vmem:[#allocation7 + $0x100] sm:$0xf]
    %v2772 = vld [vmem:[#allocation7 + $0x108] sm:$0xf]
    %v2773 = vld [vmem:[#allocation7 + $0x110] sm:$0xf]
    %v2774 = vld [vmem:[#allocation7 + $0x118] sm:$0xf]
    %v2775 = vld [vmem:[#allocation7 + $0x120] sm:$0xf]
    %v2776 = vld [vmem:[#allocation7 + $0x128] sm:$0xf]
    %v2777 = vld [vmem:[#allocation7 + $0x130] sm:$0xf]
    %v2778 = vld [vmem:[#allocation7 + $0x138] sm:$0xf]
    %v2779 = vld [vmem:[#allocation7 + $0x140] sm:$0xf]
    %v2780 = vld [vmem:[#allocation7 + $0x148] sm:$0xf]
    %v2781 = vld [vmem:[#allocation7 + $0x150] sm:$0xf]
    %v2782 = vld [vmem:[#allocation7 + $0x158] sm:$0xf]
    %v2783 = vld [vmem:[#allocation7 + $0x160] sm:$0xf]
    %v2784 = vld [vmem:[#allocation7 + $0x168] sm:$0xf]
    %v2785 = vld [vmem:[#allocation7 + $0xe8] sm:$0x2]
    %v2786 = vunpack.c.l.bf16 %v2785
    %v2787 = vlaneseq
    %v2788 = vshrl.u32 %v2787, 7
    %v2789 = vsub.s32 2, %v2788
    %v2790 = vrot.slane %v2786, %v2789
    %v2796 = vunpack.c.l.b16 %v2764
    %v2797 = vunpack.c.l.b16 %v2765
    %v2798 = vunpack.c.l.b16 %v2766
    %v2799 = vunpack.c.l.b16 %v2767
    %v2800 = vunpack.c.l.b16 %v2768
    %v2801 = vpack.c.b16 %v2797, %v2796
    %v2802 = vpack.c.b16 %v2799, %v2798
    %v2803 = vpack.c.b16 %v2800, %v2800
    %v2823 = vunpack.c.l.b16 %v2769
    %v2824 = vunpack.c.l.b16 %v2770
    %v2825 = vunpack.c.l.b16 %v2771
    %v2826 = vunpack.c.l.b16 %v2772
    %v2827 = vunpack.c.l.b16 %v2773
    %v2828 = vunpack.c.l.b16 %v2774
    %v2829 = vunpack.c.l.b16 %v2775
    %v2830 = vunpack.c.l.b16 %v2776
    %v2831 = vunpack.c.l.b16 %v2777
    %v2832 = vunpack.c.l.b16 %v2778
    %v2833 = vunpack.c.l.b16 %v2779
    %v2834 = vunpack.c.l.b16 %v2780
    %v2835 = vunpack.c.l.b16 %v2781
    %v2836 = vunpack.c.l.b16 %v2782
    %v2837 = vunpack.c.l.b16 %v2783
    %v2838 = vunpack.c.l.b16 %v2784
    %v2839 = vpack.c.b16 %v2824, %v2823
    %v2840 = vpack.c.b16 %v2826, %v2825
    %v2841 = vpack.c.b16 %v2828, %v2827
    %v2842 = vpack.c.b16 %v2830, %v2829
    %v2843 = vpack.c.b16 %v2832, %v2831
    %v2844 = vpack.c.b16 %v2834, %v2833
    %v2845 = vpack.c.b16 %v2836, %v2835
    %v2846 = vpack.c.b16 %v2838, %v2837
    %2855 = vmatprep.subr.bf16.mxu0 0
    %2856 = vmatpush1.bf16.msra.mxu0 %v2839
    %2857 = vmatprep.subr.bf16.mxu0 0
    %2858 = vmatpush1.bf16.msra.mxu0 %v2840
    %2859 = vmatprep.subr.bf16.mxu0 0
    %2860 = vmatpush1.bf16.msra.mxu0 %v2841
    %2861 = vmatprep.subr.bf16.mxu0 0
    %2862 = vmatpush1.bf16.msra.mxu0 %v2842
    %2863 = vmatprep.subr.bf16.mxu0 0
    %2864 = vmatpush1.bf16.msra.mxu0 %v2843
    %2865 = vmatprep.subr.bf16.mxu0 0
    %2866 = vmatpush1.bf16.msra.mxu0 %v2844
    %2867 = vmatprep.subr.bf16.mxu0 0
    %2868 = vmatpush1.bf16.msra.mxu0 %v2845
    %2869 = vmatprep.subr.bf16.mxu0 0
    %2870 = vmatpush1.bf16.msra.mxu0 %v2846
    %2871 = vmatprep.subr.bf16.mxu0 0
    %2872 = vmatpush1.bf16.msra.mxu0 0
    %2873 = vmatprep.subr.bf16.mxu0 0
    %2874 = vmatpush1.bf16.msra.mxu0 0
    %2875 = vmatprep.subr.bf16.mxu0 0
    %2876 = vmatpush1.bf16.msra.mxu0 0
    %2877 = vmatprep.subr.bf16.mxu0 0
    %2878 = vmatpush1.bf16.msra.mxu0 0
    %2879 = vmatprep.subr.bf16.mxu0 0
    %2880 = vmatpush1.bf16.msra.mxu0 0
    %2881 = vmatprep.subr.bf16.mxu0 0
    %2882 = vmatpush1.bf16.msra.mxu0 0
    %2883 = vmatprep.subr.bf16.mxu0 0
    %2884 = vmatpush1.bf16.msra.mxu0 0
    %2885 = vmatprep.subr.bf16.mxu0 0
    %2886 = vmatpush1.bf16.msra.mxu0 0
    %2887 = vmatprep.mubr.bf16.mxu0 0
    %2888 = vmatmul.mubr.bf16.gmra.mrb[0].mxu0 %v2801
    %v2889 = vpop.f32.mrb[0].mxu0
    %v2890 = vadd.f32 %v2790, %v2889
    %v2891 = vpop.f32.mrb[0].mxu0
    %v2892 = vpop.f32.mrb[0].mxu0
    %v2893 = vadd.f32 %v2790, %v2892
    %v2894 = vpop.f32.mrb[0].mxu0
    %2895 = vmatprep.mubr.bf16.mxu0 0
    %2896 = vmatmul.mubr.bf16.gmra.mrb[0].mxu0 %v2802
    %v2897 = vpop.f32.mrb[0].mxu0
    %v2898 = vadd.f32 %v2790, %v2897
    %v2899 = vpop.f32.mrb[0].mxu0
    %v2900 = vpop.f32.mrb[0].mxu0
    %v2901 = vadd.f32 %v2790, %v2900
    %v2902 = vpop.f32.mrb[0].mxu0
    %2903 = vmatprep.mubr.bf16.mxu0 0
    %2904 = vmatmul.mubr.bf16.gmra.mrb[0].mxu0 %v2803
    %v2905 = vpop.f32.mrb[0].mxu0
    %v2906 = vadd.f32 %v2790, %v2905
    %v2907 = vpop.f32.mrb[0].mxu0
    %v2908 = vpop.f32.mrb[0].mxu0
    %v2909 = vpop.f32.mrb[0].mxu0
    %2910 = vdwg.mxu0
    %v2911 = vmax.f32 %v2890, 0.0
    %v2912 = vmax.f32 %v2893, 0.0
    %v2913 = vmax.f32 %v2898, 0.0
    %v2914 = vmax.f32 %v2901, 0.0
    %v2915 = vmax.f32 %v2906, 0.0
    %v2916 = vld [vmem:[#allocation7 + $0xe8] sm:$0x4]
    %v2917 = vunpack.c.l.bf16 %v2916
    %v2918 = vlaneseq
    %v2919 = vshrl.u32 %v2918, 7
    %v2920 = vsub.s32 3, %v2919
    %v2921 = vrot.slane %v2786, %v2920
    %v2922 = vmul.f32 %v2911, %v2921
    %v2923 = vmul.f32 %v2912, %v2921
    %v2924 = vmul.f32 %v2913, %v2921
    %v2925 = vmul.f32 %v2914, %v2921
    %v2926 = vmul.f32 %v2915, %v2921
    %vm2927 = vcmask 261120
    %v2928 = vsel %vm2927, %v2922, 0.0
    %2929 = vadd.xlane.f32.xlu0 %v2928
    %v2930 = vpop.xlane.xlu0 %2929
    %v2931 = vsel %vm2927, %v2923, 0.0
    %2932 = vadd.xlane.f32.xlu0 %v2931
    %v2933 = vpop.xlane.xlu0 %2932
    %v2934 = vsel %vm2927, %v2924, 0.0
    %2935 = vadd.xlane.f32.xlu0 %v2934
    %v2936 = vpop.xlane.xlu0 %2935
    %v2937 = vsel %vm2927, %v2925, 0.0
    %2938 = vadd.xlane.f32.xlu0 %v2937
    %v2939 = vpop.xlane.xlu0 %2938
    %vm2940 = vcmask 257024
    %v2941 = vsel %vm2940, %v2926, 0.0
    %2942 = vadd.xlane.f32.xlu0 %v2941
    %v2943 = vpop.xlane.xlu0 %2942
    %v2944 = vlaneseq
    %v2945 = vshrl.u32 %v2944, 7
    %v2946 = vsub.s32 4, %v2945
    %v2947 = vrot.slane %v2917, %v2946
    %v2948 = vadd.f32 %v2930, %v2947
    %v2949 = vadd.f32 %v2933, %v2947
    %v2950 = vadd.f32 %v2936, %v2947
    %v2951 = vadd.f32 %v2939, %v2947
    %v2952 = vadd.f32 %v2943, %v2947
    %v2953 = vmax.f32 %v2948, 0.0
    %v2954 = vmax.f32 %v2949, 0.0
    %v2955 = vmax.f32 %v2950, 0.0
    %v2956 = vmax.f32 %v2951, 0.0
    %v2957 = vmax.f32 %v2952, 0.0
    %2958 = vst.msk [vmem:[%s2] sm:$0xff] %vm581, %v2953
    %2959 = vst.msk [vmem:[%s2 + $0x8] sm:$0xff] %vm581, %v2954
    %2960 = vst.msk [vmem:[%s2 + $0x10] sm:$0xff] %vm581, %v2955
    %2961 = vst.msk [vmem:[%s2 + $0x18] sm:$0xff] %vm581, %v2956
    %vm2962 = vcmask 3072
    %2963 = vst.msk [vmem:[%s2 + $0x20] sm:$0xf] %vm2962, %v2957
    // Predicated region
    $region18: #{cnn2_forward.1} parent=1 // pred_check
      _
    $region19: #{cnn2_forward.1} parent=1 // pred_check_branch
      %2965 = sbr.rel (0) target = $region21
    $region20: #{cnn2_forward.1} parent=1 // pred_region
      _
    $region21: #{cnn2_forward.1} parent=1 // pred_fallthru
      _
    // Predicated region
    $region22: #{cnn2_forward.1} parent=1 // pred_check
      _
    $region23: #{cnn2_forward.1} parent=1 // pred_check_branch
      %2967 = sbr.rel (0) target = $region25
    $region24: #{cnn2_forward.1} parent=1 // pred_region
      _
    $region25: #{cnn2_forward.1} parent=1 // pred_fallthru
      _
    %2968 = vsyncpa [#allocation6], 1
    %2969 = vsyncpa [#allocation8], 1

</llo_original>
